<compile_context>
chip_gen: v6e
topology: v6e:2x2x1
jax: 0.10.0
libtpu: 0.0.40
codegen_flags: <defaults>
</compile_context>

<pallas_src>
import functools

import jax
import jax.numpy as jnp
from jax import lax
from jax.experimental import pallas as pl
from jax.experimental.pallas import tpu as pltpu

VMEM_SPEC = pl.BlockSpec(memory_space=pltpu.MemorySpace.VMEM)


# ----------------------------- fused Pallas kernel -----------------------------

def fused_forward_kernel(x_ref, wconv_ref, shifts_ref,
                         wih0T_ref, whh0T_ref, b0_ref,
                         wih1T_ref, whh1T_ref, b1_ref,
                         fcwT_ref, fcb_ref,
                         o_ref, xpad_ref, im2_ref, gx0_ref, *, b_pad):
    # x_ref:      (L*B_PAD, C)  time-major rows (row = t*B_PAD + b), channels zero-extended
    # wconv_ref:  (4, K*C, C)   per-layer im2col weights (BN scale pre-folded)
    # shifts_ref: (4, 1, C)     fused eval-BN shift (+conv bias)
    # wih0T/whh0T: (C,4H)/(H,4H); b0,b1: (1,4H); wih1T/whh1T: (H,4H)
    # fcwT: (H, c_out); fcb: (1, c_out); o_ref: (B_PAD, c_out)
    # xpad_ref: ((L+2*pad)*B_PAD, C) halo scratch; im2_ref: (L*B_PAD, K*C); gx0_ref: (L*B_PAD, 4H)
    ROWS, C = x_ref.shape
    L = ROWS // b_pad
    n_conv = wconv_ref.shape[0]
    K = wconv_ref.shape[1] // C
    pad_l = (K - 1) // 2
    H = whh0T_ref.shape[0]
    PAD_ROWS = (xpad_ref.shape[0] - ROWS) // 2        # halo rows per side (8-aligned)

    # ---------------- conv stack: im2col + single deep matmul per layer (BN+ReLU fused) ---
    xpad_ref[0:PAD_ROWS, :] = jnp.zeros((PAD_ROWS, C), jnp.float32)                  # halo L
    xpad_ref[PAD_ROWS + ROWS:PAD_ROWS + ROWS + PAD_ROWS, :] = jnp.zeros((PAD_ROWS, C),
                                                                        jnp.float32)  # halo R
    xpad_ref[PAD_ROWS:PAD_ROWS + ROWS, :] = x_ref[...]                               # interior
    cur = None
    for i in range(n_conv):
        for k in range(K):                              # lane-pack K shifted slabs (8-aligned)
            r0 = PAD_ROWS + (k - pad_l) * b_pad
            im2_ref[:, k * C:(k + 1) * C] = xpad_ref[r0:r0 + ROWS, :]
        acc = jnp.dot(im2_ref[...], wconv_ref[i],        # (ROWS, K*C) @ (K*C, C)
                      preferred_element_type=jnp.float32)
        cur = jnp.maximum(acc + shifts_ref[i], 0.0)      # BN scale already in weights
        if i + 1 < n_conv:
            xpad_ref[PAD_ROWS:PAD_ROWS + ROWS, :] = cur  # halo rows stay zero

    # ---------------- 2-layer LSTM: layer-0 input projection hoisted out of the loop ------
    gx0_ref[...] = (jnp.dot(cur, wih0T_ref[...], preferred_element_type=jnp.float32)
                    + b0_ref[...])                       # (ROWS, 4H)
    whh0T = whh0T_ref[...]
    wih1T = wih1T_ref[...]
    whh1T = whh1T_ref[...]
    b1 = jnp.broadcast_to(b1_ref[...], (b_pad, 4 * H))   # broadcast hoisted out of the loop

    def gates(g):                                        # full-tile EUP, then lane-select
        sg = jax.nn.sigmoid(g)
        tg = jnp.tanh(g)
        return (sg[:, 0 * H:1 * H], sg[:, 1 * H:2 * H],
                tg[:, 2 * H:3 * H], sg[:, 3 * H:4 * H])

    h0 = jnp.zeros((b_pad, H), jnp.float32)              # matches torch.zeros h_0 / c_0
    c0 = jnp.zeros((b_pad, H), jnp.float32)
    h1 = jnp.zeros((b_pad, H), jnp.float32)
    c1 = jnp.zeros((b_pad, H), jnp.float32)
    for t in range(L):                                   # static -> fully unrolled recurrence
        g0 = gx0_ref[t * b_pad:(t + 1) * b_pad, :] + jnp.dot(
            h0, whh0T, preferred_element_type=jnp.float32)
        i0, f0, z0, o0 = gates(g0)
        c0 = f0 * c0 + i0 * z0
        h0 = o0 * jnp.tanh(c0)

        # h1-dot is independent of this step's h0 -> overlaps off the serial chain
        g1 = (jnp.dot(h0, wih1T, preferred_element_type=jnp.float32)
              + jnp.dot(h1, whh1T, preferred_element_type=jnp.float32) + b1)
        i1, f1, z1, o1 = gates(g1)
        c1 = f1 * c1 + i1 * z1
        h1 = o1 * jnp.tanh(c1)

    # ---------------- FC head fused in-kernel (dropout = identity in eval) ----------------
    o_ref[...] = (jnp.dot(h1, fcwT_ref[...], preferred_element_type=jnp.float32)
                  + fcb_ref[...])


# ----------------------------- one-time weight preparation -----------------------------

def prepare_params(p, eps=1e-5):
    """Pre-transpose / pre-fuse all weights once (outside the forward path).
    Returns a dict of ARRAYS only (shapes carry the static config) so it jits cleanly."""
    C = p["conv0_w"].shape[0]           # hidden_chn (conv out channels)
    K = p["conv0_w"].shape[2]
    H = p["whh0"].shape[1]
    wlayers, shifts = [], []
    for i in range(4):
        s = p[f"bn{i}_gamma"] / jnp.sqrt(p[f"bn{i}_var"] + eps)          # (C,)
        shifts.append((p[f"conv{i}_b"] - p[f"bn{i}_mean"]) * s + p[f"bn{i}_beta"])
        wt = jnp.transpose(p[f"conv{i}_w"], (2, 1, 0))                   # (K, Cin, C)
        if wt.shape[1] < C:                                              # layer-0 Cin zero-pad
            wt = jnp.pad(wt, ((0, 0), (0, C - wt.shape[1]), (0, 0)))
        wt = wt * s[None, None, :]                                       # fold BN scale
        wlayers.append(wt.reshape(K * C, C))                             # im2col layout
    return dict(
        wconv=jnp.stack(wlayers, 0).astype(jnp.float32),                 # (4, K*C, C)
        shifts=jnp.stack(shifts).reshape(4, 1, C).astype(jnp.float32),
        wih0T=p["wih0"].T.astype(jnp.float32),                           # (C, 4H)
        whh0T=p["whh0"].T.astype(jnp.float32),                           # (H, 4H)
        b0=(p["bih0"] + p["bhh0"]).reshape(1, 4 * H).astype(jnp.float32),
        wih1T=p["wih1"].T.astype(jnp.float32),                           # (H, 4H)
        whh1T=p["whh1"].T.astype(jnp.float32),                           # (H, 4H)
        b1=(p["bih1"] + p["bhh1"]).reshape(1, 4 * H).astype(jnp.float32),
        fcwT=p["fc_w"].T.astype(jnp.float32),                            # (H, c_out)
        fcb=p["fc_b"].reshape(1, -1).astype(jnp.float32),
    )


# ----------------------------- forward wrapper (run under jax.jit) ---------------------

def model_forward(x, pp):
    """x: (B, L, seq_len) -> (B, c_out). Mirrors Model.forward (eval mode)."""
    B, L, C0 = x.shape
    wconv = pp["wconv"]
    C = wconv.shape[2]
    K = wconv.shape[1] // C
    H = pp["whh0T"].shape[0]
    C_OUT = pp["fcb"].shape[1]
    pad_l = (K - 1) // 2
    pad_t = max(pad_l, K - 1 - pad_l)                 # halo timesteps per side
    B_PAD = ((B + 7) // 8) * 8                        # sublane-align the batch
    ROWS = L * B_PAD

    # time-major flattened rows (row = t*B_PAD + b); zero rows for b>=B, channels -> C
    x_p = jnp.pad(x.astype(jnp.float32), ((0, B_PAD - B), (0, 0), (0, C - C0)))
    x_tm = jnp.transpose(x_p, (1, 0, 2)).reshape(ROWS, C)

    out = pl.pallas_call(
        functools.partial(fused_forward_kernel, b_pad=B_PAD),
        out_shape=jax.ShapeDtypeStruct((B_PAD, C_OUT), jnp.float32),
        in_specs=[VMEM_SPEC] * 11,
        out_specs=VMEM_SPEC,
        scratch_shapes=[
            pltpu.VMEM(((L + 2 * pad_t) * B_PAD, C), jnp.float32),   # conv halo buffer
            pltpu.VMEM((ROWS, K * C), jnp.float32),                  # im2col slab buffer
            pltpu.VMEM((ROWS, 4 * H), jnp.float32),                  # hoisted layer-0 gates
        ],
    )(x_tm, pp["wconv"], pp["shifts"],
      pp["wih0T"], pp["whh0T"], pp["b0"],
      pp["wih1T"], pp["whh1T"], pp["b1"],
      pp["fcwT"], pp["fcb"])
    return out[:B]                                     # drop padded batch rows (fused by jit)


model_forward_jit = jax.jit(model_forward)


# ----------------------------- reference (pure JAX) ------------------------

def ref_forward(x, p, eps=1e-5):
    h = jnp.transpose(x.astype(jnp.float32), (0, 2, 1))
    for i in range(4):
        w = p[f"conv{i}_w"]
        K = w.shape[2]
        pad_l = (K - 1) // 2
        y = lax.conv_general_dilated(h, w, (1,), [(pad_l, K - 1 - pad_l)],
                                     dimension_numbers=("NCH", "OIH", "NCH"))
        y = y + p[f"conv{i}_b"][None, :, None]
        y = (y - p[f"bn{i}_mean"][None, :, None]) / jnp.sqrt(p[f"bn{i}_var"][None, :, None] + eps)
        y = y * p[f"bn{i}_gamma"][None, :, None] + p[f"bn{i}_beta"][None, :, None]
        h = jnp.maximum(y, 0.0)
    x_seq = jnp.transpose(h, (2, 0, 1))
    L, B, _ = x_seq.shape
    H = p["whh0"].shape[1]

    def cell(x_t, hh, cc, wih, whh, bih, bhh):
        g = x_t @ wih.T + hh @ whh.T + bih + bhh
        i, f, gg, o = jnp.split(g, 4, axis=1)
        cc = jax.nn.sigmoid(f) * cc + jax.nn.sigmoid(i) * jnp.tanh(gg)
        hh = jax.nn.sigmoid(o) * jnp.tanh(cc)
        return hh, cc

    h0 = c0 = h1 = c1 = jnp.zeros((B, H), jnp.float32)
    for t in range(L):
        h0, c0 = cell(x_seq[t], h0, c0, p["wih0"], p["whh0"], p["bih0"], p["bhh0"])
        h1, c1 = cell(h0, h1, c1, p["wih1"], p["whh1"], p["bih1"], p["bhh1"])
    return h1 @ p["fc_w"].T + p["fc_b"]


# ----------------------------- main ----------------------------------------

if __name__ == "__main__":
    # configs: seq_len=8 (conv in-channels), hidden_chn=32, filter_size=5,
    #          n_hidden=32, n_layers=2, c_out=4, dropout irrelevant (eval).
    B, L, SEQ_LEN = 2, 16, 8
    HID_CHN, K = 32, 5
    N_HIDDEN, C_OUT = 32, 4

    key = jax.random.PRNGKey(0)
    keys = iter(jax.random.split(key, 64))

    def rnd(shape, scale=0.1):
        return (scale * jax.random.normal(next(keys), shape)).astype(jnp.float32)

    params = {}
    cin = SEQ_LEN
    for i in range(4):
        params[f"conv{i}_w"] = rnd((HID_CHN, cin, K))
        params[f"conv{i}_b"] = rnd((HID_CHN,))
        params[f"bn{i}_gamma"] = 1.0 + rnd((HID_CHN,), 0.05)
        params[f"bn{i}_beta"] = rnd((HID_CHN,), 0.05)
        params[f"bn{i}_mean"] = rnd((HID_CHN,), 0.05)
        params[f"bn{i}_var"] = jnp.abs(rnd((HID_CHN,), 0.1)) + 0.5
        cin = HID_CHN
    # LSTM layer 0: input=HID_CHN, hidden=N_HIDDEN; layer 1: input=hidden=N_HIDDEN
    params["wih0"] = rnd((4 * N_HIDDEN, HID_CHN))
    params["whh0"] = rnd((4 * N_HIDDEN, N_HIDDEN))
    params["bih0"] = rnd((4 * N_HIDDEN,))
    params["bhh0"] = rnd((4 * N_HIDDEN,))
    params["wih1"] = rnd((4 * N_HIDDEN, N_HIDDEN))
    params["whh1"] = rnd((4 * N_HIDDEN, N_HIDDEN))
    params["bih1"] = rnd((4 * N_HIDDEN,))
    params["bhh1"] = rnd((4 * N_HIDDEN,))
    params["fc_w"] = rnd((C_OUT, N_HIDDEN))
    params["fc_b"] = rnd((C_OUT,))

    x = jax.random.normal(next(keys), (B, L, SEQ_LEN), dtype=jnp.float32)

    prepped = prepare_params(params)                        # one-time weight prep
    out = jax.block_until_ready(model_forward_jit(x, prepped))
    ref = jax.block_until_ready(ref_forward(x, params))

    assert out.shape == (B, C_OUT), out.shape
    assert bool(jnp.all(jnp.isfinite(out)))
    assert bool(jnp.allclose(out, ref, rtol=1e-2, atol=1e-2)), (out, ref)
    print("KERNEL_OK")
</pallas_src>

<mosaic_0001>
module attributes {stable_mosaic.version = 11 : i64} {
  func.func @fused_forward_kernel(%arg0: memref<128x32xf32, #tpu.memory_space<vmem>>, %arg1: memref<4x160x32xf32, #tpu.memory_space<vmem>>, %arg2: memref<4x1x32xf32, #tpu.memory_space<vmem>>, %arg3: memref<32x128xf32, #tpu.memory_space<vmem>>, %arg4: memref<32x128xf32, #tpu.memory_space<vmem>>, %arg5: memref<1x128xf32, #tpu.memory_space<vmem>>, %arg6: memref<32x128xf32, #tpu.memory_space<vmem>>, %arg7: memref<32x128xf32, #tpu.memory_space<vmem>>, %arg8: memref<1x128xf32, #tpu.memory_space<vmem>>, %arg9: memref<32x4xf32, #tpu.memory_space<vmem>>, %arg10: memref<1x4xf32, #tpu.memory_space<vmem>>, %arg11: memref<8x4xf32, #tpu.memory_space<vmem>>, %arg12: memref<160x32xf32, #tpu.memory_space<vmem>>, %arg13: memref<128x160xf32, #tpu.memory_space<vmem>>, %arg14: memref<128x128xf32, #tpu.memory_space<vmem>>) attributes {dimension_semantics = [], scalar_prefetch = 0 : i64, scratch_operands = 3 : i64, tpu.core_type = #tpu.core_type<tc>} {
    %cst = arith.constant 0.000000e+00 : f32
    %0 = vector.broadcast %cst : f32 to vector<16x32xf32>
    %c0 = arith.constant 0 : index
    %c0_0 = arith.constant 0 : index
    %1 = vector.load %arg12[%c0, %c0_0] : memref<160x32xf32, #tpu.memory_space<vmem>>, vector<16x32xf32>
    tpu.vector_store %arg12[%c0, %c0_0], %0 {strides = array<i32>} : memref<160x32xf32, #tpu.memory_space<vmem>>, vector<16x32xf32>,
    %cst_1 = arith.constant 0.000000e+00 : f32
    %2 = vector.broadcast %cst_1 : f32 to vector<16x32xf32>
    %c144 = arith.constant 144 : index
    %c0_2 = arith.constant 0 : index
    %3 = vector.load %arg12[%c144, %c0_2] : memref<160x32xf32, #tpu.memory_space<vmem>>, vector<16x32xf32>
    tpu.vector_store %arg12[%c144, %c0_2], %2 {strides = array<i32>} : memref<160x32xf32, #tpu.memory_space<vmem>>, vector<16x32xf32>,
    %c0_3 = arith.constant 0 : index
    %c0_4 = arith.constant 0 : index
    %4 = vector.load %arg0[%c0_3, %c0_4] : memref<128x32xf32, #tpu.memory_space<vmem>>, vector<128x32xf32>
    %c16 = arith.constant 16 : index
    %c0_5 = arith.constant 0 : index
    %5 = vector.load %arg12[%c16, %c0_5] : memref<160x32xf32, #tpu.memory_space<vmem>>, vector<128x32xf32>
    tpu.vector_store %arg12[%c16, %c0_5], %4 {strides = array<i32>} : memref<160x32xf32, #tpu.memory_space<vmem>>, vector<128x32xf32>,
    %c0_6 = arith.constant 0 : index
    %c0_7 = arith.constant 0 : index
    %6 = vector.load %arg12[%c0_6, %c0_7] : memref<160x32xf32, #tpu.memory_space<vmem>>, vector<128x32xf32>
    %c0_8 = arith.constant 0 : index
    %c0_9 = arith.constant 0 : index
    %7 = vector.load %arg13[%c0_8, %c0_9] : memref<128x160xf32, #tpu.memory_space<vmem>>, vector<128x32xf32>
    tpu.vector_store %arg13[%c0_8, %c0_9], %6 {strides = array<i32>} : memref<128x160xf32, #tpu.memory_space<vmem>>, vector<128x32xf32>,
    %c8 = arith.constant 8 : index
    %c0_10 = arith.constant 0 : index
    %8 = vector.load %arg12[%c8, %c0_10] : memref<160x32xf32, #tpu.memory_space<vmem>>, vector<128x32xf32>
    %c0_11 = arith.constant 0 : index
    %c32 = arith.constant 32 : index
    %9 = vector.load %arg13[%c0_11, %c32] : memref<128x160xf32, #tpu.memory_space<vmem>>, vector<128x32xf32>
    tpu.vector_store %arg13[%c0_11, %c32], %8 {strides = array<i32>} : memref<128x160xf32, #tpu.memory_space<vmem>>, vector<128x32xf32>,
    %c16_12 = arith.constant 16 : index
    %c0_13 = arith.constant 0 : index
    %10 = vector.load %arg12[%c16_12, %c0_13] : memref<160x32xf32, #tpu.memory_space<vmem>>, vector<128x32xf32>
    %c0_14 = arith.constant 0 : index
    %c64 = arith.constant 64 : index
    %11 = vector.load %arg13[%c0_14, %c64] : memref<128x160xf32, #tpu.memory_space<vmem>>, vector<128x32xf32>
    tpu.vector_store %arg13[%c0_14, %c64], %10 {strides = array<i32>} : memref<128x160xf32, #tpu.memory_space<vmem>>, vector<128x32xf32>,
    %c24 = arith.constant 24 : index
    %c0_15 = arith.constant 0 : index
    %12 = vector.load %arg12[%c24, %c0_15] : memref<160x32xf32, #tpu.memory_space<vmem>>, vector<128x32xf32>
    %c0_16 = arith.constant 0 : index
    %c96 = arith.constant 96 : index
    %13 = vector.load %arg13[%c0_16, %c96] : memref<128x160xf32, #tpu.memory_space<vmem>>, vector<128x32xf32>
    tpu.vector_store %arg13[%c0_16, %c96], %12 {strides = array<i32>} : memref<128x160xf32, #tpu.memory_space<vmem>>, vector<128x32xf32>,
    %c32_17 = arith.constant 32 : index
    %c0_18 = arith.constant 0 : index
    %14 = vector.load %arg12[%c32_17, %c0_18] : memref<160x32xf32, #tpu.memory_space<vmem>>, vector<128x32xf32>
    %c0_19 = arith.constant 0 : index
    %c128 = arith.constant 128 : index
    %15 = vector.load %arg13[%c0_19, %c128] : memref<128x160xf32, #tpu.memory_space<vmem>>, vector<128x32xf32>
    tpu.vector_store %arg13[%c0_19, %c128], %14 {strides = array<i32>} : memref<128x160xf32, #tpu.memory_space<vmem>>, vector<128x32xf32>,
    %c0_20 = arith.constant 0 : index
    %c0_21 = arith.constant 0 : index
    %16 = vector.load %arg13[%c0_20, %c0_21] : memref<128x160xf32, #tpu.memory_space<vmem>>, vector<128x160xf32>
    %c0_22 = arith.constant 0 : index
    %c0_23 = arith.constant 0 : index
    %c0_24 = arith.constant 0 : index
    %17 = vector.load %arg1[%c0_22, %c0_23, %c0_24] : memref<4x160x32xf32, #tpu.memory_space<vmem>>, vector<1x160x32xf32>
    %18 = vector.shape_cast %17 : vector<1x160x32xf32> to vector<160x32xf32>
    %cst_25 = arith.constant dense<0.000000e+00> : vector<128x32xf32>
    %19 = tpu.matmul %16, %18, %cst_25 {dimension_numbers = #tpu.dot_dimension_numbers<[1], [0], [0], [1], [0, 0, 1, 1], [], []>} : vector<128x160xf32>, vector<160x32xf32>, vector<128x32xf32> -> vector<128x32xf32>
    %c0_26 = arith.constant 0 : index
    %c0_27 = arith.constant 0 : index
    %c0_28 = arith.constant 0 : index
    %20 = vector.load %arg2[%c0_26, %c0_27, %c0_28] : memref<4x1x32xf32, #tpu.memory_space<vmem>>, vector<1x1x32xf32>
    %21 = vector.shape_cast %20 : vector<1x1x32xf32> to vector<1x32xf32>
    %22 = vector.broadcast %21 : vector<1x32xf32> to vector<128x32xf32>
    %23 = arith.addf %19, %22 : vector<128x32xf32>
    %cst_29 = arith.constant 0.000000e+00 : f32
    %24 = vector.broadcast %cst_29 : f32 to vector<128x32xf32>
    %25 = arith.maximumf %23, %24 : vector<128x32xf32>
    %c16_30 = arith.constant 16 : index
    %c0_31 = arith.constant 0 : index
    %26 = vector.load %arg12[%c16_30, %c0_31] : memref<160x32xf32, #tpu.memory_space<vmem>>, vector<128x32xf32>
    tpu.vector_store %arg12[%c16_30, %c0_31], %25 {strides = array<i32>} : memref<160x32xf32, #tpu.memory_space<vmem>>, vector<128x32xf32>,
    %c0_32 = arith.constant 0 : index
    %c0_33 = arith.constant 0 : index
    %27 = vector.load %arg12[%c0_32, %c0_33] : memref<160x32xf32, #tpu.memory_space<vmem>>, vector<128x32xf32>
    %c0_34 = arith.constant 0 : index
    %c0_35 = arith.constant 0 : index
    %28 = vector.load %arg13[%c0_34, %c0_35] : memref<128x160xf32, #tpu.memory_space<vmem>>, vector<128x32xf32>
    tpu.vector_store %arg13[%c0_34, %c0_35], %27 {strides = array<i32>} : memref<128x160xf32, #tpu.memory_space<vmem>>, vector<128x32xf32>,
    %c8_36 = arith.constant 8 : index
    %c0_37 = arith.constant 0 : index
    %29 = vector.load %arg12[%c8_36, %c0_37] : memref<160x32xf32, #tpu.memory_space<vmem>>, vector<128x32xf32>
    %c0_38 = arith.constant 0 : index
    %c32_39 = arith.constant 32 : index
    %30 = vector.load %arg13[%c0_38, %c32_39] : memref<128x160xf32, #tpu.memory_space<vmem>>, vector<128x32xf32>
    tpu.vector_store %arg13[%c0_38, %c32_39], %29 {strides = array<i32>} : memref<128x160xf32, #tpu.memory_space<vmem>>, vector<128x32xf32>,
    %c16_40 = arith.constant 16 : index
    %c0_41 = arith.constant 0 : index
    %31 = vector.load %arg12[%c16_40, %c0_41] : memref<160x32xf32, #tpu.memory_space<vmem>>, vector<128x32xf32>
    %c0_42 = arith.constant 0 : index
    %c64_43 = arith.constant 64 : index
    %32 = vector.load %arg13[%c0_42, %c64_43] : memref<128x160xf32, #tpu.memory_space<vmem>>, vector<128x32xf32>
    tpu.vector_store %arg13[%c0_42, %c64_43], %31 {strides = array<i32>} : memref<128x160xf32, #tpu.memory_space<vmem>>, vector<128x32xf32>,
    %c24_44 = arith.constant 24 : index
    %c0_45 = arith.constant 0 : index
    %33 = vector.load %arg12[%c24_44, %c0_45] : memref<160x32xf32, #tpu.memory_space<vmem>>, vector<128x32xf32>
    %c0_46 = arith.constant 0 : index
    %c96_47 = arith.constant 96 : index
    %34 = vector.load %arg13[%c0_46, %c96_47] : memref<128x160xf32, #tpu.memory_space<vmem>>, vector<128x32xf32>
    tpu.vector_store %arg13[%c0_46, %c96_47], %33 {strides = array<i32>} : memref<128x160xf32, #tpu.memory_space<vmem>>, vector<128x32xf32>,
    %c32_48 = arith.constant 32 : index
    %c0_49 = arith.constant 0 : index
    %35 = vector.load %arg12[%c32_48, %c0_49] : memref<160x32xf32, #tpu.memory_space<vmem>>, vector<128x32xf32>
    %c0_50 = arith.constant 0 : index
    %c128_51 = arith.constant 128 : index
    %36 = vector.load %arg13[%c0_50, %c128_51] : memref<128x160xf32, #tpu.memory_space<vmem>>, vector<128x32xf32>
    tpu.vector_store %arg13[%c0_50, %c128_51], %35 {strides = array<i32>} : memref<128x160xf32, #tpu.memory_space<vmem>>, vector<128x32xf32>,
    %c0_52 = arith.constant 0 : index
    %c0_53 = arith.constant 0 : index
    %37 = vector.load %arg13[%c0_52, %c0_53] : memref<128x160xf32, #tpu.memory_space<vmem>>, vector<128x160xf32>
    %c1 = arith.constant 1 : index
    %c0_54 = arith.constant 0 : index
    %c0_55 = arith.constant 0 : index
    %38 = vector.load %arg1[%c1, %c0_54, %c0_55] : memref<4x160x32xf32, #tpu.memory_space<vmem>>, vector<1x160x32xf32>
    %39 = vector.shape_cast %38 : vector<1x160x32xf32> to vector<160x32xf32>
    %cst_56 = arith.constant dense<0.000000e+00> : vector<128x32xf32>
    %40 = tpu.matmul %37, %39, %cst_56 {dimension_numbers = #tpu.dot_dimension_numbers<[1], [0], [0], [1], [0, 0, 1, 1], [], []>} : vector<128x160xf32>, vector<160x32xf32>, vector<128x32xf32> -> vector<128x32xf32>
    %c1_57 = arith.constant 1 : index
    %c0_58 = arith.constant 0 : index
    %c0_59 = arith.constant 0 : index
    %41 = vector.load %arg2[%c1_57, %c0_58, %c0_59] : memref<4x1x32xf32, #tpu.memory_space<vmem>>, vector<1x1x32xf32>
    %42 = vector.shape_cast %41 : vector<1x1x32xf32> to vector<1x32xf32>
    %43 = vector.broadcast %42 : vector<1x32xf32> to vector<128x32xf32>
    %44 = arith.addf %40, %43 : vector<128x32xf32>
    %cst_60 = arith.constant 0.000000e+00 : f32
    %45 = vector.broadcast %cst_60 : f32 to vector<128x32xf32>
    %46 = arith.maximumf %44, %45 : vector<128x32xf32>
    %c16_61 = arith.constant 16 : index
    %c0_62 = arith.constant 0 : index
    %47 = vector.load %arg12[%c16_61, %c0_62] : memref<160x32xf32, #tpu.memory_space<vmem>>, vector<128x32xf32>
    tpu.vector_store %arg12[%c16_61, %c0_62], %46 {strides = array<i32>} : memref<160x32xf32, #tpu.memory_space<vmem>>, vector<128x32xf32>,
    %c0_63 = arith.constant 0 : index
    %c0_64 = arith.constant 0 : index
    %48 = vector.load %arg12[%c0_63, %c0_64] : memref<160x32xf32, #tpu.memory_space<vmem>>, vector<128x32xf32>
    %c0_65 = arith.constant 0 : index
    %c0_66 = arith.constant 0 : index
    %49 = vector.load %arg13[%c0_65, %c0_66] : memref<128x160xf32, #tpu.memory_space<vmem>>, vector<128x32xf32>
    tpu.vector_store %arg13[%c0_65, %c0_66], %48 {strides = array<i32>} : memref<128x160xf32, #tpu.memory_space<vmem>>, vector<128x32xf32>,
    %c8_67 = arith.constant 8 : index
    %c0_68 = arith.constant 0 : index
    %50 = vector.load %arg12[%c8_67, %c0_68] : memref<160x32xf32, #tpu.memory_space<vmem>>, vector<128x32xf32>
    %c0_69 = arith.constant 0 : index
    %c32_70 = arith.constant 32 : index
    %51 = vector.load %arg13[%c0_69, %c32_70] : memref<128x160xf32, #tpu.memory_space<vmem>>, vector<128x32xf32>
    tpu.vector_store %arg13[%c0_69, %c32_70], %50 {strides = array<i32>} : memref<128x160xf32, #tpu.memory_space<vmem>>, vector<128x32xf32>,
    %c16_71 = arith.constant 16 : index
    %c0_72 = arith.constant 0 : index
    %52 = vector.load %arg12[%c16_71, %c0_72] : memref<160x32xf32, #tpu.memory_space<vmem>>, vector<128x32xf32>
    %c0_73 = arith.constant 0 : index
    %c64_74 = arith.constant 64 : index
    %53 = vector.load %arg13[%c0_73, %c64_74] : memref<128x160xf32, #tpu.memory_space<vmem>>, vector<128x32xf32>
    tpu.vector_store %arg13[%c0_73, %c64_74], %52 {strides = array<i32>} : memref<128x160xf32, #tpu.memory_space<vmem>>, vector<128x32xf32>,
    %c24_75 = arith.constant 24 : index
    %c0_76 = arith.constant 0 : index
    %54 = vector.load %arg12[%c24_75, %c0_76] : memref<160x32xf32, #tpu.memory_space<vmem>>, vector<128x32xf32>
    %c0_77 = arith.constant 0 : index
    %c96_78 = arith.constant 96 : index
    %55 = vector.load %arg13[%c0_77, %c96_78] : memref<128x160xf32, #tpu.memory_space<vmem>>, vector<128x32xf32>
    tpu.vector_store %arg13[%c0_77, %c96_78], %54 {strides = array<i32>} : memref<128x160xf32, #tpu.memory_space<vmem>>, vector<128x32xf32>,
    %c32_79 = arith.constant 32 : index
    %c0_80 = arith.constant 0 : index
    %56 = vector.load %arg12[%c32_79, %c0_80] : memref<160x32xf32, #tpu.memory_space<vmem>>, vector<128x32xf32>
    %c0_81 = arith.constant 0 : index
    %c128_82 = arith.constant 128 : index
    %57 = vector.load %arg13[%c0_81, %c128_82] : memref<128x160xf32, #tpu.memory_space<vmem>>, vector<128x32xf32>
    tpu.vector_store %arg13[%c0_81, %c128_82], %56 {strides = array<i32>} : memref<128x160xf32, #tpu.memory_space<vmem>>, vector<128x32xf32>,
    %c0_83 = arith.constant 0 : index
    %c0_84 = arith.constant 0 : index
    %58 = vector.load %arg13[%c0_83, %c0_84] : memref<128x160xf32, #tpu.memory_space<vmem>>, vector<128x160xf32>
    %c2 = arith.constant 2 : index
    %c0_85 = arith.constant 0 : index
    %c0_86 = arith.constant 0 : index
    %59 = vector.load %arg1[%c2, %c0_85, %c0_86] : memref<4x160x32xf32, #tpu.memory_space<vmem>>, vector<1x160x32xf32>
    %60 = vector.shape_cast %59 : vector<1x160x32xf32> to vector<160x32xf32>
    %cst_87 = arith.constant dense<0.000000e+00> : vector<128x32xf32>
    %61 = tpu.matmul %58, %60, %cst_87 {dimension_numbers = #tpu.dot_dimension_numbers<[1], [0], [0], [1], [0, 0, 1, 1], [], []>} : vector<128x160xf32>, vector<160x32xf32>, vector<128x32xf32> -> vector<128x32xf32>
    %c2_88 = arith.constant 2 : index
    %c0_89 = arith.constant 0 : index
    %c0_90 = arith.constant 0 : index
    %62 = vector.load %arg2[%c2_88, %c0_89, %c0_90] : memref<4x1x32xf32, #tpu.memory_space<vmem>>, vector<1x1x32xf32>
    %63 = vector.shape_cast %62 : vector<1x1x32xf32> to vector<1x32xf32>
    %64 = vector.broadcast %63 : vector<1x32xf32> to vector<128x32xf32>
    %65 = arith.addf %61, %64 : vector<128x32xf32>
    %cst_91 = arith.constant 0.000000e+00 : f32
    %66 = vector.broadcast %cst_91 : f32 to vector<128x32xf32>
    %67 = arith.maximumf %65, %66 : vector<128x32xf32>
    %c16_92 = arith.constant 16 : index
    %c0_93 = arith.constant 0 : index
    %68 = vector.load %arg12[%c16_92, %c0_93] : memref<160x32xf32, #tpu.memory_space<vmem>>, vector<128x32xf32>
    tpu.vector_store %arg12[%c16_92, %c0_93], %67 {strides = array<i32>} : memref<160x32xf32, #tpu.memory_space<vmem>>, vector<128x32xf32>,
    %c0_94 = arith.constant 0 : index
    %c0_95 = arith.constant 0 : index
    %69 = vector.load %arg12[%c0_94, %c0_95] : memref<160x32xf32, #tpu.memory_space<vmem>>, vector<128x32xf32>
    %c0_96 = arith.constant 0 : index
    %c0_97 = arith.constant 0 : index
    %70 = vector.load %arg13[%c0_96, %c0_97] : memref<128x160xf32, #tpu.memory_space<vmem>>, vector<128x32xf32>
    tpu.vector_store %arg13[%c0_96, %c0_97], %69 {strides = array<i32>} : memref<128x160xf32, #tpu.memory_space<vmem>>, vector<128x32xf32>,
    %c8_98 = arith.constant 8 : index
    %c0_99 = arith.constant 0 : index
    %71 = vector.load %arg12[%c8_98, %c0_99] : memref<160x32xf32, #tpu.memory_space<vmem>>, vector<128x32xf32>
    %c0_100 = arith.constant 0 : index
    %c32_101 = arith.constant 32 : index
    %72 = vector.load %arg13[%c0_100, %c32_101] : memref<128x160xf32, #tpu.memory_space<vmem>>, vector<128x32xf32>
    tpu.vector_store %arg13[%c0_100, %c32_101], %71 {strides = array<i32>} : memref<128x160xf32, #tpu.memory_space<vmem>>, vector<128x32xf32>,
    %c16_102 = arith.constant 16 : index
    %c0_103 = arith.constant 0 : index
    %73 = vector.load %arg12[%c16_102, %c0_103] : memref<160x32xf32, #tpu.memory_space<vmem>>, vector<128x32xf32>
    %c0_104 = arith.constant 0 : index
    %c64_105 = arith.constant 64 : index
    %74 = vector.load %arg13[%c0_104, %c64_105] : memref<128x160xf32, #tpu.memory_space<vmem>>, vector<128x32xf32>
    tpu.vector_store %arg13[%c0_104, %c64_105], %73 {strides = array<i32>} : memref<128x160xf32, #tpu.memory_space<vmem>>, vector<128x32xf32>,
    %c24_106 = arith.constant 24 : index
    %c0_107 = arith.constant 0 : index
    %75 = vector.load %arg12[%c24_106, %c0_107] : memref<160x32xf32, #tpu.memory_space<vmem>>, vector<128x32xf32>
    %c0_108 = arith.constant 0 : index
    %c96_109 = arith.constant 96 : index
    %76 = vector.load %arg13[%c0_108, %c96_109] : memref<128x160xf32, #tpu.memory_space<vmem>>, vector<128x32xf32>
    tpu.vector_store %arg13[%c0_108, %c96_109], %75 {strides = array<i32>} : memref<128x160xf32, #tpu.memory_space<vmem>>, vector<128x32xf32>,
    %c32_110 = arith.constant 32 : index
    %c0_111 = arith.constant 0 : index
    %77 = vector.load %arg12[%c32_110, %c0_111] : memref<160x32xf32, #tpu.memory_space<vmem>>, vector<128x32xf32>
    %c0_112 = arith.constant 0 : index
    %c128_113 = arith.constant 128 : index
    %78 = vector.load %arg13[%c0_112, %c128_113] : memref<128x160xf32, #tpu.memory_space<vmem>>, vector<128x32xf32>
    tpu.vector_store %arg13[%c0_112, %c128_113], %77 {strides = array<i32>} : memref<128x160xf32, #tpu.memory_space<vmem>>, vector<128x32xf32>,
    %c0_114 = arith.constant 0 : index
    %c0_115 = arith.constant 0 : index
    %79 = vector.load %arg13[%c0_114, %c0_115] : memref<128x160xf32, #tpu.memory_space<vmem>>, vector<128x160xf32>
    %c3 = arith.constant 3 : index
    %c0_116 = arith.constant 0 : index
    %c0_117 = arith.constant 0 : index
    %80 = vector.load %arg1[%c3, %c0_116, %c0_117] : memref<4x160x32xf32, #tpu.memory_space<vmem>>, vector<1x160x32xf32>
    %81 = vector.shape_cast %80 : vector<1x160x32xf32> to vector<160x32xf32>
    %cst_118 = arith.constant dense<0.000000e+00> : vector<128x32xf32>
    %82 = tpu.matmul %79, %81, %cst_118 {dimension_numbers = #tpu.dot_dimension_numbers<[1], [0], [0], [1], [0, 0, 1, 1], [], []>} : vector<128x160xf32>, vector<160x32xf32>, vector<128x32xf32> -> vector<128x32xf32>
    %c3_119 = arith.constant 3 : index
    %c0_120 = arith.constant 0 : index
    %c0_121 = arith.constant 0 : index
    %83 = vector.load %arg2[%c3_119, %c0_120, %c0_121] : memref<4x1x32xf32, #tpu.memory_space<vmem>>, vector<1x1x32xf32>
    %84 = vector.shape_cast %83 : vector<1x1x32xf32> to vector<1x32xf32>
    %85 = vector.broadcast %84 : vector<1x32xf32> to vector<128x32xf32>
    %86 = arith.addf %82, %85 : vector<128x32xf32>
    %cst_122 = arith.constant 0.000000e+00 : f32
    %87 = vector.broadcast %cst_122 : f32 to vector<128x32xf32>
    %88 = arith.maximumf %86, %87 : vector<128x32xf32>
    %c0_123 = arith.constant 0 : index
    %c0_124 = arith.constant 0 : index
    %89 = vector.load %arg3[%c0_123, %c0_124] : memref<32x128xf32, #tpu.memory_space<vmem>>, vector<32x128xf32>
    %cst_125 = arith.constant dense<0.000000e+00> : vector<128x128xf32>
    %90 = tpu.matmul %88, %89, %cst_125 {dimension_numbers = #tpu.dot_dimension_numbers<[1], [0], [0], [1], [0, 0, 1, 1], [], []>} : vector<128x32xf32>, vector<32x128xf32>, vector<128x128xf32> -> vector<128x128xf32>
    %c0_126 = arith.constant 0 : index
    %c0_127 = arith.constant 0 : index
    %91 = vector.load %arg5[%c0_126, %c0_127] : memref<1x128xf32, #tpu.memory_space<vmem>>, vector<1x128xf32>
    %92 = vector.broadcast %91 : vector<1x128xf32> to vector<128x128xf32>
    %93 = arith.addf %90, %92 : vector<128x128xf32>
    %c0_128 = arith.constant 0 : index
    %c0_129 = arith.constant 0 : index
    %94 = vector.load %arg14[%c0_128, %c0_129] : memref<128x128xf32, #tpu.memory_space<vmem>>, vector<128x128xf32>
    tpu.vector_store %arg14[%c0_128, %c0_129], %93 {strides = array<i32>} : memref<128x128xf32, #tpu.memory_space<vmem>>, vector<128x128xf32>,
    %c0_130 = arith.constant 0 : index
    %c0_131 = arith.constant 0 : index
    %95 = vector.load %arg4[%c0_130, %c0_131] : memref<32x128xf32, #tpu.memory_space<vmem>>, vector<32x128xf32>
    %c0_132 = arith.constant 0 : index
    %c0_133 = arith.constant 0 : index
    %96 = vector.load %arg6[%c0_132, %c0_133] : memref<32x128xf32, #tpu.memory_space<vmem>>, vector<32x128xf32>
    %c0_134 = arith.constant 0 : index
    %c0_135 = arith.constant 0 : index
    %97 = vector.load %arg7[%c0_134, %c0_135] : memref<32x128xf32, #tpu.memory_space<vmem>>, vector<32x128xf32>
    %c0_136 = arith.constant 0 : index
    %c0_137 = arith.constant 0 : index
    %98 = vector.load %arg8[%c0_136, %c0_137] : memref<1x128xf32, #tpu.memory_space<vmem>>, vector<1x128xf32>
    %99 = vector.shape_cast %98 : vector<1x128xf32> to vector<1x128xf32>
    %100 = vector.broadcast %99 : vector<1x128xf32> to vector<8x128xf32>
    %cst_138 = arith.constant 0.000000e+00 : f32
    %101 = vector.broadcast %cst_138 : f32 to vector<8x32xf32>
    %cst_139 = arith.constant 0.000000e+00 : f32
    %102 = vector.broadcast %cst_139 : f32 to vector<8x32xf32>
    %cst_140 = arith.constant 0.000000e+00 : f32
    %103 = vector.broadcast %cst_140 : f32 to vector<8x32xf32>
    %cst_141 = arith.constant 0.000000e+00 : f32
    %104 = vector.broadcast %cst_141 : f32 to vector<8x32xf32>
    %c0_142 = arith.constant 0 : index
    %c0_143 = arith.constant 0 : index
    %105 = vector.load %arg14[%c0_142, %c0_143] : memref<128x128xf32, #tpu.memory_space<vmem>>, vector<8x128xf32>
    %cst_144 = arith.constant dense<0.000000e+00> : vector<8x128xf32>
    %106 = tpu.matmul %101, %95, %cst_144 {dimension_numbers = #tpu.dot_dimension_numbers<[1], [0], [0], [1], [0, 0, 1, 1], [], []>} : vector<8x32xf32>, vector<32x128xf32>, vector<8x128xf32> -> vector<8x128xf32>
    %107 = arith.addf %105, %106 : vector<8x128xf32>
    %108 = arith.negf %107 : vector<8x128xf32>
    %109 = math.exp %108 : vector<8x128xf32>
    %cst_145 = arith.constant 1.000000e+00 : f32
    %110 = vector.broadcast %cst_145 : f32 to vector<8x128xf32>
    %111 = arith.addf %110, %109 : vector<8x128xf32>
    %112 = arith.divf %110, %111 : vector<8x128xf32>
    %113 = math.tanh %107 : vector<8x128xf32>
    %114 = vector.extract_strided_slice %112 {offsets = [0, 0], sizes = [8, 32], strides = [1, 1]} : vector<8x128xf32> to vector<8x32xf32>
    %115 = vector.extract_strided_slice %112 {offsets = [0, 32], sizes = [8, 32], strides = [1, 1]} : vector<8x128xf32> to vector<8x32xf32>
    %116 = vector.extract_strided_slice %113 {offsets = [0, 64], sizes = [8, 32], strides = [1, 1]} : vector<8x128xf32> to vector<8x32xf32>
    %117 = vector.extract_strided_slice %112 {offsets = [0, 96], sizes = [8, 32], strides = [1, 1]} : vector<8x128xf32> to vector<8x32xf32>
    %118 = arith.mulf %115, %102 : vector<8x32xf32>
    %119 = arith.mulf %114, %116 : vector<8x32xf32>
    %120 = arith.addf %118, %119 : vector<8x32xf32>
    %121 = math.tanh %120 : vector<8x32xf32>
    %122 = arith.mulf %117, %121 : vector<8x32xf32>
    %cst_146 = arith.constant dense<0.000000e+00> : vector<8x128xf32>
    %123 = tpu.matmul %122, %96, %cst_146 {dimension_numbers = #tpu.dot_dimension_numbers<[1], [0], [0], [1], [0, 0, 1, 1], [], []>} : vector<8x32xf32>, vector<32x128xf32>, vector<8x128xf32> -> vector<8x128xf32>
    %cst_147 = arith.constant dense<0.000000e+00> : vector<8x128xf32>
    %124 = tpu.matmul %103, %97, %cst_147 {dimension_numbers = #tpu.dot_dimension_numbers<[1], [0], [0], [1], [0, 0, 1, 1], [], []>} : vector<8x32xf32>, vector<32x128xf32>, vector<8x128xf32> -> vector<8x128xf32>
    %125 = arith.addf %123, %124 : vector<8x128xf32>
    %126 = arith.addf %125, %100 : vector<8x128xf32>
    %127 = arith.negf %126 : vector<8x128xf32>
    %128 = math.exp %127 : vector<8x128xf32>
    %cst_148 = arith.constant 1.000000e+00 : f32
    %129 = vector.broadcast %cst_148 : f32 to vector<8x128xf32>
    %130 = arith.addf %129, %128 : vector<8x128xf32>
    %131 = arith.divf %129, %130 : vector<8x128xf32>
    %132 = math.tanh %126 : vector<8x128xf32>
    %133 = vector.extract_strided_slice %131 {offsets = [0, 0], sizes = [8, 32], strides = [1, 1]} : vector<8x128xf32> to vector<8x32xf32>
    %134 = vector.extract_strided_slice %131 {offsets = [0, 32], sizes = [8, 32], strides = [1, 1]} : vector<8x128xf32> to vector<8x32xf32>
    %135 = vector.extract_strided_slice %132 {offsets = [0, 64], sizes = [8, 32], strides = [1, 1]} : vector<8x128xf32> to vector<8x32xf32>
    %136 = vector.extract_strided_slice %131 {offsets = [0, 96], sizes = [8, 32], strides = [1, 1]} : vector<8x128xf32> to vector<8x32xf32>
    %137 = arith.mulf %134, %104 : vector<8x32xf32>
    %138 = arith.mulf %133, %135 : vector<8x32xf32>
    %139 = arith.addf %137, %138 : vector<8x32xf32>
    %140 = math.tanh %139 : vector<8x32xf32>
    %141 = arith.mulf %136, %140 : vector<8x32xf32>
    %c8_149 = arith.constant 8 : index
    %c0_150 = arith.constant 0 : index
    %142 = vector.load %arg14[%c8_149, %c0_150] : memref<128x128xf32, #tpu.memory_space<vmem>>, vector<8x128xf32>
    %cst_151 = arith.constant dense<0.000000e+00> : vector<8x128xf32>
    %143 = tpu.matmul %122, %95, %cst_151 {dimension_numbers = #tpu.dot_dimension_numbers<[1], [0], [0], [1], [0, 0, 1, 1], [], []>} : vector<8x32xf32>, vector<32x128xf32>, vector<8x128xf32> -> vector<8x128xf32>
    %144 = arith.addf %142, %143 : vector<8x128xf32>
    %145 = arith.negf %144 : vector<8x128xf32>
    %146 = math.exp %145 : vector<8x128xf32>
    %cst_152 = arith.constant 1.000000e+00 : f32
    %147 = vector.broadcast %cst_152 : f32 to vector<8x128xf32>
    %148 = arith.addf %147, %146 : vector<8x128xf32>
    %149 = arith.divf %147, %148 : vector<8x128xf32>
    %150 = math.tanh %144 : vector<8x128xf32>
    %151 = vector.extract_strided_slice %149 {offsets = [0, 0], sizes = [8, 32], strides = [1, 1]} : vector<8x128xf32> to vector<8x32xf32>
    %152 = vector.extract_strided_slice %149 {offsets = [0, 32], sizes = [8, 32], strides = [1, 1]} : vector<8x128xf32> to vector<8x32xf32>
    %153 = vector.extract_strided_slice %150 {offsets = [0, 64], sizes = [8, 32], strides = [1, 1]} : vector<8x128xf32> to vector<8x32xf32>
    %154 = vector.extract_strided_slice %149 {offsets = [0, 96], sizes = [8, 32], strides = [1, 1]} : vector<8x128xf32> to vector<8x32xf32>
    %155 = arith.mulf %152, %120 : vector<8x32xf32>
    %156 = arith.mulf %151, %153 : vector<8x32xf32>
    %157 = arith.addf %155, %156 : vector<8x32xf32>
    %158 = math.tanh %157 : vector<8x32xf32>
    %159 = arith.mulf %154, %158 : vector<8x32xf32>
    %cst_153 = arith.constant dense<0.000000e+00> : vector<8x128xf32>
    %160 = tpu.matmul %159, %96, %cst_153 {dimension_numbers = #tpu.dot_dimension_numbers<[1], [0], [0], [1], [0, 0, 1, 1], [], []>} : vector<8x32xf32>, vector<32x128xf32>, vector<8x128xf32> -> vector<8x128xf32>
    %cst_154 = arith.constant dense<0.000000e+00> : vector<8x128xf32>
    %161 = tpu.matmul %141, %97, %cst_154 {dimension_numbers = #tpu.dot_dimension_numbers<[1], [0], [0], [1], [0, 0, 1, 1], [], []>} : vector<8x32xf32>, vector<32x128xf32>, vector<8x128xf32> -> vector<8x128xf32>
    %162 = arith.addf %160, %161 : vector<8x128xf32>
    %163 = arith.addf %162, %100 : vector<8x128xf32>
    %164 = arith.negf %163 : vector<8x128xf32>
    %165 = math.exp %164 : vector<8x128xf32>
    %cst_155 = arith.constant 1.000000e+00 : f32
    %166 = vector.broadcast %cst_155 : f32 to vector<8x128xf32>
    %167 = arith.addf %166, %165 : vector<8x128xf32>
    %168 = arith.divf %166, %167 : vector<8x128xf32>
    %169 = math.tanh %163 : vector<8x128xf32>
    %170 = vector.extract_strided_slice %168 {offsets = [0, 0], sizes = [8, 32], strides = [1, 1]} : vector<8x128xf32> to vector<8x32xf32>
    %171 = vector.extract_strided_slice %168 {offsets = [0, 32], sizes = [8, 32], strides = [1, 1]} : vector<8x128xf32> to vector<8x32xf32>
    %172 = vector.extract_strided_slice %169 {offsets = [0, 64], sizes = [8, 32], strides = [1, 1]} : vector<8x128xf32> to vector<8x32xf32>
    %173 = vector.extract_strided_slice %168 {offsets = [0, 96], sizes = [8, 32], strides = [1, 1]} : vector<8x128xf32> to vector<8x32xf32>
    %174 = arith.mulf %171, %139 : vector<8x32xf32>
    %175 = arith.mulf %170, %172 : vector<8x32xf32>
    %176 = arith.addf %174, %175 : vector<8x32xf32>
    %177 = math.tanh %176 : vector<8x32xf32>
    %178 = arith.mulf %173, %177 : vector<8x32xf32>
    %c16_156 = arith.constant 16 : index
    %c0_157 = arith.constant 0 : index
    %179 = vector.load %arg14[%c16_156, %c0_157] : memref<128x128xf32, #tpu.memory_space<vmem>>, vector<8x128xf32>
    %cst_158 = arith.constant dense<0.000000e+00> : vector<8x128xf32>
    %180 = tpu.matmul %159, %95, %cst_158 {dimension_numbers = #tpu.dot_dimension_numbers<[1], [0], [0], [1], [0, 0, 1, 1], [], []>} : vector<8x32xf32>, vector<32x128xf32>, vector<8x128xf32> -> vector<8x128xf32>
    %181 = arith.addf %179, %180 : vector<8x128xf32>
    %182 = arith.negf %181 : vector<8x128xf32>
    %183 = math.exp %182 : vector<8x128xf32>
    %cst_159 = arith.constant 1.000000e+00 : f32
    %184 = vector.broadcast %cst_159 : f32 to vector<8x128xf32>
    %185 = arith.addf %184, %183 : vector<8x128xf32>
    %186 = arith.divf %184, %185 : vector<8x128xf32>
    %187 = math.tanh %181 : vector<8x128xf32>
    %188 = vector.extract_strided_slice %186 {offsets = [0, 0], sizes = [8, 32], strides = [1, 1]} : vector<8x128xf32> to vector<8x32xf32>
    %189 = vector.extract_strided_slice %186 {offsets = [0, 32], sizes = [8, 32], strides = [1, 1]} : vector<8x128xf32> to vector<8x32xf32>
    %190 = vector.extract_strided_slice %187 {offsets = [0, 64], sizes = [8, 32], strides = [1, 1]} : vector<8x128xf32> to vector<8x32xf32>
    %191 = vector.extract_strided_slice %186 {offsets = [0, 96], sizes = [8, 32], strides = [1, 1]} : vector<8x128xf32> to vector<8x32xf32>
    %192 = arith.mulf %189, %157 : vector<8x32xf32>
    %193 = arith.mulf %188, %190 : vector<8x32xf32>
    %194 = arith.addf %192, %193 : vector<8x32xf32>
    %195 = math.tanh %194 : vector<8x32xf32>
    %196 = arith.mulf %191, %195 : vector<8x32xf32>
    %cst_160 = arith.constant dense<0.000000e+00> : vector<8x128xf32>
    %197 = tpu.matmul %196, %96, %cst_160 {dimension_numbers = #tpu.dot_dimension_numbers<[1], [0], [0], [1], [0, 0, 1, 1], [], []>} : vector<8x32xf32>, vector<32x128xf32>, vector<8x128xf32> -> vector<8x128xf32>
    %cst_161 = arith.constant dense<0.000000e+00> : vector<8x128xf32>
    %198 = tpu.matmul %178, %97, %cst_161 {dimension_numbers = #tpu.dot_dimension_numbers<[1], [0], [0], [1], [0, 0, 1, 1], [], []>} : vector<8x32xf32>, vector<32x128xf32>, vector<8x128xf32> -> vector<8x128xf32>
    %199 = arith.addf %197, %198 : vector<8x128xf32>
    %200 = arith.addf %199, %100 : vector<8x128xf32>
    %201 = arith.negf %200 : vector<8x128xf32>
    %202 = math.exp %201 : vector<8x128xf32>
    %cst_162 = arith.constant 1.000000e+00 : f32
    %203 = vector.broadcast %cst_162 : f32 to vector<8x128xf32>
    %204 = arith.addf %203, %202 : vector<8x128xf32>
    %205 = arith.divf %203, %204 : vector<8x128xf32>
    %206 = math.tanh %200 : vector<8x128xf32>
    %207 = vector.extract_strided_slice %205 {offsets = [0, 0], sizes = [8, 32], strides = [1, 1]} : vector<8x128xf32> to vector<8x32xf32>
    %208 = vector.extract_strided_slice %205 {offsets = [0, 32], sizes = [8, 32], strides = [1, 1]} : vector<8x128xf32> to vector<8x32xf32>
    %209 = vector.extract_strided_slice %206 {offsets = [0, 64], sizes = [8, 32], strides = [1, 1]} : vector<8x128xf32> to vector<8x32xf32>
    %210 = vector.extract_strided_slice %205 {offsets = [0, 96], sizes = [8, 32], strides = [1, 1]} : vector<8x128xf32> to vector<8x32xf32>
    %211 = arith.mulf %208, %176 : vector<8x32xf32>
    %212 = arith.mulf %207, %209 : vector<8x32xf32>
    %213 = arith.addf %211, %212 : vector<8x32xf32>
    %214 = math.tanh %213 : vector<8x32xf32>
    %215 = arith.mulf %210, %214 : vector<8x32xf32>
    %c24_163 = arith.constant 24 : index
    %c0_164 = arith.constant 0 : index
    %216 = vector.load %arg14[%c24_163, %c0_164] : memref<128x128xf32, #tpu.memory_space<vmem>>, vector<8x128xf32>
    %cst_165 = arith.constant dense<0.000000e+00> : vector<8x128xf32>
    %217 = tpu.matmul %196, %95, %cst_165 {dimension_numbers = #tpu.dot_dimension_numbers<[1], [0], [0], [1], [0, 0, 1, 1], [], []>} : vector<8x32xf32>, vector<32x128xf32>, vector<8x128xf32> -> vector<8x128xf32>
    %218 = arith.addf %216, %217 : vector<8x128xf32>
    %219 = arith.negf %218 : vector<8x128xf32>
    %220 = math.exp %219 : vector<8x128xf32>
    %cst_166 = arith.constant 1.000000e+00 : f32
    %221 = vector.broadcast %cst_166 : f32 to vector<8x128xf32>
    %222 = arith.addf %221, %220 : vector<8x128xf32>
    %223 = arith.divf %221, %222 : vector<8x128xf32>
    %224 = math.tanh %218 : vector<8x128xf32>
    %225 = vector.extract_strided_slice %223 {offsets = [0, 0], sizes = [8, 32], strides = [1, 1]} : vector<8x128xf32> to vector<8x32xf32>
    %226 = vector.extract_strided_slice %223 {offsets = [0, 32], sizes = [8, 32], strides = [1, 1]} : vector<8x128xf32> to vector<8x32xf32>
    %227 = vector.extract_strided_slice %224 {offsets = [0, 64], sizes = [8, 32], strides = [1, 1]} : vector<8x128xf32> to vector<8x32xf32>
    %228 = vector.extract_strided_slice %223 {offsets = [0, 96], sizes = [8, 32], strides = [1, 1]} : vector<8x128xf32> to vector<8x32xf32>
    %229 = arith.mulf %226, %194 : vector<8x32xf32>
    %230 = arith.mulf %225, %227 : vector<8x32xf32>
    %231 = arith.addf %229, %230 : vector<8x32xf32>
    %232 = math.tanh %231 : vector<8x32xf32>
    %233 = arith.mulf %228, %232 : vector<8x32xf32>
    %cst_167 = arith.constant dense<0.000000e+00> : vector<8x128xf32>
    %234 = tpu.matmul %233, %96, %cst_167 {dimension_numbers = #tpu.dot_dimension_numbers<[1], [0], [0], [1], [0, 0, 1, 1], [], []>} : vector<8x32xf32>, vector<32x128xf32>, vector<8x128xf32> -> vector<8x128xf32>
    %cst_168 = arith.constant dense<0.000000e+00> : vector<8x128xf32>
    %235 = tpu.matmul %215, %97, %cst_168 {dimension_numbers = #tpu.dot_dimension_numbers<[1], [0], [0], [1], [0, 0, 1, 1], [], []>} : vector<8x32xf32>, vector<32x128xf32>, vector<8x128xf32> -> vector<8x128xf32>
    %236 = arith.addf %234, %235 : vector<8x128xf32>
    %237 = arith.addf %236, %100 : vector<8x128xf32>
    %238 = arith.negf %237 : vector<8x128xf32>
    %239 = math.exp %238 : vector<8x128xf32>
    %cst_169 = arith.constant 1.000000e+00 : f32
    %240 = vector.broadcast %cst_169 : f32 to vector<8x128xf32>
    %241 = arith.addf %240, %239 : vector<8x128xf32>
    %242 = arith.divf %240, %241 : vector<8x128xf32>
    %243 = math.tanh %237 : vector<8x128xf32>
    %244 = vector.extract_strided_slice %242 {offsets = [0, 0], sizes = [8, 32], strides = [1, 1]} : vector<8x128xf32> to vector<8x32xf32>
    %245 = vector.extract_strided_slice %242 {offsets = [0, 32], sizes = [8, 32], strides = [1, 1]} : vector<8x128xf32> to vector<8x32xf32>
    %246 = vector.extract_strided_slice %243 {offsets = [0, 64], sizes = [8, 32], strides = [1, 1]} : vector<8x128xf32> to vector<8x32xf32>
    %247 = vector.extract_strided_slice %242 {offsets = [0, 96], sizes = [8, 32], strides = [1, 1]} : vector<8x128xf32> to vector<8x32xf32>
    %248 = arith.mulf %245, %213 : vector<8x32xf32>
    %249 = arith.mulf %244, %246 : vector<8x32xf32>
    %250 = arith.addf %248, %249 : vector<8x32xf32>
    %251 = math.tanh %250 : vector<8x32xf32>
    %252 = arith.mulf %247, %251 : vector<8x32xf32>
    %c32_170 = arith.constant 32 : index
    %c0_171 = arith.constant 0 : index
    %253 = vector.load %arg14[%c32_170, %c0_171] : memref<128x128xf32, #tpu.memory_space<vmem>>, vector<8x128xf32>
    %cst_172 = arith.constant dense<0.000000e+00> : vector<8x128xf32>
    %254 = tpu.matmul %233, %95, %cst_172 {dimension_numbers = #tpu.dot_dimension_numbers<[1], [0], [0], [1], [0, 0, 1, 1], [], []>} : vector<8x32xf32>, vector<32x128xf32>, vector<8x128xf32> -> vector<8x128xf32>
    %255 = arith.addf %253, %254 : vector<8x128xf32>
    %256 = arith.negf %255 : vector<8x128xf32>
    %257 = math.exp %256 : vector<8x128xf32>
    %cst_173 = arith.constant 1.000000e+00 : f32
    %258 = vector.broadcast %cst_173 : f32 to vector<8x128xf32>
    %259 = arith.addf %258, %257 : vector<8x128xf32>
    %260 = arith.divf %258, %259 : vector<8x128xf32>
    %261 = math.tanh %255 : vector<8x128xf32>
    %262 = vector.extract_strided_slice %260 {offsets = [0, 0], sizes = [8, 32], strides = [1, 1]} : vector<8x128xf32> to vector<8x32xf32>
    %263 = vector.extract_strided_slice %260 {offsets = [0, 32], sizes = [8, 32], strides = [1, 1]} : vector<8x128xf32> to vector<8x32xf32>
    %264 = vector.extract_strided_slice %261 {offsets = [0, 64], sizes = [8, 32], strides = [1, 1]} : vector<8x128xf32> to vector<8x32xf32>
    %265 = vector.extract_strided_slice %260 {offsets = [0, 96], sizes = [8, 32], strides = [1, 1]} : vector<8x128xf32> to vector<8x32xf32>
    %266 = arith.mulf %263, %231 : vector<8x32xf32>
    %267 = arith.mulf %262, %264 : vector<8x32xf32>
    %268 = arith.addf %266, %267 : vector<8x32xf32>
    %269 = math.tanh %268 : vector<8x32xf32>
    %270 = arith.mulf %265, %269 : vector<8x32xf32>
    %cst_174 = arith.constant dense<0.000000e+00> : vector<8x128xf32>
    %271 = tpu.matmul %270, %96, %cst_174 {dimension_numbers = #tpu.dot_dimension_numbers<[1], [0], [0], [1], [0, 0, 1, 1], [], []>} : vector<8x32xf32>, vector<32x128xf32>, vector<8x128xf32> -> vector<8x128xf32>
    %cst_175 = arith.constant dense<0.000000e+00> : vector<8x128xf32>
    %272 = tpu.matmul %252, %97, %cst_175 {dimension_numbers = #tpu.dot_dimension_numbers<[1], [0], [0], [1], [0, 0, 1, 1], [], []>} : vector<8x32xf32>, vector<32x128xf32>, vector<8x128xf32> -> vector<8x128xf32>
    %273 = arith.addf %271, %272 : vector<8x128xf32>
    %274 = arith.addf %273, %100 : vector<8x128xf32>
    %275 = arith.negf %274 : vector<8x128xf32>
    %276 = math.exp %275 : vector<8x128xf32>
    %cst_176 = arith.constant 1.000000e+00 : f32
    %277 = vector.broadcast %cst_176 : f32 to vector<8x128xf32>
    %278 = arith.addf %277, %276 : vector<8x128xf32>
    %279 = arith.divf %277, %278 : vector<8x128xf32>
    %280 = math.tanh %274 : vector<8x128xf32>
    %281 = vector.extract_strided_slice %279 {offsets = [0, 0], sizes = [8, 32], strides = [1, 1]} : vector<8x128xf32> to vector<8x32xf32>
    %282 = vector.extract_strided_slice %279 {offsets = [0, 32], sizes = [8, 32], strides = [1, 1]} : vector<8x128xf32> to vector<8x32xf32>
    %283 = vector.extract_strided_slice %280 {offsets = [0, 64], sizes = [8, 32], strides = [1, 1]} : vector<8x128xf32> to vector<8x32xf32>
    %284 = vector.extract_strided_slice %279 {offsets = [0, 96], sizes = [8, 32], strides = [1, 1]} : vector<8x128xf32> to vector<8x32xf32>
    %285 = arith.mulf %282, %250 : vector<8x32xf32>
    %286 = arith.mulf %281, %283 : vector<8x32xf32>
    %287 = arith.addf %285, %286 : vector<8x32xf32>
    %288 = math.tanh %287 : vector<8x32xf32>
    %289 = arith.mulf %284, %288 : vector<8x32xf32>
    %c40 = arith.constant 40 : index
    %c0_177 = arith.constant 0 : index
    %290 = vector.load %arg14[%c40, %c0_177] : memref<128x128xf32, #tpu.memory_space<vmem>>, vector<8x128xf32>
    %cst_178 = arith.constant dense<0.000000e+00> : vector<8x128xf32>
    %291 = tpu.matmul %270, %95, %cst_178 {dimension_numbers = #tpu.dot_dimension_numbers<[1], [0], [0], [1], [0, 0, 1, 1], [], []>} : vector<8x32xf32>, vector<32x128xf32>, vector<8x128xf32> -> vector<8x128xf32>
    %292 = arith.addf %290, %291 : vector<8x128xf32>
    %293 = arith.negf %292 : vector<8x128xf32>
    %294 = math.exp %293 : vector<8x128xf32>
    %cst_179 = arith.constant 1.000000e+00 : f32
    %295 = vector.broadcast %cst_179 : f32 to vector<8x128xf32>
    %296 = arith.addf %295, %294 : vector<8x128xf32>
    %297 = arith.divf %295, %296 : vector<8x128xf32>
    %298 = math.tanh %292 : vector<8x128xf32>
    %299 = vector.extract_strided_slice %297 {offsets = [0, 0], sizes = [8, 32], strides = [1, 1]} : vector<8x128xf32> to vector<8x32xf32>
    %300 = vector.extract_strided_slice %297 {offsets = [0, 32], sizes = [8, 32], strides = [1, 1]} : vector<8x128xf32> to vector<8x32xf32>
    %301 = vector.extract_strided_slice %298 {offsets = [0, 64], sizes = [8, 32], strides = [1, 1]} : vector<8x128xf32> to vector<8x32xf32>
    %302 = vector.extract_strided_slice %297 {offsets = [0, 96], sizes = [8, 32], strides = [1, 1]} : vector<8x128xf32> to vector<8x32xf32>
    %303 = arith.mulf %300, %268 : vector<8x32xf32>
    %304 = arith.mulf %299, %301 : vector<8x32xf32>
    %305 = arith.addf %303, %304 : vector<8x32xf32>
    %306 = math.tanh %305 : vector<8x32xf32>
    %307 = arith.mulf %302, %306 : vector<8x32xf32>
    %cst_180 = arith.constant dense<0.000000e+00> : vector<8x128xf32>
    %308 = tpu.matmul %307, %96, %cst_180 {dimension_numbers = #tpu.dot_dimension_numbers<[1], [0], [0], [1], [0, 0, 1, 1], [], []>} : vector<8x32xf32>, vector<32x128xf32>, vector<8x128xf32> -> vector<8x128xf32>
    %cst_181 = arith.constant dense<0.000000e+00> : vector<8x128xf32>
    %309 = tpu.matmul %289, %97, %cst_181 {dimension_numbers = #tpu.dot_dimension_numbers<[1], [0], [0], [1], [0, 0, 1, 1], [], []>} : vector<8x32xf32>, vector<32x128xf32>, vector<8x128xf32> -> vector<8x128xf32>
    %310 = arith.addf %308, %309 : vector<8x128xf32>
    %311 = arith.addf %310, %100 : vector<8x128xf32>
    %312 = arith.negf %311 : vector<8x128xf32>
    %313 = math.exp %312 : vector<8x128xf32>
    %cst_182 = arith.constant 1.000000e+00 : f32
    %314 = vector.broadcast %cst_182 : f32 to vector<8x128xf32>
    %315 = arith.addf %314, %313 : vector<8x128xf32>
    %316 = arith.divf %314, %315 : vector<8x128xf32>
    %317 = math.tanh %311 : vector<8x128xf32>
    %318 = vector.extract_strided_slice %316 {offsets = [0, 0], sizes = [8, 32], strides = [1, 1]} : vector<8x128xf32> to vector<8x32xf32>
    %319 = vector.extract_strided_slice %316 {offsets = [0, 32], sizes = [8, 32], strides = [1, 1]} : vector<8x128xf32> to vector<8x32xf32>
    %320 = vector.extract_strided_slice %317 {offsets = [0, 64], sizes = [8, 32], strides = [1, 1]} : vector<8x128xf32> to vector<8x32xf32>
    %321 = vector.extract_strided_slice %316 {offsets = [0, 96], sizes = [8, 32], strides = [1, 1]} : vector<8x128xf32> to vector<8x32xf32>
    %322 = arith.mulf %319, %287 : vector<8x32xf32>
    %323 = arith.mulf %318, %320 : vector<8x32xf32>
    %324 = arith.addf %322, %323 : vector<8x32xf32>
    %325 = math.tanh %324 : vector<8x32xf32>
    %326 = arith.mulf %321, %325 : vector<8x32xf32>
    %c48 = arith.constant 48 : index
    %c0_183 = arith.constant 0 : index
    %327 = vector.load %arg14[%c48, %c0_183] : memref<128x128xf32, #tpu.memory_space<vmem>>, vector<8x128xf32>
    %cst_184 = arith.constant dense<0.000000e+00> : vector<8x128xf32>
    %328 = tpu.matmul %307, %95, %cst_184 {dimension_numbers = #tpu.dot_dimension_numbers<[1], [0], [0], [1], [0, 0, 1, 1], [], []>} : vector<8x32xf32>, vector<32x128xf32>, vector<8x128xf32> -> vector<8x128xf32>
    %329 = arith.addf %327, %328 : vector<8x128xf32>
    %330 = arith.negf %329 : vector<8x128xf32>
    %331 = math.exp %330 : vector<8x128xf32>
    %cst_185 = arith.constant 1.000000e+00 : f32
    %332 = vector.broadcast %cst_185 : f32 to vector<8x128xf32>
    %333 = arith.addf %332, %331 : vector<8x128xf32>
    %334 = arith.divf %332, %333 : vector<8x128xf32>
    %335 = math.tanh %329 : vector<8x128xf32>
    %336 = vector.extract_strided_slice %334 {offsets = [0, 0], sizes = [8, 32], strides = [1, 1]} : vector<8x128xf32> to vector<8x32xf32>
    %337 = vector.extract_strided_slice %334 {offsets = [0, 32], sizes = [8, 32], strides = [1, 1]} : vector<8x128xf32> to vector<8x32xf32>
    %338 = vector.extract_strided_slice %335 {offsets = [0, 64], sizes = [8, 32], strides = [1, 1]} : vector<8x128xf32> to vector<8x32xf32>
    %339 = vector.extract_strided_slice %334 {offsets = [0, 96], sizes = [8, 32], strides = [1, 1]} : vector<8x128xf32> to vector<8x32xf32>
    %340 = arith.mulf %337, %305 : vector<8x32xf32>
    %341 = arith.mulf %336, %338 : vector<8x32xf32>
    %342 = arith.addf %340, %341 : vector<8x32xf32>
    %343 = math.tanh %342 : vector<8x32xf32>
    %344 = arith.mulf %339, %343 : vector<8x32xf32>
    %cst_186 = arith.constant dense<0.000000e+00> : vector<8x128xf32>
    %345 = tpu.matmul %344, %96, %cst_186 {dimension_numbers = #tpu.dot_dimension_numbers<[1], [0], [0], [1], [0, 0, 1, 1], [], []>} : vector<8x32xf32>, vector<32x128xf32>, vector<8x128xf32> -> vector<8x128xf32>
    %cst_187 = arith.constant dense<0.000000e+00> : vector<8x128xf32>
    %346 = tpu.matmul %326, %97, %cst_187 {dimension_numbers = #tpu.dot_dimension_numbers<[1], [0], [0], [1], [0, 0, 1, 1], [], []>} : vector<8x32xf32>, vector<32x128xf32>, vector<8x128xf32> -> vector<8x128xf32>
    %347 = arith.addf %345, %346 : vector<8x128xf32>
    %348 = arith.addf %347, %100 : vector<8x128xf32>
    %349 = arith.negf %348 : vector<8x128xf32>
    %350 = math.exp %349 : vector<8x128xf32>
    %cst_188 = arith.constant 1.000000e+00 : f32
    %351 = vector.broadcast %cst_188 : f32 to vector<8x128xf32>
    %352 = arith.addf %351, %350 : vector<8x128xf32>
    %353 = arith.divf %351, %352 : vector<8x128xf32>
    %354 = math.tanh %348 : vector<8x128xf32>
    %355 = vector.extract_strided_slice %353 {offsets = [0, 0], sizes = [8, 32], strides = [1, 1]} : vector<8x128xf32> to vector<8x32xf32>
    %356 = vector.extract_strided_slice %353 {offsets = [0, 32], sizes = [8, 32], strides = [1, 1]} : vector<8x128xf32> to vector<8x32xf32>
    %357 = vector.extract_strided_slice %354 {offsets = [0, 64], sizes = [8, 32], strides = [1, 1]} : vector<8x128xf32> to vector<8x32xf32>
    %358 = vector.extract_strided_slice %353 {offsets = [0, 96], sizes = [8, 32], strides = [1, 1]} : vector<8x128xf32> to vector<8x32xf32>
    %359 = arith.mulf %356, %324 : vector<8x32xf32>
    %360 = arith.mulf %355, %357 : vector<8x32xf32>
    %361 = arith.addf %359, %360 : vector<8x32xf32>
    %362 = math.tanh %361 : vector<8x32xf32>
    %363 = arith.mulf %358, %362 : vector<8x32xf32>
    %c56 = arith.constant 56 : index
    %c0_189 = arith.constant 0 : index
    %364 = vector.load %arg14[%c56, %c0_189] : memref<128x128xf32, #tpu.memory_space<vmem>>, vector<8x128xf32>
    %cst_190 = arith.constant dense<0.000000e+00> : vector<8x128xf32>
    %365 = tpu.matmul %344, %95, %cst_190 {dimension_numbers = #tpu.dot_dimension_numbers<[1], [0], [0], [1], [0, 0, 1, 1], [], []>} : vector<8x32xf32>, vector<32x128xf32>, vector<8x128xf32> -> vector<8x128xf32>
    %366 = arith.addf %364, %365 : vector<8x128xf32>
    %367 = arith.negf %366 : vector<8x128xf32>
    %368 = math.exp %367 : vector<8x128xf32>
    %cst_191 = arith.constant 1.000000e+00 : f32
    %369 = vector.broadcast %cst_191 : f32 to vector<8x128xf32>
    %370 = arith.addf %369, %368 : vector<8x128xf32>
    %371 = arith.divf %369, %370 : vector<8x128xf32>
    %372 = math.tanh %366 : vector<8x128xf32>
    %373 = vector.extract_strided_slice %371 {offsets = [0, 0], sizes = [8, 32], strides = [1, 1]} : vector<8x128xf32> to vector<8x32xf32>
    %374 = vector.extract_strided_slice %371 {offsets = [0, 32], sizes = [8, 32], strides = [1, 1]} : vector<8x128xf32> to vector<8x32xf32>
    %375 = vector.extract_strided_slice %372 {offsets = [0, 64], sizes = [8, 32], strides = [1, 1]} : vector<8x128xf32> to vector<8x32xf32>
    %376 = vector.extract_strided_slice %371 {offsets = [0, 96], sizes = [8, 32], strides = [1, 1]} : vector<8x128xf32> to vector<8x32xf32>
    %377 = arith.mulf %374, %342 : vector<8x32xf32>
    %378 = arith.mulf %373, %375 : vector<8x32xf32>
    %379 = arith.addf %377, %378 : vector<8x32xf32>
    %380 = math.tanh %379 : vector<8x32xf32>
    %381 = arith.mulf %376, %380 : vector<8x32xf32>
    %cst_192 = arith.constant dense<0.000000e+00> : vector<8x128xf32>
    %382 = tpu.matmul %381, %96, %cst_192 {dimension_numbers = #tpu.dot_dimension_numbers<[1], [0], [0], [1], [0, 0, 1, 1], [], []>} : vector<8x32xf32>, vector<32x128xf32>, vector<8x128xf32> -> vector<8x128xf32>
    %cst_193 = arith.constant dense<0.000000e+00> : vector<8x128xf32>
    %383 = tpu.matmul %363, %97, %cst_193 {dimension_numbers = #tpu.dot_dimension_numbers<[1], [0], [0], [1], [0, 0, 1, 1], [], []>} : vector<8x32xf32>, vector<32x128xf32>, vector<8x128xf32> -> vector<8x128xf32>
    %384 = arith.addf %382, %383 : vector<8x128xf32>
    %385 = arith.addf %384, %100 : vector<8x128xf32>
    %386 = arith.negf %385 : vector<8x128xf32>
    %387 = math.exp %386 : vector<8x128xf32>
    %cst_194 = arith.constant 1.000000e+00 : f32
    %388 = vector.broadcast %cst_194 : f32 to vector<8x128xf32>
    %389 = arith.addf %388, %387 : vector<8x128xf32>
    %390 = arith.divf %388, %389 : vector<8x128xf32>
    %391 = math.tanh %385 : vector<8x128xf32>
    %392 = vector.extract_strided_slice %390 {offsets = [0, 0], sizes = [8, 32], strides = [1, 1]} : vector<8x128xf32> to vector<8x32xf32>
    %393 = vector.extract_strided_slice %390 {offsets = [0, 32], sizes = [8, 32], strides = [1, 1]} : vector<8x128xf32> to vector<8x32xf32>
    %394 = vector.extract_strided_slice %391 {offsets = [0, 64], sizes = [8, 32], strides = [1, 1]} : vector<8x128xf32> to vector<8x32xf32>
    %395 = vector.extract_strided_slice %390 {offsets = [0, 96], sizes = [8, 32], strides = [1, 1]} : vector<8x128xf32> to vector<8x32xf32>
    %396 = arith.mulf %393, %361 : vector<8x32xf32>
    %397 = arith.mulf %392, %394 : vector<8x32xf32>
    %398 = arith.addf %396, %397 : vector<8x32xf32>
    %399 = math.tanh %398 : vector<8x32xf32>
    %400 = arith.mulf %395, %399 : vector<8x32xf32>
    %c64_195 = arith.constant 64 : index
    %c0_196 = arith.constant 0 : index
    %401 = vector.load %arg14[%c64_195, %c0_196] : memref<128x128xf32, #tpu.memory_space<vmem>>, vector<8x128xf32>
    %cst_197 = arith.constant dense<0.000000e+00> : vector<8x128xf32>
    %402 = tpu.matmul %381, %95, %cst_197 {dimension_numbers = #tpu.dot_dimension_numbers<[1], [0], [0], [1], [0, 0, 1, 1], [], []>} : vector<8x32xf32>, vector<32x128xf32>, vector<8x128xf32> -> vector<8x128xf32>
    %403 = arith.addf %401, %402 : vector<8x128xf32>
    %404 = arith.negf %403 : vector<8x128xf32>
    %405 = math.exp %404 : vector<8x128xf32>
    %cst_198 = arith.constant 1.000000e+00 : f32
    %406 = vector.broadcast %cst_198 : f32 to vector<8x128xf32>
    %407 = arith.addf %406, %405 : vector<8x128xf32>
    %408 = arith.divf %406, %407 : vector<8x128xf32>
    %409 = math.tanh %403 : vector<8x128xf32>
    %410 = vector.extract_strided_slice %408 {offsets = [0, 0], sizes = [8, 32], strides = [1, 1]} : vector<8x128xf32> to vector<8x32xf32>
    %411 = vector.extract_strided_slice %408 {offsets = [0, 32], sizes = [8, 32], strides = [1, 1]} : vector<8x128xf32> to vector<8x32xf32>
    %412 = vector.extract_strided_slice %409 {offsets = [0, 64], sizes = [8, 32], strides = [1, 1]} : vector<8x128xf32> to vector<8x32xf32>
    %413 = vector.extract_strided_slice %408 {offsets = [0, 96], sizes = [8, 32], strides = [1, 1]} : vector<8x128xf32> to vector<8x32xf32>
    %414 = arith.mulf %411, %379 : vector<8x32xf32>
    %415 = arith.mulf %410, %412 : vector<8x32xf32>
    %416 = arith.addf %414, %415 : vector<8x32xf32>
    %417 = math.tanh %416 : vector<8x32xf32>
    %418 = arith.mulf %413, %417 : vector<8x32xf32>
    %cst_199 = arith.constant dense<0.000000e+00> : vector<8x128xf32>
    %419 = tpu.matmul %418, %96, %cst_199 {dimension_numbers = #tpu.dot_dimension_numbers<[1], [0], [0], [1], [0, 0, 1, 1], [], []>} : vector<8x32xf32>, vector<32x128xf32>, vector<8x128xf32> -> vector<8x128xf32>
    %cst_200 = arith.constant dense<0.000000e+00> : vector<8x128xf32>
    %420 = tpu.matmul %400, %97, %cst_200 {dimension_numbers = #tpu.dot_dimension_numbers<[1], [0], [0], [1], [0, 0, 1, 1], [], []>} : vector<8x32xf32>, vector<32x128xf32>, vector<8x128xf32> -> vector<8x128xf32>
    %421 = arith.addf %419, %420 : vector<8x128xf32>
    %422 = arith.addf %421, %100 : vector<8x128xf32>
    %423 = arith.negf %422 : vector<8x128xf32>
    %424 = math.exp %423 : vector<8x128xf32>
    %cst_201 = arith.constant 1.000000e+00 : f32
    %425 = vector.broadcast %cst_201 : f32 to vector<8x128xf32>
    %426 = arith.addf %425, %424 : vector<8x128xf32>
    %427 = arith.divf %425, %426 : vector<8x128xf32>
    %428 = math.tanh %422 : vector<8x128xf32>
    %429 = vector.extract_strided_slice %427 {offsets = [0, 0], sizes = [8, 32], strides = [1, 1]} : vector<8x128xf32> to vector<8x32xf32>
    %430 = vector.extract_strided_slice %427 {offsets = [0, 32], sizes = [8, 32], strides = [1, 1]} : vector<8x128xf32> to vector<8x32xf32>
    %431 = vector.extract_strided_slice %428 {offsets = [0, 64], sizes = [8, 32], strides = [1, 1]} : vector<8x128xf32> to vector<8x32xf32>
    %432 = vector.extract_strided_slice %427 {offsets = [0, 96], sizes = [8, 32], strides = [1, 1]} : vector<8x128xf32> to vector<8x32xf32>
    %433 = arith.mulf %430, %398 : vector<8x32xf32>
    %434 = arith.mulf %429, %431 : vector<8x32xf32>
    %435 = arith.addf %433, %434 : vector<8x32xf32>
    %436 = math.tanh %435 : vector<8x32xf32>
    %437 = arith.mulf %432, %436 : vector<8x32xf32>
    %c72 = arith.constant 72 : index
    %c0_202 = arith.constant 0 : index
    %438 = vector.load %arg14[%c72, %c0_202] : memref<128x128xf32, #tpu.memory_space<vmem>>, vector<8x128xf32>
    %cst_203 = arith.constant dense<0.000000e+00> : vector<8x128xf32>
    %439 = tpu.matmul %418, %95, %cst_203 {dimension_numbers = #tpu.dot_dimension_numbers<[1], [0], [0], [1], [0, 0, 1, 1], [], []>} : vector<8x32xf32>, vector<32x128xf32>, vector<8x128xf32> -> vector<8x128xf32>
    %440 = arith.addf %438, %439 : vector<8x128xf32>
    %441 = arith.negf %440 : vector<8x128xf32>
    %442 = math.exp %441 : vector<8x128xf32>
    %cst_204 = arith.constant 1.000000e+00 : f32
    %443 = vector.broadcast %cst_204 : f32 to vector<8x128xf32>
    %444 = arith.addf %443, %442 : vector<8x128xf32>
    %445 = arith.divf %443, %444 : vector<8x128xf32>
    %446 = math.tanh %440 : vector<8x128xf32>
    %447 = vector.extract_strided_slice %445 {offsets = [0, 0], sizes = [8, 32], strides = [1, 1]} : vector<8x128xf32> to vector<8x32xf32>
    %448 = vector.extract_strided_slice %445 {offsets = [0, 32], sizes = [8, 32], strides = [1, 1]} : vector<8x128xf32> to vector<8x32xf32>
    %449 = vector.extract_strided_slice %446 {offsets = [0, 64], sizes = [8, 32], strides = [1, 1]} : vector<8x128xf32> to vector<8x32xf32>
    %450 = vector.extract_strided_slice %445 {offsets = [0, 96], sizes = [8, 32], strides = [1, 1]} : vector<8x128xf32> to vector<8x32xf32>
    %451 = arith.mulf %448, %416 : vector<8x32xf32>
    %452 = arith.mulf %447, %449 : vector<8x32xf32>
    %453 = arith.addf %451, %452 : vector<8x32xf32>
    %454 = math.tanh %453 : vector<8x32xf32>
    %455 = arith.mulf %450, %454 : vector<8x32xf32>
    %cst_205 = arith.constant dense<0.000000e+00> : vector<8x128xf32>
    %456 = tpu.matmul %455, %96, %cst_205 {dimension_numbers = #tpu.dot_dimension_numbers<[1], [0], [0], [1], [0, 0, 1, 1], [], []>} : vector<8x32xf32>, vector<32x128xf32>, vector<8x128xf32> -> vector<8x128xf32>
    %cst_206 = arith.constant dense<0.000000e+00> : vector<8x128xf32>
    %457 = tpu.matmul %437, %97, %cst_206 {dimension_numbers = #tpu.dot_dimension_numbers<[1], [0], [0], [1], [0, 0, 1, 1], [], []>} : vector<8x32xf32>, vector<32x128xf32>, vector<8x128xf32> -> vector<8x128xf32>
    %458 = arith.addf %456, %457 : vector<8x128xf32>
    %459 = arith.addf %458, %100 : vector<8x128xf32>
    %460 = arith.negf %459 : vector<8x128xf32>
    %461 = math.exp %460 : vector<8x128xf32>
    %cst_207 = arith.constant 1.000000e+00 : f32
    %462 = vector.broadcast %cst_207 : f32 to vector<8x128xf32>
    %463 = arith.addf %462, %461 : vector<8x128xf32>
    %464 = arith.divf %462, %463 : vector<8x128xf32>
    %465 = math.tanh %459 : vector<8x128xf32>
    %466 = vector.extract_strided_slice %464 {offsets = [0, 0], sizes = [8, 32], strides = [1, 1]} : vector<8x128xf32> to vector<8x32xf32>
    %467 = vector.extract_strided_slice %464 {offsets = [0, 32], sizes = [8, 32], strides = [1, 1]} : vector<8x128xf32> to vector<8x32xf32>
    %468 = vector.extract_strided_slice %465 {offsets = [0, 64], sizes = [8, 32], strides = [1, 1]} : vector<8x128xf32> to vector<8x32xf32>
    %469 = vector.extract_strided_slice %464 {offsets = [0, 96], sizes = [8, 32], strides = [1, 1]} : vector<8x128xf32> to vector<8x32xf32>
    %470 = arith.mulf %467, %435 : vector<8x32xf32>
    %471 = arith.mulf %466, %468 : vector<8x32xf32>
    %472 = arith.addf %470, %471 : vector<8x32xf32>
    %473 = math.tanh %472 : vector<8x32xf32>
    %474 = arith.mulf %469, %473 : vector<8x32xf32>
    %c80 = arith.constant 80 : index
    %c0_208 = arith.constant 0 : index
    %475 = vector.load %arg14[%c80, %c0_208] : memref<128x128xf32, #tpu.memory_space<vmem>>, vector<8x128xf32>
    %cst_209 = arith.constant dense<0.000000e+00> : vector<8x128xf32>
    %476 = tpu.matmul %455, %95, %cst_209 {dimension_numbers = #tpu.dot_dimension_numbers<[1], [0], [0], [1], [0, 0, 1, 1], [], []>} : vector<8x32xf32>, vector<32x128xf32>, vector<8x128xf32> -> vector<8x128xf32>
    %477 = arith.addf %475, %476 : vector<8x128xf32>
    %478 = arith.negf %477 : vector<8x128xf32>
    %479 = math.exp %478 : vector<8x128xf32>
    %cst_210 = arith.constant 1.000000e+00 : f32
    %480 = vector.broadcast %cst_210 : f32 to vector<8x128xf32>
    %481 = arith.addf %480, %479 : vector<8x128xf32>
    %482 = arith.divf %480, %481 : vector<8x128xf32>
    %483 = math.tanh %477 : vector<8x128xf32>
    %484 = vector.extract_strided_slice %482 {offsets = [0, 0], sizes = [8, 32], strides = [1, 1]} : vector<8x128xf32> to vector<8x32xf32>
    %485 = vector.extract_strided_slice %482 {offsets = [0, 32], sizes = [8, 32], strides = [1, 1]} : vector<8x128xf32> to vector<8x32xf32>
    %486 = vector.extract_strided_slice %483 {offsets = [0, 64], sizes = [8, 32], strides = [1, 1]} : vector<8x128xf32> to vector<8x32xf32>
    %487 = vector.extract_strided_slice %482 {offsets = [0, 96], sizes = [8, 32], strides = [1, 1]} : vector<8x128xf32> to vector<8x32xf32>
    %488 = arith.mulf %485, %453 : vector<8x32xf32>
    %489 = arith.mulf %484, %486 : vector<8x32xf32>
    %490 = arith.addf %488, %489 : vector<8x32xf32>
    %491 = math.tanh %490 : vector<8x32xf32>
    %492 = arith.mulf %487, %491 : vector<8x32xf32>
    %cst_211 = arith.constant dense<0.000000e+00> : vector<8x128xf32>
    %493 = tpu.matmul %492, %96, %cst_211 {dimension_numbers = #tpu.dot_dimension_numbers<[1], [0], [0], [1], [0, 0, 1, 1], [], []>} : vector<8x32xf32>, vector<32x128xf32>, vector<8x128xf32> -> vector<8x128xf32>
    %cst_212 = arith.constant dense<0.000000e+00> : vector<8x128xf32>
    %494 = tpu.matmul %474, %97, %cst_212 {dimension_numbers = #tpu.dot_dimension_numbers<[1], [0], [0], [1], [0, 0, 1, 1], [], []>} : vector<8x32xf32>, vector<32x128xf32>, vector<8x128xf32> -> vector<8x128xf32>
    %495 = arith.addf %493, %494 : vector<8x128xf32>
    %496 = arith.addf %495, %100 : vector<8x128xf32>
    %497 = arith.negf %496 : vector<8x128xf32>
    %498 = math.exp %497 : vector<8x128xf32>
    %cst_213 = arith.constant 1.000000e+00 : f32
    %499 = vector.broadcast %cst_213 : f32 to vector<8x128xf32>
    %500 = arith.addf %499, %498 : vector<8x128xf32>
    %501 = arith.divf %499, %500 : vector<8x128xf32>
    %502 = math.tanh %496 : vector<8x128xf32>
    %503 = vector.extract_strided_slice %501 {offsets = [0, 0], sizes = [8, 32], strides = [1, 1]} : vector<8x128xf32> to vector<8x32xf32>
    %504 = vector.extract_strided_slice %501 {offsets = [0, 32], sizes = [8, 32], strides = [1, 1]} : vector<8x128xf32> to vector<8x32xf32>
    %505 = vector.extract_strided_slice %502 {offsets = [0, 64], sizes = [8, 32], strides = [1, 1]} : vector<8x128xf32> to vector<8x32xf32>
    %506 = vector.extract_strided_slice %501 {offsets = [0, 96], sizes = [8, 32], strides = [1, 1]} : vector<8x128xf32> to vector<8x32xf32>
    %507 = arith.mulf %504, %472 : vector<8x32xf32>
    %508 = arith.mulf %503, %505 : vector<8x32xf32>
    %509 = arith.addf %507, %508 : vector<8x32xf32>
    %510 = math.tanh %509 : vector<8x32xf32>
    %511 = arith.mulf %506, %510 : vector<8x32xf32>
    %c88 = arith.constant 88 : index
    %c0_214 = arith.constant 0 : index
    %512 = vector.load %arg14[%c88, %c0_214] : memref<128x128xf32, #tpu.memory_space<vmem>>, vector<8x128xf32>
    %cst_215 = arith.constant dense<0.000000e+00> : vector<8x128xf32>
    %513 = tpu.matmul %492, %95, %cst_215 {dimension_numbers = #tpu.dot_dimension_numbers<[1], [0], [0], [1], [0, 0, 1, 1], [], []>} : vector<8x32xf32>, vector<32x128xf32>, vector<8x128xf32> -> vector<8x128xf32>
    %514 = arith.addf %512, %513 : vector<8x128xf32>
    %515 = arith.negf %514 : vector<8x128xf32>
    %516 = math.exp %515 : vector<8x128xf32>
    %cst_216 = arith.constant 1.000000e+00 : f32
    %517 = vector.broadcast %cst_216 : f32 to vector<8x128xf32>
    %518 = arith.addf %517, %516 : vector<8x128xf32>
    %519 = arith.divf %517, %518 : vector<8x128xf32>
    %520 = math.tanh %514 : vector<8x128xf32>
    %521 = vector.extract_strided_slice %519 {offsets = [0, 0], sizes = [8, 32], strides = [1, 1]} : vector<8x128xf32> to vector<8x32xf32>
    %522 = vector.extract_strided_slice %519 {offsets = [0, 32], sizes = [8, 32], strides = [1, 1]} : vector<8x128xf32> to vector<8x32xf32>
    %523 = vector.extract_strided_slice %520 {offsets = [0, 64], sizes = [8, 32], strides = [1, 1]} : vector<8x128xf32> to vector<8x32xf32>
    %524 = vector.extract_strided_slice %519 {offsets = [0, 96], sizes = [8, 32], strides = [1, 1]} : vector<8x128xf32> to vector<8x32xf32>
    %525 = arith.mulf %522, %490 : vector<8x32xf32>
    %526 = arith.mulf %521, %523 : vector<8x32xf32>
    %527 = arith.addf %525, %526 : vector<8x32xf32>
    %528 = math.tanh %527 : vector<8x32xf32>
    %529 = arith.mulf %524, %528 : vector<8x32xf32>
    %cst_217 = arith.constant dense<0.000000e+00> : vector<8x128xf32>
    %530 = tpu.matmul %529, %96, %cst_217 {dimension_numbers = #tpu.dot_dimension_numbers<[1], [0], [0], [1], [0, 0, 1, 1], [], []>} : vector<8x32xf32>, vector<32x128xf32>, vector<8x128xf32> -> vector<8x128xf32>
    %cst_218 = arith.constant dense<0.000000e+00> : vector<8x128xf32>
    %531 = tpu.matmul %511, %97, %cst_218 {dimension_numbers = #tpu.dot_dimension_numbers<[1], [0], [0], [1], [0, 0, 1, 1], [], []>} : vector<8x32xf32>, vector<32x128xf32>, vector<8x128xf32> -> vector<8x128xf32>
    %532 = arith.addf %530, %531 : vector<8x128xf32>
    %533 = arith.addf %532, %100 : vector<8x128xf32>
    %534 = arith.negf %533 : vector<8x128xf32>
    %535 = math.exp %534 : vector<8x128xf32>
    %cst_219 = arith.constant 1.000000e+00 : f32
    %536 = vector.broadcast %cst_219 : f32 to vector<8x128xf32>
    %537 = arith.addf %536, %535 : vector<8x128xf32>
    %538 = arith.divf %536, %537 : vector<8x128xf32>
    %539 = math.tanh %533 : vector<8x128xf32>
    %540 = vector.extract_strided_slice %538 {offsets = [0, 0], sizes = [8, 32], strides = [1, 1]} : vector<8x128xf32> to vector<8x32xf32>
    %541 = vector.extract_strided_slice %538 {offsets = [0, 32], sizes = [8, 32], strides = [1, 1]} : vector<8x128xf32> to vector<8x32xf32>
    %542 = vector.extract_strided_slice %539 {offsets = [0, 64], sizes = [8, 32], strides = [1, 1]} : vector<8x128xf32> to vector<8x32xf32>
    %543 = vector.extract_strided_slice %538 {offsets = [0, 96], sizes = [8, 32], strides = [1, 1]} : vector<8x128xf32> to vector<8x32xf32>
    %544 = arith.mulf %541, %509 : vector<8x32xf32>
    %545 = arith.mulf %540, %542 : vector<8x32xf32>
    %546 = arith.addf %544, %545 : vector<8x32xf32>
    %547 = math.tanh %546 : vector<8x32xf32>
    %548 = arith.mulf %543, %547 : vector<8x32xf32>
    %c96_220 = arith.constant 96 : index
    %c0_221 = arith.constant 0 : index
    %549 = vector.load %arg14[%c96_220, %c0_221] : memref<128x128xf32, #tpu.memory_space<vmem>>, vector<8x128xf32>
    %cst_222 = arith.constant dense<0.000000e+00> : vector<8x128xf32>
    %550 = tpu.matmul %529, %95, %cst_222 {dimension_numbers = #tpu.dot_dimension_numbers<[1], [0], [0], [1], [0, 0, 1, 1], [], []>} : vector<8x32xf32>, vector<32x128xf32>, vector<8x128xf32> -> vector<8x128xf32>
    %551 = arith.addf %549, %550 : vector<8x128xf32>
    %552 = arith.negf %551 : vector<8x128xf32>
    %553 = math.exp %552 : vector<8x128xf32>
    %cst_223 = arith.constant 1.000000e+00 : f32
    %554 = vector.broadcast %cst_223 : f32 to vector<8x128xf32>
    %555 = arith.addf %554, %553 : vector<8x128xf32>
    %556 = arith.divf %554, %555 : vector<8x128xf32>
    %557 = math.tanh %551 : vector<8x128xf32>
    %558 = vector.extract_strided_slice %556 {offsets = [0, 0], sizes = [8, 32], strides = [1, 1]} : vector<8x128xf32> to vector<8x32xf32>
    %559 = vector.extract_strided_slice %556 {offsets = [0, 32], sizes = [8, 32], strides = [1, 1]} : vector<8x128xf32> to vector<8x32xf32>
    %560 = vector.extract_strided_slice %557 {offsets = [0, 64], sizes = [8, 32], strides = [1, 1]} : vector<8x128xf32> to vector<8x32xf32>
    %561 = vector.extract_strided_slice %556 {offsets = [0, 96], sizes = [8, 32], strides = [1, 1]} : vector<8x128xf32> to vector<8x32xf32>
    %562 = arith.mulf %559, %527 : vector<8x32xf32>
    %563 = arith.mulf %558, %560 : vector<8x32xf32>
    %564 = arith.addf %562, %563 : vector<8x32xf32>
    %565 = math.tanh %564 : vector<8x32xf32>
    %566 = arith.mulf %561, %565 : vector<8x32xf32>
    %cst_224 = arith.constant dense<0.000000e+00> : vector<8x128xf32>
    %567 = tpu.matmul %566, %96, %cst_224 {dimension_numbers = #tpu.dot_dimension_numbers<[1], [0], [0], [1], [0, 0, 1, 1], [], []>} : vector<8x32xf32>, vector<32x128xf32>, vector<8x128xf32> -> vector<8x128xf32>
    %cst_225 = arith.constant dense<0.000000e+00> : vector<8x128xf32>
    %568 = tpu.matmul %548, %97, %cst_225 {dimension_numbers = #tpu.dot_dimension_numbers<[1], [0], [0], [1], [0, 0, 1, 1], [], []>} : vector<8x32xf32>, vector<32x128xf32>, vector<8x128xf32> -> vector<8x128xf32>
    %569 = arith.addf %567, %568 : vector<8x128xf32>
    %570 = arith.addf %569, %100 : vector<8x128xf32>
    %571 = arith.negf %570 : vector<8x128xf32>
    %572 = math.exp %571 : vector<8x128xf32>
    %cst_226 = arith.constant 1.000000e+00 : f32
    %573 = vector.broadcast %cst_226 : f32 to vector<8x128xf32>
    %574 = arith.addf %573, %572 : vector<8x128xf32>
    %575 = arith.divf %573, %574 : vector<8x128xf32>
    %576 = math.tanh %570 : vector<8x128xf32>
    %577 = vector.extract_strided_slice %575 {offsets = [0, 0], sizes = [8, 32], strides = [1, 1]} : vector<8x128xf32> to vector<8x32xf32>
    %578 = vector.extract_strided_slice %575 {offsets = [0, 32], sizes = [8, 32], strides = [1, 1]} : vector<8x128xf32> to vector<8x32xf32>
    %579 = vector.extract_strided_slice %576 {offsets = [0, 64], sizes = [8, 32], strides = [1, 1]} : vector<8x128xf32> to vector<8x32xf32>
    %580 = vector.extract_strided_slice %575 {offsets = [0, 96], sizes = [8, 32], strides = [1, 1]} : vector<8x128xf32> to vector<8x32xf32>
    %581 = arith.mulf %578, %546 : vector<8x32xf32>
    %582 = arith.mulf %577, %579 : vector<8x32xf32>
    %583 = arith.addf %581, %582 : vector<8x32xf32>
    %584 = math.tanh %583 : vector<8x32xf32>
    %585 = arith.mulf %580, %584 : vector<8x32xf32>
    %c104 = arith.constant 104 : index
    %c0_227 = arith.constant 0 : index
    %586 = vector.load %arg14[%c104, %c0_227] : memref<128x128xf32, #tpu.memory_space<vmem>>, vector<8x128xf32>
    %cst_228 = arith.constant dense<0.000000e+00> : vector<8x128xf32>
    %587 = tpu.matmul %566, %95, %cst_228 {dimension_numbers = #tpu.dot_dimension_numbers<[1], [0], [0], [1], [0, 0, 1, 1], [], []>} : vector<8x32xf32>, vector<32x128xf32>, vector<8x128xf32> -> vector<8x128xf32>
    %588 = arith.addf %586, %587 : vector<8x128xf32>
    %589 = arith.negf %588 : vector<8x128xf32>
    %590 = math.exp %589 : vector<8x128xf32>
    %cst_229 = arith.constant 1.000000e+00 : f32
    %591 = vector.broadcast %cst_229 : f32 to vector<8x128xf32>
    %592 = arith.addf %591, %590 : vector<8x128xf32>
    %593 = arith.divf %591, %592 : vector<8x128xf32>
    %594 = math.tanh %588 : vector<8x128xf32>
    %595 = vector.extract_strided_slice %593 {offsets = [0, 0], sizes = [8, 32], strides = [1, 1]} : vector<8x128xf32> to vector<8x32xf32>
    %596 = vector.extract_strided_slice %593 {offsets = [0, 32], sizes = [8, 32], strides = [1, 1]} : vector<8x128xf32> to vector<8x32xf32>
    %597 = vector.extract_strided_slice %594 {offsets = [0, 64], sizes = [8, 32], strides = [1, 1]} : vector<8x128xf32> to vector<8x32xf32>
    %598 = vector.extract_strided_slice %593 {offsets = [0, 96], sizes = [8, 32], strides = [1, 1]} : vector<8x128xf32> to vector<8x32xf32>
    %599 = arith.mulf %596, %564 : vector<8x32xf32>
    %600 = arith.mulf %595, %597 : vector<8x32xf32>
    %601 = arith.addf %599, %600 : vector<8x32xf32>
    %602 = math.tanh %601 : vector<8x32xf32>
    %603 = arith.mulf %598, %602 : vector<8x32xf32>
    %cst_230 = arith.constant dense<0.000000e+00> : vector<8x128xf32>
    %604 = tpu.matmul %603, %96, %cst_230 {dimension_numbers = #tpu.dot_dimension_numbers<[1], [0], [0], [1], [0, 0, 1, 1], [], []>} : vector<8x32xf32>, vector<32x128xf32>, vector<8x128xf32> -> vector<8x128xf32>
    %cst_231 = arith.constant dense<0.000000e+00> : vector<8x128xf32>
    %605 = tpu.matmul %585, %97, %cst_231 {dimension_numbers = #tpu.dot_dimension_numbers<[1], [0], [0], [1], [0, 0, 1, 1], [], []>} : vector<8x32xf32>, vector<32x128xf32>, vector<8x128xf32> -> vector<8x128xf32>
    %606 = arith.addf %604, %605 : vector<8x128xf32>
    %607 = arith.addf %606, %100 : vector<8x128xf32>
    %608 = arith.negf %607 : vector<8x128xf32>
    %609 = math.exp %608 : vector<8x128xf32>
    %cst_232 = arith.constant 1.000000e+00 : f32
    %610 = vector.broadcast %cst_232 : f32 to vector<8x128xf32>
    %611 = arith.addf %610, %609 : vector<8x128xf32>
    %612 = arith.divf %610, %611 : vector<8x128xf32>
    %613 = math.tanh %607 : vector<8x128xf32>
    %614 = vector.extract_strided_slice %612 {offsets = [0, 0], sizes = [8, 32], strides = [1, 1]} : vector<8x128xf32> to vector<8x32xf32>
    %615 = vector.extract_strided_slice %612 {offsets = [0, 32], sizes = [8, 32], strides = [1, 1]} : vector<8x128xf32> to vector<8x32xf32>
    %616 = vector.extract_strided_slice %613 {offsets = [0, 64], sizes = [8, 32], strides = [1, 1]} : vector<8x128xf32> to vector<8x32xf32>
    %617 = vector.extract_strided_slice %612 {offsets = [0, 96], sizes = [8, 32], strides = [1, 1]} : vector<8x128xf32> to vector<8x32xf32>
    %618 = arith.mulf %615, %583 : vector<8x32xf32>
    %619 = arith.mulf %614, %616 : vector<8x32xf32>
    %620 = arith.addf %618, %619 : vector<8x32xf32>
    %621 = math.tanh %620 : vector<8x32xf32>
    %622 = arith.mulf %617, %621 : vector<8x32xf32>
    %c112 = arith.constant 112 : index
    %c0_233 = arith.constant 0 : index
    %623 = vector.load %arg14[%c112, %c0_233] : memref<128x128xf32, #tpu.memory_space<vmem>>, vector<8x128xf32>
    %cst_234 = arith.constant dense<0.000000e+00> : vector<8x128xf32>
    %624 = tpu.matmul %603, %95, %cst_234 {dimension_numbers = #tpu.dot_dimension_numbers<[1], [0], [0], [1], [0, 0, 1, 1], [], []>} : vector<8x32xf32>, vector<32x128xf32>, vector<8x128xf32> -> vector<8x128xf32>
    %625 = arith.addf %623, %624 : vector<8x128xf32>
    %626 = arith.negf %625 : vector<8x128xf32>
    %627 = math.exp %626 : vector<8x128xf32>
    %cst_235 = arith.constant 1.000000e+00 : f32
    %628 = vector.broadcast %cst_235 : f32 to vector<8x128xf32>
    %629 = arith.addf %628, %627 : vector<8x128xf32>
    %630 = arith.divf %628, %629 : vector<8x128xf32>
    %631 = math.tanh %625 : vector<8x128xf32>
    %632 = vector.extract_strided_slice %630 {offsets = [0, 0], sizes = [8, 32], strides = [1, 1]} : vector<8x128xf32> to vector<8x32xf32>
    %633 = vector.extract_strided_slice %630 {offsets = [0, 32], sizes = [8, 32], strides = [1, 1]} : vector<8x128xf32> to vector<8x32xf32>
    %634 = vector.extract_strided_slice %631 {offsets = [0, 64], sizes = [8, 32], strides = [1, 1]} : vector<8x128xf32> to vector<8x32xf32>
    %635 = vector.extract_strided_slice %630 {offsets = [0, 96], sizes = [8, 32], strides = [1, 1]} : vector<8x128xf32> to vector<8x32xf32>
    %636 = arith.mulf %633, %601 : vector<8x32xf32>
    %637 = arith.mulf %632, %634 : vector<8x32xf32>
    %638 = arith.addf %636, %637 : vector<8x32xf32>
    %639 = math.tanh %638 : vector<8x32xf32>
    %640 = arith.mulf %635, %639 : vector<8x32xf32>
    %cst_236 = arith.constant dense<0.000000e+00> : vector<8x128xf32>
    %641 = tpu.matmul %640, %96, %cst_236 {dimension_numbers = #tpu.dot_dimension_numbers<[1], [0], [0], [1], [0, 0, 1, 1], [], []>} : vector<8x32xf32>, vector<32x128xf32>, vector<8x128xf32> -> vector<8x128xf32>
    %cst_237 = arith.constant dense<0.000000e+00> : vector<8x128xf32>
    %642 = tpu.matmul %622, %97, %cst_237 {dimension_numbers = #tpu.dot_dimension_numbers<[1], [0], [0], [1], [0, 0, 1, 1], [], []>} : vector<8x32xf32>, vector<32x128xf32>, vector<8x128xf32> -> vector<8x128xf32>
    %643 = arith.addf %641, %642 : vector<8x128xf32>
    %644 = arith.addf %643, %100 : vector<8x128xf32>
    %645 = arith.negf %644 : vector<8x128xf32>
    %646 = math.exp %645 : vector<8x128xf32>
    %cst_238 = arith.constant 1.000000e+00 : f32
    %647 = vector.broadcast %cst_238 : f32 to vector<8x128xf32>
    %648 = arith.addf %647, %646 : vector<8x128xf32>
    %649 = arith.divf %647, %648 : vector<8x128xf32>
    %650 = math.tanh %644 : vector<8x128xf32>
    %651 = vector.extract_strided_slice %649 {offsets = [0, 0], sizes = [8, 32], strides = [1, 1]} : vector<8x128xf32> to vector<8x32xf32>
    %652 = vector.extract_strided_slice %649 {offsets = [0, 32], sizes = [8, 32], strides = [1, 1]} : vector<8x128xf32> to vector<8x32xf32>
    %653 = vector.extract_strided_slice %650 {offsets = [0, 64], sizes = [8, 32], strides = [1, 1]} : vector<8x128xf32> to vector<8x32xf32>
    %654 = vector.extract_strided_slice %649 {offsets = [0, 96], sizes = [8, 32], strides = [1, 1]} : vector<8x128xf32> to vector<8x32xf32>
    %655 = arith.mulf %652, %620 : vector<8x32xf32>
    %656 = arith.mulf %651, %653 : vector<8x32xf32>
    %657 = arith.addf %655, %656 : vector<8x32xf32>
    %658 = math.tanh %657 : vector<8x32xf32>
    %659 = arith.mulf %654, %658 : vector<8x32xf32>
    %c120 = arith.constant 120 : index
    %c0_239 = arith.constant 0 : index
    %660 = vector.load %arg14[%c120, %c0_239] : memref<128x128xf32, #tpu.memory_space<vmem>>, vector<8x128xf32>
    %cst_240 = arith.constant dense<0.000000e+00> : vector<8x128xf32>
    %661 = tpu.matmul %640, %95, %cst_240 {dimension_numbers = #tpu.dot_dimension_numbers<[1], [0], [0], [1], [0, 0, 1, 1], [], []>} : vector<8x32xf32>, vector<32x128xf32>, vector<8x128xf32> -> vector<8x128xf32>
    %662 = arith.addf %660, %661 : vector<8x128xf32>
    %663 = arith.negf %662 : vector<8x128xf32>
    %664 = math.exp %663 : vector<8x128xf32>
    %cst_241 = arith.constant 1.000000e+00 : f32
    %665 = vector.broadcast %cst_241 : f32 to vector<8x128xf32>
    %666 = arith.addf %665, %664 : vector<8x128xf32>
    %667 = arith.divf %665, %666 : vector<8x128xf32>
    %668 = math.tanh %662 : vector<8x128xf32>
    %669 = vector.extract_strided_slice %667 {offsets = [0, 0], sizes = [8, 32], strides = [1, 1]} : vector<8x128xf32> to vector<8x32xf32>
    %670 = vector.extract_strided_slice %667 {offsets = [0, 32], sizes = [8, 32], strides = [1, 1]} : vector<8x128xf32> to vector<8x32xf32>
    %671 = vector.extract_strided_slice %668 {offsets = [0, 64], sizes = [8, 32], strides = [1, 1]} : vector<8x128xf32> to vector<8x32xf32>
    %672 = vector.extract_strided_slice %667 {offsets = [0, 96], sizes = [8, 32], strides = [1, 1]} : vector<8x128xf32> to vector<8x32xf32>
    %673 = arith.mulf %670, %638 : vector<8x32xf32>
    %674 = arith.mulf %669, %671 : vector<8x32xf32>
    %675 = arith.addf %673, %674 : vector<8x32xf32>
    %676 = math.tanh %675 : vector<8x32xf32>
    %677 = arith.mulf %672, %676 : vector<8x32xf32>
    %cst_242 = arith.constant dense<0.000000e+00> : vector<8x128xf32>
    %678 = tpu.matmul %677, %96, %cst_242 {dimension_numbers = #tpu.dot_dimension_numbers<[1], [0], [0], [1], [0, 0, 1, 1], [], []>} : vector<8x32xf32>, vector<32x128xf32>, vector<8x128xf32> -> vector<8x128xf32>
    %cst_243 = arith.constant dense<0.000000e+00> : vector<8x128xf32>
    %679 = tpu.matmul %659, %97, %cst_243 {dimension_numbers = #tpu.dot_dimension_numbers<[1], [0], [0], [1], [0, 0, 1, 1], [], []>} : vector<8x32xf32>, vector<32x128xf32>, vector<8x128xf32> -> vector<8x128xf32>
    %680 = arith.addf %678, %679 : vector<8x128xf32>
    %681 = arith.addf %680, %100 : vector<8x128xf32>
    %682 = arith.negf %681 : vector<8x128xf32>
    %683 = math.exp %682 : vector<8x128xf32>
    %cst_244 = arith.constant 1.000000e+00 : f32
    %684 = vector.broadcast %cst_244 : f32 to vector<8x128xf32>
    %685 = arith.addf %684, %683 : vector<8x128xf32>
    %686 = arith.divf %684, %685 : vector<8x128xf32>
    %687 = math.tanh %681 : vector<8x128xf32>
    %688 = vector.extract_strided_slice %686 {offsets = [0, 0], sizes = [8, 32], strides = [1, 1]} : vector<8x128xf32> to vector<8x32xf32>
    %689 = vector.extract_strided_slice %686 {offsets = [0, 32], sizes = [8, 32], strides = [1, 1]} : vector<8x128xf32> to vector<8x32xf32>
    %690 = vector.extract_strided_slice %687 {offsets = [0, 64], sizes = [8, 32], strides = [1, 1]} : vector<8x128xf32> to vector<8x32xf32>
    %691 = vector.extract_strided_slice %686 {offsets = [0, 96], sizes = [8, 32], strides = [1, 1]} : vector<8x128xf32> to vector<8x32xf32>
    %692 = arith.mulf %689, %657 : vector<8x32xf32>
    %693 = arith.mulf %688, %690 : vector<8x32xf32>
    %694 = arith.addf %692, %693 : vector<8x32xf32>
    %695 = math.tanh %694 : vector<8x32xf32>
    %696 = arith.mulf %691, %695 : vector<8x32xf32>
    %c0_245 = arith.constant 0 : index
    %c0_246 = arith.constant 0 : index
    %697 = vector.load %arg9[%c0_245, %c0_246] : memref<32x4xf32, #tpu.memory_space<vmem>>, vector<32x4xf32>
    %cst_247 = arith.constant dense<0.000000e+00> : vector<8x4xf32>
    %698 = tpu.matmul %696, %697, %cst_247 {dimension_numbers = #tpu.dot_dimension_numbers<[1], [0], [0], [1], [0, 0, 1, 1], [], []>} : vector<8x32xf32>, vector<32x4xf32>, vector<8x4xf32> -> vector<8x4xf32>
    %c0_248 = arith.constant 0 : index
    %c0_249 = arith.constant 0 : index
    %699 = vector.load %arg10[%c0_248, %c0_249] : memref<1x4xf32, #tpu.memory_space<vmem>>, vector<1x4xf32>
    %700 = vector.broadcast %699 : vector<1x4xf32> to vector<8x4xf32>
    %701 = arith.addf %698, %700 : vector<8x4xf32>
    %c0_250 = arith.constant 0 : index
    %c0_251 = arith.constant 0 : index
    %702 = vector.load %arg11[%c0_250, %c0_251] : memref<8x4xf32, #tpu.memory_space<vmem>>, vector<8x4xf32>
    tpu.vector_store %arg11[%c0_250, %c0_251], %701 {strides = array<i32>} : memref<8x4xf32, #tpu.memory_space<vmem>>, vector<8x4xf32>,
    return
  }
}

</mosaic_0001>

<llo_original>
// kernel: model_forward.1
$region0: #{model_forward.1}
  #allocation0 [shape = 'u32[]', space=smem, size = 0x4, offset = 0x4, fixed_abs, tag = 'smem constant byte address 0x4 - core index']
  #allocation1 [shape = 'u32[144,128]{1,0:T(1,128)}', space=vmem, size = 0x12000, scoped, tag = 'internal scratch']
  #allocation2 [shape = 'f32[160,32]{1,0:T(8,128)}', space=vmem, size = 0x14000, scoped, tag = 'scratch operand']
  #allocation3 [shape = 'f32[128,160]{1,0:T(8,128)}', space=vmem, size = 0x20000, scoped, tag = 'scratch operand']
  #allocation4 [shape = 'f32[128,128]{1,0:T(8,128)}', space=vmem, size = 0x10000, scoped, tag = 'scratch operand']
  %s0 = inlined_call_operand.vmem [shape: f32[128,32], index: 0, kind: input, shape index: {}]
  %s1 = inlined_call_operand.vmem [shape: f32[4,160,32], index: 1, kind: input, shape index: {}]
  %s2 = inlined_call_operand.vmem [shape: f32[4,1,32], index: 2, kind: input, shape index: {}]
  %s3 = inlined_call_operand.vmem [shape: f32[32,128], index: 3, kind: input, shape index: {}]
  %s4 = inlined_call_operand.vmem [shape: f32[32,128], index: 4, kind: input, shape index: {}]
  %s5 = inlined_call_operand.vmem [shape: f32[1,128], index: 5, kind: input, shape index: {}]
  %s6 = inlined_call_operand.vmem [shape: f32[32,128], index: 6, kind: input, shape index: {}]
  %s7 = inlined_call_operand.vmem [shape: f32[32,128], index: 7, kind: input, shape index: {}]
  %s8 = inlined_call_operand.vmem [shape: f32[1,128], index: 8, kind: input, shape index: {}]
  %s9 = inlined_call_operand.vmem [shape: f32[32,4], index: 9, kind: input, shape index: {}]
  %s10 = inlined_call_operand.vmem [shape: f32[1,4], index: 10, kind: input, shape index: {}]
  %s11 = inlined_call_operand.vmem [shape: f32[8,4], index: 11, kind: output, shape index: {}]
  %s12 = sld [smem:[#allocation0]]
  $region54: #{model_forward.1} parent=0
    _
  %s14 = ssub.s32 1, %s12
  %s15 = scalar_select 0, %s14, %s12
  // Predicated region
  $region2: #{model_forward.1} parent=0 // pred_check
    _
  $region3: #{model_forward.1} parent=0 // pred_check_branch
    %17 = sbr.rel (0) target = $region5
  $region4: #{model_forward.1} parent=0 // pred_region
    _
  $region5: #{model_forward.1} parent=0 // pred_fallthru
    _
  // Predicated region
  $region6: #{model_forward.1} parent=0 // pred_check
    _
  $region7: #{model_forward.1} parent=0 // pred_check_branch
    %19 = sbr.rel (0) target = $region9
  $region8: #{model_forward.1} parent=0 // pred_region
    _
  $region9: #{model_forward.1} parent=0 // pred_fallthru
    _
  // Predicated region
  $region10: #{model_forward.1} parent=0 // pred_check
    _
  $region11: #{model_forward.1} parent=0 // pred_check_branch
    %21 = sbr.rel (0) target = $region13
  $region12: #{model_forward.1} parent=0 // pred_region
    _
  $region13: #{model_forward.1} parent=0 // pred_fallthru
    _
  // Predicated region
  $region14: #{model_forward.1} parent=0 // pred_check
    _
  $region15: #{model_forward.1} parent=0 // pred_check_branch
    %23 = sbr.rel (0) target = $region17
  $region16: #{model_forward.1} parent=0 // pred_region
    _
  $region17: #{model_forward.1} parent=0 // pred_fallthru
    _
  // Predicated region
  $region18: #{model_forward.1} parent=0 // pred_check
    _
  $region19: #{model_forward.1} parent=0 // pred_check_branch
    %25 = sbr.rel (0) target = $region21
  $region20: #{model_forward.1} parent=0 // pred_region
    _
  $region21: #{model_forward.1} parent=0 // pred_fallthru
    _
  // Predicated region
  $region22: #{model_forward.1} parent=0 // pred_check
    _
  $region23: #{model_forward.1} parent=0 // pred_check_branch
    %27 = sbr.rel (0) target = $region25
  $region24: #{model_forward.1} parent=0 // pred_region
    _
  $region25: #{model_forward.1} parent=0 // pred_fallthru
    _
  // Predicated region
  $region26: #{model_forward.1} parent=0 // pred_check
    _
  $region27: #{model_forward.1} parent=0 // pred_check_branch
    %29 = sbr.rel (0) target = $region29
  $region28: #{model_forward.1} parent=0 // pred_region
    _
  $region29: #{model_forward.1} parent=0 // pred_fallthru
    _
  // Predicated region
  $region30: #{model_forward.1} parent=0 // pred_check
    _
  $region31: #{model_forward.1} parent=0 // pred_check_branch
    %31 = sbr.rel (0) target = $region33
  $region32: #{model_forward.1} parent=0 // pred_region
    _
  $region33: #{model_forward.1} parent=0 // pred_fallthru
    _
  // Predicated region
  $region34: #{model_forward.1} parent=0 // pred_check
    _
  $region35: #{model_forward.1} parent=0 // pred_check_branch
    %33 = sbr.rel (0) target = $region37
  $region36: #{model_forward.1} parent=0 // pred_region
    _
  $region37: #{model_forward.1} parent=0 // pred_fallthru
    _
  // Predicated region
  $region38: #{model_forward.1} parent=0 // pred_check
    _
  $region39: #{model_forward.1} parent=0 // pred_check_branch
    %35 = sbr.rel (0) target = $region41
  $region40: #{model_forward.1} parent=0 // pred_region
    _
  $region41: #{model_forward.1} parent=0 // pred_fallthru
    _
  // Predicated region
  $region42: #{model_forward.1} parent=0 // pred_check
    _
  $region43: #{model_forward.1} parent=0 // pred_check_branch
    %37 = sbr.rel (0) target = $region45
  $region44: #{model_forward.1} parent=0 // pred_region
    _
  $region45: #{model_forward.1} parent=0 // pred_fallthru
    _
  %vm38 = vcmask 261120
  %39 = vst.msk [vmem:[#allocation2] sm:$0xff] %vm38, 0.0
  %40 = vst.msk [vmem:[#allocation2 + $0x8] sm:$0xff] %vm38, 0.0
  %41 = vst.msk [vmem:[#allocation2 + $0x90] sm:$0xff] %vm38, 0.0
  %42 = vst.msk [vmem:[#allocation2 + $0x98] sm:$0xff] %vm38, 0.0
  %v43 = vld [vmem:[%s0] sm:$0xff]
  %v44 = vld [vmem:[%s0 + $0x8] sm:$0xff]
  %v45 = vld [vmem:[%s0 + $0x10] sm:$0xff]
  %v46 = vld [vmem:[%s0 + $0x18] sm:$0xff]
  %v47 = vld [vmem:[%s0 + $0x20] sm:$0xff]
  %v48 = vld [vmem:[%s0 + $0x28] sm:$0xff]
  %v49 = vld [vmem:[%s0 + $0x30] sm:$0xff]
  %v50 = vld [vmem:[%s0 + $0x38] sm:$0xff]
  %v51 = vld [vmem:[%s0 + $0x40] sm:$0xff]
  %v52 = vld [vmem:[%s0 + $0x48] sm:$0xff]
  %v53 = vld [vmem:[%s0 + $0x50] sm:$0xff]
  %v54 = vld [vmem:[%s0 + $0x58] sm:$0xff]
  %v55 = vld [vmem:[%s0 + $0x60] sm:$0xff]
  %v56 = vld [vmem:[%s0 + $0x68] sm:$0xff]
  %v57 = vld [vmem:[%s0 + $0x70] sm:$0xff]
  %v58 = vld [vmem:[%s0 + $0x78] sm:$0xff]
  %59 = vst.msk [vmem:[#allocation2 + $0x10] sm:$0xff] %vm38, %v43
  %60 = vst.msk [vmem:[#allocation2 + $0x18] sm:$0xff] %vm38, %v44
  %61 = vst.msk [vmem:[#allocation2 + $0x20] sm:$0xff] %vm38, %v45
  %62 = vst.msk [vmem:[#allocation2 + $0x28] sm:$0xff] %vm38, %v46
  %63 = vst.msk [vmem:[#allocation2 + $0x30] sm:$0xff] %vm38, %v47
  %64 = vst.msk [vmem:[#allocation2 + $0x38] sm:$0xff] %vm38, %v48
  %65 = vst.msk [vmem:[#allocation2 + $0x40] sm:$0xff] %vm38, %v49
  %66 = vst.msk [vmem:[#allocation2 + $0x48] sm:$0xff] %vm38, %v50
  %67 = vst.msk [vmem:[#allocation2 + $0x50] sm:$0xff] %vm38, %v51
  %68 = vst.msk [vmem:[#allocation2 + $0x58] sm:$0xff] %vm38, %v52
  %69 = vst.msk [vmem:[#allocation2 + $0x60] sm:$0xff] %vm38, %v53
  %70 = vst.msk [vmem:[#allocation2 + $0x68] sm:$0xff] %vm38, %v54
  %71 = vst.msk [vmem:[#allocation2 + $0x70] sm:$0xff] %vm38, %v55
  %72 = vst.msk [vmem:[#allocation2 + $0x78] sm:$0xff] %vm38, %v56
  %73 = vst.msk [vmem:[#allocation2 + $0x80] sm:$0xff] %vm38, %v57
  %74 = vst.msk [vmem:[#allocation2 + $0x88] sm:$0xff] %vm38, %v58
  %v75 = vld [vmem:[#allocation2] sm:$0xff]
  %v76 = vld [vmem:[#allocation2 + $0x8] sm:$0xff]
  %v77 = vld [vmem:[#allocation2 + $0x10] sm:$0xff]
  %v78 = vld [vmem:[#allocation2 + $0x18] sm:$0xff]
  %v79 = vld [vmem:[#allocation2 + $0x20] sm:$0xff]
  %v80 = vld [vmem:[#allocation2 + $0x28] sm:$0xff]
  %v81 = vld [vmem:[#allocation2 + $0x30] sm:$0xff]
  %v82 = vld [vmem:[#allocation2 + $0x38] sm:$0xff]
  %v83 = vld [vmem:[#allocation2 + $0x40] sm:$0xff]
  %v84 = vld [vmem:[#allocation2 + $0x48] sm:$0xff]
  %v85 = vld [vmem:[#allocation2 + $0x50] sm:$0xff]
  %v86 = vld [vmem:[#allocation2 + $0x58] sm:$0xff]
  %v87 = vld [vmem:[#allocation2 + $0x60] sm:$0xff]
  %v88 = vld [vmem:[#allocation2 + $0x68] sm:$0xff]
  %v89 = vld [vmem:[#allocation2 + $0x70] sm:$0xff]
  %v90 = vld [vmem:[#allocation2 + $0x78] sm:$0xff]
  %91 = vst.msk [vmem:[#allocation3] sm:$0xff] %vm38, %v75
  %92 = vst.msk [vmem:[#allocation3 + $0x10] sm:$0xff] %vm38, %v76
  %93 = vst.msk [vmem:[#allocation3 + $0x20] sm:$0xff] %vm38, %v77
  %94 = vst.msk [vmem:[#allocation3 + $0x30] sm:$0xff] %vm38, %v78
  %95 = vst.msk [vmem:[#allocation3 + $0x40] sm:$0xff] %vm38, %v79
  %96 = vst.msk [vmem:[#allocation3 + $0x50] sm:$0xff] %vm38, %v80
  %97 = vst.msk [vmem:[#allocation3 + $0x60] sm:$0xff] %vm38, %v81
  %98 = vst.msk [vmem:[#allocation3 + $0x70] sm:$0xff] %vm38, %v82
  %99 = vst.msk [vmem:[#allocation3 + $0x80] sm:$0xff] %vm38, %v83
  %100 = vst.msk [vmem:[#allocation3 + $0x90] sm:$0xff] %vm38, %v84
  %101 = vst.msk [vmem:[#allocation3 + $0xa0] sm:$0xff] %vm38, %v85
  %102 = vst.msk [vmem:[#allocation3 + $0xb0] sm:$0xff] %vm38, %v86
  %103 = vst.msk [vmem:[#allocation3 + $0xc0] sm:$0xff] %vm38, %v87
  %104 = vst.msk [vmem:[#allocation3 + $0xd0] sm:$0xff] %vm38, %v88
  %105 = vst.msk [vmem:[#allocation3 + $0xe0] sm:$0xff] %vm38, %v89
  %106 = vst.msk [vmem:[#allocation3 + $0xf0] sm:$0xff] %vm38, %v90
  %v107 = vld [vmem:[#allocation2 + $0x8] sm:$0xff]
  %v108 = vld [vmem:[#allocation2 + $0x10] sm:$0xff]
  %v109 = vld [vmem:[#allocation2 + $0x18] sm:$0xff]
  %v110 = vld [vmem:[#allocation2 + $0x20] sm:$0xff]
  %v111 = vld [vmem:[#allocation2 + $0x28] sm:$0xff]
  %v112 = vld [vmem:[#allocation2 + $0x30] sm:$0xff]
  %v113 = vld [vmem:[#allocation2 + $0x38] sm:$0xff]
  %v114 = vld [vmem:[#allocation2 + $0x40] sm:$0xff]
  %v115 = vld [vmem:[#allocation2 + $0x48] sm:$0xff]
  %v116 = vld [vmem:[#allocation2 + $0x50] sm:$0xff]
  %v117 = vld [vmem:[#allocation2 + $0x58] sm:$0xff]
  %v118 = vld [vmem:[#allocation2 + $0x60] sm:$0xff]
  %v119 = vld [vmem:[#allocation2 + $0x68] sm:$0xff]
  %v120 = vld [vmem:[#allocation2 + $0x70] sm:$0xff]
  %v121 = vld [vmem:[#allocation2 + $0x78] sm:$0xff]
  %v122 = vld [vmem:[#allocation2 + $0x80] sm:$0xff]
  %139 = vrot.lane.b32.xlu0 %v107, 32
  %v140 = vpop.permute.xlu0 %139
  %141 = vrot.lane.b32.xlu0 %v108, 32
  %v142 = vpop.permute.xlu0 %141
  %143 = vrot.lane.b32.xlu0 %v109, 32
  %v144 = vpop.permute.xlu0 %143
  %145 = vrot.lane.b32.xlu0 %v110, 32
  %v146 = vpop.permute.xlu0 %145
  %147 = vrot.lane.b32.xlu0 %v111, 32
  %v148 = vpop.permute.xlu0 %147
  %149 = vrot.lane.b32.xlu0 %v112, 32
  %v150 = vpop.permute.xlu0 %149
  %151 = vrot.lane.b32.xlu0 %v113, 32
  %v152 = vpop.permute.xlu0 %151
  %153 = vrot.lane.b32.xlu0 %v114, 32
  %v154 = vpop.permute.xlu0 %153
  %155 = vrot.lane.b32.xlu0 %v115, 32
  %v156 = vpop.permute.xlu0 %155
  %157 = vrot.lane.b32.xlu0 %v116, 32
  %v158 = vpop.permute.xlu0 %157
  %159 = vrot.lane.b32.xlu0 %v117, 32
  %v160 = vpop.permute.xlu0 %159
  %161 = vrot.lane.b32.xlu0 %v118, 32
  %v162 = vpop.permute.xlu0 %161
  %163 = vrot.lane.b32.xlu0 %v119, 32
  %v164 = vpop.permute.xlu0 %163
  %165 = vrot.lane.b32.xlu0 %v120, 32
  %v166 = vpop.permute.xlu0 %165
  %167 = vrot.lane.b32.xlu0 %v121, 32
  %v168 = vpop.permute.xlu0 %167
  %169 = vrot.lane.b32.xlu0 %v122, 32
  %v170 = vpop.permute.xlu0 %169
  %vm187 = vcmask 523520
  %188 = vst.msk [vmem:[#allocation3] sm:$0xff] %vm187, %v140
  %189 = vst.msk [vmem:[#allocation3 + $0x10] sm:$0xff] %vm187, %v142
  %190 = vst.msk [vmem:[#allocation3 + $0x20] sm:$0xff] %vm187, %v144
  %191 = vst.msk [vmem:[#allocation3 + $0x30] sm:$0xff] %vm187, %v146
  %192 = vst.msk [vmem:[#allocation3 + $0x40] sm:$0xff] %vm187, %v148
  %193 = vst.msk [vmem:[#allocation3 + $0x50] sm:$0xff] %vm187, %v150
  %194 = vst.msk [vmem:[#allocation3 + $0x60] sm:$0xff] %vm187, %v152
  %195 = vst.msk [vmem:[#allocation3 + $0x70] sm:$0xff] %vm187, %v154
  %196 = vst.msk [vmem:[#allocation3 + $0x80] sm:$0xff] %vm187, %v156
  %197 = vst.msk [vmem:[#allocation3 + $0x90] sm:$0xff] %vm187, %v158
  %198 = vst.msk [vmem:[#allocation3 + $0xa0] sm:$0xff] %vm187, %v160
  %199 = vst.msk [vmem:[#allocation3 + $0xb0] sm:$0xff] %vm187, %v162
  %200 = vst.msk [vmem:[#allocation3 + $0xc0] sm:$0xff] %vm187, %v164
  %201 = vst.msk [vmem:[#allocation3 + $0xd0] sm:$0xff] %vm187, %v166
  %202 = vst.msk [vmem:[#allocation3 + $0xe0] sm:$0xff] %vm187, %v168
  %203 = vst.msk [vmem:[#allocation3 + $0xf0] sm:$0xff] %vm187, %v170
  %v204 = vld [vmem:[#allocation2 + $0x10] sm:$0xff]
  %v205 = vld [vmem:[#allocation2 + $0x18] sm:$0xff]
  %v206 = vld [vmem:[#allocation2 + $0x20] sm:$0xff]
  %v207 = vld [vmem:[#allocation2 + $0x28] sm:$0xff]
  %v208 = vld [vmem:[#allocation2 + $0x30] sm:$0xff]
  %v209 = vld [vmem:[#allocation2 + $0x38] sm:$0xff]
  %v210 = vld [vmem:[#allocation2 + $0x40] sm:$0xff]
  %v211 = vld [vmem:[#allocation2 + $0x48] sm:$0xff]
  %v212 = vld [vmem:[#allocation2 + $0x50] sm:$0xff]
  %v213 = vld [vmem:[#allocation2 + $0x58] sm:$0xff]
  %v214 = vld [vmem:[#allocation2 + $0x60] sm:$0xff]
  %v215 = vld [vmem:[#allocation2 + $0x68] sm:$0xff]
  %v216 = vld [vmem:[#allocation2 + $0x70] sm:$0xff]
  %v217 = vld [vmem:[#allocation2 + $0x78] sm:$0xff]
  %v218 = vld [vmem:[#allocation2 + $0x80] sm:$0xff]
  %v219 = vld [vmem:[#allocation2 + $0x88] sm:$0xff]
  %236 = vrot.lane.b32.xlu0 %v204, 64
  %v237 = vpop.permute.xlu0 %236
  %238 = vrot.lane.b32.xlu0 %v205, 64
  %v239 = vpop.permute.xlu0 %238
  %240 = vrot.lane.b32.xlu0 %v206, 64
  %v241 = vpop.permute.xlu0 %240
  %242 = vrot.lane.b32.xlu0 %v207, 64
  %v243 = vpop.permute.xlu0 %242
  %244 = vrot.lane.b32.xlu0 %v208, 64
  %v245 = vpop.permute.xlu0 %244
  %246 = vrot.lane.b32.xlu0 %v209, 64
  %v247 = vpop.permute.xlu0 %246
  %248 = vrot.lane.b32.xlu0 %v210, 64
  %v249 = vpop.permute.xlu0 %248
  %250 = vrot.lane.b32.xlu0 %v211, 64
  %v251 = vpop.permute.xlu0 %250
  %252 = vrot.lane.b32.xlu0 %v212, 64
  %v253 = vpop.permute.xlu0 %252
  %254 = vrot.lane.b32.xlu0 %v213, 64
  %v255 = vpop.permute.xlu0 %254
  %256 = vrot.lane.b32.xlu0 %v214, 64
  %v257 = vpop.permute.xlu0 %256
  %258 = vrot.lane.b32.xlu0 %v215, 64
  %v259 = vpop.permute.xlu0 %258
  %260 = vrot.lane.b32.xlu0 %v216, 64
  %v261 = vpop.permute.xlu0 %260
  %262 = vrot.lane.b32.xlu0 %v217, 64
  %v263 = vpop.permute.xlu0 %262
  %264 = vrot.lane.b32.xlu0 %v218, 64
  %v265 = vpop.permute.xlu0 %264
  %266 = vrot.lane.b32.xlu0 %v219, 64
  %v267 = vpop.permute.xlu0 %266
  %vm284 = vcmask 785920
  %285 = vst.msk [vmem:[#allocation3] sm:$0xff] %vm284, %v237
  %286 = vst.msk [vmem:[#allocation3 + $0x10] sm:$0xff] %vm284, %v239
  %287 = vst.msk [vmem:[#allocation3 + $0x20] sm:$0xff] %vm284, %v241
  %288 = vst.msk [vmem:[#allocation3 + $0x30] sm:$0xff] %vm284, %v243
  %289 = vst.msk [vmem:[#allocation3 + $0x40] sm:$0xff] %vm284, %v245
  %290 = vst.msk [vmem:[#allocation3 + $0x50] sm:$0xff] %vm284, %v247
  %291 = vst.msk [vmem:[#allocation3 + $0x60] sm:$0xff] %vm284, %v249
  %292 = vst.msk [vmem:[#allocation3 + $0x70] sm:$0xff] %vm284, %v251
  %293 = vst.msk [vmem:[#allocation3 + $0x80] sm:$0xff] %vm284, %v253
  %294 = vst.msk [vmem:[#allocation3 + $0x90] sm:$0xff] %vm284, %v255
  %295 = vst.msk [vmem:[#allocation3 + $0xa0] sm:$0xff] %vm284, %v257
  %296 = vst.msk [vmem:[#allocation3 + $0xb0] sm:$0xff] %vm284, %v259
  %297 = vst.msk [vmem:[#allocation3 + $0xc0] sm:$0xff] %vm284, %v261
  %298 = vst.msk [vmem:[#allocation3 + $0xd0] sm:$0xff] %vm284, %v263
  %299 = vst.msk [vmem:[#allocation3 + $0xe0] sm:$0xff] %vm284, %v265
  %300 = vst.msk [vmem:[#allocation3 + $0xf0] sm:$0xff] %vm284, %v267
  %v301 = vld [vmem:[#allocation2 + $0x18] sm:$0xff]
  %v302 = vld [vmem:[#allocation2 + $0x20] sm:$0xff]
  %v303 = vld [vmem:[#allocation2 + $0x28] sm:$0xff]
  %v304 = vld [vmem:[#allocation2 + $0x30] sm:$0xff]
  %v305 = vld [vmem:[#allocation2 + $0x38] sm:$0xff]
  %v306 = vld [vmem:[#allocation2 + $0x40] sm:$0xff]
  %v307 = vld [vmem:[#allocation2 + $0x48] sm:$0xff]
  %v308 = vld [vmem:[#allocation2 + $0x50] sm:$0xff]
  %v309 = vld [vmem:[#allocation2 + $0x58] sm:$0xff]
  %v310 = vld [vmem:[#allocation2 + $0x60] sm:$0xff]
  %v311 = vld [vmem:[#allocation2 + $0x68] sm:$0xff]
  %v312 = vld [vmem:[#allocation2 + $0x70] sm:$0xff]
  %v313 = vld [vmem:[#allocation2 + $0x78] sm:$0xff]
  %v314 = vld [vmem:[#allocation2 + $0x80] sm:$0xff]
  %v315 = vld [vmem:[#allocation2 + $0x88] sm:$0xff]
  %v316 = vld [vmem:[#allocation2 + $0x90] sm:$0xff]
  %333 = vrot.lane.b32.xlu0 %v301, 96
  %v334 = vpop.permute.xlu0 %333
  %335 = vrot.lane.b32.xlu0 %v302, 96
  %v336 = vpop.permute.xlu0 %335
  %337 = vrot.lane.b32.xlu0 %v303, 96
  %v338 = vpop.permute.xlu0 %337
  %339 = vrot.lane.b32.xlu0 %v304, 96
  %v340 = vpop.permute.xlu0 %339
  %341 = vrot.lane.b32.xlu0 %v305, 96
  %v342 = vpop.permute.xlu0 %341
  %343 = vrot.lane.b32.xlu0 %v306, 96
  %v344 = vpop.permute.xlu0 %343
  %345 = vrot.lane.b32.xlu0 %v307, 96
  %v346 = vpop.permute.xlu0 %345
  %347 = vrot.lane.b32.xlu0 %v308, 96
  %v348 = vpop.permute.xlu0 %347
  %349 = vrot.lane.b32.xlu0 %v309, 96
  %v350 = vpop.permute.xlu0 %349
  %351 = vrot.lane.b32.xlu0 %v310, 96
  %v352 = vpop.permute.xlu0 %351
  %353 = vrot.lane.b32.xlu0 %v311, 96
  %v354 = vpop.permute.xlu0 %353
  %355 = vrot.lane.b32.xlu0 %v312, 96
  %v356 = vpop.permute.xlu0 %355
  %357 = vrot.lane.b32.xlu0 %v313, 96
  %v358 = vpop.permute.xlu0 %357
  %359 = vrot.lane.b32.xlu0 %v314, 96
  %v360 = vpop.permute.xlu0 %359
  %361 = vrot.lane.b32.xlu0 %v315, 96
  %v362 = vpop.permute.xlu0 %361
  %363 = vrot.lane.b32.xlu0 %v316, 96
  %v364 = vpop.permute.xlu0 %363
  %vm381 = vcmask 1048320
  %382 = vst.msk [vmem:[#allocation3] sm:$0xff] %vm381, %v334
  %383 = vst.msk [vmem:[#allocation3 + $0x10] sm:$0xff] %vm381, %v336
  %384 = vst.msk [vmem:[#allocation3 + $0x20] sm:$0xff] %vm381, %v338
  %385 = vst.msk [vmem:[#allocation3 + $0x30] sm:$0xff] %vm381, %v340
  %386 = vst.msk [vmem:[#allocation3 + $0x40] sm:$0xff] %vm381, %v342
  %387 = vst.msk [vmem:[#allocation3 + $0x50] sm:$0xff] %vm381, %v344
  %388 = vst.msk [vmem:[#allocation3 + $0x60] sm:$0xff] %vm381, %v346
  %389 = vst.msk [vmem:[#allocation3 + $0x70] sm:$0xff] %vm381, %v348
  %390 = vst.msk [vmem:[#allocation3 + $0x80] sm:$0xff] %vm381, %v350
  %391 = vst.msk [vmem:[#allocation3 + $0x90] sm:$0xff] %vm381, %v352
  %392 = vst.msk [vmem:[#allocation3 + $0xa0] sm:$0xff] %vm381, %v354
  %393 = vst.msk [vmem:[#allocation3 + $0xb0] sm:$0xff] %vm381, %v356
  %394 = vst.msk [vmem:[#allocation3 + $0xc0] sm:$0xff] %vm381, %v358
  %395 = vst.msk [vmem:[#allocation3 + $0xd0] sm:$0xff] %vm381, %v360
  %396 = vst.msk [vmem:[#allocation3 + $0xe0] sm:$0xff] %vm381, %v362
  %397 = vst.msk [vmem:[#allocation3 + $0xf0] sm:$0xff] %vm381, %v364
  %v398 = vld [vmem:[#allocation2 + $0x20] sm:$0xff]
  %v399 = vld [vmem:[#allocation2 + $0x28] sm:$0xff]
  %v400 = vld [vmem:[#allocation2 + $0x30] sm:$0xff]
  %v401 = vld [vmem:[#allocation2 + $0x38] sm:$0xff]
  %v402 = vld [vmem:[#allocation2 + $0x40] sm:$0xff]
  %v403 = vld [vmem:[#allocation2 + $0x48] sm:$0xff]
  %v404 = vld [vmem:[#allocation2 + $0x50] sm:$0xff]
  %v405 = vld [vmem:[#allocation2 + $0x58] sm:$0xff]
  %v406 = vld [vmem:[#allocation2 + $0x60] sm:$0xff]
  %v407 = vld [vmem:[#allocation2 + $0x68] sm:$0xff]
  %v408 = vld [vmem:[#allocation2 + $0x70] sm:$0xff]
  %v409 = vld [vmem:[#allocation2 + $0x78] sm:$0xff]
  %v410 = vld [vmem:[#allocation2 + $0x80] sm:$0xff]
  %v411 = vld [vmem:[#allocation2 + $0x88] sm:$0xff]
  %v412 = vld [vmem:[#allocation2 + $0x90] sm:$0xff]
  %v413 = vld [vmem:[#allocation2 + $0x98] sm:$0xff]
  %414 = vst.msk [vmem:[#allocation3 + $0x8] sm:$0xff] %vm38, %v398
  %415 = vst.msk [vmem:[#allocation3 + $0x18] sm:$0xff] %vm38, %v399
  %416 = vst.msk [vmem:[#allocation3 + $0x28] sm:$0xff] %vm38, %v400
  %417 = vst.msk [vmem:[#allocation3 + $0x38] sm:$0xff] %vm38, %v401
  %418 = vst.msk [vmem:[#allocation3 + $0x48] sm:$0xff] %vm38, %v402
  %419 = vst.msk [vmem:[#allocation3 + $0x58] sm:$0xff] %vm38, %v403
  %420 = vst.msk [vmem:[#allocation3 + $0x68] sm:$0xff] %vm38, %v404
  %421 = vst.msk [vmem:[#allocation3 + $0x78] sm:$0xff] %vm38, %v405
  %422 = vst.msk [vmem:[#allocation3 + $0x88] sm:$0xff] %vm38, %v406
  %423 = vst.msk [vmem:[#allocation3 + $0x98] sm:$0xff] %vm38, %v407
  %424 = vst.msk [vmem:[#allocation3 + $0xa8] sm:$0xff] %vm38, %v408
  %425 = vst.msk [vmem:[#allocation3 + $0xb8] sm:$0xff] %vm38, %v409
  %426 = vst.msk [vmem:[#allocation3 + $0xc8] sm:$0xff] %vm38, %v410
  %427 = vst.msk [vmem:[#allocation3 + $0xd8] sm:$0xff] %vm38, %v411
  %428 = vst.msk [vmem:[#allocation3 + $0xe8] sm:$0xff] %vm38, %v412
  %429 = vst.msk [vmem:[#allocation3 + $0xf8] sm:$0xff] %vm38, %v413
  %v430 = vld [vmem:[#allocation3] sm:$0xff]
  %v431 = vld [vmem:[#allocation3 + $0x8] sm:$0xff]
  %v432 = vld [vmem:[#allocation3 + $0x10] sm:$0xff]
  %v433 = vld [vmem:[#allocation3 + $0x18] sm:$0xff]
  %v434 = vld [vmem:[#allocation3 + $0x20] sm:$0xff]
  %v435 = vld [vmem:[#allocation3 + $0x28] sm:$0xff]
  %v436 = vld [vmem:[#allocation3 + $0x30] sm:$0xff]
  %v437 = vld [vmem:[#allocation3 + $0x38] sm:$0xff]
  %v438 = vld [vmem:[#allocation3 + $0x40] sm:$0xff]
  %v439 = vld [vmem:[#allocation3 + $0x48] sm:$0xff]
  %v440 = vld [vmem:[#allocation3 + $0x50] sm:$0xff]
  %v441 = vld [vmem:[#allocation3 + $0x58] sm:$0xff]
  %v442 = vld [vmem:[#allocation3 + $0x60] sm:$0xff]
  %v443 = vld [vmem:[#allocation3 + $0x68] sm:$0xff]
  %v444 = vld [vmem:[#allocation3 + $0x70] sm:$0xff]
  %v445 = vld [vmem:[#allocation3 + $0x78] sm:$0xff]
  %v446 = vld [vmem:[#allocation3 + $0x80] sm:$0xff]
  %v447 = vld [vmem:[#allocation3 + $0x88] sm:$0xff]
  %v448 = vld [vmem:[#allocation3 + $0x90] sm:$0xff]
  %v449 = vld [vmem:[#allocation3 + $0x98] sm:$0xff]
  %v450 = vld [vmem:[#allocation3 + $0xa0] sm:$0xff]
  %v451 = vld [vmem:[#allocation3 + $0xa8] sm:$0xff]
  %v452 = vld [vmem:[#allocation3 + $0xb0] sm:$0xff]
  %v453 = vld [vmem:[#allocation3 + $0xb8] sm:$0xff]
  %v454 = vld [vmem:[#allocation3 + $0xc0] sm:$0xff]
  %v455 = vld [vmem:[#allocation3 + $0xc8] sm:$0xff]
  %v456 = vld [vmem:[#allocation3 + $0xd0] sm:$0xff]
  %v457 = vld [vmem:[#allocation3 + $0xd8] sm:$0xff]
  %v458 = vld [vmem:[#allocation3 + $0xe0] sm:$0xff]
  %v459 = vld [vmem:[#allocation3 + $0xe8] sm:$0xff]
  %v460 = vld [vmem:[#allocation3 + $0xf0] sm:$0xff]
  %v461 = vld [vmem:[#allocation3 + $0xf8] sm:$0xff]
  %v462 = vld [vmem:[%s1] sm:$0xff]
  %v463 = vld [vmem:[%s1 + $0x8] sm:$0xff]
  %v464 = vld [vmem:[%s1 + $0x10] sm:$0xff]
  %v465 = vld [vmem:[%s1 + $0x18] sm:$0xff]
  %v466 = vld [vmem:[%s1 + $0x20] sm:$0xff]
  %v467 = vld [vmem:[%s1 + $0x28] sm:$0xff]
  %v468 = vld [vmem:[%s1 + $0x30] sm:$0xff]
  %v469 = vld [vmem:[%s1 + $0x38] sm:$0xff]
  %v470 = vld [vmem:[%s1 + $0x40] sm:$0xff]
  %v471 = vld [vmem:[%s1 + $0x48] sm:$0xff]
  %v472 = vld [vmem:[%s1 + $0x50] sm:$0xff]
  %v473 = vld [vmem:[%s1 + $0x58] sm:$0xff]
  %v474 = vld [vmem:[%s1 + $0x60] sm:$0xff]
  %v475 = vld [vmem:[%s1 + $0x68] sm:$0xff]
  %v476 = vld [vmem:[%s1 + $0x70] sm:$0xff]
  %v477 = vld [vmem:[%s1 + $0x78] sm:$0xff]
  %v478 = vld [vmem:[%s1 + $0x80] sm:$0xff]
  %v479 = vld [vmem:[%s1 + $0x88] sm:$0xff]
  %v480 = vld [vmem:[%s1 + $0x90] sm:$0xff]
  %v481 = vld [vmem:[%s1 + $0x98] sm:$0xff]
  %v482 = vld [vmem:[%s2] sm:$0x1]
  %v484 = vlaneseq
  %v485 = vshrl.u32 %v484, 7
  %v486 = vsub.s32 0, %v485
  %v487 = vrot.slane %v482, %v486
  %v490 = vsel %vm38, %v431, 0
  %v493 = vsel %vm38, %v433, 0
  %v496 = vsel %vm38, %v435, 0
  %v499 = vsel %vm38, %v437, 0
  %v502 = vsel %vm38, %v439, 0
  %v505 = vsel %vm38, %v441, 0
  %v508 = vsel %vm38, %v443, 0
  %v511 = vsel %vm38, %v445, 0
  %v514 = vsel %vm38, %v447, 0
  %v517 = vsel %vm38, %v449, 0
  %v520 = vsel %vm38, %v451, 0
  %v523 = vsel %vm38, %v453, 0
  %v526 = vsel %vm38, %v455, 0
  %v529 = vsel %vm38, %v457, 0
  %v532 = vsel %vm38, %v459, 0
  %v535 = vsel %vm38, %v461, 0
  %537 = vmatprep.subr.mxu0 0.0
  %538 = vmatpush1.msra.mxu0 %v477
  %539 = vmatprep.subr.mxu0 0.0
  %540 = vmatpush1.msra.mxu0 %v476
  %541 = vmatprep.subr.mxu0 0.0
  %542 = vmatpush1.msra.mxu0 %v475
  %543 = vmatprep.subr.mxu0 0.0
  %544 = vmatpush1.msra.mxu0 %v474
  %545 = vmatprep.subr.mxu0 0.0
  %546 = vmatpush1.msra.mxu0 %v473
  %547 = vmatprep.subr.mxu0 0.0
  %548 = vmatpush1.msra.mxu0 %v472
  %549 = vmatprep.subr.mxu0 0.0
  %550 = vmatpush1.msra.mxu0 %v471
  %551 = vmatprep.subr.mxu0 0.0
  %552 = vmatpush1.msra.mxu0 %v470
  %553 = vmatprep.subr.mxu0 0.0
  %554 = vmatpush1.msra.mxu0 %v469
  %555 = vmatprep.subr.mxu0 0.0
  %556 = vmatpush1.msra.mxu0 %v468
  %557 = vmatprep.subr.mxu0 0.0
  %558 = vmatpush1.msra.mxu0 %v467
  %559 = vmatprep.subr.mxu0 0.0
  %560 = vmatpush1.msra.mxu0 %v466
  %561 = vmatprep.subr.mxu0 0.0
  %562 = vmatpush1.msra.mxu0 %v465
  %563 = vmatprep.subr.mxu0 0.0
  %564 = vmatpush1.msra.mxu0 %v464
  %565 = vmatprep.subr.mxu0 0.0
  %566 = vmatpush1.msra.mxu0 %v463
  %567 = vmatprep.subr.mxu0 0.0
  %568 = vmatpush1.msra.mxu0 %v462
  %569 = vmatprep.subr.mxu0 0.0
  %570 = vmatpush2.msra.mxu0 0.0
  %571 = vmatprep.subr.mxu0 0.0
  %572 = vmatpush2.msra.mxu0 0.0
  %573 = vmatprep.subr.mxu0 0.0
  %574 = vmatpush2.msra.mxu0 0.0
  %575 = vmatprep.subr.mxu0 0.0
  %576 = vmatpush2.msra.mxu0 0.0
  %577 = vmatprep.subr.mxu0 0.0
  %578 = vmatpush2.msra.mxu0 0.0
  %579 = vmatprep.subr.mxu0 0.0
  %580 = vmatpush2.msra.mxu0 0.0
  %581 = vmatprep.subr.mxu0 0.0
  %582 = vmatpush2.msra.mxu0 0.0
  %583 = vmatprep.subr.mxu0 0.0
  %584 = vmatpush2.msra.mxu0 0.0
  %585 = vmatprep.subr.mxu0 0.0
  %586 = vmatpush2.msra.mxu0 0.0
  %587 = vmatprep.subr.mxu0 0.0
  %588 = vmatpush2.msra.mxu0 0.0
  %589 = vmatprep.subr.mxu0 0.0
  %590 = vmatpush2.msra.mxu0 0.0
  %591 = vmatprep.subr.mxu0 0.0
  %592 = vmatpush2.msra.mxu0 0.0
  %593 = vmatprep.subr.mxu0 0.0
  %594 = vmatpush2.msra.mxu0 %v481
  %595 = vmatprep.subr.mxu0 0.0
  %596 = vmatpush2.msra.mxu0 %v480
  %597 = vmatprep.subr.mxu0 0.0
  %598 = vmatpush2.msra.mxu0 %v479
  %599 = vmatprep.subr.mxu0 0.0
  %600 = vmatpush2.msra.mxu0 %v478
  %601 = vmatprep.mubr.f32.mxu0 %v490
  %602 = vmatmul.mubr.f32.gmra.mxu0 %v430
  %v603 = vpop.f32.mrf.mxu0
  %v604 = vadd.f32 %v487, %v603
  %v605 = vpop.f32.mrf.mxu0
  %606 = vmatprep.mubr.f32.mxu0 %v493
  %607 = vmatmul.mubr.f32.gmra.mxu0 %v432
  %v608 = vpop.f32.mrf.mxu0
  %v609 = vadd.f32 %v487, %v608
  %v610 = vpop.f32.mrf.mxu0
  %611 = vmatprep.mubr.f32.mxu0 %v496
  %612 = vmatmul.mubr.f32.gmra.mxu0 %v434
  %v613 = vpop.f32.mrf.mxu0
  %v614 = vadd.f32 %v487, %v613
  %v615 = vpop.f32.mrf.mxu0
  %616 = vmatprep.mubr.f32.mxu0 %v499
  %617 = vmatmul.mubr.f32.gmra.mxu0 %v436
  %v618 = vpop.f32.mrf.mxu0
  %v619 = vadd.f32 %v487, %v618
  %v620 = vpop.f32.mrf.mxu0
  %621 = vmatprep.mubr.f32.mxu0 %v502
  %622 = vmatmul.mubr.f32.gmra.mxu0 %v438
  %v623 = vpop.f32.mrf.mxu0
  %v624 = vadd.f32 %v487, %v623
  %v625 = vpop.f32.mrf.mxu0
  %626 = vmatprep.mubr.f32.mxu0 %v505
  %627 = vmatmul.mubr.f32.gmra.mxu0 %v440
  %v628 = vpop.f32.mrf.mxu0
  %v629 = vadd.f32 %v487, %v628
  %v630 = vpop.f32.mrf.mxu0
  %631 = vmatprep.mubr.f32.mxu0 %v508
  %632 = vmatmul.mubr.f32.gmra.mxu0 %v442
  %v633 = vpop.f32.mrf.mxu0
  %v634 = vadd.f32 %v487, %v633
  %v635 = vpop.f32.mrf.mxu0
  %636 = vmatprep.mubr.f32.mxu0 %v511
  %637 = vmatmul.mubr.f32.gmra.mxu0 %v444
  %v638 = vpop.f32.mrf.mxu0
  %v639 = vadd.f32 %v487, %v638
  %v640 = vpop.f32.mrf.mxu0
  %641 = vmatprep.mubr.f32.mxu0 %v514
  %642 = vmatmul.mubr.f32.gmra.mxu0 %v446
  %v643 = vpop.f32.mrf.mxu0
  %v644 = vadd.f32 %v487, %v643
  %v645 = vpop.f32.mrf.mxu0
  %646 = vmatprep.mubr.f32.mxu0 %v517
  %647 = vmatmul.mubr.f32.gmra.mxu0 %v448
  %v648 = vpop.f32.mrf.mxu0
  %v649 = vadd.f32 %v487, %v648
  %v650 = vpop.f32.mrf.mxu0
  %651 = vmatprep.mubr.f32.mxu0 %v520
  %652 = vmatmul.mubr.f32.gmra.mxu0 %v450
  %v653 = vpop.f32.mrf.mxu0
  %v654 = vadd.f32 %v487, %v653
  %v655 = vpop.f32.mrf.mxu0
  %656 = vmatprep.mubr.f32.mxu0 %v523
  %657 = vmatmul.mubr.f32.gmra.mxu0 %v452
  %v658 = vpop.f32.mrf.mxu0
  %v659 = vadd.f32 %v487, %v658
  %v660 = vpop.f32.mrf.mxu0
  %661 = vmatprep.mubr.f32.mxu0 %v526
  %662 = vmatmul.mubr.f32.gmra.mxu0 %v454
  %v663 = vpop.f32.mrf.mxu0
  %v664 = vadd.f32 %v487, %v663
  %v665 = vpop.f32.mrf.mxu0
  %666 = vmatprep.mubr.f32.mxu0 %v529
  %667 = vmatmul.mubr.f32.gmra.mxu0 %v456
  %v668 = vpop.f32.mrf.mxu0
  %v669 = vadd.f32 %v487, %v668
  %v670 = vpop.f32.mrf.mxu0
  %671 = vmatprep.mubr.f32.mxu0 %v532
  %672 = vmatmul.mubr.f32.gmra.mxu0 %v458
  %v673 = vpop.f32.mrf.mxu0
  %v674 = vadd.f32 %v487, %v673
  %v675 = vpop.f32.mrf.mxu0
  %676 = vmatprep.mubr.f32.mxu0 %v535
  %677 = vmatmul.mubr.f32.gmra.mxu0 %v460
  %v678 = vpop.f32.mrf.mxu0
  %v679 = vadd.f32 %v487, %v678
  %v680 = vpop.f32.mrf.mxu0
  %681 = vdwg.mxu0
  %v682 = vmax.f32 %v604, 0.0
  %v683 = vmax.f32 %v609, 0.0
  %v684 = vmax.f32 %v614, 0.0
  %v685 = vmax.f32 %v619, 0.0
  %v686 = vmax.f32 %v624, 0.0
  %v687 = vmax.f32 %v629, 0.0
  %v688 = vmax.f32 %v634, 0.0
  %v689 = vmax.f32 %v639, 0.0
  %v690 = vmax.f32 %v644, 0.0
  %v691 = vmax.f32 %v649, 0.0
  %v692 = vmax.f32 %v654, 0.0
  %v693 = vmax.f32 %v659, 0.0
  %v694 = vmax.f32 %v664, 0.0
  %v695 = vmax.f32 %v669, 0.0
  %v696 = vmax.f32 %v674, 0.0
  %v697 = vmax.f32 %v679, 0.0
  %698 = vst.msk [vmem:[#allocation2 + $0x10] sm:$0xff] %vm38, %v682
  %699 = vst.msk [vmem:[#allocation2 + $0x18] sm:$0xff] %vm38, %v683
  %700 = vst.msk [vmem:[#allocation2 + $0x20] sm:$0xff] %vm38, %v684
  %701 = vst.msk [vmem:[#allocation2 + $0x28] sm:$0xff] %vm38, %v685
  %702 = vst.msk [vmem:[#allocation2 + $0x30] sm:$0xff] %vm38, %v686
  %703 = vst.msk [vmem:[#allocation2 + $0x38] sm:$0xff] %vm38, %v687
  %704 = vst.msk [vmem:[#allocation2 + $0x40] sm:$0xff] %vm38, %v688
  %705 = vst.msk [vmem:[#allocation2 + $0x48] sm:$0xff] %vm38, %v689
  %706 = vst.msk [vmem:[#allocation2 + $0x50] sm:$0xff] %vm38, %v690
  %707 = vst.msk [vmem:[#allocation2 + $0x58] sm:$0xff] %vm38, %v691
  %708 = vst.msk [vmem:[#allocation2 + $0x60] sm:$0xff] %vm38, %v692
  %709 = vst.msk [vmem:[#allocation2 + $0x68] sm:$0xff] %vm38, %v693
  %710 = vst.msk [vmem:[#allocation2 + $0x70] sm:$0xff] %vm38, %v694
  %711 = vst.msk [vmem:[#allocation2 + $0x78] sm:$0xff] %vm38, %v695
  %712 = vst.msk [vmem:[#allocation2 + $0x80] sm:$0xff] %vm38, %v696
  %713 = vst.msk [vmem:[#allocation2 + $0x88] sm:$0xff] %vm38, %v697
  %v714 = vld [vmem:[#allocation2] sm:$0xff]
  %v715 = vld [vmem:[#allocation2 + $0x8] sm:$0xff]
  %v716 = vld [vmem:[#allocation2 + $0x10] sm:$0xff]
  %v717 = vld [vmem:[#allocation2 + $0x18] sm:$0xff]
  %v718 = vld [vmem:[#allocation2 + $0x20] sm:$0xff]
  %v719 = vld [vmem:[#allocation2 + $0x28] sm:$0xff]
  %v720 = vld [vmem:[#allocation2 + $0x30] sm:$0xff]
  %v721 = vld [vmem:[#allocation2 + $0x38] sm:$0xff]
  %v722 = vld [vmem:[#allocation2 + $0x40] sm:$0xff]
  %v723 = vld [vmem:[#allocation2 + $0x48] sm:$0xff]
  %v724 = vld [vmem:[#allocation2 + $0x50] sm:$0xff]
  %v725 = vld [vmem:[#allocation2 + $0x58] sm:$0xff]
  %v726 = vld [vmem:[#allocation2 + $0x60] sm:$0xff]
  %v727 = vld [vmem:[#allocation2 + $0x68] sm:$0xff]
  %v728 = vld [vmem:[#allocation2 + $0x70] sm:$0xff]
  %v729 = vld [vmem:[#allocation2 + $0x78] sm:$0xff]
  %730 = vst.msk [vmem:[#allocation3] sm:$0xff] %vm38, %v714
  %731 = vst.msk [vmem:[#allocation3 + $0x10] sm:$0xff] %vm38, %v715
  %732 = vst.msk [vmem:[#allocation3 + $0x20] sm:$0xff] %vm38, %v716
  %733 = vst.msk [vmem:[#allocation3 + $0x30] sm:$0xff] %vm38, %v717
  %734 = vst.msk [vmem:[#allocation3 + $0x40] sm:$0xff] %vm38, %v718
  %735 = vst.msk [vmem:[#allocation3 + $0x50] sm:$0xff] %vm38, %v719
  %736 = vst.msk [vmem:[#allocation3 + $0x60] sm:$0xff] %vm38, %v720
  %737 = vst.msk [vmem:[#allocation3 + $0x70] sm:$0xff] %vm38, %v721
  %738 = vst.msk [vmem:[#allocation3 + $0x80] sm:$0xff] %vm38, %v722
  %739 = vst.msk [vmem:[#allocation3 + $0x90] sm:$0xff] %vm38, %v723
  %740 = vst.msk [vmem:[#allocation3 + $0xa0] sm:$0xff] %vm38, %v724
  %741 = vst.msk [vmem:[#allocation3 + $0xb0] sm:$0xff] %vm38, %v725
  %742 = vst.msk [vmem:[#allocation3 + $0xc0] sm:$0xff] %vm38, %v726
  %743 = vst.msk [vmem:[#allocation3 + $0xd0] sm:$0xff] %vm38, %v727
  %744 = vst.msk [vmem:[#allocation3 + $0xe0] sm:$0xff] %vm38, %v728
  %745 = vst.msk [vmem:[#allocation3 + $0xf0] sm:$0xff] %vm38, %v729
  %v746 = vld [vmem:[#allocation2 + $0x8] sm:$0xff]
  %v747 = vld [vmem:[#allocation2 + $0x10] sm:$0xff]
  %v748 = vld [vmem:[#allocation2 + $0x18] sm:$0xff]
  %v749 = vld [vmem:[#allocation2 + $0x20] sm:$0xff]
  %v750 = vld [vmem:[#allocation2 + $0x28] sm:$0xff]
  %v751 = vld [vmem:[#allocation2 + $0x30] sm:$0xff]
  %v752 = vld [vmem:[#allocation2 + $0x38] sm:$0xff]
  %v753 = vld [vmem:[#allocation2 + $0x40] sm:$0xff]
  %v754 = vld [vmem:[#allocation2 + $0x48] sm:$0xff]
  %v755 = vld [vmem:[#allocation2 + $0x50] sm:$0xff]
  %v756 = vld [vmem:[#allocation2 + $0x58] sm:$0xff]
  %v757 = vld [vmem:[#allocation2 + $0x60] sm:$0xff]
  %v758 = vld [vmem:[#allocation2 + $0x68] sm:$0xff]
  %v759 = vld [vmem:[#allocation2 + $0x70] sm:$0xff]
  %v760 = vld [vmem:[#allocation2 + $0x78] sm:$0xff]
  %v761 = vld [vmem:[#allocation2 + $0x80] sm:$0xff]
  %778 = vrot.lane.b32.xlu0 %v746, 32
  %v779 = vpop.permute.xlu0 %778
  %780 = vrot.lane.b32.xlu0 %v747, 32
  %v781 = vpop.permute.xlu0 %780
  %782 = vrot.lane.b32.xlu0 %v748, 32
  %v783 = vpop.permute.xlu0 %782
  %784 = vrot.lane.b32.xlu0 %v749, 32
  %v785 = vpop.permute.xlu0 %784
  %786 = vrot.lane.b32.xlu0 %v750, 32
  %v787 = vpop.permute.xlu0 %786
  %788 = vrot.lane.b32.xlu0 %v751, 32
  %v789 = vpop.permute.xlu0 %788
  %790 = vrot.lane.b32.xlu0 %v752, 32
  %v791 = vpop.permute.xlu0 %790
  %792 = vrot.lane.b32.xlu0 %v753, 32
  %v793 = vpop.permute.xlu0 %792
  %794 = vrot.lane.b32.xlu0 %v754, 32
  %v795 = vpop.permute.xlu0 %794
  %796 = vrot.lane.b32.xlu0 %v755, 32
  %v797 = vpop.permute.xlu0 %796
  %798 = vrot.lane.b32.xlu0 %v756, 32
  %v799 = vpop.permute.xlu0 %798
  %800 = vrot.lane.b32.xlu0 %v757, 32
  %v801 = vpop.permute.xlu0 %800
  %802 = vrot.lane.b32.xlu0 %v758, 32
  %v803 = vpop.permute.xlu0 %802
  %804 = vrot.lane.b32.xlu0 %v759, 32
  %v805 = vpop.permute.xlu0 %804
  %806 = vrot.lane.b32.xlu0 %v760, 32
  %v807 = vpop.permute.xlu0 %806
  %808 = vrot.lane.b32.xlu0 %v761, 32
  %v809 = vpop.permute.xlu0 %808
  %826 = vst.msk [vmem:[#allocation3] sm:$0xff] %vm187, %v779
  %827 = vst.msk [vmem:[#allocation3 + $0x10] sm:$0xff] %vm187, %v781
  %828 = vst.msk [vmem:[#allocation3 + $0x20] sm:$0xff] %vm187, %v783
  %829 = vst.msk [vmem:[#allocation3 + $0x30] sm:$0xff] %vm187, %v785
  %830 = vst.msk [vmem:[#allocation3 + $0x40] sm:$0xff] %vm187, %v787
  %831 = vst.msk [vmem:[#allocation3 + $0x50] sm:$0xff] %vm187, %v789
  %832 = vst.msk [vmem:[#allocation3 + $0x60] sm:$0xff] %vm187, %v791
  %833 = vst.msk [vmem:[#allocation3 + $0x70] sm:$0xff] %vm187, %v793
  %834 = vst.msk [vmem:[#allocation3 + $0x80] sm:$0xff] %vm187, %v795
  %835 = vst.msk [vmem:[#allocation3 + $0x90] sm:$0xff] %vm187, %v797
  %836 = vst.msk [vmem:[#allocation3 + $0xa0] sm:$0xff] %vm187, %v799
  %837 = vst.msk [vmem:[#allocation3 + $0xb0] sm:$0xff] %vm187, %v801
  %838 = vst.msk [vmem:[#allocation3 + $0xc0] sm:$0xff] %vm187, %v803
  %839 = vst.msk [vmem:[#allocation3 + $0xd0] sm:$0xff] %vm187, %v805
  %840 = vst.msk [vmem:[#allocation3 + $0xe0] sm:$0xff] %vm187, %v807
  %841 = vst.msk [vmem:[#allocation3 + $0xf0] sm:$0xff] %vm187, %v809
  %v842 = vld [vmem:[#allocation2 + $0x10] sm:$0xff]
  %v843 = vld [vmem:[#allocation2 + $0x18] sm:$0xff]
  %v844 = vld [vmem:[#allocation2 + $0x20] sm:$0xff]
  %v845 = vld [vmem:[#allocation2 + $0x28] sm:$0xff]
  %v846 = vld [vmem:[#allocation2 + $0x30] sm:$0xff]
  %v847 = vld [vmem:[#allocation2 + $0x38] sm:$0xff]
  %v848 = vld [vmem:[#allocation2 + $0x40] sm:$0xff]
  %v849 = vld [vmem:[#allocation2 + $0x48] sm:$0xff]
  %v850 = vld [vmem:[#allocation2 + $0x50] sm:$0xff]
  %v851 = vld [vmem:[#allocation2 + $0x58] sm:$0xff]
  %v852 = vld [vmem:[#allocation2 + $0x60] sm:$0xff]
  %v853 = vld [vmem:[#allocation2 + $0x68] sm:$0xff]
  %v854 = vld [vmem:[#allocation2 + $0x70] sm:$0xff]
  %v855 = vld [vmem:[#allocation2 + $0x78] sm:$0xff]
  %v856 = vld [vmem:[#allocation2 + $0x80] sm:$0xff]
  %v857 = vld [vmem:[#allocation2 + $0x88] sm:$0xff]
  %874 = vrot.lane.b32.xlu0 %v842, 64
  %v875 = vpop.permute.xlu0 %874
  %876 = vrot.lane.b32.xlu0 %v843, 64
  %v877 = vpop.permute.xlu0 %876
  %878 = vrot.lane.b32.xlu0 %v844, 64
  %v879 = vpop.permute.xlu0 %878
  %880 = vrot.lane.b32.xlu0 %v845, 64
  %v881 = vpop.permute.xlu0 %880
  %882 = vrot.lane.b32.xlu0 %v846, 64
  %v883 = vpop.permute.xlu0 %882
  %884 = vrot.lane.b32.xlu0 %v847, 64
  %v885 = vpop.permute.xlu0 %884
  %886 = vrot.lane.b32.xlu0 %v848, 64
  %v887 = vpop.permute.xlu0 %886
  %888 = vrot.lane.b32.xlu0 %v849, 64
  %v889 = vpop.permute.xlu0 %888
  %890 = vrot.lane.b32.xlu0 %v850, 64
  %v891 = vpop.permute.xlu0 %890
  %892 = vrot.lane.b32.xlu0 %v851, 64
  %v893 = vpop.permute.xlu0 %892
  %894 = vrot.lane.b32.xlu0 %v852, 64
  %v895 = vpop.permute.xlu0 %894
  %896 = vrot.lane.b32.xlu0 %v853, 64
  %v897 = vpop.permute.xlu0 %896
  %898 = vrot.lane.b32.xlu0 %v854, 64
  %v899 = vpop.permute.xlu0 %898
  %900 = vrot.lane.b32.xlu0 %v855, 64
  %v901 = vpop.permute.xlu0 %900
  %902 = vrot.lane.b32.xlu0 %v856, 64
  %v903 = vpop.permute.xlu0 %902
  %904 = vrot.lane.b32.xlu0 %v857, 64
  %v905 = vpop.permute.xlu0 %904
  %922 = vst.msk [vmem:[#allocation3] sm:$0xff] %vm284, %v875
  %923 = vst.msk [vmem:[#allocation3 + $0x10] sm:$0xff] %vm284, %v877
  %924 = vst.msk [vmem:[#allocation3 + $0x20] sm:$0xff] %vm284, %v879
  %925 = vst.msk [vmem:[#allocation3 + $0x30] sm:$0xff] %vm284, %v881
  %926 = vst.msk [vmem:[#allocation3 + $0x40] sm:$0xff] %vm284, %v883
  %927 = vst.msk [vmem:[#allocation3 + $0x50] sm:$0xff] %vm284, %v885
  %928 = vst.msk [vmem:[#allocation3 + $0x60] sm:$0xff] %vm284, %v887
  %929 = vst.msk [vmem:[#allocation3 + $0x70] sm:$0xff] %vm284, %v889
  %930 = vst.msk [vmem:[#allocation3 + $0x80] sm:$0xff] %vm284, %v891
  %931 = vst.msk [vmem:[#allocation3 + $0x90] sm:$0xff] %vm284, %v893
  %932 = vst.msk [vmem:[#allocation3 + $0xa0] sm:$0xff] %vm284, %v895
  %933 = vst.msk [vmem:[#allocation3 + $0xb0] sm:$0xff] %vm284, %v897
  %934 = vst.msk [vmem:[#allocation3 + $0xc0] sm:$0xff] %vm284, %v899
  %935 = vst.msk [vmem:[#allocation3 + $0xd0] sm:$0xff] %vm284, %v901
  %936 = vst.msk [vmem:[#allocation3 + $0xe0] sm:$0xff] %vm284, %v903
  %937 = vst.msk [vmem:[#allocation3 + $0xf0] sm:$0xff] %vm284, %v905
  %v938 = vld [vmem:[#allocation2 + $0x18] sm:$0xff]
  %v939 = vld [vmem:[#allocation2 + $0x20] sm:$0xff]
  %v940 = vld [vmem:[#allocation2 + $0x28] sm:$0xff]
  %v941 = vld [vmem:[#allocation2 + $0x30] sm:$0xff]
  %v942 = vld [vmem:[#allocation2 + $0x38] sm:$0xff]
  %v943 = vld [vmem:[#allocation2 + $0x40] sm:$0xff]
  %v944 = vld [vmem:[#allocation2 + $0x48] sm:$0xff]
  %v945 = vld [vmem:[#allocation2 + $0x50] sm:$0xff]
  %v946 = vld [vmem:[#allocation2 + $0x58] sm:$0xff]
  %v947 = vld [vmem:[#allocation2 + $0x60] sm:$0xff]
  %v948 = vld [vmem:[#allocation2 + $0x68] sm:$0xff]
  %v949 = vld [vmem:[#allocation2 + $0x70] sm:$0xff]
  %v950 = vld [vmem:[#allocation2 + $0x78] sm:$0xff]
  %v951 = vld [vmem:[#allocation2 + $0x80] sm:$0xff]
  %v952 = vld [vmem:[#allocation2 + $0x88] sm:$0xff]
  %v953 = vld [vmem:[#allocation2 + $0x90] sm:$0xff]
  %970 = vrot.lane.b32.xlu0 %v938, 96
  %v971 = vpop.permute.xlu0 %970
  %972 = vrot.lane.b32.xlu0 %v939, 96
  %v973 = vpop.permute.xlu0 %972
  %974 = vrot.lane.b32.xlu0 %v940, 96
  %v975 = vpop.permute.xlu0 %974
  %976 = vrot.lane.b32.xlu0 %v941, 96
  %v977 = vpop.permute.xlu0 %976
  %978 = vrot.lane.b32.xlu0 %v942, 96
  %v979 = vpop.permute.xlu0 %978
  %980 = vrot.lane.b32.xlu0 %v943, 96
  %v981 = vpop.permute.xlu0 %980
  %982 = vrot.lane.b32.xlu0 %v944, 96
  %v983 = vpop.permute.xlu0 %982
  %984 = vrot.lane.b32.xlu0 %v945, 96
  %v985 = vpop.permute.xlu0 %984
  %986 = vrot.lane.b32.xlu0 %v946, 96
  %v987 = vpop.permute.xlu0 %986
  %988 = vrot.lane.b32.xlu0 %v947, 96
  %v989 = vpop.permute.xlu0 %988
  %990 = vrot.lane.b32.xlu0 %v948, 96
  %v991 = vpop.permute.xlu0 %990
  %992 = vrot.lane.b32.xlu0 %v949, 96
  %v993 = vpop.permute.xlu0 %992
  %994 = vrot.lane.b32.xlu0 %v950, 96
  %v995 = vpop.permute.xlu0 %994
  %996 = vrot.lane.b32.xlu0 %v951, 96
  %v997 = vpop.permute.xlu0 %996
  %998 = vrot.lane.b32.xlu0 %v952, 96
  %v999 = vpop.permute.xlu0 %998
  %1000 = vrot.lane.b32.xlu0 %v953, 96
  %v1001 = vpop.permute.xlu0 %1000
  %1018 = vst.msk [vmem:[#allocation3] sm:$0xff] %vm381, %v971
  %1019 = vst.msk [vmem:[#allocation3 + $0x10] sm:$0xff] %vm381, %v973
  %1020 = vst.msk [vmem:[#allocation3 + $0x20] sm:$0xff] %vm381, %v975
  %1021 = vst.msk [vmem:[#allocation3 + $0x30] sm:$0xff] %vm381, %v977
  %1022 = vst.msk [vmem:[#allocation3 + $0x40] sm:$0xff] %vm381, %v979
  %1023 = vst.msk [vmem:[#allocation3 + $0x50] sm:$0xff] %vm381, %v981
  %1024 = vst.msk [vmem:[#allocation3 + $0x60] sm:$0xff] %vm381, %v983
  %1025 = vst.msk [vmem:[#allocation3 + $0x70] sm:$0xff] %vm381, %v985
  %1026 = vst.msk [vmem:[#allocation3 + $0x80] sm:$0xff] %vm381, %v987
  %1027 = vst.msk [vmem:[#allocation3 + $0x90] sm:$0xff] %vm381, %v989
  %1028 = vst.msk [vmem:[#allocation3 + $0xa0] sm:$0xff] %vm381, %v991
  %1029 = vst.msk [vmem:[#allocation3 + $0xb0] sm:$0xff] %vm381, %v993
  %1030 = vst.msk [vmem:[#allocation3 + $0xc0] sm:$0xff] %vm381, %v995
  %1031 = vst.msk [vmem:[#allocation3 + $0xd0] sm:$0xff] %vm381, %v997
  %1032 = vst.msk [vmem:[#allocation3 + $0xe0] sm:$0xff] %vm381, %v999
  %1033 = vst.msk [vmem:[#allocation3 + $0xf0] sm:$0xff] %vm381, %v1001
  %v1034 = vld [vmem:[#allocation2 + $0x20] sm:$0xff]
  %v1035 = vld [vmem:[#allocation2 + $0x28] sm:$0xff]
  %v1036 = vld [vmem:[#allocation2 + $0x30] sm:$0xff]
  %v1037 = vld [vmem:[#allocation2 + $0x38] sm:$0xff]
  %v1038 = vld [vmem:[#allocation2 + $0x40] sm:$0xff]
  %v1039 = vld [vmem:[#allocation2 + $0x48] sm:$0xff]
  %v1040 = vld [vmem:[#allocation2 + $0x50] sm:$0xff]
  %v1041 = vld [vmem:[#allocation2 + $0x58] sm:$0xff]
  %v1042 = vld [vmem:[#allocation2 + $0x60] sm:$0xff]
  %v1043 = vld [vmem:[#allocation2 + $0x68] sm:$0xff]
  %v1044 = vld [vmem:[#allocation2 + $0x70] sm:$0xff]
  %v1045 = vld [vmem:[#allocation2 + $0x78] sm:$0xff]
  %v1046 = vld [vmem:[#allocation2 + $0x80] sm:$0xff]
  %v1047 = vld [vmem:[#allocation2 + $0x88] sm:$0xff]
  %v1048 = vld [vmem:[#allocation2 + $0x90] sm:$0xff]
  %v1049 = vld [vmem:[#allocation2 + $0x98] sm:$0xff]
  %1050 = vst.msk [vmem:[#allocation3 + $0x8] sm:$0xff] %vm38, %v1034
  %1051 = vst.msk [vmem:[#allocation3 + $0x18] sm:$0xff] %vm38, %v1035
  %1052 = vst.msk [vmem:[#allocation3 + $0x28] sm:$0xff] %vm38, %v1036
  %1053 = vst.msk [vmem:[#allocation3 + $0x38] sm:$0xff] %vm38, %v1037
  %1054 = vst.msk [vmem:[#allocation3 + $0x48] sm:$0xff] %vm38, %v1038
  %1055 = vst.msk [vmem:[#allocation3 + $0x58] sm:$0xff] %vm38, %v1039
  %1056 = vst.msk [vmem:[#allocation3 + $0x68] sm:$0xff] %vm38, %v1040
  %1057 = vst.msk [vmem:[#allocation3 + $0x78] sm:$0xff] %vm38, %v1041
  %1058 = vst.msk [vmem:[#allocation3 + $0x88] sm:$0xff] %vm38, %v1042
  %1059 = vst.msk [vmem:[#allocation3 + $0x98] sm:$0xff] %vm38, %v1043
  %1060 = vst.msk [vmem:[#allocation3 + $0xa8] sm:$0xff] %vm38, %v1044
  %1061 = vst.msk [vmem:[#allocation3 + $0xb8] sm:$0xff] %vm38, %v1045
  %1062 = vst.msk [vmem:[#allocation3 + $0xc8] sm:$0xff] %vm38, %v1046
  %1063 = vst.msk [vmem:[#allocation3 + $0xd8] sm:$0xff] %vm38, %v1047
  %1064 = vst.msk [vmem:[#allocation3 + $0xe8] sm:$0xff] %vm38, %v1048
  %1065 = vst.msk [vmem:[#allocation3 + $0xf8] sm:$0xff] %vm38, %v1049
  %v1066 = vld [vmem:[#allocation3] sm:$0xff]
  %v1067 = vld [vmem:[#allocation3 + $0x8] sm:$0xff]
  %v1068 = vld [vmem:[#allocation3 + $0x10] sm:$0xff]
  %v1069 = vld [vmem:[#allocation3 + $0x18] sm:$0xff]
  %v1070 = vld [vmem:[#allocation3 + $0x20] sm:$0xff]
  %v1071 = vld [vmem:[#allocation3 + $0x28] sm:$0xff]
  %v1072 = vld [vmem:[#allocation3 + $0x30] sm:$0xff]
  %v1073 = vld [vmem:[#allocation3 + $0x38] sm:$0xff]
  %v1074 = vld [vmem:[#allocation3 + $0x40] sm:$0xff]
  %v1075 = vld [vmem:[#allocation3 + $0x48] sm:$0xff]
  %v1076 = vld [vmem:[#allocation3 + $0x50] sm:$0xff]
  %v1077 = vld [vmem:[#allocation3 + $0x58] sm:$0xff]
  %v1078 = vld [vmem:[#allocation3 + $0x60] sm:$0xff]
  %v1079 = vld [vmem:[#allocation3 + $0x68] sm:$0xff]
  %v1080 = vld [vmem:[#allocation3 + $0x70] sm:$0xff]
  %v1081 = vld [vmem:[#allocation3 + $0x78] sm:$0xff]
  %v1082 = vld [vmem:[#allocation3 + $0x80] sm:$0xff]
  %v1083 = vld [vmem:[#allocation3 + $0x88] sm:$0xff]
  %v1084 = vld [vmem:[#allocation3 + $0x90] sm:$0xff]
  %v1085 = vld [vmem:[#allocation3 + $0x98] sm:$0xff]
  %v1086 = vld [vmem:[#allocation3 + $0xa0] sm:$0xff]
  %v1087 = vld [vmem:[#allocation3 + $0xa8] sm:$0xff]
  %v1088 = vld [vmem:[#allocation3 + $0xb0] sm:$0xff]
  %v1089 = vld [vmem:[#allocation3 + $0xb8] sm:$0xff]
  %v1090 = vld [vmem:[#allocation3 + $0xc0] sm:$0xff]
  %v1091 = vld [vmem:[#allocation3 + $0xc8] sm:$0xff]
  %v1092 = vld [vmem:[#allocation3 + $0xd0] sm:$0xff]
  %v1093 = vld [vmem:[#allocation3 + $0xd8] sm:$0xff]
  %v1094 = vld [vmem:[#allocation3 + $0xe0] sm:$0xff]
  %v1095 = vld [vmem:[#allocation3 + $0xe8] sm:$0xff]
  %v1096 = vld [vmem:[#allocation3 + $0xf0] sm:$0xff]
  %v1097 = vld [vmem:[#allocation3 + $0xf8] sm:$0xff]
  %s1098 = scalar_lea.vmem %s1, 160
  %v1099 = vld [vmem:[%s1098] sm:$0xff]
  %v1100 = vld [vmem:[%s1098 + $0x8] sm:$0xff]
  %v1101 = vld [vmem:[%s1098 + $0x10] sm:$0xff]
  %v1102 = vld [vmem:[%s1098 + $0x18] sm:$0xff]
  %v1103 = vld [vmem:[%s1098 + $0x20] sm:$0xff]
  %v1104 = vld [vmem:[%s1098 + $0x28] sm:$0xff]
  %v1105 = vld [vmem:[%s1098 + $0x30] sm:$0xff]
  %v1106 = vld [vmem:[%s1098 + $0x38] sm:$0xff]
  %v1107 = vld [vmem:[%s1098 + $0x40] sm:$0xff]
  %v1108 = vld [vmem:[%s1098 + $0x48] sm:$0xff]
  %v1109 = vld [vmem:[%s1098 + $0x50] sm:$0xff]
  %v1110 = vld [vmem:[%s1098 + $0x58] sm:$0xff]
  %v1111 = vld [vmem:[%s1098 + $0x60] sm:$0xff]
  %v1112 = vld [vmem:[%s1098 + $0x68] sm:$0xff]
  %v1113 = vld [vmem:[%s1098 + $0x70] sm:$0xff]
  %v1114 = vld [vmem:[%s1098 + $0x78] sm:$0xff]
  %v1115 = vld [vmem:[%s1098 + $0x80] sm:$0xff]
  %v1116 = vld [vmem:[%s1098 + $0x88] sm:$0xff]
  %v1117 = vld [vmem:[%s1098 + $0x90] sm:$0xff]
  %v1118 = vld [vmem:[%s1098 + $0x98] sm:$0xff]
  %s1119 = scalar_lea.vmem %s2, 1
  %v1120 = vld [vmem:[%s1119] sm:$0x1]
  %v1122 = vlaneseq
  %v1123 = vshrl.u32 %v1122, 7
  %v1124 = vsub.s32 0, %v1123
  %v1125 = vrot.slane %v1120, %v1124
  %v1128 = vsel %vm38, %v1067, 0
  %v1131 = vsel %vm38, %v1069, 0
  %v1134 = vsel %vm38, %v1071, 0
  %v1137 = vsel %vm38, %v1073, 0
  %v1140 = vsel %vm38, %v1075, 0
  %v1143 = vsel %vm38, %v1077, 0
  %v1146 = vsel %vm38, %v1079, 0
  %v1149 = vsel %vm38, %v1081, 0
  %v1152 = vsel %vm38, %v1083, 0
  %v1155 = vsel %vm38, %v1085, 0
  %v1158 = vsel %vm38, %v1087, 0
  %v1161 = vsel %vm38, %v1089, 0
  %v1164 = vsel %vm38, %v1091, 0
  %v1167 = vsel %vm38, %v1093, 0
  %v1170 = vsel %vm38, %v1095, 0
  %v1173 = vsel %vm38, %v1097, 0
  %1175 = vmatprep.subr.mxu0 0.0
  %1176 = vmatpush1.msra.mxu0 %v1114
  %1177 = vmatprep.subr.mxu0 0.0
  %1178 = vmatpush1.msra.mxu0 %v1113
  %1179 = vmatprep.subr.mxu0 0.0
  %1180 = vmatpush1.msra.mxu0 %v1112
  %1181 = vmatprep.subr.mxu0 0.0
  %1182 = vmatpush1.msra.mxu0 %v1111
  %1183 = vmatprep.subr.mxu0 0.0
  %1184 = vmatpush1.msra.mxu0 %v1110
  %1185 = vmatprep.subr.mxu0 0.0
  %1186 = vmatpush1.msra.mxu0 %v1109
  %1187 = vmatprep.subr.mxu0 0.0
  %1188 = vmatpush1.msra.mxu0 %v1108
  %1189 = vmatprep.subr.mxu0 0.0
  %1190 = vmatpush1.msra.mxu0 %v1107
  %1191 = vmatprep.subr.mxu0 0.0
  %1192 = vmatpush1.msra.mxu0 %v1106
  %1193 = vmatprep.subr.mxu0 0.0
  %1194 = vmatpush1.msra.mxu0 %v1105
  %1195 = vmatprep.subr.mxu0 0.0
  %1196 = vmatpush1.msra.mxu0 %v1104
  %1197 = vmatprep.subr.mxu0 0.0
  %1198 = vmatpush1.msra.mxu0 %v1103
  %1199 = vmatprep.subr.mxu0 0.0
  %1200 = vmatpush1.msra.mxu0 %v1102
  %1201 = vmatprep.subr.mxu0 0.0
  %1202 = vmatpush1.msra.mxu0 %v1101
  %1203 = vmatprep.subr.mxu0 0.0
  %1204 = vmatpush1.msra.mxu0 %v1100
  %1205 = vmatprep.subr.mxu0 0.0
  %1206 = vmatpush1.msra.mxu0 %v1099
  %1207 = vmatprep.subr.mxu0 0.0
  %1208 = vmatpush2.msra.mxu0 0.0
  %1209 = vmatprep.subr.mxu0 0.0
  %1210 = vmatpush2.msra.mxu0 0.0
  %1211 = vmatprep.subr.mxu0 0.0
  %1212 = vmatpush2.msra.mxu0 0.0
  %1213 = vmatprep.subr.mxu0 0.0
  %1214 = vmatpush2.msra.mxu0 0.0
  %1215 = vmatprep.subr.mxu0 0.0
  %1216 = vmatpush2.msra.mxu0 0.0
  %1217 = vmatprep.subr.mxu0 0.0
  %1218 = vmatpush2.msra.mxu0 0.0
  %1219 = vmatprep.subr.mxu0 0.0
  %1220 = vmatpush2.msra.mxu0 0.0
  %1221 = vmatprep.subr.mxu0 0.0
  %1222 = vmatpush2.msra.mxu0 0.0
  %1223 = vmatprep.subr.mxu0 0.0
  %1224 = vmatpush2.msra.mxu0 0.0
  %1225 = vmatprep.subr.mxu0 0.0
  %1226 = vmatpush2.msra.mxu0 0.0
  %1227 = vmatprep.subr.mxu0 0.0
  %1228 = vmatpush2.msra.mxu0 0.0
  %1229 = vmatprep.subr.mxu0 0.0
  %1230 = vmatpush2.msra.mxu0 0.0
  %1231 = vmatprep.subr.mxu0 0.0
  %1232 = vmatpush2.msra.mxu0 %v1118
  %1233 = vmatprep.subr.mxu0 0.0
  %1234 = vmatpush2.msra.mxu0 %v1117
  %1235 = vmatprep.subr.mxu0 0.0
  %1236 = vmatpush2.msra.mxu0 %v1116
  %1237 = vmatprep.subr.mxu0 0.0
  %1238 = vmatpush2.msra.mxu0 %v1115
  %1239 = vmatprep.mubr.f32.mxu0 %v1128
  %1240 = vmatmul.mubr.f32.gmra.mxu0 %v1066
  %v1241 = vpop.f32.mrf.mxu0
  %v1242 = vadd.f32 %v1125, %v1241
  %v1243 = vpop.f32.mrf.mxu0
  %1244 = vmatprep.mubr.f32.mxu0 %v1131
  %1245 = vmatmul.mubr.f32.gmra.mxu0 %v1068
  %v1246 = vpop.f32.mrf.mxu0
  %v1247 = vadd.f32 %v1125, %v1246
  %v1248 = vpop.f32.mrf.mxu0
  %1249 = vmatprep.mubr.f32.mxu0 %v1134
  %1250 = vmatmul.mubr.f32.gmra.mxu0 %v1070
  %v1251 = vpop.f32.mrf.mxu0
  %v1252 = vadd.f32 %v1125, %v1251
  %v1253 = vpop.f32.mrf.mxu0
  %1254 = vmatprep.mubr.f32.mxu0 %v1137
  %1255 = vmatmul.mubr.f32.gmra.mxu0 %v1072
  %v1256 = vpop.f32.mrf.mxu0
  %v1257 = vadd.f32 %v1125, %v1256
  %v1258 = vpop.f32.mrf.mxu0
  %1259 = vmatprep.mubr.f32.mxu0 %v1140
  %1260 = vmatmul.mubr.f32.gmra.mxu0 %v1074
  %v1261 = vpop.f32.mrf.mxu0
  %v1262 = vadd.f32 %v1125, %v1261
  %v1263 = vpop.f32.mrf.mxu0
  %1264 = vmatprep.mubr.f32.mxu0 %v1143
  %1265 = vmatmul.mubr.f32.gmra.mxu0 %v1076
  %v1266 = vpop.f32.mrf.mxu0
  %v1267 = vadd.f32 %v1125, %v1266
  %v1268 = vpop.f32.mrf.mxu0
  %1269 = vmatprep.mubr.f32.mxu0 %v1146
  %1270 = vmatmul.mubr.f32.gmra.mxu0 %v1078
  %v1271 = vpop.f32.mrf.mxu0
  %v1272 = vadd.f32 %v1125, %v1271
  %v1273 = vpop.f32.mrf.mxu0
  %1274 = vmatprep.mubr.f32.mxu0 %v1149
  %1275 = vmatmul.mubr.f32.gmra.mxu0 %v1080
  %v1276 = vpop.f32.mrf.mxu0
  %v1277 = vadd.f32 %v1125, %v1276
  %v1278 = vpop.f32.mrf.mxu0
  %1279 = vmatprep.mubr.f32.mxu0 %v1152
  %1280 = vmatmul.mubr.f32.gmra.mxu0 %v1082
  %v1281 = vpop.f32.mrf.mxu0
  %v1282 = vadd.f32 %v1125, %v1281
  %v1283 = vpop.f32.mrf.mxu0
  %1284 = vmatprep.mubr.f32.mxu0 %v1155
  %1285 = vmatmul.mubr.f32.gmra.mxu0 %v1084
  %v1286 = vpop.f32.mrf.mxu0
  %v1287 = vadd.f32 %v1125, %v1286
  %v1288 = vpop.f32.mrf.mxu0
  %1289 = vmatprep.mubr.f32.mxu0 %v1158
  %1290 = vmatmul.mubr.f32.gmra.mxu0 %v1086
  %v1291 = vpop.f32.mrf.mxu0
  %v1292 = vadd.f32 %v1125, %v1291
  %v1293 = vpop.f32.mrf.mxu0
  %1294 = vmatprep.mubr.f32.mxu0 %v1161
  %1295 = vmatmul.mubr.f32.gmra.mxu0 %v1088
  %v1296 = vpop.f32.mrf.mxu0
  %v1297 = vadd.f32 %v1125, %v1296
  %v1298 = vpop.f32.mrf.mxu0
  %1299 = vmatprep.mubr.f32.mxu0 %v1164
  %1300 = vmatmul.mubr.f32.gmra.mxu0 %v1090
  %v1301 = vpop.f32.mrf.mxu0
  %v1302 = vadd.f32 %v1125, %v1301
  %v1303 = vpop.f32.mrf.mxu0
  %1304 = vmatprep.mubr.f32.mxu0 %v1167
  %1305 = vmatmul.mubr.f32.gmra.mxu0 %v1092
  %v1306 = vpop.f32.mrf.mxu0
  %v1307 = vadd.f32 %v1125, %v1306
  %v1308 = vpop.f32.mrf.mxu0
  %1309 = vmatprep.mubr.f32.mxu0 %v1170
  %1310 = vmatmul.mubr.f32.gmra.mxu0 %v1094
  %v1311 = vpop.f32.mrf.mxu0
  %v1312 = vadd.f32 %v1125, %v1311
  %v1313 = vpop.f32.mrf.mxu0
  %1314 = vmatprep.mubr.f32.mxu0 %v1173
  %1315 = vmatmul.mubr.f32.gmra.mxu0 %v1096
  %v1316 = vpop.f32.mrf.mxu0
  %v1317 = vadd.f32 %v1125, %v1316
  %v1318 = vpop.f32.mrf.mxu0
  %1319 = vdwg.mxu0
  %v1320 = vmax.f32 %v1242, 0.0
  %v1321 = vmax.f32 %v1247, 0.0
  %v1322 = vmax.f32 %v1252, 0.0
  %v1323 = vmax.f32 %v1257, 0.0
  %v1324 = vmax.f32 %v1262, 0.0
  %v1325 = vmax.f32 %v1267, 0.0
  %v1326 = vmax.f32 %v1272, 0.0
  %v1327 = vmax.f32 %v1277, 0.0
  %v1328 = vmax.f32 %v1282, 0.0
  %v1329 = vmax.f32 %v1287, 0.0
  %v1330 = vmax.f32 %v1292, 0.0
  %v1331 = vmax.f32 %v1297, 0.0
  %v1332 = vmax.f32 %v1302, 0.0
  %v1333 = vmax.f32 %v1307, 0.0
  %v1334 = vmax.f32 %v1312, 0.0
  %v1335 = vmax.f32 %v1317, 0.0
  %1336 = vst.msk [vmem:[#allocation2 + $0x10] sm:$0xff] %vm38, %v1320
  %1337 = vst.msk [vmem:[#allocation2 + $0x18] sm:$0xff] %vm38, %v1321
  %1338 = vst.msk [vmem:[#allocation2 + $0x20] sm:$0xff] %vm38, %v1322
  %1339 = vst.msk [vmem:[#allocation2 + $0x28] sm:$0xff] %vm38, %v1323
  %1340 = vst.msk [vmem:[#allocation2 + $0x30] sm:$0xff] %vm38, %v1324
  %1341 = vst.msk [vmem:[#allocation2 + $0x38] sm:$0xff] %vm38, %v1325
  %1342 = vst.msk [vmem:[#allocation2 + $0x40] sm:$0xff] %vm38, %v1326
  %1343 = vst.msk [vmem:[#allocation2 + $0x48] sm:$0xff] %vm38, %v1327
  %1344 = vst.msk [vmem:[#allocation2 + $0x50] sm:$0xff] %vm38, %v1328
  %1345 = vst.msk [vmem:[#allocation2 + $0x58] sm:$0xff] %vm38, %v1329
  %1346 = vst.msk [vmem:[#allocation2 + $0x60] sm:$0xff] %vm38, %v1330
  %1347 = vst.msk [vmem:[#allocation2 + $0x68] sm:$0xff] %vm38, %v1331
  %1348 = vst.msk [vmem:[#allocation2 + $0x70] sm:$0xff] %vm38, %v1332
  %1349 = vst.msk [vmem:[#allocation2 + $0x78] sm:$0xff] %vm38, %v1333
  %1350 = vst.msk [vmem:[#allocation2 + $0x80] sm:$0xff] %vm38, %v1334
  %1351 = vst.msk [vmem:[#allocation2 + $0x88] sm:$0xff] %vm38, %v1335
  %v1352 = vld [vmem:[#allocation2] sm:$0xff]
  %v1353 = vld [vmem:[#allocation2 + $0x8] sm:$0xff]
  %v1354 = vld [vmem:[#allocation2 + $0x10] sm:$0xff]
  %v1355 = vld [vmem:[#allocation2 + $0x18] sm:$0xff]
  %v1356 = vld [vmem:[#allocation2 + $0x20] sm:$0xff]
  %v1357 = vld [vmem:[#allocation2 + $0x28] sm:$0xff]
  %v1358 = vld [vmem:[#allocation2 + $0x30] sm:$0xff]
  %v1359 = vld [vmem:[#allocation2 + $0x38] sm:$0xff]
  %v1360 = vld [vmem:[#allocation2 + $0x40] sm:$0xff]
  %v1361 = vld [vmem:[#allocation2 + $0x48] sm:$0xff]
  %v1362 = vld [vmem:[#allocation2 + $0x50] sm:$0xff]
  %v1363 = vld [vmem:[#allocation2 + $0x58] sm:$0xff]
  %v1364 = vld [vmem:[#allocation2 + $0x60] sm:$0xff]
  %v1365 = vld [vmem:[#allocation2 + $0x68] sm:$0xff]
  %v1366 = vld [vmem:[#allocation2 + $0x70] sm:$0xff]
  %v1367 = vld [vmem:[#allocation2 + $0x78] sm:$0xff]
  %1368 = vst.msk [vmem:[#allocation3] sm:$0xff] %vm38, %v1352
  %1369 = vst.msk [vmem:[#allocation3 + $0x10] sm:$0xff] %vm38, %v1353
  %1370 = vst.msk [vmem:[#allocation3 + $0x20] sm:$0xff] %vm38, %v1354
  %1371 = vst.msk [vmem:[#allocation3 + $0x30] sm:$0xff] %vm38, %v1355
  %1372 = vst.msk [vmem:[#allocation3 + $0x40] sm:$0xff] %vm38, %v1356
  %1373 = vst.msk [vmem:[#allocation3 + $0x50] sm:$0xff] %vm38, %v1357
  %1374 = vst.msk [vmem:[#allocation3 + $0x60] sm:$0xff] %vm38, %v1358
  %1375 = vst.msk [vmem:[#allocation3 + $0x70] sm:$0xff] %vm38, %v1359
  %1376 = vst.msk [vmem:[#allocation3 + $0x80] sm:$0xff] %vm38, %v1360
  %1377 = vst.msk [vmem:[#allocation3 + $0x90] sm:$0xff] %vm38, %v1361
  %1378 = vst.msk [vmem:[#allocation3 + $0xa0] sm:$0xff] %vm38, %v1362
  %1379 = vst.msk [vmem:[#allocation3 + $0xb0] sm:$0xff] %vm38, %v1363
  %1380 = vst.msk [vmem:[#allocation3 + $0xc0] sm:$0xff] %vm38, %v1364
  %1381 = vst.msk [vmem:[#allocation3 + $0xd0] sm:$0xff] %vm38, %v1365
  %1382 = vst.msk [vmem:[#allocation3 + $0xe0] sm:$0xff] %vm38, %v1366
  %1383 = vst.msk [vmem:[#allocation3 + $0xf0] sm:$0xff] %vm38, %v1367
  %v1384 = vld [vmem:[#allocation2 + $0x8] sm:$0xff]
  %v1385 = vld [vmem:[#allocation2 + $0x10] sm:$0xff]
  %v1386 = vld [vmem:[#allocation2 + $0x18] sm:$0xff]
  %v1387 = vld [vmem:[#allocation2 + $0x20] sm:$0xff]
  %v1388 = vld [vmem:[#allocation2 + $0x28] sm:$0xff]
  %v1389 = vld [vmem:[#allocation2 + $0x30] sm:$0xff]
  %v1390 = vld [vmem:[#allocation2 + $0x38] sm:$0xff]
  %v1391 = vld [vmem:[#allocation2 + $0x40] sm:$0xff]
  %v1392 = vld [vmem:[#allocation2 + $0x48] sm:$0xff]
  %v1393 = vld [vmem:[#allocation2 + $0x50] sm:$0xff]
  %v1394 = vld [vmem:[#allocation2 + $0x58] sm:$0xff]
  %v1395 = vld [vmem:[#allocation2 + $0x60] sm:$0xff]
  %v1396 = vld [vmem:[#allocation2 + $0x68] sm:$0xff]
  %v1397 = vld [vmem:[#allocation2 + $0x70] sm:$0xff]
  %v1398 = vld [vmem:[#allocation2 + $0x78] sm:$0xff]
  %v1399 = vld [vmem:[#allocation2 + $0x80] sm:$0xff]
  %1416 = vrot.lane.b32.xlu0 %v1384, 32
  %v1417 = vpop.permute.xlu0 %1416
  %1418 = vrot.lane.b32.xlu0 %v1385, 32
  %v1419 = vpop.permute.xlu0 %1418
  %1420 = vrot.lane.b32.xlu0 %v1386, 32
  %v1421 = vpop.permute.xlu0 %1420
  %1422 = vrot.lane.b32.xlu0 %v1387, 32
  %v1423 = vpop.permute.xlu0 %1422
  %1424 = vrot.lane.b32.xlu0 %v1388, 32
  %v1425 = vpop.permute.xlu0 %1424
  %1426 = vrot.lane.b32.xlu0 %v1389, 32
  %v1427 = vpop.permute.xlu0 %1426
  %1428 = vrot.lane.b32.xlu0 %v1390, 32
  %v1429 = vpop.permute.xlu0 %1428
  %1430 = vrot.lane.b32.xlu0 %v1391, 32
  %v1431 = vpop.permute.xlu0 %1430
  %1432 = vrot.lane.b32.xlu0 %v1392, 32
  %v1433 = vpop.permute.xlu0 %1432
  %1434 = vrot.lane.b32.xlu0 %v1393, 32
  %v1435 = vpop.permute.xlu0 %1434
  %1436 = vrot.lane.b32.xlu0 %v1394, 32
  %v1437 = vpop.permute.xlu0 %1436
  %1438 = vrot.lane.b32.xlu0 %v1395, 32
  %v1439 = vpop.permute.xlu0 %1438
  %1440 = vrot.lane.b32.xlu0 %v1396, 32
  %v1441 = vpop.permute.xlu0 %1440
  %1442 = vrot.lane.b32.xlu0 %v1397, 32
  %v1443 = vpop.permute.xlu0 %1442
  %1444 = vrot.lane.b32.xlu0 %v1398, 32
  %v1445 = vpop.permute.xlu0 %1444
  %1446 = vrot.lane.b32.xlu0 %v1399, 32
  %v1447 = vpop.permute.xlu0 %1446
  %1464 = vst.msk [vmem:[#allocation3] sm:$0xff] %vm187, %v1417
  %1465 = vst.msk [vmem:[#allocation3 + $0x10] sm:$0xff] %vm187, %v1419
  %1466 = vst.msk [vmem:[#allocation3 + $0x20] sm:$0xff] %vm187, %v1421
  %1467 = vst.msk [vmem:[#allocation3 + $0x30] sm:$0xff] %vm187, %v1423
  %1468 = vst.msk [vmem:[#allocation3 + $0x40] sm:$0xff] %vm187, %v1425
  %1469 = vst.msk [vmem:[#allocation3 + $0x50] sm:$0xff] %vm187, %v1427
  %1470 = vst.msk [vmem:[#allocation3 + $0x60] sm:$0xff] %vm187, %v1429
  %1471 = vst.msk [vmem:[#allocation3 + $0x70] sm:$0xff] %vm187, %v1431
  %1472 = vst.msk [vmem:[#allocation3 + $0x80] sm:$0xff] %vm187, %v1433
  %1473 = vst.msk [vmem:[#allocation3 + $0x90] sm:$0xff] %vm187, %v1435
  %1474 = vst.msk [vmem:[#allocation3 + $0xa0] sm:$0xff] %vm187, %v1437
  %1475 = vst.msk [vmem:[#allocation3 + $0xb0] sm:$0xff] %vm187, %v1439
  %1476 = vst.msk [vmem:[#allocation3 + $0xc0] sm:$0xff] %vm187, %v1441
  %1477 = vst.msk [vmem:[#allocation3 + $0xd0] sm:$0xff] %vm187, %v1443
  %1478 = vst.msk [vmem:[#allocation3 + $0xe0] sm:$0xff] %vm187, %v1445
  %1479 = vst.msk [vmem:[#allocation3 + $0xf0] sm:$0xff] %vm187, %v1447
  %v1480 = vld [vmem:[#allocation2 + $0x10] sm:$0xff]
  %v1481 = vld [vmem:[#allocation2 + $0x18] sm:$0xff]
  %v1482 = vld [vmem:[#allocation2 + $0x20] sm:$0xff]
  %v1483 = vld [vmem:[#allocation2 + $0x28] sm:$0xff]
  %v1484 = vld [vmem:[#allocation2 + $0x30] sm:$0xff]
  %v1485 = vld [vmem:[#allocation2 + $0x38] sm:$0xff]
  %v1486 = vld [vmem:[#allocation2 + $0x40] sm:$0xff]
  %v1487 = vld [vmem:[#allocation2 + $0x48] sm:$0xff]
  %v1488 = vld [vmem:[#allocation2 + $0x50] sm:$0xff]
  %v1489 = vld [vmem:[#allocation2 + $0x58] sm:$0xff]
  %v1490 = vld [vmem:[#allocation2 + $0x60] sm:$0xff]
  %v1491 = vld [vmem:[#allocation2 + $0x68] sm:$0xff]
  %v1492 = vld [vmem:[#allocation2 + $0x70] sm:$0xff]
  %v1493 = vld [vmem:[#allocation2 + $0x78] sm:$0xff]
  %v1494 = vld [vmem:[#allocation2 + $0x80] sm:$0xff]
  %v1495 = vld [vmem:[#allocation2 + $0x88] sm:$0xff]
  %1512 = vrot.lane.b32.xlu0 %v1480, 64
  %v1513 = vpop.permute.xlu0 %1512
  %1514 = vrot.lane.b32.xlu0 %v1481, 64
  %v1515 = vpop.permute.xlu0 %1514
  %1516 = vrot.lane.b32.xlu0 %v1482, 64
  %v1517 = vpop.permute.xlu0 %1516
  %1518 = vrot.lane.b32.xlu0 %v1483, 64
  %v1519 = vpop.permute.xlu0 %1518
  %1520 = vrot.lane.b32.xlu0 %v1484, 64
  %v1521 = vpop.permute.xlu0 %1520
  %1522 = vrot.lane.b32.xlu0 %v1485, 64
  %v1523 = vpop.permute.xlu0 %1522
  %1524 = vrot.lane.b32.xlu0 %v1486, 64
  %v1525 = vpop.permute.xlu0 %1524
  %1526 = vrot.lane.b32.xlu0 %v1487, 64
  %v1527 = vpop.permute.xlu0 %1526
  %1528 = vrot.lane.b32.xlu0 %v1488, 64
  %v1529 = vpop.permute.xlu0 %1528
  %1530 = vrot.lane.b32.xlu0 %v1489, 64
  %v1531 = vpop.permute.xlu0 %1530
  %1532 = vrot.lane.b32.xlu0 %v1490, 64
  %v1533 = vpop.permute.xlu0 %1532
  %1534 = vrot.lane.b32.xlu0 %v1491, 64
  %v1535 = vpop.permute.xlu0 %1534
  %1536 = vrot.lane.b32.xlu0 %v1492, 64
  %v1537 = vpop.permute.xlu0 %1536
  %1538 = vrot.lane.b32.xlu0 %v1493, 64
  %v1539 = vpop.permute.xlu0 %1538
  %1540 = vrot.lane.b32.xlu0 %v1494, 64
  %v1541 = vpop.permute.xlu0 %1540
  %1542 = vrot.lane.b32.xlu0 %v1495, 64
  %v1543 = vpop.permute.xlu0 %1542
  %1560 = vst.msk [vmem:[#allocation3] sm:$0xff] %vm284, %v1513
  %1561 = vst.msk [vmem:[#allocation3 + $0x10] sm:$0xff] %vm284, %v1515
  %1562 = vst.msk [vmem:[#allocation3 + $0x20] sm:$0xff] %vm284, %v1517
  %1563 = vst.msk [vmem:[#allocation3 + $0x30] sm:$0xff] %vm284, %v1519
  %1564 = vst.msk [vmem:[#allocation3 + $0x40] sm:$0xff] %vm284, %v1521
  %1565 = vst.msk [vmem:[#allocation3 + $0x50] sm:$0xff] %vm284, %v1523
  %1566 = vst.msk [vmem:[#allocation3 + $0x60] sm:$0xff] %vm284, %v1525
  %1567 = vst.msk [vmem:[#allocation3 + $0x70] sm:$0xff] %vm284, %v1527
  %1568 = vst.msk [vmem:[#allocation3 + $0x80] sm:$0xff] %vm284, %v1529
  %1569 = vst.msk [vmem:[#allocation3 + $0x90] sm:$0xff] %vm284, %v1531
  %1570 = vst.msk [vmem:[#allocation3 + $0xa0] sm:$0xff] %vm284, %v1533
  %1571 = vst.msk [vmem:[#allocation3 + $0xb0] sm:$0xff] %vm284, %v1535
  %1572 = vst.msk [vmem:[#allocation3 + $0xc0] sm:$0xff] %vm284, %v1537
  %1573 = vst.msk [vmem:[#allocation3 + $0xd0] sm:$0xff] %vm284, %v1539
  %1574 = vst.msk [vmem:[#allocation3 + $0xe0] sm:$0xff] %vm284, %v1541
  %1575 = vst.msk [vmem:[#allocation3 + $0xf0] sm:$0xff] %vm284, %v1543
  %v1576 = vld [vmem:[#allocation2 + $0x18] sm:$0xff]
  %v1577 = vld [vmem:[#allocation2 + $0x20] sm:$0xff]
  %v1578 = vld [vmem:[#allocation2 + $0x28] sm:$0xff]
  %v1579 = vld [vmem:[#allocation2 + $0x30] sm:$0xff]
  %v1580 = vld [vmem:[#allocation2 + $0x38] sm:$0xff]
  %v1581 = vld [vmem:[#allocation2 + $0x40] sm:$0xff]
  %v1582 = vld [vmem:[#allocation2 + $0x48] sm:$0xff]
  %v1583 = vld [vmem:[#allocation2 + $0x50] sm:$0xff]
  %v1584 = vld [vmem:[#allocation2 + $0x58] sm:$0xff]
  %v1585 = vld [vmem:[#allocation2 + $0x60] sm:$0xff]
  %v1586 = vld [vmem:[#allocation2 + $0x68] sm:$0xff]
  %v1587 = vld [vmem:[#allocation2 + $0x70] sm:$0xff]
  %v1588 = vld [vmem:[#allocation2 + $0x78] sm:$0xff]
  %v1589 = vld [vmem:[#allocation2 + $0x80] sm:$0xff]
  %v1590 = vld [vmem:[#allocation2 + $0x88] sm:$0xff]
  %v1591 = vld [vmem:[#allocation2 + $0x90] sm:$0xff]
  %1608 = vrot.lane.b32.xlu0 %v1576, 96
  %v1609 = vpop.permute.xlu0 %1608
  %1610 = vrot.lane.b32.xlu0 %v1577, 96
  %v1611 = vpop.permute.xlu0 %1610
  %1612 = vrot.lane.b32.xlu0 %v1578, 96
  %v1613 = vpop.permute.xlu0 %1612
  %1614 = vrot.lane.b32.xlu0 %v1579, 96
  %v1615 = vpop.permute.xlu0 %1614
  %1616 = vrot.lane.b32.xlu0 %v1580, 96
  %v1617 = vpop.permute.xlu0 %1616
  %1618 = vrot.lane.b32.xlu0 %v1581, 96
  %v1619 = vpop.permute.xlu0 %1618
  %1620 = vrot.lane.b32.xlu0 %v1582, 96
  %v1621 = vpop.permute.xlu0 %1620
  %1622 = vrot.lane.b32.xlu0 %v1583, 96
  %v1623 = vpop.permute.xlu0 %1622
  %1624 = vrot.lane.b32.xlu0 %v1584, 96
  %v1625 = vpop.permute.xlu0 %1624
  %1626 = vrot.lane.b32.xlu0 %v1585, 96
  %v1627 = vpop.permute.xlu0 %1626
  %1628 = vrot.lane.b32.xlu0 %v1586, 96
  %v1629 = vpop.permute.xlu0 %1628
  %1630 = vrot.lane.b32.xlu0 %v1587, 96
  %v1631 = vpop.permute.xlu0 %1630
  %1632 = vrot.lane.b32.xlu0 %v1588, 96
  %v1633 = vpop.permute.xlu0 %1632
  %1634 = vrot.lane.b32.xlu0 %v1589, 96
  %v1635 = vpop.permute.xlu0 %1634
  %1636 = vrot.lane.b32.xlu0 %v1590, 96
  %v1637 = vpop.permute.xlu0 %1636
  %1638 = vrot.lane.b32.xlu0 %v1591, 96
  %v1639 = vpop.permute.xlu0 %1638
  %1656 = vst.msk [vmem:[#allocation3] sm:$0xff] %vm381, %v1609
  %1657 = vst.msk [vmem:[#allocation3 + $0x10] sm:$0xff] %vm381, %v1611
  %1658 = vst.msk [vmem:[#allocation3 + $0x20] sm:$0xff] %vm381, %v1613
  %1659 = vst.msk [vmem:[#allocation3 + $0x30] sm:$0xff] %vm381, %v1615
  %1660 = vst.msk [vmem:[#allocation3 + $0x40] sm:$0xff] %vm381, %v1617
  %1661 = vst.msk [vmem:[#allocation3 + $0x50] sm:$0xff] %vm381, %v1619
  %1662 = vst.msk [vmem:[#allocation3 + $0x60] sm:$0xff] %vm381, %v1621
  %1663 = vst.msk [vmem:[#allocation3 + $0x70] sm:$0xff] %vm381, %v1623
  %1664 = vst.msk [vmem:[#allocation3 + $0x80] sm:$0xff] %vm381, %v1625
  %1665 = vst.msk [vmem:[#allocation3 + $0x90] sm:$0xff] %vm381, %v1627
  %1666 = vst.msk [vmem:[#allocation3 + $0xa0] sm:$0xff] %vm381, %v1629
  %1667 = vst.msk [vmem:[#allocation3 + $0xb0] sm:$0xff] %vm381, %v1631
  %1668 = vst.msk [vmem:[#allocation3 + $0xc0] sm:$0xff] %vm381, %v1633
  %1669 = vst.msk [vmem:[#allocation3 + $0xd0] sm:$0xff] %vm381, %v1635
  %1670 = vst.msk [vmem:[#allocation3 + $0xe0] sm:$0xff] %vm381, %v1637
  %1671 = vst.msk [vmem:[#allocation3 + $0xf0] sm:$0xff] %vm381, %v1639
  %v1672 = vld [vmem:[#allocation2 + $0x20] sm:$0xff]
  %v1673 = vld [vmem:[#allocation2 + $0x28] sm:$0xff]
  %v1674 = vld [vmem:[#allocation2 + $0x30] sm:$0xff]
  %v1675 = vld [vmem:[#allocation2 + $0x38] sm:$0xff]
  %v1676 = vld [vmem:[#allocation2 + $0x40] sm:$0xff]
  %v1677 = vld [vmem:[#allocation2 + $0x48] sm:$0xff]
  %v1678 = vld [vmem:[#allocation2 + $0x50] sm:$0xff]
  %v1679 = vld [vmem:[#allocation2 + $0x58] sm:$0xff]
  %v1680 = vld [vmem:[#allocation2 + $0x60] sm:$0xff]
  %v1681 = vld [vmem:[#allocation2 + $0x68] sm:$0xff]
  %v1682 = vld [vmem:[#allocation2 + $0x70] sm:$0xff]
  %v1683 = vld [vmem:[#allocation2 + $0x78] sm:$0xff]
  %v1684 = vld [vmem:[#allocation2 + $0x80] sm:$0xff]
  %v1685 = vld [vmem:[#allocation2 + $0x88] sm:$0xff]
  %v1686 = vld [vmem:[#allocation2 + $0x90] sm:$0xff]
  %v1687 = vld [vmem:[#allocation2 + $0x98] sm:$0xff]
  %1688 = vst.msk [vmem:[#allocation3 + $0x8] sm:$0xff] %vm38, %v1672
  %1689 = vst.msk [vmem:[#allocation3 + $0x18] sm:$0xff] %vm38, %v1673
  %1690 = vst.msk [vmem:[#allocation3 + $0x28] sm:$0xff] %vm38, %v1674
  %1691 = vst.msk [vmem:[#allocation3 + $0x38] sm:$0xff] %vm38, %v1675
  %1692 = vst.msk [vmem:[#allocation3 + $0x48] sm:$0xff] %vm38, %v1676
  %1693 = vst.msk [vmem:[#allocation3 + $0x58] sm:$0xff] %vm38, %v1677
  %1694 = vst.msk [vmem:[#allocation3 + $0x68] sm:$0xff] %vm38, %v1678
  %1695 = vst.msk [vmem:[#allocation3 + $0x78] sm:$0xff] %vm38, %v1679
  %1696 = vst.msk [vmem:[#allocation3 + $0x88] sm:$0xff] %vm38, %v1680
  %1697 = vst.msk [vmem:[#allocation3 + $0x98] sm:$0xff] %vm38, %v1681
  %1698 = vst.msk [vmem:[#allocation3 + $0xa8] sm:$0xff] %vm38, %v1682
  %1699 = vst.msk [vmem:[#allocation3 + $0xb8] sm:$0xff] %vm38, %v1683
  %1700 = vst.msk [vmem:[#allocation3 + $0xc8] sm:$0xff] %vm38, %v1684
  %1701 = vst.msk [vmem:[#allocation3 + $0xd8] sm:$0xff] %vm38, %v1685
  %1702 = vst.msk [vmem:[#allocation3 + $0xe8] sm:$0xff] %vm38, %v1686
  %1703 = vst.msk [vmem:[#allocation3 + $0xf8] sm:$0xff] %vm38, %v1687
  %v1704 = vld [vmem:[#allocation3] sm:$0xff]
  %v1705 = vld [vmem:[#allocation3 + $0x8] sm:$0xff]
  %v1706 = vld [vmem:[#allocation3 + $0x10] sm:$0xff]
  %v1707 = vld [vmem:[#allocation3 + $0x18] sm:$0xff]
  %v1708 = vld [vmem:[#allocation3 + $0x20] sm:$0xff]
  %v1709 = vld [vmem:[#allocation3 + $0x28] sm:$0xff]
  %v1710 = vld [vmem:[#allocation3 + $0x30] sm:$0xff]
  %v1711 = vld [vmem:[#allocation3 + $0x38] sm:$0xff]
  %v1712 = vld [vmem:[#allocation3 + $0x40] sm:$0xff]
  %v1713 = vld [vmem:[#allocation3 + $0x48] sm:$0xff]
  %v1714 = vld [vmem:[#allocation3 + $0x50] sm:$0xff]
  %v1715 = vld [vmem:[#allocation3 + $0x58] sm:$0xff]
  %v1716 = vld [vmem:[#allocation3 + $0x60] sm:$0xff]
  %v1717 = vld [vmem:[#allocation3 + $0x68] sm:$0xff]
  %v1718 = vld [vmem:[#allocation3 + $0x70] sm:$0xff]
  %v1719 = vld [vmem:[#allocation3 + $0x78] sm:$0xff]
  %v1720 = vld [vmem:[#allocation3 + $0x80] sm:$0xff]
  %v1721 = vld [vmem:[#allocation3 + $0x88] sm:$0xff]
  %v1722 = vld [vmem:[#allocation3 + $0x90] sm:$0xff]
  %v1723 = vld [vmem:[#allocation3 + $0x98] sm:$0xff]
  %v1724 = vld [vmem:[#allocation3 + $0xa0] sm:$0xff]
  %v1725 = vld [vmem:[#allocation3 + $0xa8] sm:$0xff]
  %v1726 = vld [vmem:[#allocation3 + $0xb0] sm:$0xff]
  %v1727 = vld [vmem:[#allocation3 + $0xb8] sm:$0xff]
  %v1728 = vld [vmem:[#allocation3 + $0xc0] sm:$0xff]
  %v1729 = vld [vmem:[#allocation3 + $0xc8] sm:$0xff]
  %v1730 = vld [vmem:[#allocation3 + $0xd0] sm:$0xff]
  %v1731 = vld [vmem:[#allocation3 + $0xd8] sm:$0xff]
  %v1732 = vld [vmem:[#allocation3 + $0xe0] sm:$0xff]
  %v1733 = vld [vmem:[#allocation3 + $0xe8] sm:$0xff]
  %v1734 = vld [vmem:[#allocation3 + $0xf0] sm:$0xff]
  %v1735 = vld [vmem:[#allocation3 + $0xf8] sm:$0xff]
  %s1736 = scalar_lea.vmem %s1, 320
  %v1737 = vld [vmem:[%s1736] sm:$0xff]
  %v1738 = vld [vmem:[%s1736 + $0x8] sm:$0xff]
  %v1739 = vld [vmem:[%s1736 + $0x10] sm:$0xff]
  %v1740 = vld [vmem:[%s1736 + $0x18] sm:$0xff]
  %v1741 = vld [vmem:[%s1736 + $0x20] sm:$0xff]
  %v1742 = vld [vmem:[%s1736 + $0x28] sm:$0xff]
  %v1743 = vld [vmem:[%s1736 + $0x30] sm:$0xff]
  %v1744 = vld [vmem:[%s1736 + $0x38] sm:$0xff]
  %v1745 = vld [vmem:[%s1736 + $0x40] sm:$0xff]
  %v1746 = vld [vmem:[%s1736 + $0x48] sm:$0xff]
  %v1747 = vld [vmem:[%s1736 + $0x50] sm:$0xff]
  %v1748 = vld [vmem:[%s1736 + $0x58] sm:$0xff]
  %v1749 = vld [vmem:[%s1736 + $0x60] sm:$0xff]
  %v1750 = vld [vmem:[%s1736 + $0x68] sm:$0xff]
  %v1751 = vld [vmem:[%s1736 + $0x70] sm:$0xff]
  %v1752 = vld [vmem:[%s1736 + $0x78] sm:$0xff]
  %v1753 = vld [vmem:[%s1736 + $0x80] sm:$0xff]
  %v1754 = vld [vmem:[%s1736 + $0x88] sm:$0xff]
  %v1755 = vld [vmem:[%s1736 + $0x90] sm:$0xff]
  %v1756 = vld [vmem:[%s1736 + $0x98] sm:$0xff]
  %s1757 = scalar_lea.vmem %s2, 2
  %v1758 = vld [vmem:[%s1757] sm:$0x1]
  %v1760 = vlaneseq
  %v1761 = vshrl.u32 %v1760, 7
  %v1762 = vsub.s32 0, %v1761
  %v1763 = vrot.slane %v1758, %v1762
  %v1766 = vsel %vm38, %v1705, 0
  %v1769 = vsel %vm38, %v1707, 0
  %v1772 = vsel %vm38, %v1709, 0
  %v1775 = vsel %vm38, %v1711, 0
  %v1778 = vsel %vm38, %v1713, 0
  %v1781 = vsel %vm38, %v1715, 0
  %v1784 = vsel %vm38, %v1717, 0
  %v1787 = vsel %vm38, %v1719, 0
  %v1790 = vsel %vm38, %v1721, 0
  %v1793 = vsel %vm38, %v1723, 0
  %v1796 = vsel %vm38, %v1725, 0
  %v1799 = vsel %vm38, %v1727, 0
  %v1802 = vsel %vm38, %v1729, 0
  %v1805 = vsel %vm38, %v1731, 0
  %v1808 = vsel %vm38, %v1733, 0
  %v1811 = vsel %vm38, %v1735, 0
  %1813 = vmatprep.subr.mxu0 0.0
  %1814 = vmatpush1.msra.mxu0 %v1752
  %1815 = vmatprep.subr.mxu0 0.0
  %1816 = vmatpush1.msra.mxu0 %v1751
  %1817 = vmatprep.subr.mxu0 0.0
  %1818 = vmatpush1.msra.mxu0 %v1750
  %1819 = vmatprep.subr.mxu0 0.0
  %1820 = vmatpush1.msra.mxu0 %v1749
  %1821 = vmatprep.subr.mxu0 0.0
  %1822 = vmatpush1.msra.mxu0 %v1748
  %1823 = vmatprep.subr.mxu0 0.0
  %1824 = vmatpush1.msra.mxu0 %v1747
  %1825 = vmatprep.subr.mxu0 0.0
  %1826 = vmatpush1.msra.mxu0 %v1746
  %1827 = vmatprep.subr.mxu0 0.0
  %1828 = vmatpush1.msra.mxu0 %v1745
  %1829 = vmatprep.subr.mxu0 0.0
  %1830 = vmatpush1.msra.mxu0 %v1744
  %1831 = vmatprep.subr.mxu0 0.0
  %1832 = vmatpush1.msra.mxu0 %v1743
  %1833 = vmatprep.subr.mxu0 0.0
  %1834 = vmatpush1.msra.mxu0 %v1742
  %1835 = vmatprep.subr.mxu0 0.0
  %1836 = vmatpush1.msra.mxu0 %v1741
  %1837 = vmatprep.subr.mxu0 0.0
  %1838 = vmatpush1.msra.mxu0 %v1740
  %1839 = vmatprep.subr.mxu0 0.0
  %1840 = vmatpush1.msra.mxu0 %v1739
  %1841 = vmatprep.subr.mxu0 0.0
  %1842 = vmatpush1.msra.mxu0 %v1738
  %1843 = vmatprep.subr.mxu0 0.0
  %1844 = vmatpush1.msra.mxu0 %v1737
  %1845 = vmatprep.subr.mxu0 0.0
  %1846 = vmatpush2.msra.mxu0 0.0
  %1847 = vmatprep.subr.mxu0 0.0
  %1848 = vmatpush2.msra.mxu0 0.0
  %1849 = vmatprep.subr.mxu0 0.0
  %1850 = vmatpush2.msra.mxu0 0.0
  %1851 = vmatprep.subr.mxu0 0.0
  %1852 = vmatpush2.msra.mxu0 0.0
  %1853 = vmatprep.subr.mxu0 0.0
  %1854 = vmatpush2.msra.mxu0 0.0
  %1855 = vmatprep.subr.mxu0 0.0
  %1856 = vmatpush2.msra.mxu0 0.0
  %1857 = vmatprep.subr.mxu0 0.0
  %1858 = vmatpush2.msra.mxu0 0.0
  %1859 = vmatprep.subr.mxu0 0.0
  %1860 = vmatpush2.msra.mxu0 0.0
  %1861 = vmatprep.subr.mxu0 0.0
  %1862 = vmatpush2.msra.mxu0 0.0
  %1863 = vmatprep.subr.mxu0 0.0
  %1864 = vmatpush2.msra.mxu0 0.0
  %1865 = vmatprep.subr.mxu0 0.0
  %1866 = vmatpush2.msra.mxu0 0.0
  %1867 = vmatprep.subr.mxu0 0.0
  %1868 = vmatpush2.msra.mxu0 0.0
  %1869 = vmatprep.subr.mxu0 0.0
  %1870 = vmatpush2.msra.mxu0 %v1756
  %1871 = vmatprep.subr.mxu0 0.0
  %1872 = vmatpush2.msra.mxu0 %v1755
  %1873 = vmatprep.subr.mxu0 0.0
  %1874 = vmatpush2.msra.mxu0 %v1754
  %1875 = vmatprep.subr.mxu0 0.0
  %1876 = vmatpush2.msra.mxu0 %v1753
  %1877 = vmatprep.mubr.f32.mxu0 %v1766
  %1878 = vmatmul.mubr.f32.gmra.mxu0 %v1704
  %v1879 = vpop.f32.mrf.mxu0
  %v1880 = vadd.f32 %v1763, %v1879
  %v1881 = vpop.f32.mrf.mxu0
  %1882 = vmatprep.mubr.f32.mxu0 %v1769
  %1883 = vmatmul.mubr.f32.gmra.mxu0 %v1706
  %v1884 = vpop.f32.mrf.mxu0
  %v1885 = vadd.f32 %v1763, %v1884
  %v1886 = vpop.f32.mrf.mxu0
  %1887 = vmatprep.mubr.f32.mxu0 %v1772
  %1888 = vmatmul.mubr.f32.gmra.mxu0 %v1708
  %v1889 = vpop.f32.mrf.mxu0
  %v1890 = vadd.f32 %v1763, %v1889
  %v1891 = vpop.f32.mrf.mxu0
  %1892 = vmatprep.mubr.f32.mxu0 %v1775
  %1893 = vmatmul.mubr.f32.gmra.mxu0 %v1710
  %v1894 = vpop.f32.mrf.mxu0
  %v1895 = vadd.f32 %v1763, %v1894
  %v1896 = vpop.f32.mrf.mxu0
  %1897 = vmatprep.mubr.f32.mxu0 %v1778
  %1898 = vmatmul.mubr.f32.gmra.mxu0 %v1712
  %v1899 = vpop.f32.mrf.mxu0
  %v1900 = vadd.f32 %v1763, %v1899
  %v1901 = vpop.f32.mrf.mxu0
  %1902 = vmatprep.mubr.f32.mxu0 %v1781
  %1903 = vmatmul.mubr.f32.gmra.mxu0 %v1714
  %v1904 = vpop.f32.mrf.mxu0
  %v1905 = vadd.f32 %v1763, %v1904
  %v1906 = vpop.f32.mrf.mxu0
  %1907 = vmatprep.mubr.f32.mxu0 %v1784
  %1908 = vmatmul.mubr.f32.gmra.mxu0 %v1716
  %v1909 = vpop.f32.mrf.mxu0
  %v1910 = vadd.f32 %v1763, %v1909
  %v1911 = vpop.f32.mrf.mxu0
  %1912 = vmatprep.mubr.f32.mxu0 %v1787
  %1913 = vmatmul.mubr.f32.gmra.mxu0 %v1718
  %v1914 = vpop.f32.mrf.mxu0
  %v1915 = vadd.f32 %v1763, %v1914
  %v1916 = vpop.f32.mrf.mxu0
  %1917 = vmatprep.mubr.f32.mxu0 %v1790
  %1918 = vmatmul.mubr.f32.gmra.mxu0 %v1720
  %v1919 = vpop.f32.mrf.mxu0
  %v1920 = vadd.f32 %v1763, %v1919
  %v1921 = vpop.f32.mrf.mxu0
  %1922 = vmatprep.mubr.f32.mxu0 %v1793
  %1923 = vmatmul.mubr.f32.gmra.mxu0 %v1722
  %v1924 = vpop.f32.mrf.mxu0
  %v1925 = vadd.f32 %v1763, %v1924
  %v1926 = vpop.f32.mrf.mxu0
  %1927 = vmatprep.mubr.f32.mxu0 %v1796
  %1928 = vmatmul.mubr.f32.gmra.mxu0 %v1724
  %v1929 = vpop.f32.mrf.mxu0
  %v1930 = vadd.f32 %v1763, %v1929
  %v1931 = vpop.f32.mrf.mxu0
  %1932 = vmatprep.mubr.f32.mxu0 %v1799
  %1933 = vmatmul.mubr.f32.gmra.mxu0 %v1726
  %v1934 = vpop.f32.mrf.mxu0
  %v1935 = vadd.f32 %v1763, %v1934
  %v1936 = vpop.f32.mrf.mxu0
  %1937 = vmatprep.mubr.f32.mxu0 %v1802
  %1938 = vmatmul.mubr.f32.gmra.mxu0 %v1728
  %v1939 = vpop.f32.mrf.mxu0
  %v1940 = vadd.f32 %v1763, %v1939
  %v1941 = vpop.f32.mrf.mxu0
  %1942 = vmatprep.mubr.f32.mxu0 %v1805
  %1943 = vmatmul.mubr.f32.gmra.mxu0 %v1730
  %v1944 = vpop.f32.mrf.mxu0
  %v1945 = vadd.f32 %v1763, %v1944
  %v1946 = vpop.f32.mrf.mxu0
  %1947 = vmatprep.mubr.f32.mxu0 %v1808
  %1948 = vmatmul.mubr.f32.gmra.mxu0 %v1732
  %v1949 = vpop.f32.mrf.mxu0
  %v1950 = vadd.f32 %v1763, %v1949
  %v1951 = vpop.f32.mrf.mxu0
  %1952 = vmatprep.mubr.f32.mxu0 %v1811
  %1953 = vmatmul.mubr.f32.gmra.mxu0 %v1734
  %v1954 = vpop.f32.mrf.mxu0
  %v1955 = vadd.f32 %v1763, %v1954
  %v1956 = vpop.f32.mrf.mxu0
  %1957 = vdwg.mxu0
  %v1958 = vmax.f32 %v1880, 0.0
  %v1959 = vmax.f32 %v1885, 0.0
  %v1960 = vmax.f32 %v1890, 0.0
  %v1961 = vmax.f32 %v1895, 0.0
  %v1962 = vmax.f32 %v1900, 0.0
  %v1963 = vmax.f32 %v1905, 0.0
  %v1964 = vmax.f32 %v1910, 0.0
  %v1965 = vmax.f32 %v1915, 0.0
  %v1966 = vmax.f32 %v1920, 0.0
  %v1967 = vmax.f32 %v1925, 0.0
  %v1968 = vmax.f32 %v1930, 0.0
  %v1969 = vmax.f32 %v1935, 0.0
  %v1970 = vmax.f32 %v1940, 0.0
  %v1971 = vmax.f32 %v1945, 0.0
  %v1972 = vmax.f32 %v1950, 0.0
  %v1973 = vmax.f32 %v1955, 0.0
  %1974 = vst.msk [vmem:[#allocation2 + $0x10] sm:$0xff] %vm38, %v1958
  %1975 = vst.msk [vmem:[#allocation2 + $0x18] sm:$0xff] %vm38, %v1959
  %1976 = vst.msk [vmem:[#allocation2 + $0x20] sm:$0xff] %vm38, %v1960
  %1977 = vst.msk [vmem:[#allocation2 + $0x28] sm:$0xff] %vm38, %v1961
  %1978 = vst.msk [vmem:[#allocation2 + $0x30] sm:$0xff] %vm38, %v1962
  %1979 = vst.msk [vmem:[#allocation2 + $0x38] sm:$0xff] %vm38, %v1963
  %1980 = vst.msk [vmem:[#allocation2 + $0x40] sm:$0xff] %vm38, %v1964
  %1981 = vst.msk [vmem:[#allocation2 + $0x48] sm:$0xff] %vm38, %v1965
  %1982 = vst.msk [vmem:[#allocation2 + $0x50] sm:$0xff] %vm38, %v1966
  %1983 = vst.msk [vmem:[#allocation2 + $0x58] sm:$0xff] %vm38, %v1967
  %1984 = vst.msk [vmem:[#allocation2 + $0x60] sm:$0xff] %vm38, %v1968
  %1985 = vst.msk [vmem:[#allocation2 + $0x68] sm:$0xff] %vm38, %v1969
  %1986 = vst.msk [vmem:[#allocation2 + $0x70] sm:$0xff] %vm38, %v1970
  %1987 = vst.msk [vmem:[#allocation2 + $0x78] sm:$0xff] %vm38, %v1971
  %1988 = vst.msk [vmem:[#allocation2 + $0x80] sm:$0xff] %vm38, %v1972
  %1989 = vst.msk [vmem:[#allocation2 + $0x88] sm:$0xff] %vm38, %v1973
  %v1990 = vld [vmem:[#allocation2] sm:$0xff]
  %v1991 = vld [vmem:[#allocation2 + $0x8] sm:$0xff]
  %v1992 = vld [vmem:[#allocation2 + $0x10] sm:$0xff]
  %v1993 = vld [vmem:[#allocation2 + $0x18] sm:$0xff]
  %v1994 = vld [vmem:[#allocation2 + $0x20] sm:$0xff]
  %v1995 = vld [vmem:[#allocation2 + $0x28] sm:$0xff]
  %v1996 = vld [vmem:[#allocation2 + $0x30] sm:$0xff]
  %v1997 = vld [vmem:[#allocation2 + $0x38] sm:$0xff]
  %v1998 = vld [vmem:[#allocation2 + $0x40] sm:$0xff]
  %v1999 = vld [vmem:[#allocation2 + $0x48] sm:$0xff]
  %v2000 = vld [vmem:[#allocation2 + $0x50] sm:$0xff]
  %v2001 = vld [vmem:[#allocation2 + $0x58] sm:$0xff]
  %v2002 = vld [vmem:[#allocation2 + $0x60] sm:$0xff]
  %v2003 = vld [vmem:[#allocation2 + $0x68] sm:$0xff]
  %v2004 = vld [vmem:[#allocation2 + $0x70] sm:$0xff]
  %v2005 = vld [vmem:[#allocation2 + $0x78] sm:$0xff]
  %2006 = vst.msk [vmem:[#allocation3] sm:$0xff] %vm38, %v1990
  %2007 = vst.msk [vmem:[#allocation3 + $0x10] sm:$0xff] %vm38, %v1991
  %2008 = vst.msk [vmem:[#allocation3 + $0x20] sm:$0xff] %vm38, %v1992
  %2009 = vst.msk [vmem:[#allocation3 + $0x30] sm:$0xff] %vm38, %v1993
  %2010 = vst.msk [vmem:[#allocation3 + $0x40] sm:$0xff] %vm38, %v1994
  %2011 = vst.msk [vmem:[#allocation3 + $0x50] sm:$0xff] %vm38, %v1995
  %2012 = vst.msk [vmem:[#allocation3 + $0x60] sm:$0xff] %vm38, %v1996
  %2013 = vst.msk [vmem:[#allocation3 + $0x70] sm:$0xff] %vm38, %v1997
  %2014 = vst.msk [vmem:[#allocation3 + $0x80] sm:$0xff] %vm38, %v1998
  %2015 = vst.msk [vmem:[#allocation3 + $0x90] sm:$0xff] %vm38, %v1999
  %2016 = vst.msk [vmem:[#allocation3 + $0xa0] sm:$0xff] %vm38, %v2000
  %2017 = vst.msk [vmem:[#allocation3 + $0xb0] sm:$0xff] %vm38, %v2001
  %2018 = vst.msk [vmem:[#allocation3 + $0xc0] sm:$0xff] %vm38, %v2002
  %2019 = vst.msk [vmem:[#allocation3 + $0xd0] sm:$0xff] %vm38, %v2003
  %2020 = vst.msk [vmem:[#allocation3 + $0xe0] sm:$0xff] %vm38, %v2004
  %2021 = vst.msk [vmem:[#allocation3 + $0xf0] sm:$0xff] %vm38, %v2005
  %v2022 = vld [vmem:[#allocation2 + $0x8] sm:$0xff]
  %v2023 = vld [vmem:[#allocation2 + $0x10] sm:$0xff]
  %v2024 = vld [vmem:[#allocation2 + $0x18] sm:$0xff]
  %v2025 = vld [vmem:[#allocation2 + $0x20] sm:$0xff]
  %v2026 = vld [vmem:[#allocation2 + $0x28] sm:$0xff]
  %v2027 = vld [vmem:[#allocation2 + $0x30] sm:$0xff]
  %v2028 = vld [vmem:[#allocation2 + $0x38] sm:$0xff]
  %v2029 = vld [vmem:[#allocation2 + $0x40] sm:$0xff]
  %v2030 = vld [vmem:[#allocation2 + $0x48] sm:$0xff]
  %v2031 = vld [vmem:[#allocation2 + $0x50] sm:$0xff]
  %v2032 = vld [vmem:[#allocation2 + $0x58] sm:$0xff]
  %v2033 = vld [vmem:[#allocation2 + $0x60] sm:$0xff]
  %v2034 = vld [vmem:[#allocation2 + $0x68] sm:$0xff]
  %v2035 = vld [vmem:[#allocation2 + $0x70] sm:$0xff]
  %v2036 = vld [vmem:[#allocation2 + $0x78] sm:$0xff]
  %v2037 = vld [vmem:[#allocation2 + $0x80] sm:$0xff]
  %2054 = vrot.lane.b32.xlu0 %v2022, 32
  %v2055 = vpop.permute.xlu0 %2054
  %2056 = vrot.lane.b32.xlu0 %v2023, 32
  %v2057 = vpop.permute.xlu0 %2056
  %2058 = vrot.lane.b32.xlu0 %v2024, 32
  %v2059 = vpop.permute.xlu0 %2058
  %2060 = vrot.lane.b32.xlu0 %v2025, 32
  %v2061 = vpop.permute.xlu0 %2060
  %2062 = vrot.lane.b32.xlu0 %v2026, 32
  %v2063 = vpop.permute.xlu0 %2062
  %2064 = vrot.lane.b32.xlu0 %v2027, 32
  %v2065 = vpop.permute.xlu0 %2064
  %2066 = vrot.lane.b32.xlu0 %v2028, 32
  %v2067 = vpop.permute.xlu0 %2066
  %2068 = vrot.lane.b32.xlu0 %v2029, 32
  %v2069 = vpop.permute.xlu0 %2068
  %2070 = vrot.lane.b32.xlu0 %v2030, 32
  %v2071 = vpop.permute.xlu0 %2070
  %2072 = vrot.lane.b32.xlu0 %v2031, 32
  %v2073 = vpop.permute.xlu0 %2072
  %2074 = vrot.lane.b32.xlu0 %v2032, 32
  %v2075 = vpop.permute.xlu0 %2074
  %2076 = vrot.lane.b32.xlu0 %v2033, 32
  %v2077 = vpop.permute.xlu0 %2076
  %2078 = vrot.lane.b32.xlu0 %v2034, 32
  %v2079 = vpop.permute.xlu0 %2078
  %2080 = vrot.lane.b32.xlu0 %v2035, 32
  %v2081 = vpop.permute.xlu0 %2080
  %2082 = vrot.lane.b32.xlu0 %v2036, 32
  %v2083 = vpop.permute.xlu0 %2082
  %2084 = vrot.lane.b32.xlu0 %v2037, 32
  %v2085 = vpop.permute.xlu0 %2084
  %2102 = vst.msk [vmem:[#allocation3] sm:$0xff] %vm187, %v2055
  %2103 = vst.msk [vmem:[#allocation3 + $0x10] sm:$0xff] %vm187, %v2057
  %2104 = vst.msk [vmem:[#allocation3 + $0x20] sm:$0xff] %vm187, %v2059
  %2105 = vst.msk [vmem:[#allocation3 + $0x30] sm:$0xff] %vm187, %v2061
  %2106 = vst.msk [vmem:[#allocation3 + $0x40] sm:$0xff] %vm187, %v2063
  %2107 = vst.msk [vmem:[#allocation3 + $0x50] sm:$0xff] %vm187, %v2065
  %2108 = vst.msk [vmem:[#allocation3 + $0x60] sm:$0xff] %vm187, %v2067
  %2109 = vst.msk [vmem:[#allocation3 + $0x70] sm:$0xff] %vm187, %v2069
  %2110 = vst.msk [vmem:[#allocation3 + $0x80] sm:$0xff] %vm187, %v2071
  %2111 = vst.msk [vmem:[#allocation3 + $0x90] sm:$0xff] %vm187, %v2073
  %2112 = vst.msk [vmem:[#allocation3 + $0xa0] sm:$0xff] %vm187, %v2075
  %2113 = vst.msk [vmem:[#allocation3 + $0xb0] sm:$0xff] %vm187, %v2077
  %2114 = vst.msk [vmem:[#allocation3 + $0xc0] sm:$0xff] %vm187, %v2079
  %2115 = vst.msk [vmem:[#allocation3 + $0xd0] sm:$0xff] %vm187, %v2081
  %2116 = vst.msk [vmem:[#allocation3 + $0xe0] sm:$0xff] %vm187, %v2083
  %2117 = vst.msk [vmem:[#allocation3 + $0xf0] sm:$0xff] %vm187, %v2085
  %v2118 = vld [vmem:[#allocation2 + $0x10] sm:$0xff]
  %v2119 = vld [vmem:[#allocation2 + $0x18] sm:$0xff]
  %v2120 = vld [vmem:[#allocation2 + $0x20] sm:$0xff]
  %v2121 = vld [vmem:[#allocation2 + $0x28] sm:$0xff]
  %v2122 = vld [vmem:[#allocation2 + $0x30] sm:$0xff]
  %v2123 = vld [vmem:[#allocation2 + $0x38] sm:$0xff]
  %v2124 = vld [vmem:[#allocation2 + $0x40] sm:$0xff]
  %v2125 = vld [vmem:[#allocation2 + $0x48] sm:$0xff]
  %v2126 = vld [vmem:[#allocation2 + $0x50] sm:$0xff]
  %v2127 = vld [vmem:[#allocation2 + $0x58] sm:$0xff]
  %v2128 = vld [vmem:[#allocation2 + $0x60] sm:$0xff]
  %v2129 = vld [vmem:[#allocation2 + $0x68] sm:$0xff]
  %v2130 = vld [vmem:[#allocation2 + $0x70] sm:$0xff]
  %v2131 = vld [vmem:[#allocation2 + $0x78] sm:$0xff]
  %v2132 = vld [vmem:[#allocation2 + $0x80] sm:$0xff]
  %v2133 = vld [vmem:[#allocation2 + $0x88] sm:$0xff]
  %2150 = vrot.lane.b32.xlu0 %v2118, 64
  %v2151 = vpop.permute.xlu0 %2150
  %2152 = vrot.lane.b32.xlu0 %v2119, 64
  %v2153 = vpop.permute.xlu0 %2152
  %2154 = vrot.lane.b32.xlu0 %v2120, 64
  %v2155 = vpop.permute.xlu0 %2154
  %2156 = vrot.lane.b32.xlu0 %v2121, 64
  %v2157 = vpop.permute.xlu0 %2156
  %2158 = vrot.lane.b32.xlu0 %v2122, 64
  %v2159 = vpop.permute.xlu0 %2158
  %2160 = vrot.lane.b32.xlu0 %v2123, 64
  %v2161 = vpop.permute.xlu0 %2160
  %2162 = vrot.lane.b32.xlu0 %v2124, 64
  %v2163 = vpop.permute.xlu0 %2162
  %2164 = vrot.lane.b32.xlu0 %v2125, 64
  %v2165 = vpop.permute.xlu0 %2164
  %2166 = vrot.lane.b32.xlu0 %v2126, 64
  %v2167 = vpop.permute.xlu0 %2166
  %2168 = vrot.lane.b32.xlu0 %v2127, 64
  %v2169 = vpop.permute.xlu0 %2168
  %2170 = vrot.lane.b32.xlu0 %v2128, 64
  %v2171 = vpop.permute.xlu0 %2170
  %2172 = vrot.lane.b32.xlu0 %v2129, 64
  %v2173 = vpop.permute.xlu0 %2172
  %2174 = vrot.lane.b32.xlu0 %v2130, 64
  %v2175 = vpop.permute.xlu0 %2174
  %2176 = vrot.lane.b32.xlu0 %v2131, 64
  %v2177 = vpop.permute.xlu0 %2176
  %2178 = vrot.lane.b32.xlu0 %v2132, 64
  %v2179 = vpop.permute.xlu0 %2178
  %2180 = vrot.lane.b32.xlu0 %v2133, 64
  %v2181 = vpop.permute.xlu0 %2180
  %2198 = vst.msk [vmem:[#allocation3] sm:$0xff] %vm284, %v2151
  %2199 = vst.msk [vmem:[#allocation3 + $0x10] sm:$0xff] %vm284, %v2153
  %2200 = vst.msk [vmem:[#allocation3 + $0x20] sm:$0xff] %vm284, %v2155
  %2201 = vst.msk [vmem:[#allocation3 + $0x30] sm:$0xff] %vm284, %v2157
  %2202 = vst.msk [vmem:[#allocation3 + $0x40] sm:$0xff] %vm284, %v2159
  %2203 = vst.msk [vmem:[#allocation3 + $0x50] sm:$0xff] %vm284, %v2161
  %2204 = vst.msk [vmem:[#allocation3 + $0x60] sm:$0xff] %vm284, %v2163
  %2205 = vst.msk [vmem:[#allocation3 + $0x70] sm:$0xff] %vm284, %v2165
  %2206 = vst.msk [vmem:[#allocation3 + $0x80] sm:$0xff] %vm284, %v2167
  %2207 = vst.msk [vmem:[#allocation3 + $0x90] sm:$0xff] %vm284, %v2169
  %2208 = vst.msk [vmem:[#allocation3 + $0xa0] sm:$0xff] %vm284, %v2171
  %2209 = vst.msk [vmem:[#allocation3 + $0xb0] sm:$0xff] %vm284, %v2173
  %2210 = vst.msk [vmem:[#allocation3 + $0xc0] sm:$0xff] %vm284, %v2175
  %2211 = vst.msk [vmem:[#allocation3 + $0xd0] sm:$0xff] %vm284, %v2177
  %2212 = vst.msk [vmem:[#allocation3 + $0xe0] sm:$0xff] %vm284, %v2179
  %2213 = vst.msk [vmem:[#allocation3 + $0xf0] sm:$0xff] %vm284, %v2181
  %v2214 = vld [vmem:[#allocation2 + $0x18] sm:$0xff]
  %v2215 = vld [vmem:[#allocation2 + $0x20] sm:$0xff]
  %v2216 = vld [vmem:[#allocation2 + $0x28] sm:$0xff]
  %v2217 = vld [vmem:[#allocation2 + $0x30] sm:$0xff]
  %v2218 = vld [vmem:[#allocation2 + $0x38] sm:$0xff]
  %v2219 = vld [vmem:[#allocation2 + $0x40] sm:$0xff]
  %v2220 = vld [vmem:[#allocation2 + $0x48] sm:$0xff]
  %v2221 = vld [vmem:[#allocation2 + $0x50] sm:$0xff]
  %v2222 = vld [vmem:[#allocation2 + $0x58] sm:$0xff]
  %v2223 = vld [vmem:[#allocation2 + $0x60] sm:$0xff]
  %v2224 = vld [vmem:[#allocation2 + $0x68] sm:$0xff]
  %v2225 = vld [vmem:[#allocation2 + $0x70] sm:$0xff]
  %v2226 = vld [vmem:[#allocation2 + $0x78] sm:$0xff]
  %v2227 = vld [vmem:[#allocation2 + $0x80] sm:$0xff]
  %v2228 = vld [vmem:[#allocation2 + $0x88] sm:$0xff]
  %v2229 = vld [vmem:[#allocation2 + $0x90] sm:$0xff]
  %2246 = vrot.lane.b32.xlu0 %v2214, 96
  %v2247 = vpop.permute.xlu0 %2246
  %2248 = vrot.lane.b32.xlu0 %v2215, 96
  %v2249 = vpop.permute.xlu0 %2248
  %2250 = vrot.lane.b32.xlu0 %v2216, 96
  %v2251 = vpop.permute.xlu0 %2250
  %2252 = vrot.lane.b32.xlu0 %v2217, 96
  %v2253 = vpop.permute.xlu0 %2252
  %2254 = vrot.lane.b32.xlu0 %v2218, 96
  %v2255 = vpop.permute.xlu0 %2254
  %2256 = vrot.lane.b32.xlu0 %v2219, 96
  %v2257 = vpop.permute.xlu0 %2256
  %2258 = vrot.lane.b32.xlu0 %v2220, 96
  %v2259 = vpop.permute.xlu0 %2258
  %2260 = vrot.lane.b32.xlu0 %v2221, 96
  %v2261 = vpop.permute.xlu0 %2260
  %2262 = vrot.lane.b32.xlu0 %v2222, 96
  %v2263 = vpop.permute.xlu0 %2262
  %2264 = vrot.lane.b32.xlu0 %v2223, 96
  %v2265 = vpop.permute.xlu0 %2264
  %2266 = vrot.lane.b32.xlu0 %v2224, 96
  %v2267 = vpop.permute.xlu0 %2266
  %2268 = vrot.lane.b32.xlu0 %v2225, 96
  %v2269 = vpop.permute.xlu0 %2268
  %2270 = vrot.lane.b32.xlu0 %v2226, 96
  %v2271 = vpop.permute.xlu0 %2270
  %2272 = vrot.lane.b32.xlu0 %v2227, 96
  %v2273 = vpop.permute.xlu0 %2272
  %2274 = vrot.lane.b32.xlu0 %v2228, 96
  %v2275 = vpop.permute.xlu0 %2274
  %2276 = vrot.lane.b32.xlu0 %v2229, 96
  %v2277 = vpop.permute.xlu0 %2276
  %2294 = vst.msk [vmem:[#allocation3] sm:$0xff] %vm381, %v2247
  %2295 = vst.msk [vmem:[#allocation3 + $0x10] sm:$0xff] %vm381, %v2249
  %2296 = vst.msk [vmem:[#allocation3 + $0x20] sm:$0xff] %vm381, %v2251
  %2297 = vst.msk [vmem:[#allocation3 + $0x30] sm:$0xff] %vm381, %v2253
  %2298 = vst.msk [vmem:[#allocation3 + $0x40] sm:$0xff] %vm381, %v2255
  %2299 = vst.msk [vmem:[#allocation3 + $0x50] sm:$0xff] %vm381, %v2257
  %2300 = vst.msk [vmem:[#allocation3 + $0x60] sm:$0xff] %vm381, %v2259
  %2301 = vst.msk [vmem:[#allocation3 + $0x70] sm:$0xff] %vm381, %v2261
  %2302 = vst.msk [vmem:[#allocation3 + $0x80] sm:$0xff] %vm381, %v2263
  %2303 = vst.msk [vmem:[#allocation3 + $0x90] sm:$0xff] %vm381, %v2265
  %2304 = vst.msk [vmem:[#allocation3 + $0xa0] sm:$0xff] %vm381, %v2267
  %2305 = vst.msk [vmem:[#allocation3 + $0xb0] sm:$0xff] %vm381, %v2269
  %2306 = vst.msk [vmem:[#allocation3 + $0xc0] sm:$0xff] %vm381, %v2271
  %2307 = vst.msk [vmem:[#allocation3 + $0xd0] sm:$0xff] %vm381, %v2273
  %2308 = vst.msk [vmem:[#allocation3 + $0xe0] sm:$0xff] %vm381, %v2275
  %2309 = vst.msk [vmem:[#allocation3 + $0xf0] sm:$0xff] %vm381, %v2277
  %v2310 = vld [vmem:[#allocation2 + $0x20] sm:$0xff]
  %v2311 = vld [vmem:[#allocation2 + $0x28] sm:$0xff]
  %v2312 = vld [vmem:[#allocation2 + $0x30] sm:$0xff]
  %v2313 = vld [vmem:[#allocation2 + $0x38] sm:$0xff]
  %v2314 = vld [vmem:[#allocation2 + $0x40] sm:$0xff]
  %v2315 = vld [vmem:[#allocation2 + $0x48] sm:$0xff]
  %v2316 = vld [vmem:[#allocation2 + $0x50] sm:$0xff]
  %v2317 = vld [vmem:[#allocation2 + $0x58] sm:$0xff]
  %v2318 = vld [vmem:[#allocation2 + $0x60] sm:$0xff]
  %v2319 = vld [vmem:[#allocation2 + $0x68] sm:$0xff]
  %v2320 = vld [vmem:[#allocation2 + $0x70] sm:$0xff]
  %v2321 = vld [vmem:[#allocation2 + $0x78] sm:$0xff]
  %v2322 = vld [vmem:[#allocation2 + $0x80] sm:$0xff]
  %v2323 = vld [vmem:[#allocation2 + $0x88] sm:$0xff]
  %v2324 = vld [vmem:[#allocation2 + $0x90] sm:$0xff]
  %v2325 = vld [vmem:[#allocation2 + $0x98] sm:$0xff]
  %2326 = vst.msk [vmem:[#allocation3 + $0x8] sm:$0xff] %vm38, %v2310
  %2327 = vst.msk [vmem:[#allocation3 + $0x18] sm:$0xff] %vm38, %v2311
  %2328 = vst.msk [vmem:[#allocation3 + $0x28] sm:$0xff] %vm38, %v2312
  %2329 = vst.msk [vmem:[#allocation3 + $0x38] sm:$0xff] %vm38, %v2313
  %2330 = vst.msk [vmem:[#allocation3 + $0x48] sm:$0xff] %vm38, %v2314
  %2331 = vst.msk [vmem:[#allocation3 + $0x58] sm:$0xff] %vm38, %v2315
  %2332 = vst.msk [vmem:[#allocation3 + $0x68] sm:$0xff] %vm38, %v2316
  %2333 = vst.msk [vmem:[#allocation3 + $0x78] sm:$0xff] %vm38, %v2317
  %2334 = vst.msk [vmem:[#allocation3 + $0x88] sm:$0xff] %vm38, %v2318
  %2335 = vst.msk [vmem:[#allocation3 + $0x98] sm:$0xff] %vm38, %v2319
  %2336 = vst.msk [vmem:[#allocation3 + $0xa8] sm:$0xff] %vm38, %v2320
  %2337 = vst.msk [vmem:[#allocation3 + $0xb8] sm:$0xff] %vm38, %v2321
  %2338 = vst.msk [vmem:[#allocation3 + $0xc8] sm:$0xff] %vm38, %v2322
  %2339 = vst.msk [vmem:[#allocation3 + $0xd8] sm:$0xff] %vm38, %v2323
  %2340 = vst.msk [vmem:[#allocation3 + $0xe8] sm:$0xff] %vm38, %v2324
  %2341 = vst.msk [vmem:[#allocation3 + $0xf8] sm:$0xff] %vm38, %v2325
  %v2342 = vld [vmem:[#allocation3] sm:$0xff]
  %v2343 = vld [vmem:[#allocation3 + $0x8] sm:$0xff]
  %v2344 = vld [vmem:[#allocation3 + $0x10] sm:$0xff]
  %v2345 = vld [vmem:[#allocation3 + $0x18] sm:$0xff]
  %v2346 = vld [vmem:[#allocation3 + $0x20] sm:$0xff]
  %v2347 = vld [vmem:[#allocation3 + $0x28] sm:$0xff]
  %v2348 = vld [vmem:[#allocation3 + $0x30] sm:$0xff]
  %v2349 = vld [vmem:[#allocation3 + $0x38] sm:$0xff]
  %v2350 = vld [vmem:[#allocation3 + $0x40] sm:$0xff]
  %v2351 = vld [vmem:[#allocation3 + $0x48] sm:$0xff]
  %v2352 = vld [vmem:[#allocation3 + $0x50] sm:$0xff]
  %v2353 = vld [vmem:[#allocation3 + $0x58] sm:$0xff]
  %v2354 = vld [vmem:[#allocation3 + $0x60] sm:$0xff]
  %v2355 = vld [vmem:[#allocation3 + $0x68] sm:$0xff]
  %v2356 = vld [vmem:[#allocation3 + $0x70] sm:$0xff]
  %v2357 = vld [vmem:[#allocation3 + $0x78] sm:$0xff]
  %v2358 = vld [vmem:[#allocation3 + $0x80] sm:$0xff]
  %v2359 = vld [vmem:[#allocation3 + $0x88] sm:$0xff]
  %v2360 = vld [vmem:[#allocation3 + $0x90] sm:$0xff]
  %v2361 = vld [vmem:[#allocation3 + $0x98] sm:$0xff]
  %v2362 = vld [vmem:[#allocation3 + $0xa0] sm:$0xff]
  %v2363 = vld [vmem:[#allocation3 + $0xa8] sm:$0xff]
  %v2364 = vld [vmem:[#allocation3 + $0xb0] sm:$0xff]
  %v2365 = vld [vmem:[#allocation3 + $0xb8] sm:$0xff]
  %v2366 = vld [vmem:[#allocation3 + $0xc0] sm:$0xff]
  %v2367 = vld [vmem:[#allocation3 + $0xc8] sm:$0xff]
  %v2368 = vld [vmem:[#allocation3 + $0xd0] sm:$0xff]
  %v2369 = vld [vmem:[#allocation3 + $0xd8] sm:$0xff]
  %v2370 = vld [vmem:[#allocation3 + $0xe0] sm:$0xff]
  %v2371 = vld [vmem:[#allocation3 + $0xe8] sm:$0xff]
  %v2372 = vld [vmem:[#allocation3 + $0xf0] sm:$0xff]
  %v2373 = vld [vmem:[#allocation3 + $0xf8] sm:$0xff]
  %s2374 = scalar_lea.vmem %s1, 480
  %v2375 = vld [vmem:[%s2374] sm:$0xff]
  %v2376 = vld [vmem:[%s2374 + $0x8] sm:$0xff]
  %v2377 = vld [vmem:[%s2374 + $0x10] sm:$0xff]
  %v2378 = vld [vmem:[%s2374 + $0x18] sm:$0xff]
  %v2379 = vld [vmem:[%s2374 + $0x20] sm:$0xff]
  %v2380 = vld [vmem:[%s2374 + $0x28] sm:$0xff]
  %v2381 = vld [vmem:[%s2374 + $0x30] sm:$0xff]
  %v2382 = vld [vmem:[%s2374 + $0x38] sm:$0xff]
  %v2383 = vld [vmem:[%s2374 + $0x40] sm:$0xff]
  %v2384 = vld [vmem:[%s2374 + $0x48] sm:$0xff]
  %v2385 = vld [vmem:[%s2374 + $0x50] sm:$0xff]
  %v2386 = vld [vmem:[%s2374 + $0x58] sm:$0xff]
  %v2387 = vld [vmem:[%s2374 + $0x60] sm:$0xff]
  %v2388 = vld [vmem:[%s2374 + $0x68] sm:$0xff]
  %v2389 = vld [vmem:[%s2374 + $0x70] sm:$0xff]
  %v2390 = vld [vmem:[%s2374 + $0x78] sm:$0xff]
  %v2391 = vld [vmem:[%s2374 + $0x80] sm:$0xff]
  %v2392 = vld [vmem:[%s2374 + $0x88] sm:$0xff]
  %v2393 = vld [vmem:[%s2374 + $0x90] sm:$0xff]
  %v2394 = vld [vmem:[%s2374 + $0x98] sm:$0xff]
  %s2395 = scalar_lea.vmem %s2, 3
  %v2396 = vld [vmem:[%s2395] sm:$0x1]
  %v2398 = vlaneseq
  %v2399 = vshrl.u32 %v2398, 7
  %v2400 = vsub.s32 0, %v2399
  %v2401 = vrot.slane %v2396, %v2400
  %v2404 = vsel %vm38, %v2343, 0
  %v2407 = vsel %vm38, %v2345, 0
  %v2410 = vsel %vm38, %v2347, 0
  %v2413 = vsel %vm38, %v2349, 0
  %v2416 = vsel %vm38, %v2351, 0
  %v2419 = vsel %vm38, %v2353, 0
  %v2422 = vsel %vm38, %v2355, 0
  %v2425 = vsel %vm38, %v2357, 0
  %v2428 = vsel %vm38, %v2359, 0
  %v2431 = vsel %vm38, %v2361, 0
  %v2434 = vsel %vm38, %v2363, 0
  %v2437 = vsel %vm38, %v2365, 0
  %v2440 = vsel %vm38, %v2367, 0
  %v2443 = vsel %vm38, %v2369, 0
  %v2446 = vsel %vm38, %v2371, 0
  %v2449 = vsel %vm38, %v2373, 0
  %2451 = vmatprep.subr.mxu0 0.0
  %2452 = vmatpush1.msra.mxu0 %v2390
  %2453 = vmatprep.subr.mxu0 0.0
  %2454 = vmatpush1.msra.mxu0 %v2389
  %2455 = vmatprep.subr.mxu0 0.0
  %2456 = vmatpush1.msra.mxu0 %v2388
  %2457 = vmatprep.subr.mxu0 0.0
  %2458 = vmatpush1.msra.mxu0 %v2387
  %2459 = vmatprep.subr.mxu0 0.0
  %2460 = vmatpush1.msra.mxu0 %v2386
  %2461 = vmatprep.subr.mxu0 0.0
  %2462 = vmatpush1.msra.mxu0 %v2385
  %2463 = vmatprep.subr.mxu0 0.0
  %2464 = vmatpush1.msra.mxu0 %v2384
  %2465 = vmatprep.subr.mxu0 0.0
  %2466 = vmatpush1.msra.mxu0 %v2383
  %2467 = vmatprep.subr.mxu0 0.0
  %2468 = vmatpush1.msra.mxu0 %v2382
  %2469 = vmatprep.subr.mxu0 0.0
  %2470 = vmatpush1.msra.mxu0 %v2381
  %2471 = vmatprep.subr.mxu0 0.0
  %2472 = vmatpush1.msra.mxu0 %v2380
  %2473 = vmatprep.subr.mxu0 0.0
  %2474 = vmatpush1.msra.mxu0 %v2379
  %2475 = vmatprep.subr.mxu0 0.0
  %2476 = vmatpush1.msra.mxu0 %v2378
  %2477 = vmatprep.subr.mxu0 0.0
  %2478 = vmatpush1.msra.mxu0 %v2377
  %2479 = vmatprep.subr.mxu0 0.0
  %2480 = vmatpush1.msra.mxu0 %v2376
  %2481 = vmatprep.subr.mxu0 0.0
  %2482 = vmatpush1.msra.mxu0 %v2375
  %2483 = vmatprep.subr.mxu0 0.0
  %2484 = vmatpush2.msra.mxu0 0.0
  %2485 = vmatprep.subr.mxu0 0.0
  %2486 = vmatpush2.msra.mxu0 0.0
  %2487 = vmatprep.subr.mxu0 0.0
  %2488 = vmatpush2.msra.mxu0 0.0
  %2489 = vmatprep.subr.mxu0 0.0
  %2490 = vmatpush2.msra.mxu0 0.0
  %2491 = vmatprep.subr.mxu0 0.0
  %2492 = vmatpush2.msra.mxu0 0.0
  %2493 = vmatprep.subr.mxu0 0.0
  %2494 = vmatpush2.msra.mxu0 0.0
  %2495 = vmatprep.subr.mxu0 0.0
  %2496 = vmatpush2.msra.mxu0 0.0
  %2497 = vmatprep.subr.mxu0 0.0
  %2498 = vmatpush2.msra.mxu0 0.0
  %2499 = vmatprep.subr.mxu0 0.0
  %2500 = vmatpush2.msra.mxu0 0.0
  %2501 = vmatprep.subr.mxu0 0.0
  %2502 = vmatpush2.msra.mxu0 0.0
  %2503 = vmatprep.subr.mxu0 0.0
  %2504 = vmatpush2.msra.mxu0 0.0
  %2505 = vmatprep.subr.mxu0 0.0
  %2506 = vmatpush2.msra.mxu0 0.0
  %2507 = vmatprep.subr.mxu0 0.0
  %2508 = vmatpush2.msra.mxu0 %v2394
  %2509 = vmatprep.subr.mxu0 0.0
  %2510 = vmatpush2.msra.mxu0 %v2393
  %2511 = vmatprep.subr.mxu0 0.0
  %2512 = vmatpush2.msra.mxu0 %v2392
  %2513 = vmatprep.subr.mxu0 0.0
  %2514 = vmatpush2.msra.mxu0 %v2391
  %2515 = vmatprep.mubr.f32.mxu0 %v2404
  %2516 = vmatmul.mubr.f32.gmra.mxu0 %v2342
  %v2517 = vpop.f32.mrf.mxu0
  %v2518 = vadd.f32 %v2401, %v2517
  %v2519 = vpop.f32.mrf.mxu0
  %2520 = vmatprep.mubr.f32.mxu0 %v2407
  %2521 = vmatmul.mubr.f32.gmra.mxu0 %v2344
  %v2522 = vpop.f32.mrf.mxu0
  %v2523 = vadd.f32 %v2401, %v2522
  %v2524 = vpop.f32.mrf.mxu0
  %2525 = vmatprep.mubr.f32.mxu0 %v2410
  %2526 = vmatmul.mubr.f32.gmra.mxu0 %v2346
  %v2527 = vpop.f32.mrf.mxu0
  %v2528 = vadd.f32 %v2401, %v2527
  %v2529 = vpop.f32.mrf.mxu0
  %2530 = vmatprep.mubr.f32.mxu0 %v2413
  %2531 = vmatmul.mubr.f32.gmra.mxu0 %v2348
  %v2532 = vpop.f32.mrf.mxu0
  %v2533 = vadd.f32 %v2401, %v2532
  %v2534 = vpop.f32.mrf.mxu0
  %2535 = vmatprep.mubr.f32.mxu0 %v2416
  %2536 = vmatmul.mubr.f32.gmra.mxu0 %v2350
  %v2537 = vpop.f32.mrf.mxu0
  %v2538 = vadd.f32 %v2401, %v2537
  %v2539 = vpop.f32.mrf.mxu0
  %2540 = vmatprep.mubr.f32.mxu0 %v2419
  %2541 = vmatmul.mubr.f32.gmra.mxu0 %v2352
  %v2542 = vpop.f32.mrf.mxu0
  %v2543 = vadd.f32 %v2401, %v2542
  %v2544 = vpop.f32.mrf.mxu0
  %2545 = vmatprep.mubr.f32.mxu0 %v2422
  %2546 = vmatmul.mubr.f32.gmra.mxu0 %v2354
  %v2547 = vpop.f32.mrf.mxu0
  %v2548 = vadd.f32 %v2401, %v2547
  %v2549 = vpop.f32.mrf.mxu0
  %2550 = vmatprep.mubr.f32.mxu0 %v2425
  %2551 = vmatmul.mubr.f32.gmra.mxu0 %v2356
  %v2552 = vpop.f32.mrf.mxu0
  %v2553 = vadd.f32 %v2401, %v2552
  %v2554 = vpop.f32.mrf.mxu0
  %2555 = vmatprep.mubr.f32.mxu0 %v2428
  %2556 = vmatmul.mubr.f32.gmra.mxu0 %v2358
  %v2557 = vpop.f32.mrf.mxu0
  %v2558 = vadd.f32 %v2401, %v2557
  %v2559 = vpop.f32.mrf.mxu0
  %2560 = vmatprep.mubr.f32.mxu0 %v2431
  %2561 = vmatmul.mubr.f32.gmra.mxu0 %v2360
  %v2562 = vpop.f32.mrf.mxu0
  %v2563 = vadd.f32 %v2401, %v2562
  %v2564 = vpop.f32.mrf.mxu0
  %2565 = vmatprep.mubr.f32.mxu0 %v2434
  %2566 = vmatmul.mubr.f32.gmra.mxu0 %v2362
  %v2567 = vpop.f32.mrf.mxu0
  %v2568 = vadd.f32 %v2401, %v2567
  %v2569 = vpop.f32.mrf.mxu0
  %2570 = vmatprep.mubr.f32.mxu0 %v2437
  %2571 = vmatmul.mubr.f32.gmra.mxu0 %v2364
  %v2572 = vpop.f32.mrf.mxu0
  %v2573 = vadd.f32 %v2401, %v2572
  %v2574 = vpop.f32.mrf.mxu0
  %2575 = vmatprep.mubr.f32.mxu0 %v2440
  %2576 = vmatmul.mubr.f32.gmra.mxu0 %v2366
  %v2577 = vpop.f32.mrf.mxu0
  %v2578 = vadd.f32 %v2401, %v2577
  %v2579 = vpop.f32.mrf.mxu0
  %2580 = vmatprep.mubr.f32.mxu0 %v2443
  %2581 = vmatmul.mubr.f32.gmra.mxu0 %v2368
  %v2582 = vpop.f32.mrf.mxu0
  %v2583 = vadd.f32 %v2401, %v2582
  %v2584 = vpop.f32.mrf.mxu0
  %2585 = vmatprep.mubr.f32.mxu0 %v2446
  %2586 = vmatmul.mubr.f32.gmra.mxu0 %v2370
  %v2587 = vpop.f32.mrf.mxu0
  %v2588 = vadd.f32 %v2401, %v2587
  %v2589 = vpop.f32.mrf.mxu0
  %2590 = vmatprep.mubr.f32.mxu0 %v2449
  %2591 = vmatmul.mubr.f32.gmra.mxu0 %v2372
  %v2592 = vpop.f32.mrf.mxu0
  %v2593 = vadd.f32 %v2401, %v2592
  %v2594 = vpop.f32.mrf.mxu0
  %2595 = vdwg.mxu0
  %v2596 = vmax.f32 %v2518, 0.0
  %v2597 = vmax.f32 %v2523, 0.0
  %v2598 = vmax.f32 %v2528, 0.0
  %v2599 = vmax.f32 %v2533, 0.0
  %v2600 = vmax.f32 %v2538, 0.0
  %v2601 = vmax.f32 %v2543, 0.0
  %v2602 = vmax.f32 %v2548, 0.0
  %v2603 = vmax.f32 %v2553, 0.0
  %v2604 = vmax.f32 %v2558, 0.0
  %v2605 = vmax.f32 %v2563, 0.0
  %v2606 = vmax.f32 %v2568, 0.0
  %v2607 = vmax.f32 %v2573, 0.0
  %v2608 = vmax.f32 %v2578, 0.0
  %v2609 = vmax.f32 %v2583, 0.0
  %v2610 = vmax.f32 %v2588, 0.0
  %v2611 = vmax.f32 %v2593, 0.0
  %v2612 = vld [vmem:[%s3] sm:$0xff]
  %v2613 = vld [vmem:[%s3 + $0x8] sm:$0xff]
  %v2614 = vld [vmem:[%s3 + $0x10] sm:$0xff]
  %v2615 = vld [vmem:[%s3 + $0x18] sm:$0xff]
  %v2616 = vld [vmem:[%s5] sm:$0x1]
  %v2618 = vlaneseq
  %v2619 = vshrl.u32 %v2618, 7
  %v2620 = vsub.s32 0, %v2619
  %v2621 = vrot.slane %v2616, %v2620
  %v2624 = vsel %vm38, %v2596, 0
  %v2627 = vsel %vm38, %v2597, 0
  %v2630 = vsel %vm38, %v2598, 0
  %v2633 = vsel %vm38, %v2599, 0
  %v2636 = vsel %vm38, %v2600, 0
  %v2639 = vsel %vm38, %v2601, 0
  %v2642 = vsel %vm38, %v2602, 0
  %v2645 = vsel %vm38, %v2603, 0
  %v2648 = vsel %vm38, %v2604, 0
  %v2651 = vsel %vm38, %v2605, 0
  %v2654 = vsel %vm38, %v2606, 0
  %v2657 = vsel %vm38, %v2607, 0
  %v2660 = vsel %vm38, %v2608, 0
  %v2663 = vsel %vm38, %v2609, 0
  %v2666 = vsel %vm38, %v2610, 0
  %v2669 = vsel %vm38, %v2611, 0
  %2671 = vmatprep.subr.mxu0 0.0
  %2672 = vmatpush1.msra.mxu0 0.0
  %2673 = vmatprep.subr.mxu0 0.0
  %2674 = vmatpush1.msra.mxu0 0.0
  %2675 = vmatprep.subr.mxu0 0.0
  %2676 = vmatpush1.msra.mxu0 0.0
  %2677 = vmatprep.subr.mxu0 0.0
  %2678 = vmatpush1.msra.mxu0 0.0
  %2679 = vmatprep.subr.mxu0 0.0
  %2680 = vmatpush1.msra.mxu0 0.0
  %2681 = vmatprep.subr.mxu0 0.0
  %2682 = vmatpush1.msra.mxu0 0.0
  %2683 = vmatprep.subr.mxu0 0.0
  %2684 = vmatpush1.msra.mxu0 0.0
  %2685 = vmatprep.subr.mxu0 0.0
  %2686 = vmatpush1.msra.mxu0 0.0
  %2687 = vmatprep.subr.mxu0 0.0
  %2688 = vmatpush1.msra.mxu0 0.0
  %2689 = vmatprep.subr.mxu0 0.0
  %2690 = vmatpush1.msra.mxu0 0.0
  %2691 = vmatprep.subr.mxu0 0.0
  %2692 = vmatpush1.msra.mxu0 0.0
  %2693 = vmatprep.subr.mxu0 0.0
  %2694 = vmatpush1.msra.mxu0 0.0
  %2695 = vmatprep.subr.mxu0 0.0
  %2696 = vmatpush1.msra.mxu0 %v2615
  %2697 = vmatprep.subr.mxu0 0.0
  %2698 = vmatpush1.msra.mxu0 %v2614
  %2699 = vmatprep.subr.mxu0 0.0
  %2700 = vmatpush1.msra.mxu0 %v2613
  %2701 = vmatprep.subr.mxu0 0.0
  %2702 = vmatpush1.msra.mxu0 %v2612
  %2703 = vmatprep.subr.mxu0 0.0
  %2704 = vmatpush2.msra.mxu0 0.0
  %2705 = vmatprep.subr.mxu0 0.0
  %2706 = vmatpush2.msra.mxu0 0.0
  %2707 = vmatprep.subr.mxu0 0.0
  %2708 = vmatpush2.msra.mxu0 0.0
  %2709 = vmatprep.subr.mxu0 0.0
  %2710 = vmatpush2.msra.mxu0 0.0
  %2711 = vmatprep.subr.mxu0 0.0
  %2712 = vmatpush2.msra.mxu0 0.0
  %2713 = vmatprep.subr.mxu0 0.0
  %2714 = vmatpush2.msra.mxu0 0.0
  %2715 = vmatprep.subr.mxu0 0.0
  %2716 = vmatpush2.msra.mxu0 0.0
  %2717 = vmatprep.subr.mxu0 0.0
  %2718 = vmatpush2.msra.mxu0 0.0
  %2719 = vmatprep.subr.mxu0 0.0
  %2720 = vmatpush2.msra.mxu0 0.0
  %2721 = vmatprep.subr.mxu0 0.0
  %2722 = vmatpush2.msra.mxu0 0.0
  %2723 = vmatprep.subr.mxu0 0.0
  %2724 = vmatpush2.msra.mxu0 0.0
  %2725 = vmatprep.subr.mxu0 0.0
  %2726 = vmatpush2.msra.mxu0 0.0
  %2727 = vmatprep.subr.mxu0 0.0
  %2728 = vmatpush2.msra.mxu0 0.0
  %2729 = vmatprep.subr.mxu0 0.0
  %2730 = vmatpush2.msra.mxu0 0.0
  %2731 = vmatprep.subr.mxu0 0.0
  %2732 = vmatpush2.msra.mxu0 0.0
  %2733 = vmatprep.subr.mxu0 0.0
  %2734 = vmatpush2.msra.mxu0 0.0
  %2735 = vmatprep.mubr.f32.mxu0 0.0
  %2736 = vmatmul.mubr.f32.gmra.mxu0 %v2624
  %v2737 = vpop.f32.mrf.mxu0
  %v2738 = vadd.f32 %v2621, %v2737
  %v2739 = vpop.f32.mrf.mxu0
  %2740 = vmatprep.mubr.f32.mxu0 0.0
  %2741 = vmatmul.mubr.f32.gmra.mxu0 %v2627
  %v2742 = vpop.f32.mrf.mxu0
  %v2743 = vadd.f32 %v2621, %v2742
  %v2744 = vpop.f32.mrf.mxu0
  %2745 = vmatprep.mubr.f32.mxu0 0.0
  %2746 = vmatmul.mubr.f32.gmra.mxu0 %v2630
  %v2747 = vpop.f32.mrf.mxu0
  %v2748 = vadd.f32 %v2621, %v2747
  %v2749 = vpop.f32.mrf.mxu0
  %2750 = vmatprep.mubr.f32.mxu0 0.0
  %2751 = vmatmul.mubr.f32.gmra.mxu0 %v2633
  %v2752 = vpop.f32.mrf.mxu0
  %v2753 = vadd.f32 %v2621, %v2752
  %v2754 = vpop.f32.mrf.mxu0
  %2755 = vmatprep.mubr.f32.mxu0 0.0
  %2756 = vmatmul.mubr.f32.gmra.mxu0 %v2636
  %v2757 = vpop.f32.mrf.mxu0
  %v2758 = vadd.f32 %v2621, %v2757
  %v2759 = vpop.f32.mrf.mxu0
  %2760 = vmatprep.mubr.f32.mxu0 0.0
  %2761 = vmatmul.mubr.f32.gmra.mxu0 %v2639
  %v2762 = vpop.f32.mrf.mxu0
  %v2763 = vadd.f32 %v2621, %v2762
  %v2764 = vpop.f32.mrf.mxu0
  %2765 = vmatprep.mubr.f32.mxu0 0.0
  %2766 = vmatmul.mubr.f32.gmra.mxu0 %v2642
  %v2767 = vpop.f32.mrf.mxu0
  %v2768 = vadd.f32 %v2621, %v2767
  %v2769 = vpop.f32.mrf.mxu0
  %2770 = vmatprep.mubr.f32.mxu0 0.0
  %2771 = vmatmul.mubr.f32.gmra.mxu0 %v2645
  %v2772 = vpop.f32.mrf.mxu0
  %v2773 = vadd.f32 %v2621, %v2772
  %v2774 = vpop.f32.mrf.mxu0
  %2775 = vmatprep.mubr.f32.mxu0 0.0
  %2776 = vmatmul.mubr.f32.gmra.mxu0 %v2648
  %v2777 = vpop.f32.mrf.mxu0
  %v2778 = vadd.f32 %v2621, %v2777
  %v2779 = vpop.f32.mrf.mxu0
  %2780 = vmatprep.mubr.f32.mxu0 0.0
  %2781 = vmatmul.mubr.f32.gmra.mxu0 %v2651
  %v2782 = vpop.f32.mrf.mxu0
  %v2783 = vadd.f32 %v2621, %v2782
  %v2784 = vpop.f32.mrf.mxu0
  %2785 = vmatprep.mubr.f32.mxu0 0.0
  %2786 = vmatmul.mubr.f32.gmra.mxu0 %v2654
  %v2787 = vpop.f32.mrf.mxu0
  %v2788 = vadd.f32 %v2621, %v2787
  %v2789 = vpop.f32.mrf.mxu0
  %2790 = vmatprep.mubr.f32.mxu0 0.0
  %2791 = vmatmul.mubr.f32.gmra.mxu0 %v2657
  %v2792 = vpop.f32.mrf.mxu0
  %v2793 = vadd.f32 %v2621, %v2792
  %v2794 = vpop.f32.mrf.mxu0
  %2795 = vmatprep.mubr.f32.mxu0 0.0
  %2796 = vmatmul.mubr.f32.gmra.mxu0 %v2660
  %v2797 = vpop.f32.mrf.mxu0
  %v2798 = vadd.f32 %v2621, %v2797
  %v2799 = vpop.f32.mrf.mxu0
  %2800 = vmatprep.mubr.f32.mxu0 0.0
  %2801 = vmatmul.mubr.f32.gmra.mxu0 %v2663
  %v2802 = vpop.f32.mrf.mxu0
  %v2803 = vadd.f32 %v2621, %v2802
  %v2804 = vpop.f32.mrf.mxu0
  %2805 = vmatprep.mubr.f32.mxu0 0.0
  %2806 = vmatmul.mubr.f32.gmra.mxu0 %v2666
  %v2807 = vpop.f32.mrf.mxu0
  %v2808 = vadd.f32 %v2621, %v2807
  %v2809 = vpop.f32.mrf.mxu0
  %2810 = vmatprep.mubr.f32.mxu0 0.0
  %2811 = vmatmul.mubr.f32.gmra.mxu0 %v2669
  %v2812 = vpop.f32.mrf.mxu0
  %v2813 = vadd.f32 %v2621, %v2812
  %v2814 = vpop.f32.mrf.mxu0
  %2815 = vdwg.mxu0
  %2816 = vst [vmem:[#allocation4] sm:$0xff] %v2738
  %2817 = vst [vmem:[#allocation4 + $0x8] sm:$0xff] %v2743
  %2818 = vst [vmem:[#allocation4 + $0x10] sm:$0xff] %v2748
  %2819 = vst [vmem:[#allocation4 + $0x18] sm:$0xff] %v2753
  %2820 = vst [vmem:[#allocation4 + $0x20] sm:$0xff] %v2758
  %2821 = vst [vmem:[#allocation4 + $0x28] sm:$0xff] %v2763
  %2822 = vst [vmem:[#allocation4 + $0x30] sm:$0xff] %v2768
  %2823 = vst [vmem:[#allocation4 + $0x38] sm:$0xff] %v2773
  %2824 = vst [vmem:[#allocation4 + $0x40] sm:$0xff] %v2778
  %2825 = vst [vmem:[#allocation4 + $0x48] sm:$0xff] %v2783
  %2826 = vst [vmem:[#allocation4 + $0x50] sm:$0xff] %v2788
  %2827 = vst [vmem:[#allocation4 + $0x58] sm:$0xff] %v2793
  %2828 = vst [vmem:[#allocation4 + $0x60] sm:$0xff] %v2798
  %2829 = vst [vmem:[#allocation4 + $0x68] sm:$0xff] %v2803
  %2830 = vst [vmem:[#allocation4 + $0x70] sm:$0xff] %v2808
  %2831 = vst [vmem:[#allocation4 + $0x78] sm:$0xff] %v2813
  %v2832 = vld [vmem:[%s4] sm:$0xff]
  %v2833 = vld [vmem:[%s4 + $0x8] sm:$0xff]
  %v2834 = vld [vmem:[%s4 + $0x10] sm:$0xff]
  %v2835 = vld [vmem:[%s4 + $0x18] sm:$0xff]
  %v2836 = vld [vmem:[%s6] sm:$0xff]
  %v2837 = vld [vmem:[%s6 + $0x8] sm:$0xff]
  %v2838 = vld [vmem:[%s6 + $0x10] sm:$0xff]
  %v2839 = vld [vmem:[%s6 + $0x18] sm:$0xff]
  %v2840 = vld [vmem:[%s7] sm:$0xff]
  %v2841 = vld [vmem:[%s7 + $0x8] sm:$0xff]
  %v2842 = vld [vmem:[%s7 + $0x10] sm:$0xff]
  %v2843 = vld [vmem:[%s7 + $0x18] sm:$0xff]
  %v2844 = vld [vmem:[%s8] sm:$0x1]
  %v2846 = vlaneseq
  %v2847 = vshrl.u32 %v2846, 7
  %v2848 = vsub.s32 0, %v2847
  %v2849 = vrot.slane %v2844, %v2848
  %v2851 = vld [vmem:[#allocation4] sm:$0xff]
  %v2853 = vsel %vm38, 0.0, 0
  %2855 = vmatprep.subr.mxu0 0.0
  %2856 = vmatpush1.msra.mxu0 0.0
  %2857 = vmatprep.subr.mxu0 0.0
  %2858 = vmatpush1.msra.mxu0 0.0
  %2859 = vmatprep.subr.mxu0 0.0
  %2860 = vmatpush1.msra.mxu0 0.0
  %2861 = vmatprep.subr.mxu0 0.0
  %2862 = vmatpush1.msra.mxu0 0.0
  %2863 = vmatprep.subr.mxu0 0.0
  %2864 = vmatpush1.msra.mxu0 0.0
  %2865 = vmatprep.subr.mxu0 0.0
  %2866 = vmatpush1.msra.mxu0 0.0
  %2867 = vmatprep.subr.mxu0 0.0
  %2868 = vmatpush1.msra.mxu0 0.0
  %2869 = vmatprep.subr.mxu0 0.0
  %2870 = vmatpush1.msra.mxu0 0.0
  %2871 = vmatprep.subr.mxu0 0.0
  %2872 = vmatpush1.msra.mxu0 0.0
  %2873 = vmatprep.subr.mxu0 0.0
  %2874 = vmatpush1.msra.mxu0 0.0
  %2875 = vmatprep.subr.mxu0 0.0
  %2876 = vmatpush1.msra.mxu0 0.0
  %2877 = vmatprep.subr.mxu0 0.0
  %2878 = vmatpush1.msra.mxu0 0.0
  %2879 = vmatprep.subr.mxu0 0.0
  %2880 = vmatpush1.msra.mxu0 %v2835
  %2881 = vmatprep.subr.mxu0 0.0
  %2882 = vmatpush1.msra.mxu0 %v2834
  %2883 = vmatprep.subr.mxu0 0.0
  %2884 = vmatpush1.msra.mxu0 %v2833
  %2885 = vmatprep.subr.mxu0 0.0
  %2886 = vmatpush1.msra.mxu0 %v2832
  %2887 = vmatprep.subr.mxu0 0.0
  %2888 = vmatpush2.msra.mxu0 0.0
  %2889 = vmatprep.subr.mxu0 0.0
  %2890 = vmatpush2.msra.mxu0 0.0
  %2891 = vmatprep.subr.mxu0 0.0
  %2892 = vmatpush2.msra.mxu0 0.0
  %2893 = vmatprep.subr.mxu0 0.0
  %2894 = vmatpush2.msra.mxu0 0.0
  %2895 = vmatprep.subr.mxu0 0.0
  %2896 = vmatpush2.msra.mxu0 0.0
  %2897 = vmatprep.subr.mxu0 0.0
  %2898 = vmatpush2.msra.mxu0 0.0
  %2899 = vmatprep.subr.mxu0 0.0
  %2900 = vmatpush2.msra.mxu0 0.0
  %2901 = vmatprep.subr.mxu0 0.0
  %2902 = vmatpush2.msra.mxu0 0.0
  %2903 = vmatprep.subr.mxu0 0.0
  %2904 = vmatpush2.msra.mxu0 0.0
  %2905 = vmatprep.subr.mxu0 0.0
  %2906 = vmatpush2.msra.mxu0 0.0
  %2907 = vmatprep.subr.mxu0 0.0
  %2908 = vmatpush2.msra.mxu0 0.0
  %2909 = vmatprep.subr.mxu0 0.0
  %2910 = vmatpush2.msra.mxu0 0.0
  %2911 = vmatprep.subr.mxu0 0.0
  %2912 = vmatpush2.msra.mxu0 0.0
  %2913 = vmatprep.subr.mxu0 0.0
  %2914 = vmatpush2.msra.mxu0 0.0
  %2915 = vmatprep.subr.mxu0 0.0
  %2916 = vmatpush2.msra.mxu0 0.0
  %2917 = vmatprep.subr.mxu0 0.0
  %2918 = vmatpush2.msra.mxu0 0.0
  %2919 = vmatprep.mubr.f32.mxu0 0.0
  %2920 = vmatmul.mubr.f32.gmra.mxu0 %v2853
  %v2921 = vpop.f32.mrf.mxu0
  %v2922 = vadd.f32 0.0, %v2921
  %v2923 = vpop.f32.mrf.mxu0
  %2924 = vdwg.mxu0
  %v2925 = vadd.f32 %v2851, %v2922
  %v2926 = vxor.u32 %v2925, 2147483648
  %v2927 = vmul.f32 %v2926, 1.442695
  %v2928 = vpow.pop %v2927
  %v2929 = vadd.f32 %v2928, 1.0
  %v2930 = vrcp.pop %v2929
  %v2931 = vmul.f32 1.0, %v2930
  %v2932 = vtanh.pop %v2925
  %v2933 = vmul.f32 %v2931, 0.0
  %2935 = vrot.lane.b32.xlu0 %v2932, 64
  %v2936 = vpop.permute.xlu0 %2935
  %v2938 = vmul.f32 %v2931, %v2936
  %2940 = vrot.lane.b32.xlu0 %v2938, 32
  %v2941 = vpop.permute.xlu0 %2940
  %v2943 = vadd.f32 %v2933, %v2941
  %v2944 = vtanh.pop %v2943
  %2946 = vrot.lane.b32.xlu0 %v2944, 64
  %v2947 = vpop.permute.xlu0 %2946
  %v2949 = vmul.f32 %v2931, %v2947
  %2950 = vmatprep.subr.mxu0 0.0
  %2951 = vmatpush1.msra.mxu0 0.0
  %2952 = vmatprep.subr.mxu0 0.0
  %2953 = vmatpush1.msra.mxu0 0.0
  %2954 = vmatprep.subr.mxu0 0.0
  %2955 = vmatpush1.msra.mxu0 0.0
  %2956 = vmatprep.subr.mxu0 0.0
  %2957 = vmatpush1.msra.mxu0 0.0
  %2958 = vmatprep.subr.mxu0 0.0
  %2959 = vmatpush1.msra.mxu0 0.0
  %2960 = vmatprep.subr.mxu0 0.0
  %2961 = vmatpush1.msra.mxu0 0.0
  %2962 = vmatprep.subr.mxu0 0.0
  %2963 = vmatpush1.msra.mxu0 0.0
  %2964 = vmatprep.subr.mxu0 0.0
  %2965 = vmatpush1.msra.mxu0 0.0
  %2966 = vmatprep.subr.mxu0 0.0
  %2967 = vmatpush1.msra.mxu0 0.0
  %2968 = vmatprep.subr.mxu0 0.0
  %2969 = vmatpush1.msra.mxu0 0.0
  %2970 = vmatprep.subr.mxu0 0.0
  %2971 = vmatpush1.msra.mxu0 0.0
  %2972 = vmatprep.subr.mxu0 0.0
  %2973 = vmatpush1.msra.mxu0 0.0
  %2974 = vmatprep.subr.mxu0 0.0
  %2975 = vmatpush1.msra.mxu0 %v2843
  %2976 = vmatprep.subr.mxu0 0.0
  %2977 = vmatpush1.msra.mxu0 %v2842
  %2978 = vmatprep.subr.mxu0 0.0
  %2979 = vmatpush1.msra.mxu0 %v2841
  %2980 = vmatprep.subr.mxu0 0.0
  %2981 = vmatpush1.msra.mxu0 %v2840
  %2982 = vmatprep.subr.mxu0 0.0
  %2983 = vmatpush2.msra.mxu0 0.0
  %2984 = vmatprep.subr.mxu0 0.0
  %2985 = vmatpush2.msra.mxu0 0.0
  %2986 = vmatprep.subr.mxu0 0.0
  %2987 = vmatpush2.msra.mxu0 0.0
  %2988 = vmatprep.subr.mxu0 0.0
  %2989 = vmatpush2.msra.mxu0 0.0
  %2990 = vmatprep.subr.mxu0 0.0
  %2991 = vmatpush2.msra.mxu0 0.0
  %2992 = vmatprep.subr.mxu0 0.0
  %2993 = vmatpush2.msra.mxu0 0.0
  %2994 = vmatprep.subr.mxu0 0.0
  %2995 = vmatpush2.msra.mxu0 0.0
  %2996 = vmatprep.subr.mxu0 0.0
  %2997 = vmatpush2.msra.mxu0 0.0
  %2998 = vmatprep.subr.mxu0 0.0
  %2999 = vmatpush2.msra.mxu0 0.0
  %3000 = vmatprep.subr.mxu0 0.0
  %3001 = vmatpush2.msra.mxu0 0.0
  %3002 = vmatprep.subr.mxu0 0.0
  %3003 = vmatpush2.msra.mxu0 0.0
  %3004 = vmatprep.subr.mxu0 0.0
  %3005 = vmatpush2.msra.mxu0 0.0
  %3006 = vmatprep.subr.mxu0 0.0
  %3007 = vmatpush2.msra.mxu0 0.0
  %3008 = vmatprep.subr.mxu0 0.0
  %3009 = vmatpush2.msra.mxu0 0.0
  %3010 = vmatprep.subr.mxu0 0.0
  %3011 = vmatpush2.msra.mxu0 0.0
  %3012 = vmatprep.subr.mxu0 0.0
  %3013 = vmatpush2.msra.mxu0 0.0
  %3014 = vmatprep.mubr.f32.mxu0 0.0
  %3015 = vmatmul.mubr.f32.gmra.mxu0 %v2853
  %v3016 = vpop.f32.mrf.mxu0
  %v3017 = vadd.f32 0.0, %v3016
  %v3018 = vpop.f32.mrf.mxu0
  %3019 = vdwg.mxu0
  %3021 = vrot.lane.b32.xlu0 %v2949, 32
  %v3022 = vpop.permute.xlu0 %3021
  %v3023 = vsel %vm38, %v3022, 0
  %3025 = vmatprep.subr.mxu0 0.0
  %3026 = vmatpush1.msra.mxu0 0.0
  %3027 = vmatprep.subr.mxu0 0.0
  %3028 = vmatpush1.msra.mxu0 0.0
  %3029 = vmatprep.subr.mxu0 0.0
  %3030 = vmatpush1.msra.mxu0 0.0
  %3031 = vmatprep.subr.mxu0 0.0
  %3032 = vmatpush1.msra.mxu0 0.0
  %3033 = vmatprep.subr.mxu0 0.0
  %3034 = vmatpush1.msra.mxu0 0.0
  %3035 = vmatprep.subr.mxu0 0.0
  %3036 = vmatpush1.msra.mxu0 0.0
  %3037 = vmatprep.subr.mxu0 0.0
  %3038 = vmatpush1.msra.mxu0 0.0
  %3039 = vmatprep.subr.mxu0 0.0
  %3040 = vmatpush1.msra.mxu0 0.0
  %3041 = vmatprep.subr.mxu0 0.0
  %3042 = vmatpush1.msra.mxu0 0.0
  %3043 = vmatprep.subr.mxu0 0.0
  %3044 = vmatpush1.msra.mxu0 0.0
  %3045 = vmatprep.subr.mxu0 0.0
  %3046 = vmatpush1.msra.mxu0 0.0
  %3047 = vmatprep.subr.mxu0 0.0
  %3048 = vmatpush1.msra.mxu0 0.0
  %3049 = vmatprep.subr.mxu0 0.0
  %3050 = vmatpush1.msra.mxu0 %v2839
  %3051 = vmatprep.subr.mxu0 0.0
  %3052 = vmatpush1.msra.mxu0 %v2838
  %3053 = vmatprep.subr.mxu0 0.0
  %3054 = vmatpush1.msra.mxu0 %v2837
  %3055 = vmatprep.subr.mxu0 0.0
  %3056 = vmatpush1.msra.mxu0 %v2836
  %3057 = vmatprep.subr.mxu0 0.0
  %3058 = vmatpush2.msra.mxu0 0.0
  %3059 = vmatprep.subr.mxu0 0.0
  %3060 = vmatpush2.msra.mxu0 0.0
  %3061 = vmatprep.subr.mxu0 0.0
  %3062 = vmatpush2.msra.mxu0 0.0
  %3063 = vmatprep.subr.mxu0 0.0
  %3064 = vmatpush2.msra.mxu0 0.0
  %3065 = vmatprep.subr.mxu0 0.0
  %3066 = vmatpush2.msra.mxu0 0.0
  %3067 = vmatprep.subr.mxu0 0.0
  %3068 = vmatpush2.msra.mxu0 0.0
  %3069 = vmatprep.subr.mxu0 0.0
  %3070 = vmatpush2.msra.mxu0 0.0
  %3071 = vmatprep.subr.mxu0 0.0
  %3072 = vmatpush2.msra.mxu0 0.0
  %3073 = vmatprep.subr.mxu0 0.0
  %3074 = vmatpush2.msra.mxu0 0.0
  %3075 = vmatprep.subr.mxu0 0.0
  %3076 = vmatpush2.msra.mxu0 0.0
  %3077 = vmatprep.subr.mxu0 0.0
  %3078 = vmatpush2.msra.mxu0 0.0
  %3079 = vmatprep.subr.mxu0 0.0
  %3080 = vmatpush2.msra.mxu0 0.0
  %3081 = vmatprep.subr.mxu0 0.0
  %3082 = vmatpush2.msra.mxu0 0.0
  %3083 = vmatprep.subr.mxu0 0.0
  %3084 = vmatpush2.msra.mxu0 0.0
  %3085 = vmatprep.subr.mxu0 0.0
  %3086 = vmatpush2.msra.mxu0 0.0
  %3087 = vmatprep.subr.mxu0 0.0
  %3088 = vmatpush2.msra.mxu0 0.0
  %3089 = vmatprep.mubr.f32.mxu0 0.0
  %3090 = vmatmul.mubr.f32.gmra.mxu0 %v3023
  %v3091 = vpop.f32.mrf.mxu0
  %v3092 = vadd.f32 %v3017, %v3091
  %v3093 = vpop.f32.mrf.mxu0
  %3094 = vdwg.mxu0
  %v3095 = vadd.f32 %v3092, %v2849
  %v3096 = vxor.u32 %v3095, 2147483648
  %v3097 = vmul.f32 %v3096, 1.442695
  %v3098 = vpow.pop %v3097
  %v3099 = vadd.f32 %v3098, 1.0
  %v3100 = vrcp.pop %v3099
  %v3101 = vmul.f32 1.0, %v3100
  %v3102 = vtanh.pop %v3095
  %v3103 = vmul.f32 %v3101, 0.0
  %3105 = vrot.lane.b32.xlu0 %v3102, 64
  %v3106 = vpop.permute.xlu0 %3105
  %v3108 = vmul.f32 %v3101, %v3106
  %3110 = vrot.lane.b32.xlu0 %v3108, 32
  %v3111 = vpop.permute.xlu0 %3110
  %v3113 = vadd.f32 %v3103, %v3111
  %v3114 = vtanh.pop %v3113
  %3116 = vrot.lane.b32.xlu0 %v3114, 64
  %v3117 = vpop.permute.xlu0 %3116
  %v3119 = vmul.f32 %v3101, %v3117
  %v3120 = vld [vmem:[#allocation4 + $0x8] sm:$0xff]
  %3121 = vmatprep.subr.mxu0 0.0
  %3122 = vmatpush1.msra.mxu0 0.0
  %3123 = vmatprep.subr.mxu0 0.0
  %3124 = vmatpush1.msra.mxu0 0.0
  %3125 = vmatprep.subr.mxu0 0.0
  %3126 = vmatpush1.msra.mxu0 0.0
  %3127 = vmatprep.subr.mxu0 0.0
  %3128 = vmatpush1.msra.mxu0 0.0
  %3129 = vmatprep.subr.mxu0 0.0
  %3130 = vmatpush1.msra.mxu0 0.0
  %3131 = vmatprep.subr.mxu0 0.0
  %3132 = vmatpush1.msra.mxu0 0.0
  %3133 = vmatprep.subr.mxu0 0.0
  %3134 = vmatpush1.msra.mxu0 0.0
  %3135 = vmatprep.subr.mxu0 0.0
  %3136 = vmatpush1.msra.mxu0 0.0
  %3137 = vmatprep.subr.mxu0 0.0
  %3138 = vmatpush1.msra.mxu0 0.0
  %3139 = vmatprep.subr.mxu0 0.0
  %3140 = vmatpush1.msra.mxu0 0.0
  %3141 = vmatprep.subr.mxu0 0.0
  %3142 = vmatpush1.msra.mxu0 0.0
  %3143 = vmatprep.subr.mxu0 0.0
  %3144 = vmatpush1.msra.mxu0 0.0
  %3145 = vmatprep.subr.mxu0 0.0
  %3146 = vmatpush1.msra.mxu0 %v2835
  %3147 = vmatprep.subr.mxu0 0.0
  %3148 = vmatpush1.msra.mxu0 %v2834
  %3149 = vmatprep.subr.mxu0 0.0
  %3150 = vmatpush1.msra.mxu0 %v2833
  %3151 = vmatprep.subr.mxu0 0.0
  %3152 = vmatpush1.msra.mxu0 %v2832
  %3153 = vmatprep.subr.mxu0 0.0
  %3154 = vmatpush2.msra.mxu0 0.0
  %3155 = vmatprep.subr.mxu0 0.0
  %3156 = vmatpush2.msra.mxu0 0.0
  %3157 = vmatprep.subr.mxu0 0.0
  %3158 = vmatpush2.msra.mxu0 0.0
  %3159 = vmatprep.subr.mxu0 0.0
  %3160 = vmatpush2.msra.mxu0 0.0
  %3161 = vmatprep.subr.mxu0 0.0
  %3162 = vmatpush2.msra.mxu0 0.0
  %3163 = vmatprep.subr.mxu0 0.0
  %3164 = vmatpush2.msra.mxu0 0.0
  %3165 = vmatprep.subr.mxu0 0.0
  %3166 = vmatpush2.msra.mxu0 0.0
  %3167 = vmatprep.subr.mxu0 0.0
  %3168 = vmatpush2.msra.mxu0 0.0
  %3169 = vmatprep.subr.mxu0 0.0
  %3170 = vmatpush2.msra.mxu0 0.0
  %3171 = vmatprep.subr.mxu0 0.0
  %3172 = vmatpush2.msra.mxu0 0.0
  %3173 = vmatprep.subr.mxu0 0.0
  %3174 = vmatpush2.msra.mxu0 0.0
  %3175 = vmatprep.subr.mxu0 0.0
  %3176 = vmatpush2.msra.mxu0 0.0
  %3177 = vmatprep.subr.mxu0 0.0
  %3178 = vmatpush2.msra.mxu0 0.0
  %3179 = vmatprep.subr.mxu0 0.0
  %3180 = vmatpush2.msra.mxu0 0.0
  %3181 = vmatprep.subr.mxu0 0.0
  %3182 = vmatpush2.msra.mxu0 0.0
  %3183 = vmatprep.subr.mxu0 0.0
  %3184 = vmatpush2.msra.mxu0 0.0
  %3185 = vmatprep.mubr.f32.mxu0 0.0
  %3186 = vmatmul.mubr.f32.gmra.mxu0 %v3023
  %v3187 = vpop.f32.mrf.mxu0
  %v3188 = vadd.f32 0.0, %v3187
  %v3189 = vpop.f32.mrf.mxu0
  %3190 = vdwg.mxu0
  %v3191 = vadd.f32 %v3120, %v3188
  %v3192 = vxor.u32 %v3191, 2147483648
  %v3193 = vmul.f32 %v3192, 1.442695
  %v3194 = vpow.pop %v3193
  %v3195 = vadd.f32 %v3194, 1.0
  %v3196 = vrcp.pop %v3195
  %v3197 = vmul.f32 1.0, %v3196
  %v3198 = vtanh.pop %v3191
  %v3199 = vmul.f32 %v3197, %v2943
  %3201 = vrot.lane.b32.xlu0 %v3198, 64
  %v3202 = vpop.permute.xlu0 %3201
  %v3204 = vmul.f32 %v3197, %v3202
  %3206 = vrot.lane.b32.xlu0 %v3204, 32
  %v3207 = vpop.permute.xlu0 %3206
  %v3209 = vadd.f32 %v3199, %v3207
  %v3210 = vtanh.pop %v3209
  %3212 = vrot.lane.b32.xlu0 %v3210, 64
  %v3213 = vpop.permute.xlu0 %3212
  %v3215 = vmul.f32 %v3197, %v3213
  %3217 = vrot.lane.b32.xlu0 %v3119, 32
  %v3218 = vpop.permute.xlu0 %3217
  %v3219 = vsel %vm38, %v3218, 0
  %3221 = vmatprep.subr.mxu0 0.0
  %3222 = vmatpush1.msra.mxu0 0.0
  %3223 = vmatprep.subr.mxu0 0.0
  %3224 = vmatpush1.msra.mxu0 0.0
  %3225 = vmatprep.subr.mxu0 0.0
  %3226 = vmatpush1.msra.mxu0 0.0
  %3227 = vmatprep.subr.mxu0 0.0
  %3228 = vmatpush1.msra.mxu0 0.0
  %3229 = vmatprep.subr.mxu0 0.0
  %3230 = vmatpush1.msra.mxu0 0.0
  %3231 = vmatprep.subr.mxu0 0.0
  %3232 = vmatpush1.msra.mxu0 0.0
  %3233 = vmatprep.subr.mxu0 0.0
  %3234 = vmatpush1.msra.mxu0 0.0
  %3235 = vmatprep.subr.mxu0 0.0
  %3236 = vmatpush1.msra.mxu0 0.0
  %3237 = vmatprep.subr.mxu0 0.0
  %3238 = vmatpush1.msra.mxu0 0.0
  %3239 = vmatprep.subr.mxu0 0.0
  %3240 = vmatpush1.msra.mxu0 0.0
  %3241 = vmatprep.subr.mxu0 0.0
  %3242 = vmatpush1.msra.mxu0 0.0
  %3243 = vmatprep.subr.mxu0 0.0
  %3244 = vmatpush1.msra.mxu0 0.0
  %3245 = vmatprep.subr.mxu0 0.0
  %3246 = vmatpush1.msra.mxu0 %v2843
  %3247 = vmatprep.subr.mxu0 0.0
  %3248 = vmatpush1.msra.mxu0 %v2842
  %3249 = vmatprep.subr.mxu0 0.0
  %3250 = vmatpush1.msra.mxu0 %v2841
  %3251 = vmatprep.subr.mxu0 0.0
  %3252 = vmatpush1.msra.mxu0 %v2840
  %3253 = vmatprep.subr.mxu0 0.0
  %3254 = vmatpush2.msra.mxu0 0.0
  %3255 = vmatprep.subr.mxu0 0.0
  %3256 = vmatpush2.msra.mxu0 0.0
  %3257 = vmatprep.subr.mxu0 0.0
  %3258 = vmatpush2.msra.mxu0 0.0
  %3259 = vmatprep.subr.mxu0 0.0
  %3260 = vmatpush2.msra.mxu0 0.0
  %3261 = vmatprep.subr.mxu0 0.0
  %3262 = vmatpush2.msra.mxu0 0.0
  %3263 = vmatprep.subr.mxu0 0.0
  %3264 = vmatpush2.msra.mxu0 0.0
  %3265 = vmatprep.subr.mxu0 0.0
  %3266 = vmatpush2.msra.mxu0 0.0
  %3267 = vmatprep.subr.mxu0 0.0
  %3268 = vmatpush2.msra.mxu0 0.0
  %3269 = vmatprep.subr.mxu0 0.0
  %3270 = vmatpush2.msra.mxu0 0.0
  %3271 = vmatprep.subr.mxu0 0.0
  %3272 = vmatpush2.msra.mxu0 0.0
  %3273 = vmatprep.subr.mxu0 0.0
  %3274 = vmatpush2.msra.mxu0 0.0
  %3275 = vmatprep.subr.mxu0 0.0
  %3276 = vmatpush2.msra.mxu0 0.0
  %3277 = vmatprep.subr.mxu0 0.0
  %3278 = vmatpush2.msra.mxu0 0.0
  %3279 = vmatprep.subr.mxu0 0.0
  %3280 = vmatpush2.msra.mxu0 0.0
  %3281 = vmatprep.subr.mxu0 0.0
  %3282 = vmatpush2.msra.mxu0 0.0
  %3283 = vmatprep.subr.mxu0 0.0
  %3284 = vmatpush2.msra.mxu0 0.0
  %3285 = vmatprep.mubr.f32.mxu0 0.0
  %3286 = vmatmul.mubr.f32.gmra.mxu0 %v3219
  %v3287 = vpop.f32.mrf.mxu0
  %v3288 = vadd.f32 0.0, %v3287
  %v3289 = vpop.f32.mrf.mxu0
  %3290 = vdwg.mxu0
  %3292 = vrot.lane.b32.xlu0 %v3215, 32
  %v3293 = vpop.permute.xlu0 %3292
  %v3294 = vsel %vm38, %v3293, 0
  %3296 = vmatprep.subr.mxu0 0.0
  %3297 = vmatpush1.msra.mxu0 0.0
  %3298 = vmatprep.subr.mxu0 0.0
  %3299 = vmatpush1.msra.mxu0 0.0
  %3300 = vmatprep.subr.mxu0 0.0
  %3301 = vmatpush1.msra.mxu0 0.0
  %3302 = vmatprep.subr.mxu0 0.0
  %3303 = vmatpush1.msra.mxu0 0.0
  %3304 = vmatprep.subr.mxu0 0.0
  %3305 = vmatpush1.msra.mxu0 0.0
  %3306 = vmatprep.subr.mxu0 0.0
  %3307 = vmatpush1.msra.mxu0 0.0
  %3308 = vmatprep.subr.mxu0 0.0
  %3309 = vmatpush1.msra.mxu0 0.0
  %3310 = vmatprep.subr.mxu0 0.0
  %3311 = vmatpush1.msra.mxu0 0.0
  %3312 = vmatprep.subr.mxu0 0.0
  %3313 = vmatpush1.msra.mxu0 0.0
  %3314 = vmatprep.subr.mxu0 0.0
  %3315 = vmatpush1.msra.mxu0 0.0
  %3316 = vmatprep.subr.mxu0 0.0
  %3317 = vmatpush1.msra.mxu0 0.0
  %3318 = vmatprep.subr.mxu0 0.0
  %3319 = vmatpush1.msra.mxu0 0.0
  %3320 = vmatprep.subr.mxu0 0.0
  %3321 = vmatpush1.msra.mxu0 %v2839
  %3322 = vmatprep.subr.mxu0 0.0
  %3323 = vmatpush1.msra.mxu0 %v2838
  %3324 = vmatprep.subr.mxu0 0.0
  %3325 = vmatpush1.msra.mxu0 %v2837
  %3326 = vmatprep.subr.mxu0 0.0
  %3327 = vmatpush1.msra.mxu0 %v2836
  %3328 = vmatprep.subr.mxu0 0.0
  %3329 = vmatpush2.msra.mxu0 0.0
  %3330 = vmatprep.subr.mxu0 0.0
  %3331 = vmatpush2.msra.mxu0 0.0
  %3332 = vmatprep.subr.mxu0 0.0
  %3333 = vmatpush2.msra.mxu0 0.0
  %3334 = vmatprep.subr.mxu0 0.0
  %3335 = vmatpush2.msra.mxu0 0.0
  %3336 = vmatprep.subr.mxu0 0.0
  %3337 = vmatpush2.msra.mxu0 0.0
  %3338 = vmatprep.subr.mxu0 0.0
  %3339 = vmatpush2.msra.mxu0 0.0
  %3340 = vmatprep.subr.mxu0 0.0
  %3341 = vmatpush2.msra.mxu0 0.0
  %3342 = vmatprep.subr.mxu0 0.0
  %3343 = vmatpush2.msra.mxu0 0.0
  %3344 = vmatprep.subr.mxu0 0.0
  %3345 = vmatpush2.msra.mxu0 0.0
  %3346 = vmatprep.subr.mxu0 0.0
  %3347 = vmatpush2.msra.mxu0 0.0
  %3348 = vmatprep.subr.mxu0 0.0
  %3349 = vmatpush2.msra.mxu0 0.0
  %3350 = vmatprep.subr.mxu0 0.0
  %3351 = vmatpush2.msra.mxu0 0.0
  %3352 = vmatprep.subr.mxu0 0.0
  %3353 = vmatpush2.msra.mxu0 0.0
  %3354 = vmatprep.subr.mxu0 0.0
  %3355 = vmatpush2.msra.mxu0 0.0
  %3356 = vmatprep.subr.mxu0 0.0
  %3357 = vmatpush2.msra.mxu0 0.0
  %3358 = vmatprep.subr.mxu0 0.0
  %3359 = vmatpush2.msra.mxu0 0.0
  %3360 = vmatprep.mubr.f32.mxu0 0.0
  %3361 = vmatmul.mubr.f32.gmra.mxu0 %v3294
  %v3362 = vpop.f32.mrf.mxu0
  %v3363 = vadd.f32 %v3288, %v3362
  %v3364 = vpop.f32.mrf.mxu0
  %3365 = vdwg.mxu0
  %v3366 = vadd.f32 %v3363, %v2849
  %v3367 = vxor.u32 %v3366, 2147483648
  %v3368 = vmul.f32 %v3367, 1.442695
  %v3369 = vpow.pop %v3368
  %v3370 = vadd.f32 %v3369, 1.0
  %v3371 = vrcp.pop %v3370
  %v3372 = vmul.f32 1.0, %v3371
  %v3373 = vtanh.pop %v3366
  %v3374 = vmul.f32 %v3372, %v3113
  %3376 = vrot.lane.b32.xlu0 %v3373, 64
  %v3377 = vpop.permute.xlu0 %3376
  %v3379 = vmul.f32 %v3372, %v3377
  %3381 = vrot.lane.b32.xlu0 %v3379, 32
  %v3382 = vpop.permute.xlu0 %3381
  %v3384 = vadd.f32 %v3374, %v3382
  %v3385 = vtanh.pop %v3384
  %3387 = vrot.lane.b32.xlu0 %v3385, 64
  %v3388 = vpop.permute.xlu0 %3387
  %v3390 = vmul.f32 %v3372, %v3388
  %v3391 = vld [vmem:[#allocation4 + $0x10] sm:$0xff]
  %3392 = vmatprep.subr.mxu0 0.0
  %3393 = vmatpush1.msra.mxu0 0.0
  %3394 = vmatprep.subr.mxu0 0.0
  %3395 = vmatpush1.msra.mxu0 0.0
  %3396 = vmatprep.subr.mxu0 0.0
  %3397 = vmatpush1.msra.mxu0 0.0
  %3398 = vmatprep.subr.mxu0 0.0
  %3399 = vmatpush1.msra.mxu0 0.0
  %3400 = vmatprep.subr.mxu0 0.0
  %3401 = vmatpush1.msra.mxu0 0.0
  %3402 = vmatprep.subr.mxu0 0.0
  %3403 = vmatpush1.msra.mxu0 0.0
  %3404 = vmatprep.subr.mxu0 0.0
  %3405 = vmatpush1.msra.mxu0 0.0
  %3406 = vmatprep.subr.mxu0 0.0
  %3407 = vmatpush1.msra.mxu0 0.0
  %3408 = vmatprep.subr.mxu0 0.0
  %3409 = vmatpush1.msra.mxu0 0.0
  %3410 = vmatprep.subr.mxu0 0.0
  %3411 = vmatpush1.msra.mxu0 0.0
  %3412 = vmatprep.subr.mxu0 0.0
  %3413 = vmatpush1.msra.mxu0 0.0
  %3414 = vmatprep.subr.mxu0 0.0
  %3415 = vmatpush1.msra.mxu0 0.0
  %3416 = vmatprep.subr.mxu0 0.0
  %3417 = vmatpush1.msra.mxu0 %v2835
  %3418 = vmatprep.subr.mxu0 0.0
  %3419 = vmatpush1.msra.mxu0 %v2834
  %3420 = vmatprep.subr.mxu0 0.0
  %3421 = vmatpush1.msra.mxu0 %v2833
  %3422 = vmatprep.subr.mxu0 0.0
  %3423 = vmatpush1.msra.mxu0 %v2832
  %3424 = vmatprep.subr.mxu0 0.0
  %3425 = vmatpush2.msra.mxu0 0.0
  %3426 = vmatprep.subr.mxu0 0.0
  %3427 = vmatpush2.msra.mxu0 0.0
  %3428 = vmatprep.subr.mxu0 0.0
  %3429 = vmatpush2.msra.mxu0 0.0
  %3430 = vmatprep.subr.mxu0 0.0
  %3431 = vmatpush2.msra.mxu0 0.0
  %3432 = vmatprep.subr.mxu0 0.0
  %3433 = vmatpush2.msra.mxu0 0.0
  %3434 = vmatprep.subr.mxu0 0.0
  %3435 = vmatpush2.msra.mxu0 0.0
  %3436 = vmatprep.subr.mxu0 0.0
  %3437 = vmatpush2.msra.mxu0 0.0
  %3438 = vmatprep.subr.mxu0 0.0
  %3439 = vmatpush2.msra.mxu0 0.0
  %3440 = vmatprep.subr.mxu0 0.0
  %3441 = vmatpush2.msra.mxu0 0.0
  %3442 = vmatprep.subr.mxu0 0.0
  %3443 = vmatpush2.msra.mxu0 0.0
  %3444 = vmatprep.subr.mxu0 0.0
  %3445 = vmatpush2.msra.mxu0 0.0
  %3446 = vmatprep.subr.mxu0 0.0
  %3447 = vmatpush2.msra.mxu0 0.0
  %3448 = vmatprep.subr.mxu0 0.0
  %3449 = vmatpush2.msra.mxu0 0.0
  %3450 = vmatprep.subr.mxu0 0.0
  %3451 = vmatpush2.msra.mxu0 0.0
  %3452 = vmatprep.subr.mxu0 0.0
  %3453 = vmatpush2.msra.mxu0 0.0
  %3454 = vmatprep.subr.mxu0 0.0
  %3455 = vmatpush2.msra.mxu0 0.0
  %3456 = vmatprep.mubr.f32.mxu0 0.0
  %3457 = vmatmul.mubr.f32.gmra.mxu0 %v3294
  %v3458 = vpop.f32.mrf.mxu0
  %v3459 = vadd.f32 0.0, %v3458
  %v3460 = vpop.f32.mrf.mxu0
  %3461 = vdwg.mxu0
  %v3462 = vadd.f32 %v3391, %v3459
  %v3463 = vxor.u32 %v3462, 2147483648
  %v3464 = vmul.f32 %v3463, 1.442695
  %v3465 = vpow.pop %v3464
  %v3466 = vadd.f32 %v3465, 1.0
  %v3467 = vrcp.pop %v3466
  %v3468 = vmul.f32 1.0, %v3467
  %v3469 = vtanh.pop %v3462
  %v3470 = vmul.f32 %v3468, %v3209
  %3472 = vrot.lane.b32.xlu0 %v3469, 64
  %v3473 = vpop.permute.xlu0 %3472
  %v3475 = vmul.f32 %v3468, %v3473
  %3477 = vrot.lane.b32.xlu0 %v3475, 32
  %v3478 = vpop.permute.xlu0 %3477
  %v3480 = vadd.f32 %v3470, %v3478
  %v3481 = vtanh.pop %v3480
  %3483 = vrot.lane.b32.xlu0 %v3481, 64
  %v3484 = vpop.permute.xlu0 %3483
  %v3486 = vmul.f32 %v3468, %v3484
  %3488 = vrot.lane.b32.xlu0 %v3390, 32
  %v3489 = vpop.permute.xlu0 %3488
  %v3490 = vsel %vm38, %v3489, 0
  %3492 = vmatprep.subr.mxu0 0.0
  %3493 = vmatpush1.msra.mxu0 0.0
  %3494 = vmatprep.subr.mxu0 0.0
  %3495 = vmatpush1.msra.mxu0 0.0
  %3496 = vmatprep.subr.mxu0 0.0
  %3497 = vmatpush1.msra.mxu0 0.0
  %3498 = vmatprep.subr.mxu0 0.0
  %3499 = vmatpush1.msra.mxu0 0.0
  %3500 = vmatprep.subr.mxu0 0.0
  %3501 = vmatpush1.msra.mxu0 0.0
  %3502 = vmatprep.subr.mxu0 0.0
  %3503 = vmatpush1.msra.mxu0 0.0
  %3504 = vmatprep.subr.mxu0 0.0
  %3505 = vmatpush1.msra.mxu0 0.0
  %3506 = vmatprep.subr.mxu0 0.0
  %3507 = vmatpush1.msra.mxu0 0.0
  %3508 = vmatprep.subr.mxu0 0.0
  %3509 = vmatpush1.msra.mxu0 0.0
  %3510 = vmatprep.subr.mxu0 0.0
  %3511 = vmatpush1.msra.mxu0 0.0
  %3512 = vmatprep.subr.mxu0 0.0
  %3513 = vmatpush1.msra.mxu0 0.0
  %3514 = vmatprep.subr.mxu0 0.0
  %3515 = vmatpush1.msra.mxu0 0.0
  %3516 = vmatprep.subr.mxu0 0.0
  %3517 = vmatpush1.msra.mxu0 %v2843
  %3518 = vmatprep.subr.mxu0 0.0
  %3519 = vmatpush1.msra.mxu0 %v2842
  %3520 = vmatprep.subr.mxu0 0.0
  %3521 = vmatpush1.msra.mxu0 %v2841
  %3522 = vmatprep.subr.mxu0 0.0
  %3523 = vmatpush1.msra.mxu0 %v2840
  %3524 = vmatprep.subr.mxu0 0.0
  %3525 = vmatpush2.msra.mxu0 0.0
  %3526 = vmatprep.subr.mxu0 0.0
  %3527 = vmatpush2.msra.mxu0 0.0
  %3528 = vmatprep.subr.mxu0 0.0
  %3529 = vmatpush2.msra.mxu0 0.0
  %3530 = vmatprep.subr.mxu0 0.0
  %3531 = vmatpush2.msra.mxu0 0.0
  %3532 = vmatprep.subr.mxu0 0.0
  %3533 = vmatpush2.msra.mxu0 0.0
  %3534 = vmatprep.subr.mxu0 0.0
  %3535 = vmatpush2.msra.mxu0 0.0
  %3536 = vmatprep.subr.mxu0 0.0
  %3537 = vmatpush2.msra.mxu0 0.0
  %3538 = vmatprep.subr.mxu0 0.0
  %3539 = vmatpush2.msra.mxu0 0.0
  %3540 = vmatprep.subr.mxu0 0.0
  %3541 = vmatpush2.msra.mxu0 0.0
  %3542 = vmatprep.subr.mxu0 0.0
  %3543 = vmatpush2.msra.mxu0 0.0
  %3544 = vmatprep.subr.mxu0 0.0
  %3545 = vmatpush2.msra.mxu0 0.0
  %3546 = vmatprep.subr.mxu0 0.0
  %3547 = vmatpush2.msra.mxu0 0.0
  %3548 = vmatprep.subr.mxu0 0.0
  %3549 = vmatpush2.msra.mxu0 0.0
  %3550 = vmatprep.subr.mxu0 0.0
  %3551 = vmatpush2.msra.mxu0 0.0
  %3552 = vmatprep.subr.mxu0 0.0
  %3553 = vmatpush2.msra.mxu0 0.0
  %3554 = vmatprep.subr.mxu0 0.0
  %3555 = vmatpush2.msra.mxu0 0.0
  %3556 = vmatprep.mubr.f32.mxu0 0.0
  %3557 = vmatmul.mubr.f32.gmra.mxu0 %v3490
  %v3558 = vpop.f32.mrf.mxu0
  %v3559 = vadd.f32 0.0, %v3558
  %v3560 = vpop.f32.mrf.mxu0
  %3561 = vdwg.mxu0
  %3563 = vrot.lane.b32.xlu0 %v3486, 32
  %v3564 = vpop.permute.xlu0 %3563
  %v3565 = vsel %vm38, %v3564, 0
  %3567 = vmatprep.subr.mxu0 0.0
  %3568 = vmatpush1.msra.mxu0 0.0
  %3569 = vmatprep.subr.mxu0 0.0
  %3570 = vmatpush1.msra.mxu0 0.0
  %3571 = vmatprep.subr.mxu0 0.0
  %3572 = vmatpush1.msra.mxu0 0.0
  %3573 = vmatprep.subr.mxu0 0.0
  %3574 = vmatpush1.msra.mxu0 0.0
  %3575 = vmatprep.subr.mxu0 0.0
  %3576 = vmatpush1.msra.mxu0 0.0
  %3577 = vmatprep.subr.mxu0 0.0
  %3578 = vmatpush1.msra.mxu0 0.0
  %3579 = vmatprep.subr.mxu0 0.0
  %3580 = vmatpush1.msra.mxu0 0.0
  %3581 = vmatprep.subr.mxu0 0.0
  %3582 = vmatpush1.msra.mxu0 0.0
  %3583 = vmatprep.subr.mxu0 0.0
  %3584 = vmatpush1.msra.mxu0 0.0
  %3585 = vmatprep.subr.mxu0 0.0
  %3586 = vmatpush1.msra.mxu0 0.0
  %3587 = vmatprep.subr.mxu0 0.0
  %3588 = vmatpush1.msra.mxu0 0.0
  %3589 = vmatprep.subr.mxu0 0.0
  %3590 = vmatpush1.msra.mxu0 0.0
  %3591 = vmatprep.subr.mxu0 0.0
  %3592 = vmatpush1.msra.mxu0 %v2839
  %3593 = vmatprep.subr.mxu0 0.0
  %3594 = vmatpush1.msra.mxu0 %v2838
  %3595 = vmatprep.subr.mxu0 0.0
  %3596 = vmatpush1.msra.mxu0 %v2837
  %3597 = vmatprep.subr.mxu0 0.0
  %3598 = vmatpush1.msra.mxu0 %v2836
  %3599 = vmatprep.subr.mxu0 0.0
  %3600 = vmatpush2.msra.mxu0 0.0
  %3601 = vmatprep.subr.mxu0 0.0
  %3602 = vmatpush2.msra.mxu0 0.0
  %3603 = vmatprep.subr.mxu0 0.0
  %3604 = vmatpush2.msra.mxu0 0.0
  %3605 = vmatprep.subr.mxu0 0.0
  %3606 = vmatpush2.msra.mxu0 0.0
  %3607 = vmatprep.subr.mxu0 0.0
  %3608 = vmatpush2.msra.mxu0 0.0
  %3609 = vmatprep.subr.mxu0 0.0
  %3610 = vmatpush2.msra.mxu0 0.0
  %3611 = vmatprep.subr.mxu0 0.0
  %3612 = vmatpush2.msra.mxu0 0.0
  %3613 = vmatprep.subr.mxu0 0.0
  %3614 = vmatpush2.msra.mxu0 0.0
  %3615 = vmatprep.subr.mxu0 0.0
  %3616 = vmatpush2.msra.mxu0 0.0
  %3617 = vmatprep.subr.mxu0 0.0
  %3618 = vmatpush2.msra.mxu0 0.0
  %3619 = vmatprep.subr.mxu0 0.0
  %3620 = vmatpush2.msra.mxu0 0.0
  %3621 = vmatprep.subr.mxu0 0.0
  %3622 = vmatpush2.msra.mxu0 0.0
  %3623 = vmatprep.subr.mxu0 0.0
  %3624 = vmatpush2.msra.mxu0 0.0
  %3625 = vmatprep.subr.mxu0 0.0
  %3626 = vmatpush2.msra.mxu0 0.0
  %3627 = vmatprep.subr.mxu0 0.0
  %3628 = vmatpush2.msra.mxu0 0.0
  %3629 = vmatprep.subr.mxu0 0.0
  %3630 = vmatpush2.msra.mxu0 0.0
  %3631 = vmatprep.mubr.f32.mxu0 0.0
  %3632 = vmatmul.mubr.f32.gmra.mxu0 %v3565
  %v3633 = vpop.f32.mrf.mxu0
  %v3634 = vadd.f32 %v3559, %v3633
  %v3635 = vpop.f32.mrf.mxu0
  %3636 = vdwg.mxu0
  %v3637 = vadd.f32 %v3634, %v2849
  %v3638 = vxor.u32 %v3637, 2147483648
  %v3639 = vmul.f32 %v3638, 1.442695
  %v3640 = vpow.pop %v3639
  %v3641 = vadd.f32 %v3640, 1.0
  %v3642 = vrcp.pop %v3641
  %v3643 = vmul.f32 1.0, %v3642
  %v3644 = vtanh.pop %v3637
  %v3645 = vmul.f32 %v3643, %v3384
  %3647 = vrot.lane.b32.xlu0 %v3644, 64
  %v3648 = vpop.permute.xlu0 %3647
  %v3650 = vmul.f32 %v3643, %v3648
  %3652 = vrot.lane.b32.xlu0 %v3650, 32
  %v3653 = vpop.permute.xlu0 %3652
  %v3655 = vadd.f32 %v3645, %v3653
  %v3656 = vtanh.pop %v3655
  %3658 = vrot.lane.b32.xlu0 %v3656, 64
  %v3659 = vpop.permute.xlu0 %3658
  %v3661 = vmul.f32 %v3643, %v3659
  %v3662 = vld [vmem:[#allocation4 + $0x18] sm:$0xff]
  %3663 = vmatprep.subr.mxu0 0.0
  %3664 = vmatpush1.msra.mxu0 0.0
  %3665 = vmatprep.subr.mxu0 0.0
  %3666 = vmatpush1.msra.mxu0 0.0
  %3667 = vmatprep.subr.mxu0 0.0
  %3668 = vmatpush1.msra.mxu0 0.0
  %3669 = vmatprep.subr.mxu0 0.0
  %3670 = vmatpush1.msra.mxu0 0.0
  %3671 = vmatprep.subr.mxu0 0.0
  %3672 = vmatpush1.msra.mxu0 0.0
  %3673 = vmatprep.subr.mxu0 0.0
  %3674 = vmatpush1.msra.mxu0 0.0
  %3675 = vmatprep.subr.mxu0 0.0
  %3676 = vmatpush1.msra.mxu0 0.0
  %3677 = vmatprep.subr.mxu0 0.0
  %3678 = vmatpush1.msra.mxu0 0.0
  %3679 = vmatprep.subr.mxu0 0.0
  %3680 = vmatpush1.msra.mxu0 0.0
  %3681 = vmatprep.subr.mxu0 0.0
  %3682 = vmatpush1.msra.mxu0 0.0
  %3683 = vmatprep.subr.mxu0 0.0
  %3684 = vmatpush1.msra.mxu0 0.0
  %3685 = vmatprep.subr.mxu0 0.0
  %3686 = vmatpush1.msra.mxu0 0.0
  %3687 = vmatprep.subr.mxu0 0.0
  %3688 = vmatpush1.msra.mxu0 %v2835
  %3689 = vmatprep.subr.mxu0 0.0
  %3690 = vmatpush1.msra.mxu0 %v2834
  %3691 = vmatprep.subr.mxu0 0.0
  %3692 = vmatpush1.msra.mxu0 %v2833
  %3693 = vmatprep.subr.mxu0 0.0
  %3694 = vmatpush1.msra.mxu0 %v2832
  %3695 = vmatprep.subr.mxu0 0.0
  %3696 = vmatpush2.msra.mxu0 0.0
  %3697 = vmatprep.subr.mxu0 0.0
  %3698 = vmatpush2.msra.mxu0 0.0
  %3699 = vmatprep.subr.mxu0 0.0
  %3700 = vmatpush2.msra.mxu0 0.0
  %3701 = vmatprep.subr.mxu0 0.0
  %3702 = vmatpush2.msra.mxu0 0.0
  %3703 = vmatprep.subr.mxu0 0.0
  %3704 = vmatpush2.msra.mxu0 0.0
  %3705 = vmatprep.subr.mxu0 0.0
  %3706 = vmatpush2.msra.mxu0 0.0
  %3707 = vmatprep.subr.mxu0 0.0
  %3708 = vmatpush2.msra.mxu0 0.0
  %3709 = vmatprep.subr.mxu0 0.0
  %3710 = vmatpush2.msra.mxu0 0.0
  %3711 = vmatprep.subr.mxu0 0.0
  %3712 = vmatpush2.msra.mxu0 0.0
  %3713 = vmatprep.subr.mxu0 0.0
  %3714 = vmatpush2.msra.mxu0 0.0
  %3715 = vmatprep.subr.mxu0 0.0
  %3716 = vmatpush2.msra.mxu0 0.0
  %3717 = vmatprep.subr.mxu0 0.0
  %3718 = vmatpush2.msra.mxu0 0.0
  %3719 = vmatprep.subr.mxu0 0.0
  %3720 = vmatpush2.msra.mxu0 0.0
  %3721 = vmatprep.subr.mxu0 0.0
  %3722 = vmatpush2.msra.mxu0 0.0
  %3723 = vmatprep.subr.mxu0 0.0
  %3724 = vmatpush2.msra.mxu0 0.0
  %3725 = vmatprep.subr.mxu0 0.0
  %3726 = vmatpush2.msra.mxu0 0.0
  %3727 = vmatprep.mubr.f32.mxu0 0.0
  %3728 = vmatmul.mubr.f32.gmra.mxu0 %v3565
  %v3729 = vpop.f32.mrf.mxu0
  %v3730 = vadd.f32 0.0, %v3729
  %v3731 = vpop.f32.mrf.mxu0
  %3732 = vdwg.mxu0
  %v3733 = vadd.f32 %v3662, %v3730
  %v3734 = vxor.u32 %v3733, 2147483648
  %v3735 = vmul.f32 %v3734, 1.442695
  %v3736 = vpow.pop %v3735
  %v3737 = vadd.f32 %v3736, 1.0
  %v3738 = vrcp.pop %v3737
  %v3739 = vmul.f32 1.0, %v3738
  %v3740 = vtanh.pop %v3733
  %v3741 = vmul.f32 %v3739, %v3480
  %3743 = vrot.lane.b32.xlu0 %v3740, 64
  %v3744 = vpop.permute.xlu0 %3743
  %v3746 = vmul.f32 %v3739, %v3744
  %3748 = vrot.lane.b32.xlu0 %v3746, 32
  %v3749 = vpop.permute.xlu0 %3748
  %v3751 = vadd.f32 %v3741, %v3749
  %v3752 = vtanh.pop %v3751
  %3754 = vrot.lane.b32.xlu0 %v3752, 64
  %v3755 = vpop.permute.xlu0 %3754
  %v3757 = vmul.f32 %v3739, %v3755
  %3759 = vrot.lane.b32.xlu0 %v3661, 32
  %v3760 = vpop.permute.xlu0 %3759
  %v3761 = vsel %vm38, %v3760, 0
  %3763 = vmatprep.subr.mxu0 0.0
  %3764 = vmatpush1.msra.mxu0 0.0
  %3765 = vmatprep.subr.mxu0 0.0
  %3766 = vmatpush1.msra.mxu0 0.0
  %3767 = vmatprep.subr.mxu0 0.0
  %3768 = vmatpush1.msra.mxu0 0.0
  %3769 = vmatprep.subr.mxu0 0.0
  %3770 = vmatpush1.msra.mxu0 0.0
  %3771 = vmatprep.subr.mxu0 0.0
  %3772 = vmatpush1.msra.mxu0 0.0
  %3773 = vmatprep.subr.mxu0 0.0
  %3774 = vmatpush1.msra.mxu0 0.0
  %3775 = vmatprep.subr.mxu0 0.0
  %3776 = vmatpush1.msra.mxu0 0.0
  %3777 = vmatprep.subr.mxu0 0.0
  %3778 = vmatpush1.msra.mxu0 0.0
  %3779 = vmatprep.subr.mxu0 0.0
  %3780 = vmatpush1.msra.mxu0 0.0
  %3781 = vmatprep.subr.mxu0 0.0
  %3782 = vmatpush1.msra.mxu0 0.0
  %3783 = vmatprep.subr.mxu0 0.0
  %3784 = vmatpush1.msra.mxu0 0.0
  %3785 = vmatprep.subr.mxu0 0.0
  %3786 = vmatpush1.msra.mxu0 0.0
  %3787 = vmatprep.subr.mxu0 0.0
  %3788 = vmatpush1.msra.mxu0 %v2843
  %3789 = vmatprep.subr.mxu0 0.0
  %3790 = vmatpush1.msra.mxu0 %v2842
  %3791 = vmatprep.subr.mxu0 0.0
  %3792 = vmatpush1.msra.mxu0 %v2841
  %3793 = vmatprep.subr.mxu0 0.0
  %3794 = vmatpush1.msra.mxu0 %v2840
  %3795 = vmatprep.subr.mxu0 0.0
  %3796 = vmatpush2.msra.mxu0 0.0
  %3797 = vmatprep.subr.mxu0 0.0
  %3798 = vmatpush2.msra.mxu0 0.0
  %3799 = vmatprep.subr.mxu0 0.0
  %3800 = vmatpush2.msra.mxu0 0.0
  %3801 = vmatprep.subr.mxu0 0.0
  %3802 = vmatpush2.msra.mxu0 0.0
  %3803 = vmatprep.subr.mxu0 0.0
  %3804 = vmatpush2.msra.mxu0 0.0
  %3805 = vmatprep.subr.mxu0 0.0
  %3806 = vmatpush2.msra.mxu0 0.0
  %3807 = vmatprep.subr.mxu0 0.0
  %3808 = vmatpush2.msra.mxu0 0.0
  %3809 = vmatprep.subr.mxu0 0.0
  %3810 = vmatpush2.msra.mxu0 0.0
  %3811 = vmatprep.subr.mxu0 0.0
  %3812 = vmatpush2.msra.mxu0 0.0
  %3813 = vmatprep.subr.mxu0 0.0
  %3814 = vmatpush2.msra.mxu0 0.0
  %3815 = vmatprep.subr.mxu0 0.0
  %3816 = vmatpush2.msra.mxu0 0.0
  %3817 = vmatprep.subr.mxu0 0.0
  %3818 = vmatpush2.msra.mxu0 0.0
  %3819 = vmatprep.subr.mxu0 0.0
  %3820 = vmatpush2.msra.mxu0 0.0
  %3821 = vmatprep.subr.mxu0 0.0
  %3822 = vmatpush2.msra.mxu0 0.0
  %3823 = vmatprep.subr.mxu0 0.0
  %3824 = vmatpush2.msra.mxu0 0.0
  %3825 = vmatprep.subr.mxu0 0.0
  %3826 = vmatpush2.msra.mxu0 0.0
  %3827 = vmatprep.mubr.f32.mxu0 0.0
  %3828 = vmatmul.mubr.f32.gmra.mxu0 %v3761
  %v3829 = vpop.f32.mrf.mxu0
  %v3830 = vadd.f32 0.0, %v3829
  %v3831 = vpop.f32.mrf.mxu0
  %3832 = vdwg.mxu0
  %3834 = vrot.lane.b32.xlu0 %v3757, 32
  %v3835 = vpop.permute.xlu0 %3834
  %v3836 = vsel %vm38, %v3835, 0
  %3838 = vmatprep.subr.mxu0 0.0
  %3839 = vmatpush1.msra.mxu0 0.0
  %3840 = vmatprep.subr.mxu0 0.0
  %3841 = vmatpush1.msra.mxu0 0.0
  %3842 = vmatprep.subr.mxu0 0.0
  %3843 = vmatpush1.msra.mxu0 0.0
  %3844 = vmatprep.subr.mxu0 0.0
  %3845 = vmatpush1.msra.mxu0 0.0
  %3846 = vmatprep.subr.mxu0 0.0
  %3847 = vmatpush1.msra.mxu0 0.0
  %3848 = vmatprep.subr.mxu0 0.0
  %3849 = vmatpush1.msra.mxu0 0.0
  %3850 = vmatprep.subr.mxu0 0.0
  %3851 = vmatpush1.msra.mxu0 0.0
  %3852 = vmatprep.subr.mxu0 0.0
  %3853 = vmatpush1.msra.mxu0 0.0
  %3854 = vmatprep.subr.mxu0 0.0
  %3855 = vmatpush1.msra.mxu0 0.0
  %3856 = vmatprep.subr.mxu0 0.0
  %3857 = vmatpush1.msra.mxu0 0.0
  %3858 = vmatprep.subr.mxu0 0.0
  %3859 = vmatpush1.msra.mxu0 0.0
  %3860 = vmatprep.subr.mxu0 0.0
  %3861 = vmatpush1.msra.mxu0 0.0
  %3862 = vmatprep.subr.mxu0 0.0
  %3863 = vmatpush1.msra.mxu0 %v2839
  %3864 = vmatprep.subr.mxu0 0.0
  %3865 = vmatpush1.msra.mxu0 %v2838
  %3866 = vmatprep.subr.mxu0 0.0
  %3867 = vmatpush1.msra.mxu0 %v2837
  %3868 = vmatprep.subr.mxu0 0.0
  %3869 = vmatpush1.msra.mxu0 %v2836
  %3870 = vmatprep.subr.mxu0 0.0
  %3871 = vmatpush2.msra.mxu0 0.0
  %3872 = vmatprep.subr.mxu0 0.0
  %3873 = vmatpush2.msra.mxu0 0.0
  %3874 = vmatprep.subr.mxu0 0.0
  %3875 = vmatpush2.msra.mxu0 0.0
  %3876 = vmatprep.subr.mxu0 0.0
  %3877 = vmatpush2.msra.mxu0 0.0
  %3878 = vmatprep.subr.mxu0 0.0
  %3879 = vmatpush2.msra.mxu0 0.0
  %3880 = vmatprep.subr.mxu0 0.0
  %3881 = vmatpush2.msra.mxu0 0.0
  %3882 = vmatprep.subr.mxu0 0.0
  %3883 = vmatpush2.msra.mxu0 0.0
  %3884 = vmatprep.subr.mxu0 0.0
  %3885 = vmatpush2.msra.mxu0 0.0
  %3886 = vmatprep.subr.mxu0 0.0
  %3887 = vmatpush2.msra.mxu0 0.0
  %3888 = vmatprep.subr.mxu0 0.0
  %3889 = vmatpush2.msra.mxu0 0.0
  %3890 = vmatprep.subr.mxu0 0.0
  %3891 = vmatpush2.msra.mxu0 0.0
  %3892 = vmatprep.subr.mxu0 0.0
  %3893 = vmatpush2.msra.mxu0 0.0
  %3894 = vmatprep.subr.mxu0 0.0
  %3895 = vmatpush2.msra.mxu0 0.0
  %3896 = vmatprep.subr.mxu0 0.0
  %3897 = vmatpush2.msra.mxu0 0.0
  %3898 = vmatprep.subr.mxu0 0.0
  %3899 = vmatpush2.msra.mxu0 0.0
  %3900 = vmatprep.subr.mxu0 0.0
  %3901 = vmatpush2.msra.mxu0 0.0
  %3902 = vmatprep.mubr.f32.mxu0 0.0
  %3903 = vmatmul.mubr.f32.gmra.mxu0 %v3836
  %v3904 = vpop.f32.mrf.mxu0
  %v3905 = vadd.f32 %v3830, %v3904
  %v3906 = vpop.f32.mrf.mxu0
  %3907 = vdwg.mxu0
  %v3908 = vadd.f32 %v3905, %v2849
  %v3909 = vxor.u32 %v3908, 2147483648
  %v3910 = vmul.f32 %v3909, 1.442695
  %v3911 = vpow.pop %v3910
  %v3912 = vadd.f32 %v3911, 1.0
  %v3913 = vrcp.pop %v3912
  %v3914 = vmul.f32 1.0, %v3913
  %v3915 = vtanh.pop %v3908
  %v3916 = vmul.f32 %v3914, %v3655
  %3918 = vrot.lane.b32.xlu0 %v3915, 64
  %v3919 = vpop.permute.xlu0 %3918
  %v3921 = vmul.f32 %v3914, %v3919
  %3923 = vrot.lane.b32.xlu0 %v3921, 32
  %v3924 = vpop.permute.xlu0 %3923
  %v3926 = vadd.f32 %v3916, %v3924
  %v3927 = vtanh.pop %v3926
  %3929 = vrot.lane.b32.xlu0 %v3927, 64
  %v3930 = vpop.permute.xlu0 %3929
  %v3932 = vmul.f32 %v3914, %v3930
  %v3933 = vld [vmem:[#allocation4 + $0x20] sm:$0xff]
  %3934 = vmatprep.subr.mxu0 0.0
  %3935 = vmatpush1.msra.mxu0 0.0
  %3936 = vmatprep.subr.mxu0 0.0
  %3937 = vmatpush1.msra.mxu0 0.0
  %3938 = vmatprep.subr.mxu0 0.0
  %3939 = vmatpush1.msra.mxu0 0.0
  %3940 = vmatprep.subr.mxu0 0.0
  %3941 = vmatpush1.msra.mxu0 0.0
  %3942 = vmatprep.subr.mxu0 0.0
  %3943 = vmatpush1.msra.mxu0 0.0
  %3944 = vmatprep.subr.mxu0 0.0
  %3945 = vmatpush1.msra.mxu0 0.0
  %3946 = vmatprep.subr.mxu0 0.0
  %3947 = vmatpush1.msra.mxu0 0.0
  %3948 = vmatprep.subr.mxu0 0.0
  %3949 = vmatpush1.msra.mxu0 0.0
  %3950 = vmatprep.subr.mxu0 0.0
  %3951 = vmatpush1.msra.mxu0 0.0
  %3952 = vmatprep.subr.mxu0 0.0
  %3953 = vmatpush1.msra.mxu0 0.0
  %3954 = vmatprep.subr.mxu0 0.0
  %3955 = vmatpush1.msra.mxu0 0.0
  %3956 = vmatprep.subr.mxu0 0.0
  %3957 = vmatpush1.msra.mxu0 0.0
  %3958 = vmatprep.subr.mxu0 0.0
  %3959 = vmatpush1.msra.mxu0 %v2835
  %3960 = vmatprep.subr.mxu0 0.0
  %3961 = vmatpush1.msra.mxu0 %v2834
  %3962 = vmatprep.subr.mxu0 0.0
  %3963 = vmatpush1.msra.mxu0 %v2833
  %3964 = vmatprep.subr.mxu0 0.0
  %3965 = vmatpush1.msra.mxu0 %v2832
  %3966 = vmatprep.subr.mxu0 0.0
  %3967 = vmatpush2.msra.mxu0 0.0
  %3968 = vmatprep.subr.mxu0 0.0
  %3969 = vmatpush2.msra.mxu0 0.0
  %3970 = vmatprep.subr.mxu0 0.0
  %3971 = vmatpush2.msra.mxu0 0.0
  %3972 = vmatprep.subr.mxu0 0.0
  %3973 = vmatpush2.msra.mxu0 0.0
  %3974 = vmatprep.subr.mxu0 0.0
  %3975 = vmatpush2.msra.mxu0 0.0
  %3976 = vmatprep.subr.mxu0 0.0
  %3977 = vmatpush2.msra.mxu0 0.0
  %3978 = vmatprep.subr.mxu0 0.0
  %3979 = vmatpush2.msra.mxu0 0.0
  %3980 = vmatprep.subr.mxu0 0.0
  %3981 = vmatpush2.msra.mxu0 0.0
  %3982 = vmatprep.subr.mxu0 0.0
  %3983 = vmatpush2.msra.mxu0 0.0
  %3984 = vmatprep.subr.mxu0 0.0
  %3985 = vmatpush2.msra.mxu0 0.0
  %3986 = vmatprep.subr.mxu0 0.0
  %3987 = vmatpush2.msra.mxu0 0.0
  %3988 = vmatprep.subr.mxu0 0.0
  %3989 = vmatpush2.msra.mxu0 0.0
  %3990 = vmatprep.subr.mxu0 0.0
  %3991 = vmatpush2.msra.mxu0 0.0
  %3992 = vmatprep.subr.mxu0 0.0
  %3993 = vmatpush2.msra.mxu0 0.0
  %3994 = vmatprep.subr.mxu0 0.0
  %3995 = vmatpush2.msra.mxu0 0.0
  %3996 = vmatprep.subr.mxu0 0.0
  %3997 = vmatpush2.msra.mxu0 0.0
  %3998 = vmatprep.mubr.f32.mxu0 0.0
  %3999 = vmatmul.mubr.f32.gmra.mxu0 %v3836
  %v4000 = vpop.f32.mrf.mxu0
  %v4001 = vadd.f32 0.0, %v4000
  %v4002 = vpop.f32.mrf.mxu0
  %4003 = vdwg.mxu0
  %v4004 = vadd.f32 %v3933, %v4001
  %v4005 = vxor.u32 %v4004, 2147483648
  %v4006 = vmul.f32 %v4005, 1.442695
  %v4007 = vpow.pop %v4006
  %v4008 = vadd.f32 %v4007, 1.0
  %v4009 = vrcp.pop %v4008
  %v4010 = vmul.f32 1.0, %v4009
  %v4011 = vtanh.pop %v4004
  %v4012 = vmul.f32 %v4010, %v3751
  %4014 = vrot.lane.b32.xlu0 %v4011, 64
  %v4015 = vpop.permute.xlu0 %4014
  %v4017 = vmul.f32 %v4010, %v4015
  %4019 = vrot.lane.b32.xlu0 %v4017, 32
  %v4020 = vpop.permute.xlu0 %4019
  %v4022 = vadd.f32 %v4012, %v4020
  %v4023 = vtanh.pop %v4022
  %4025 = vrot.lane.b32.xlu0 %v4023, 64
  %v4026 = vpop.permute.xlu0 %4025
  %v4028 = vmul.f32 %v4010, %v4026
  %4030 = vrot.lane.b32.xlu0 %v3932, 32
  %v4031 = vpop.permute.xlu0 %4030
  %v4032 = vsel %vm38, %v4031, 0
  %4034 = vmatprep.subr.mxu0 0.0
  %4035 = vmatpush1.msra.mxu0 0.0
  %4036 = vmatprep.subr.mxu0 0.0
  %4037 = vmatpush1.msra.mxu0 0.0
  %4038 = vmatprep.subr.mxu0 0.0
  %4039 = vmatpush1.msra.mxu0 0.0
  %4040 = vmatprep.subr.mxu0 0.0
  %4041 = vmatpush1.msra.mxu0 0.0
  %4042 = vmatprep.subr.mxu0 0.0
  %4043 = vmatpush1.msra.mxu0 0.0
  %4044 = vmatprep.subr.mxu0 0.0
  %4045 = vmatpush1.msra.mxu0 0.0
  %4046 = vmatprep.subr.mxu0 0.0
  %4047 = vmatpush1.msra.mxu0 0.0
  %4048 = vmatprep.subr.mxu0 0.0
  %4049 = vmatpush1.msra.mxu0 0.0
  %4050 = vmatprep.subr.mxu0 0.0
  %4051 = vmatpush1.msra.mxu0 0.0
  %4052 = vmatprep.subr.mxu0 0.0
  %4053 = vmatpush1.msra.mxu0 0.0
  %4054 = vmatprep.subr.mxu0 0.0
  %4055 = vmatpush1.msra.mxu0 0.0
  %4056 = vmatprep.subr.mxu0 0.0
  %4057 = vmatpush1.msra.mxu0 0.0
  %4058 = vmatprep.subr.mxu0 0.0
  %4059 = vmatpush1.msra.mxu0 %v2843
  %4060 = vmatprep.subr.mxu0 0.0
  %4061 = vmatpush1.msra.mxu0 %v2842
  %4062 = vmatprep.subr.mxu0 0.0
  %4063 = vmatpush1.msra.mxu0 %v2841
  %4064 = vmatprep.subr.mxu0 0.0
  %4065 = vmatpush1.msra.mxu0 %v2840
  %4066 = vmatprep.subr.mxu0 0.0
  %4067 = vmatpush2.msra.mxu0 0.0
  %4068 = vmatprep.subr.mxu0 0.0
  %4069 = vmatpush2.msra.mxu0 0.0
  %4070 = vmatprep.subr.mxu0 0.0
  %4071 = vmatpush2.msra.mxu0 0.0
  %4072 = vmatprep.subr.mxu0 0.0
  %4073 = vmatpush2.msra.mxu0 0.0
  %4074 = vmatprep.subr.mxu0 0.0
  %4075 = vmatpush2.msra.mxu0 0.0
  %4076 = vmatprep.subr.mxu0 0.0
  %4077 = vmatpush2.msra.mxu0 0.0
  %4078 = vmatprep.subr.mxu0 0.0
  %4079 = vmatpush2.msra.mxu0 0.0
  %4080 = vmatprep.subr.mxu0 0.0
  %4081 = vmatpush2.msra.mxu0 0.0
  %4082 = vmatprep.subr.mxu0 0.0
  %4083 = vmatpush2.msra.mxu0 0.0
  %4084 = vmatprep.subr.mxu0 0.0
  %4085 = vmatpush2.msra.mxu0 0.0
  %4086 = vmatprep.subr.mxu0 0.0
  %4087 = vmatpush2.msra.mxu0 0.0
  %4088 = vmatprep.subr.mxu0 0.0
  %4089 = vmatpush2.msra.mxu0 0.0
  %4090 = vmatprep.subr.mxu0 0.0
  %4091 = vmatpush2.msra.mxu0 0.0
  %4092 = vmatprep.subr.mxu0 0.0
  %4093 = vmatpush2.msra.mxu0 0.0
  %4094 = vmatprep.subr.mxu0 0.0
  %4095 = vmatpush2.msra.mxu0 0.0
  %4096 = vmatprep.subr.mxu0 0.0
  %4097 = vmatpush2.msra.mxu0 0.0
  %4098 = vmatprep.mubr.f32.mxu0 0.0
  %4099 = vmatmul.mubr.f32.gmra.mxu0 %v4032
  %v4100 = vpop.f32.mrf.mxu0
  %v4101 = vadd.f32 0.0, %v4100
  %v4102 = vpop.f32.mrf.mxu0
  %4103 = vdwg.mxu0
  %4105 = vrot.lane.b32.xlu0 %v4028, 32
  %v4106 = vpop.permute.xlu0 %4105
  %v4107 = vsel %vm38, %v4106, 0
  %4109 = vmatprep.subr.mxu0 0.0
  %4110 = vmatpush1.msra.mxu0 0.0
  %4111 = vmatprep.subr.mxu0 0.0
  %4112 = vmatpush1.msra.mxu0 0.0
  %4113 = vmatprep.subr.mxu0 0.0
  %4114 = vmatpush1.msra.mxu0 0.0
  %4115 = vmatprep.subr.mxu0 0.0
  %4116 = vmatpush1.msra.mxu0 0.0
  %4117 = vmatprep.subr.mxu0 0.0
  %4118 = vmatpush1.msra.mxu0 0.0
  %4119 = vmatprep.subr.mxu0 0.0
  %4120 = vmatpush1.msra.mxu0 0.0
  %4121 = vmatprep.subr.mxu0 0.0
  %4122 = vmatpush1.msra.mxu0 0.0
  %4123 = vmatprep.subr.mxu0 0.0
  %4124 = vmatpush1.msra.mxu0 0.0
  %4125 = vmatprep.subr.mxu0 0.0
  %4126 = vmatpush1.msra.mxu0 0.0
  %4127 = vmatprep.subr.mxu0 0.0
  %4128 = vmatpush1.msra.mxu0 0.0
  %4129 = vmatprep.subr.mxu0 0.0
  %4130 = vmatpush1.msra.mxu0 0.0
  %4131 = vmatprep.subr.mxu0 0.0
  %4132 = vmatpush1.msra.mxu0 0.0
  %4133 = vmatprep.subr.mxu0 0.0
  %4134 = vmatpush1.msra.mxu0 %v2839
  %4135 = vmatprep.subr.mxu0 0.0
  %4136 = vmatpush1.msra.mxu0 %v2838
  %4137 = vmatprep.subr.mxu0 0.0
  %4138 = vmatpush1.msra.mxu0 %v2837
  %4139 = vmatprep.subr.mxu0 0.0
  %4140 = vmatpush1.msra.mxu0 %v2836
  %4141 = vmatprep.subr.mxu0 0.0
  %4142 = vmatpush2.msra.mxu0 0.0
  %4143 = vmatprep.subr.mxu0 0.0
  %4144 = vmatpush2.msra.mxu0 0.0
  %4145 = vmatprep.subr.mxu0 0.0
  %4146 = vmatpush2.msra.mxu0 0.0
  %4147 = vmatprep.subr.mxu0 0.0
  %4148 = vmatpush2.msra.mxu0 0.0
  %4149 = vmatprep.subr.mxu0 0.0
  %4150 = vmatpush2.msra.mxu0 0.0
  %4151 = vmatprep.subr.mxu0 0.0
  %4152 = vmatpush2.msra.mxu0 0.0
  %4153 = vmatprep.subr.mxu0 0.0
  %4154 = vmatpush2.msra.mxu0 0.0
  %4155 = vmatprep.subr.mxu0 0.0
  %4156 = vmatpush2.msra.mxu0 0.0
  %4157 = vmatprep.subr.mxu0 0.0
  %4158 = vmatpush2.msra.mxu0 0.0
  %4159 = vmatprep.subr.mxu0 0.0
  %4160 = vmatpush2.msra.mxu0 0.0
  %4161 = vmatprep.subr.mxu0 0.0
  %4162 = vmatpush2.msra.mxu0 0.0
  %4163 = vmatprep.subr.mxu0 0.0
  %4164 = vmatpush2.msra.mxu0 0.0
  %4165 = vmatprep.subr.mxu0 0.0
  %4166 = vmatpush2.msra.mxu0 0.0
  %4167 = vmatprep.subr.mxu0 0.0
  %4168 = vmatpush2.msra.mxu0 0.0
  %4169 = vmatprep.subr.mxu0 0.0
  %4170 = vmatpush2.msra.mxu0 0.0
  %4171 = vmatprep.subr.mxu0 0.0
  %4172 = vmatpush2.msra.mxu0 0.0
  %4173 = vmatprep.mubr.f32.mxu0 0.0
  %4174 = vmatmul.mubr.f32.gmra.mxu0 %v4107
  %v4175 = vpop.f32.mrf.mxu0
  %v4176 = vadd.f32 %v4101, %v4175
  %v4177 = vpop.f32.mrf.mxu0
  %4178 = vdwg.mxu0
  %v4179 = vadd.f32 %v4176, %v2849
  %v4180 = vxor.u32 %v4179, 2147483648
  %v4181 = vmul.f32 %v4180, 1.442695
  %v4182 = vpow.pop %v4181
  %v4183 = vadd.f32 %v4182, 1.0
  %v4184 = vrcp.pop %v4183
  %v4185 = vmul.f32 1.0, %v4184
  %v4186 = vtanh.pop %v4179
  %v4187 = vmul.f32 %v4185, %v3926
  %4189 = vrot.lane.b32.xlu0 %v4186, 64
  %v4190 = vpop.permute.xlu0 %4189
  %v4192 = vmul.f32 %v4185, %v4190
  %4194 = vrot.lane.b32.xlu0 %v4192, 32
  %v4195 = vpop.permute.xlu0 %4194
  %v4197 = vadd.f32 %v4187, %v4195
  %v4198 = vtanh.pop %v4197
  %4200 = vrot.lane.b32.xlu0 %v4198, 64
  %v4201 = vpop.permute.xlu0 %4200
  %v4203 = vmul.f32 %v4185, %v4201
  %v4204 = vld [vmem:[#allocation4 + $0x28] sm:$0xff]
  %4205 = vmatprep.subr.mxu0 0.0
  %4206 = vmatpush1.msra.mxu0 0.0
  %4207 = vmatprep.subr.mxu0 0.0
  %4208 = vmatpush1.msra.mxu0 0.0
  %4209 = vmatprep.subr.mxu0 0.0
  %4210 = vmatpush1.msra.mxu0 0.0
  %4211 = vmatprep.subr.mxu0 0.0
  %4212 = vmatpush1.msra.mxu0 0.0
  %4213 = vmatprep.subr.mxu0 0.0
  %4214 = vmatpush1.msra.mxu0 0.0
  %4215 = vmatprep.subr.mxu0 0.0
  %4216 = vmatpush1.msra.mxu0 0.0
  %4217 = vmatprep.subr.mxu0 0.0
  %4218 = vmatpush1.msra.mxu0 0.0
  %4219 = vmatprep.subr.mxu0 0.0
  %4220 = vmatpush1.msra.mxu0 0.0
  %4221 = vmatprep.subr.mxu0 0.0
  %4222 = vmatpush1.msra.mxu0 0.0
  %4223 = vmatprep.subr.mxu0 0.0
  %4224 = vmatpush1.msra.mxu0 0.0
  %4225 = vmatprep.subr.mxu0 0.0
  %4226 = vmatpush1.msra.mxu0 0.0
  %4227 = vmatprep.subr.mxu0 0.0
  %4228 = vmatpush1.msra.mxu0 0.0
  %4229 = vmatprep.subr.mxu0 0.0
  %4230 = vmatpush1.msra.mxu0 %v2835
  %4231 = vmatprep.subr.mxu0 0.0
  %4232 = vmatpush1.msra.mxu0 %v2834
  %4233 = vmatprep.subr.mxu0 0.0
  %4234 = vmatpush1.msra.mxu0 %v2833
  %4235 = vmatprep.subr.mxu0 0.0
  %4236 = vmatpush1.msra.mxu0 %v2832
  %4237 = vmatprep.subr.mxu0 0.0
  %4238 = vmatpush2.msra.mxu0 0.0
  %4239 = vmatprep.subr.mxu0 0.0
  %4240 = vmatpush2.msra.mxu0 0.0
  %4241 = vmatprep.subr.mxu0 0.0
  %4242 = vmatpush2.msra.mxu0 0.0
  %4243 = vmatprep.subr.mxu0 0.0
  %4244 = vmatpush2.msra.mxu0 0.0
  %4245 = vmatprep.subr.mxu0 0.0
  %4246 = vmatpush2.msra.mxu0 0.0
  %4247 = vmatprep.subr.mxu0 0.0
  %4248 = vmatpush2.msra.mxu0 0.0
  %4249 = vmatprep.subr.mxu0 0.0
  %4250 = vmatpush2.msra.mxu0 0.0
  %4251 = vmatprep.subr.mxu0 0.0
  %4252 = vmatpush2.msra.mxu0 0.0
  %4253 = vmatprep.subr.mxu0 0.0
  %4254 = vmatpush2.msra.mxu0 0.0
  %4255 = vmatprep.subr.mxu0 0.0
  %4256 = vmatpush2.msra.mxu0 0.0
  %4257 = vmatprep.subr.mxu0 0.0
  %4258 = vmatpush2.msra.mxu0 0.0
  %4259 = vmatprep.subr.mxu0 0.0
  %4260 = vmatpush2.msra.mxu0 0.0
  %4261 = vmatprep.subr.mxu0 0.0
  %4262 = vmatpush2.msra.mxu0 0.0
  %4263 = vmatprep.subr.mxu0 0.0
  %4264 = vmatpush2.msra.mxu0 0.0
  %4265 = vmatprep.subr.mxu0 0.0
  %4266 = vmatpush2.msra.mxu0 0.0
  %4267 = vmatprep.subr.mxu0 0.0
  %4268 = vmatpush2.msra.mxu0 0.0
  %4269 = vmatprep.mubr.f32.mxu0 0.0
  %4270 = vmatmul.mubr.f32.gmra.mxu0 %v4107
  %v4271 = vpop.f32.mrf.mxu0
  %v4272 = vadd.f32 0.0, %v4271
  %v4273 = vpop.f32.mrf.mxu0
  %4274 = vdwg.mxu0
  %v4275 = vadd.f32 %v4204, %v4272
  %v4276 = vxor.u32 %v4275, 2147483648
  %v4277 = vmul.f32 %v4276, 1.442695
  %v4278 = vpow.pop %v4277
  %v4279 = vadd.f32 %v4278, 1.0
  %v4280 = vrcp.pop %v4279
  %v4281 = vmul.f32 1.0, %v4280
  %v4282 = vtanh.pop %v4275
  %v4283 = vmul.f32 %v4281, %v4022
  %4285 = vrot.lane.b32.xlu0 %v4282, 64
  %v4286 = vpop.permute.xlu0 %4285
  %v4288 = vmul.f32 %v4281, %v4286
  %4290 = vrot.lane.b32.xlu0 %v4288, 32
  %v4291 = vpop.permute.xlu0 %4290
  %v4293 = vadd.f32 %v4283, %v4291
  %v4294 = vtanh.pop %v4293
  %4296 = vrot.lane.b32.xlu0 %v4294, 64
  %v4297 = vpop.permute.xlu0 %4296
  %v4299 = vmul.f32 %v4281, %v4297
  %4301 = vrot.lane.b32.xlu0 %v4203, 32
  %v4302 = vpop.permute.xlu0 %4301
  %v4303 = vsel %vm38, %v4302, 0
  %4305 = vmatprep.subr.mxu0 0.0
  %4306 = vmatpush1.msra.mxu0 0.0
  %4307 = vmatprep.subr.mxu0 0.0
  %4308 = vmatpush1.msra.mxu0 0.0
  %4309 = vmatprep.subr.mxu0 0.0
  %4310 = vmatpush1.msra.mxu0 0.0
  %4311 = vmatprep.subr.mxu0 0.0
  %4312 = vmatpush1.msra.mxu0 0.0
  %4313 = vmatprep.subr.mxu0 0.0
  %4314 = vmatpush1.msra.mxu0 0.0
  %4315 = vmatprep.subr.mxu0 0.0
  %4316 = vmatpush1.msra.mxu0 0.0
  %4317 = vmatprep.subr.mxu0 0.0
  %4318 = vmatpush1.msra.mxu0 0.0
  %4319 = vmatprep.subr.mxu0 0.0
  %4320 = vmatpush1.msra.mxu0 0.0
  %4321 = vmatprep.subr.mxu0 0.0
  %4322 = vmatpush1.msra.mxu0 0.0
  %4323 = vmatprep.subr.mxu0 0.0
  %4324 = vmatpush1.msra.mxu0 0.0
  %4325 = vmatprep.subr.mxu0 0.0
  %4326 = vmatpush1.msra.mxu0 0.0
  %4327 = vmatprep.subr.mxu0 0.0
  %4328 = vmatpush1.msra.mxu0 0.0
  %4329 = vmatprep.subr.mxu0 0.0
  %4330 = vmatpush1.msra.mxu0 %v2843
  %4331 = vmatprep.subr.mxu0 0.0
  %4332 = vmatpush1.msra.mxu0 %v2842
  %4333 = vmatprep.subr.mxu0 0.0
  %4334 = vmatpush1.msra.mxu0 %v2841
  %4335 = vmatprep.subr.mxu0 0.0
  %4336 = vmatpush1.msra.mxu0 %v2840
  %4337 = vmatprep.subr.mxu0 0.0
  %4338 = vmatpush2.msra.mxu0 0.0
  %4339 = vmatprep.subr.mxu0 0.0
  %4340 = vmatpush2.msra.mxu0 0.0
  %4341 = vmatprep.subr.mxu0 0.0
  %4342 = vmatpush2.msra.mxu0 0.0
  %4343 = vmatprep.subr.mxu0 0.0
  %4344 = vmatpush2.msra.mxu0 0.0
  %4345 = vmatprep.subr.mxu0 0.0
  %4346 = vmatpush2.msra.mxu0 0.0
  %4347 = vmatprep.subr.mxu0 0.0
  %4348 = vmatpush2.msra.mxu0 0.0
  %4349 = vmatprep.subr.mxu0 0.0
  %4350 = vmatpush2.msra.mxu0 0.0
  %4351 = vmatprep.subr.mxu0 0.0
  %4352 = vmatpush2.msra.mxu0 0.0
  %4353 = vmatprep.subr.mxu0 0.0
  %4354 = vmatpush2.msra.mxu0 0.0
  %4355 = vmatprep.subr.mxu0 0.0
  %4356 = vmatpush2.msra.mxu0 0.0
  %4357 = vmatprep.subr.mxu0 0.0
  %4358 = vmatpush2.msra.mxu0 0.0
  %4359 = vmatprep.subr.mxu0 0.0
  %4360 = vmatpush2.msra.mxu0 0.0
  %4361 = vmatprep.subr.mxu0 0.0
  %4362 = vmatpush2.msra.mxu0 0.0
  %4363 = vmatprep.subr.mxu0 0.0
  %4364 = vmatpush2.msra.mxu0 0.0
  %4365 = vmatprep.subr.mxu0 0.0
  %4366 = vmatpush2.msra.mxu0 0.0
  %4367 = vmatprep.subr.mxu0 0.0
  %4368 = vmatpush2.msra.mxu0 0.0
  %4369 = vmatprep.mubr.f32.mxu0 0.0
  %4370 = vmatmul.mubr.f32.gmra.mxu0 %v4303
  %v4371 = vpop.f32.mrf.mxu0
  %v4372 = vadd.f32 0.0, %v4371
  %v4373 = vpop.f32.mrf.mxu0
  %4374 = vdwg.mxu0
  %4376 = vrot.lane.b32.xlu0 %v4299, 32
  %v4377 = vpop.permute.xlu0 %4376
  %v4378 = vsel %vm38, %v4377, 0
  %4380 = vmatprep.subr.mxu0 0.0
  %4381 = vmatpush1.msra.mxu0 0.0
  %4382 = vmatprep.subr.mxu0 0.0
  %4383 = vmatpush1.msra.mxu0 0.0
  %4384 = vmatprep.subr.mxu0 0.0
  %4385 = vmatpush1.msra.mxu0 0.0
  %4386 = vmatprep.subr.mxu0 0.0
  %4387 = vmatpush1.msra.mxu0 0.0
  %4388 = vmatprep.subr.mxu0 0.0
  %4389 = vmatpush1.msra.mxu0 0.0
  %4390 = vmatprep.subr.mxu0 0.0
  %4391 = vmatpush1.msra.mxu0 0.0
  %4392 = vmatprep.subr.mxu0 0.0
  %4393 = vmatpush1.msra.mxu0 0.0
  %4394 = vmatprep.subr.mxu0 0.0
  %4395 = vmatpush1.msra.mxu0 0.0
  %4396 = vmatprep.subr.mxu0 0.0
  %4397 = vmatpush1.msra.mxu0 0.0
  %4398 = vmatprep.subr.mxu0 0.0
  %4399 = vmatpush1.msra.mxu0 0.0
  %4400 = vmatprep.subr.mxu0 0.0
  %4401 = vmatpush1.msra.mxu0 0.0
  %4402 = vmatprep.subr.mxu0 0.0
  %4403 = vmatpush1.msra.mxu0 0.0
  %4404 = vmatprep.subr.mxu0 0.0
  %4405 = vmatpush1.msra.mxu0 %v2839
  %4406 = vmatprep.subr.mxu0 0.0
  %4407 = vmatpush1.msra.mxu0 %v2838
  %4408 = vmatprep.subr.mxu0 0.0
  %4409 = vmatpush1.msra.mxu0 %v2837
  %4410 = vmatprep.subr.mxu0 0.0
  %4411 = vmatpush1.msra.mxu0 %v2836
  %4412 = vmatprep.subr.mxu0 0.0
  %4413 = vmatpush2.msra.mxu0 0.0
  %4414 = vmatprep.subr.mxu0 0.0
  %4415 = vmatpush2.msra.mxu0 0.0
  %4416 = vmatprep.subr.mxu0 0.0
  %4417 = vmatpush2.msra.mxu0 0.0
  %4418 = vmatprep.subr.mxu0 0.0
  %4419 = vmatpush2.msra.mxu0 0.0
  %4420 = vmatprep.subr.mxu0 0.0
  %4421 = vmatpush2.msra.mxu0 0.0
  %4422 = vmatprep.subr.mxu0 0.0
  %4423 = vmatpush2.msra.mxu0 0.0
  %4424 = vmatprep.subr.mxu0 0.0
  %4425 = vmatpush2.msra.mxu0 0.0
  %4426 = vmatprep.subr.mxu0 0.0
  %4427 = vmatpush2.msra.mxu0 0.0
  %4428 = vmatprep.subr.mxu0 0.0
  %4429 = vmatpush2.msra.mxu0 0.0
  %4430 = vmatprep.subr.mxu0 0.0
  %4431 = vmatpush2.msra.mxu0 0.0
  %4432 = vmatprep.subr.mxu0 0.0
  %4433 = vmatpush2.msra.mxu0 0.0
  %4434 = vmatprep.subr.mxu0 0.0
  %4435 = vmatpush2.msra.mxu0 0.0
  %4436 = vmatprep.subr.mxu0 0.0
  %4437 = vmatpush2.msra.mxu0 0.0
  %4438 = vmatprep.subr.mxu0 0.0
  %4439 = vmatpush2.msra.mxu0 0.0
  %4440 = vmatprep.subr.mxu0 0.0
  %4441 = vmatpush2.msra.mxu0 0.0
  %4442 = vmatprep.subr.mxu0 0.0
  %4443 = vmatpush2.msra.mxu0 0.0
  %4444 = vmatprep.mubr.f32.mxu0 0.0
  %4445 = vmatmul.mubr.f32.gmra.mxu0 %v4378
  %v4446 = vpop.f32.mrf.mxu0
  %v4447 = vadd.f32 %v4372, %v4446
  %v4448 = vpop.f32.mrf.mxu0
  %4449 = vdwg.mxu0
  %v4450 = vadd.f32 %v4447, %v2849
  %v4451 = vxor.u32 %v4450, 2147483648
  %v4452 = vmul.f32 %v4451, 1.442695
  %v4453 = vpow.pop %v4452
  %v4454 = vadd.f32 %v4453, 1.0
  %v4455 = vrcp.pop %v4454
  %v4456 = vmul.f32 1.0, %v4455
  %v4457 = vtanh.pop %v4450
  %v4458 = vmul.f32 %v4456, %v4197
  %4460 = vrot.lane.b32.xlu0 %v4457, 64
  %v4461 = vpop.permute.xlu0 %4460
  %v4463 = vmul.f32 %v4456, %v4461
  %4465 = vrot.lane.b32.xlu0 %v4463, 32
  %v4466 = vpop.permute.xlu0 %4465
  %v4468 = vadd.f32 %v4458, %v4466
  %v4469 = vtanh.pop %v4468
  %4471 = vrot.lane.b32.xlu0 %v4469, 64
  %v4472 = vpop.permute.xlu0 %4471
  %v4474 = vmul.f32 %v4456, %v4472
  %v4475 = vld [vmem:[#allocation4 + $0x30] sm:$0xff]
  %4476 = vmatprep.subr.mxu0 0.0
  %4477 = vmatpush1.msra.mxu0 0.0
  %4478 = vmatprep.subr.mxu0 0.0
  %4479 = vmatpush1.msra.mxu0 0.0
  %4480 = vmatprep.subr.mxu0 0.0
  %4481 = vmatpush1.msra.mxu0 0.0
  %4482 = vmatprep.subr.mxu0 0.0
  %4483 = vmatpush1.msra.mxu0 0.0
  %4484 = vmatprep.subr.mxu0 0.0
  %4485 = vmatpush1.msra.mxu0 0.0
  %4486 = vmatprep.subr.mxu0 0.0
  %4487 = vmatpush1.msra.mxu0 0.0
  %4488 = vmatprep.subr.mxu0 0.0
  %4489 = vmatpush1.msra.mxu0 0.0
  %4490 = vmatprep.subr.mxu0 0.0
  %4491 = vmatpush1.msra.mxu0 0.0
  %4492 = vmatprep.subr.mxu0 0.0
  %4493 = vmatpush1.msra.mxu0 0.0
  %4494 = vmatprep.subr.mxu0 0.0
  %4495 = vmatpush1.msra.mxu0 0.0
  %4496 = vmatprep.subr.mxu0 0.0
  %4497 = vmatpush1.msra.mxu0 0.0
  %4498 = vmatprep.subr.mxu0 0.0
  %4499 = vmatpush1.msra.mxu0 0.0
  %4500 = vmatprep.subr.mxu0 0.0
  %4501 = vmatpush1.msra.mxu0 %v2835
  %4502 = vmatprep.subr.mxu0 0.0
  %4503 = vmatpush1.msra.mxu0 %v2834
  %4504 = vmatprep.subr.mxu0 0.0
  %4505 = vmatpush1.msra.mxu0 %v2833
  %4506 = vmatprep.subr.mxu0 0.0
  %4507 = vmatpush1.msra.mxu0 %v2832
  %4508 = vmatprep.subr.mxu0 0.0
  %4509 = vmatpush2.msra.mxu0 0.0
  %4510 = vmatprep.subr.mxu0 0.0
  %4511 = vmatpush2.msra.mxu0 0.0
  %4512 = vmatprep.subr.mxu0 0.0
  %4513 = vmatpush2.msra.mxu0 0.0
  %4514 = vmatprep.subr.mxu0 0.0
  %4515 = vmatpush2.msra.mxu0 0.0
  %4516 = vmatprep.subr.mxu0 0.0
  %4517 = vmatpush2.msra.mxu0 0.0
  %4518 = vmatprep.subr.mxu0 0.0
  %4519 = vmatpush2.msra.mxu0 0.0
  %4520 = vmatprep.subr.mxu0 0.0
  %4521 = vmatpush2.msra.mxu0 0.0
  %4522 = vmatprep.subr.mxu0 0.0
  %4523 = vmatpush2.msra.mxu0 0.0
  %4524 = vmatprep.subr.mxu0 0.0
  %4525 = vmatpush2.msra.mxu0 0.0
  %4526 = vmatprep.subr.mxu0 0.0
  %4527 = vmatpush2.msra.mxu0 0.0
  %4528 = vmatprep.subr.mxu0 0.0
  %4529 = vmatpush2.msra.mxu0 0.0
  %4530 = vmatprep.subr.mxu0 0.0
  %4531 = vmatpush2.msra.mxu0 0.0
  %4532 = vmatprep.subr.mxu0 0.0
  %4533 = vmatpush2.msra.mxu0 0.0
  %4534 = vmatprep.subr.mxu0 0.0
  %4535 = vmatpush2.msra.mxu0 0.0
  %4536 = vmatprep.subr.mxu0 0.0
  %4537 = vmatpush2.msra.mxu0 0.0
  %4538 = vmatprep.subr.mxu0 0.0
  %4539 = vmatpush2.msra.mxu0 0.0
  %4540 = vmatprep.mubr.f32.mxu0 0.0
  %4541 = vmatmul.mubr.f32.gmra.mxu0 %v4378
  %v4542 = vpop.f32.mrf.mxu0
  %v4543 = vadd.f32 0.0, %v4542
  %v4544 = vpop.f32.mrf.mxu0
  %4545 = vdwg.mxu0
  %v4546 = vadd.f32 %v4475, %v4543
  %v4547 = vxor.u32 %v4546, 2147483648
  %v4548 = vmul.f32 %v4547, 1.442695
  %v4549 = vpow.pop %v4548
  %v4550 = vadd.f32 %v4549, 1.0
  %v4551 = vrcp.pop %v4550
  %v4552 = vmul.f32 1.0, %v4551
  %v4553 = vtanh.pop %v4546
  %v4554 = vmul.f32 %v4552, %v4293
  %4556 = vrot.lane.b32.xlu0 %v4553, 64
  %v4557 = vpop.permute.xlu0 %4556
  %v4559 = vmul.f32 %v4552, %v4557
  %4561 = vrot.lane.b32.xlu0 %v4559, 32
  %v4562 = vpop.permute.xlu0 %4561
  %v4564 = vadd.f32 %v4554, %v4562
  %v4565 = vtanh.pop %v4564
  %4567 = vrot.lane.b32.xlu0 %v4565, 64
  %v4568 = vpop.permute.xlu0 %4567
  %v4570 = vmul.f32 %v4552, %v4568
  %4572 = vrot.lane.b32.xlu0 %v4474, 32
  %v4573 = vpop.permute.xlu0 %4572
  %v4574 = vsel %vm38, %v4573, 0
  %4576 = vmatprep.subr.mxu0 0.0
  %4577 = vmatpush1.msra.mxu0 0.0
  %4578 = vmatprep.subr.mxu0 0.0
  %4579 = vmatpush1.msra.mxu0 0.0
  %4580 = vmatprep.subr.mxu0 0.0
  %4581 = vmatpush1.msra.mxu0 0.0
  %4582 = vmatprep.subr.mxu0 0.0
  %4583 = vmatpush1.msra.mxu0 0.0
  %4584 = vmatprep.subr.mxu0 0.0
  %4585 = vmatpush1.msra.mxu0 0.0
  %4586 = vmatprep.subr.mxu0 0.0
  %4587 = vmatpush1.msra.mxu0 0.0
  %4588 = vmatprep.subr.mxu0 0.0
  %4589 = vmatpush1.msra.mxu0 0.0
  %4590 = vmatprep.subr.mxu0 0.0
  %4591 = vmatpush1.msra.mxu0 0.0
  %4592 = vmatprep.subr.mxu0 0.0
  %4593 = vmatpush1.msra.mxu0 0.0
  %4594 = vmatprep.subr.mxu0 0.0
  %4595 = vmatpush1.msra.mxu0 0.0
  %4596 = vmatprep.subr.mxu0 0.0
  %4597 = vmatpush1.msra.mxu0 0.0
  %4598 = vmatprep.subr.mxu0 0.0
  %4599 = vmatpush1.msra.mxu0 0.0
  %4600 = vmatprep.subr.mxu0 0.0
  %4601 = vmatpush1.msra.mxu0 %v2843
  %4602 = vmatprep.subr.mxu0 0.0
  %4603 = vmatpush1.msra.mxu0 %v2842
  %4604 = vmatprep.subr.mxu0 0.0
  %4605 = vmatpush1.msra.mxu0 %v2841
  %4606 = vmatprep.subr.mxu0 0.0
  %4607 = vmatpush1.msra.mxu0 %v2840
  %4608 = vmatprep.subr.mxu0 0.0
  %4609 = vmatpush2.msra.mxu0 0.0
  %4610 = vmatprep.subr.mxu0 0.0
  %4611 = vmatpush2.msra.mxu0 0.0
  %4612 = vmatprep.subr.mxu0 0.0
  %4613 = vmatpush2.msra.mxu0 0.0
  %4614 = vmatprep.subr.mxu0 0.0
  %4615 = vmatpush2.msra.mxu0 0.0
  %4616 = vmatprep.subr.mxu0 0.0
  %4617 = vmatpush2.msra.mxu0 0.0
  %4618 = vmatprep.subr.mxu0 0.0
  %4619 = vmatpush2.msra.mxu0 0.0
  %4620 = vmatprep.subr.mxu0 0.0
  %4621 = vmatpush2.msra.mxu0 0.0
  %4622 = vmatprep.subr.mxu0 0.0
  %4623 = vmatpush2.msra.mxu0 0.0
  %4624 = vmatprep.subr.mxu0 0.0
  %4625 = vmatpush2.msra.mxu0 0.0
  %4626 = vmatprep.subr.mxu0 0.0
  %4627 = vmatpush2.msra.mxu0 0.0
  %4628 = vmatprep.subr.mxu0 0.0
  %4629 = vmatpush2.msra.mxu0 0.0
  %4630 = vmatprep.subr.mxu0 0.0
  %4631 = vmatpush2.msra.mxu0 0.0
  %4632 = vmatprep.subr.mxu0 0.0
  %4633 = vmatpush2.msra.mxu0 0.0
  %4634 = vmatprep.subr.mxu0 0.0
  %4635 = vmatpush2.msra.mxu0 0.0
  %4636 = vmatprep.subr.mxu0 0.0
  %4637 = vmatpush2.msra.mxu0 0.0
  %4638 = vmatprep.subr.mxu0 0.0
  %4639 = vmatpush2.msra.mxu0 0.0
  %4640 = vmatprep.mubr.f32.mxu0 0.0
  %4641 = vmatmul.mubr.f32.gmra.mxu0 %v4574
  %v4642 = vpop.f32.mrf.mxu0
  %v4643 = vadd.f32 0.0, %v4642
  %v4644 = vpop.f32.mrf.mxu0
  %4645 = vdwg.mxu0
  %4647 = vrot.lane.b32.xlu0 %v4570, 32
  %v4648 = vpop.permute.xlu0 %4647
  %v4649 = vsel %vm38, %v4648, 0
  %4651 = vmatprep.subr.mxu0 0.0
  %4652 = vmatpush1.msra.mxu0 0.0
  %4653 = vmatprep.subr.mxu0 0.0
  %4654 = vmatpush1.msra.mxu0 0.0
  %4655 = vmatprep.subr.mxu0 0.0
  %4656 = vmatpush1.msra.mxu0 0.0
  %4657 = vmatprep.subr.mxu0 0.0
  %4658 = vmatpush1.msra.mxu0 0.0
  %4659 = vmatprep.subr.mxu0 0.0
  %4660 = vmatpush1.msra.mxu0 0.0
  %4661 = vmatprep.subr.mxu0 0.0
  %4662 = vmatpush1.msra.mxu0 0.0
  %4663 = vmatprep.subr.mxu0 0.0
  %4664 = vmatpush1.msra.mxu0 0.0
  %4665 = vmatprep.subr.mxu0 0.0
  %4666 = vmatpush1.msra.mxu0 0.0
  %4667 = vmatprep.subr.mxu0 0.0
  %4668 = vmatpush1.msra.mxu0 0.0
  %4669 = vmatprep.subr.mxu0 0.0
  %4670 = vmatpush1.msra.mxu0 0.0
  %4671 = vmatprep.subr.mxu0 0.0
  %4672 = vmatpush1.msra.mxu0 0.0
  %4673 = vmatprep.subr.mxu0 0.0
  %4674 = vmatpush1.msra.mxu0 0.0
  %4675 = vmatprep.subr.mxu0 0.0
  %4676 = vmatpush1.msra.mxu0 %v2839
  %4677 = vmatprep.subr.mxu0 0.0
  %4678 = vmatpush1.msra.mxu0 %v2838
  %4679 = vmatprep.subr.mxu0 0.0
  %4680 = vmatpush1.msra.mxu0 %v2837
  %4681 = vmatprep.subr.mxu0 0.0
  %4682 = vmatpush1.msra.mxu0 %v2836
  %4683 = vmatprep.subr.mxu0 0.0
  %4684 = vmatpush2.msra.mxu0 0.0
  %4685 = vmatprep.subr.mxu0 0.0
  %4686 = vmatpush2.msra.mxu0 0.0
  %4687 = vmatprep.subr.mxu0 0.0
  %4688 = vmatpush2.msra.mxu0 0.0
  %4689 = vmatprep.subr.mxu0 0.0
  %4690 = vmatpush2.msra.mxu0 0.0
  %4691 = vmatprep.subr.mxu0 0.0
  %4692 = vmatpush2.msra.mxu0 0.0
  %4693 = vmatprep.subr.mxu0 0.0
  %4694 = vmatpush2.msra.mxu0 0.0
  %4695 = vmatprep.subr.mxu0 0.0
  %4696 = vmatpush2.msra.mxu0 0.0
  %4697 = vmatprep.subr.mxu0 0.0
  %4698 = vmatpush2.msra.mxu0 0.0
  %4699 = vmatprep.subr.mxu0 0.0
  %4700 = vmatpush2.msra.mxu0 0.0
  %4701 = vmatprep.subr.mxu0 0.0
  %4702 = vmatpush2.msra.mxu0 0.0
  %4703 = vmatprep.subr.mxu0 0.0
  %4704 = vmatpush2.msra.mxu0 0.0
  %4705 = vmatprep.subr.mxu0 0.0
  %4706 = vmatpush2.msra.mxu0 0.0
  %4707 = vmatprep.subr.mxu0 0.0
  %4708 = vmatpush2.msra.mxu0 0.0
  %4709 = vmatprep.subr.mxu0 0.0
  %4710 = vmatpush2.msra.mxu0 0.0
  %4711 = vmatprep.subr.mxu0 0.0
  %4712 = vmatpush2.msra.mxu0 0.0
  %4713 = vmatprep.subr.mxu0 0.0
  %4714 = vmatpush2.msra.mxu0 0.0
  %4715 = vmatprep.mubr.f32.mxu0 0.0
  %4716 = vmatmul.mubr.f32.gmra.mxu0 %v4649
  %v4717 = vpop.f32.mrf.mxu0
  %v4718 = vadd.f32 %v4643, %v4717
  %v4719 = vpop.f32.mrf.mxu0
  %4720 = vdwg.mxu0
  %v4721 = vadd.f32 %v4718, %v2849
  %v4722 = vxor.u32 %v4721, 2147483648
  %v4723 = vmul.f32 %v4722, 1.442695
  %v4724 = vpow.pop %v4723
  %v4725 = vadd.f32 %v4724, 1.0
  %v4726 = vrcp.pop %v4725
  %v4727 = vmul.f32 1.0, %v4726
  %v4728 = vtanh.pop %v4721
  %v4729 = vmul.f32 %v4727, %v4468
  %4731 = vrot.lane.b32.xlu0 %v4728, 64
  %v4732 = vpop.permute.xlu0 %4731
  %v4734 = vmul.f32 %v4727, %v4732
  %4736 = vrot.lane.b32.xlu0 %v4734, 32
  %v4737 = vpop.permute.xlu0 %4736
  %v4739 = vadd.f32 %v4729, %v4737
  %v4740 = vtanh.pop %v4739
  %4742 = vrot.lane.b32.xlu0 %v4740, 64
  %v4743 = vpop.permute.xlu0 %4742
  %v4745 = vmul.f32 %v4727, %v4743
  %v4746 = vld [vmem:[#allocation4 + $0x38] sm:$0xff]
  %4747 = vmatprep.subr.mxu0 0.0
  %4748 = vmatpush1.msra.mxu0 0.0
  %4749 = vmatprep.subr.mxu0 0.0
  %4750 = vmatpush1.msra.mxu0 0.0
  %4751 = vmatprep.subr.mxu0 0.0
  %4752 = vmatpush1.msra.mxu0 0.0
  %4753 = vmatprep.subr.mxu0 0.0
  %4754 = vmatpush1.msra.mxu0 0.0
  %4755 = vmatprep.subr.mxu0 0.0
  %4756 = vmatpush1.msra.mxu0 0.0
  %4757 = vmatprep.subr.mxu0 0.0
  %4758 = vmatpush1.msra.mxu0 0.0
  %4759 = vmatprep.subr.mxu0 0.0
  %4760 = vmatpush1.msra.mxu0 0.0
  %4761 = vmatprep.subr.mxu0 0.0
  %4762 = vmatpush1.msra.mxu0 0.0
  %4763 = vmatprep.subr.mxu0 0.0
  %4764 = vmatpush1.msra.mxu0 0.0
  %4765 = vmatprep.subr.mxu0 0.0
  %4766 = vmatpush1.msra.mxu0 0.0
  %4767 = vmatprep.subr.mxu0 0.0
  %4768 = vmatpush1.msra.mxu0 0.0
  %4769 = vmatprep.subr.mxu0 0.0
  %4770 = vmatpush1.msra.mxu0 0.0
  %4771 = vmatprep.subr.mxu0 0.0
  %4772 = vmatpush1.msra.mxu0 %v2835
  %4773 = vmatprep.subr.mxu0 0.0
  %4774 = vmatpush1.msra.mxu0 %v2834
  %4775 = vmatprep.subr.mxu0 0.0
  %4776 = vmatpush1.msra.mxu0 %v2833
  %4777 = vmatprep.subr.mxu0 0.0
  %4778 = vmatpush1.msra.mxu0 %v2832
  %4779 = vmatprep.subr.mxu0 0.0
  %4780 = vmatpush2.msra.mxu0 0.0
  %4781 = vmatprep.subr.mxu0 0.0
  %4782 = vmatpush2.msra.mxu0 0.0
  %4783 = vmatprep.subr.mxu0 0.0
  %4784 = vmatpush2.msra.mxu0 0.0
  %4785 = vmatprep.subr.mxu0 0.0
  %4786 = vmatpush2.msra.mxu0 0.0
  %4787 = vmatprep.subr.mxu0 0.0
  %4788 = vmatpush2.msra.mxu0 0.0
  %4789 = vmatprep.subr.mxu0 0.0
  %4790 = vmatpush2.msra.mxu0 0.0
  %4791 = vmatprep.subr.mxu0 0.0
  %4792 = vmatpush2.msra.mxu0 0.0
  %4793 = vmatprep.subr.mxu0 0.0
  %4794 = vmatpush2.msra.mxu0 0.0
  %4795 = vmatprep.subr.mxu0 0.0
  %4796 = vmatpush2.msra.mxu0 0.0
  %4797 = vmatprep.subr.mxu0 0.0
  %4798 = vmatpush2.msra.mxu0 0.0
  %4799 = vmatprep.subr.mxu0 0.0
  %4800 = vmatpush2.msra.mxu0 0.0
  %4801 = vmatprep.subr.mxu0 0.0
  %4802 = vmatpush2.msra.mxu0 0.0
  %4803 = vmatprep.subr.mxu0 0.0
  %4804 = vmatpush2.msra.mxu0 0.0
  %4805 = vmatprep.subr.mxu0 0.0
  %4806 = vmatpush2.msra.mxu0 0.0
  %4807 = vmatprep.subr.mxu0 0.0
  %4808 = vmatpush2.msra.mxu0 0.0
  %4809 = vmatprep.subr.mxu0 0.0
  %4810 = vmatpush2.msra.mxu0 0.0
  %4811 = vmatprep.mubr.f32.mxu0 0.0
  %4812 = vmatmul.mubr.f32.gmra.mxu0 %v4649
  %v4813 = vpop.f32.mrf.mxu0
  %v4814 = vadd.f32 0.0, %v4813
  %v4815 = vpop.f32.mrf.mxu0
  %4816 = vdwg.mxu0
  %v4817 = vadd.f32 %v4746, %v4814
  %v4818 = vxor.u32 %v4817, 2147483648
  %v4819 = vmul.f32 %v4818, 1.442695
  %v4820 = vpow.pop %v4819
  %v4821 = vadd.f32 %v4820, 1.0
  %v4822 = vrcp.pop %v4821
  %v4823 = vmul.f32 1.0, %v4822
  %v4824 = vtanh.pop %v4817
  %v4825 = vmul.f32 %v4823, %v4564
  %4827 = vrot.lane.b32.xlu0 %v4824, 64
  %v4828 = vpop.permute.xlu0 %4827
  %v4830 = vmul.f32 %v4823, %v4828
  %4832 = vrot.lane.b32.xlu0 %v4830, 32
  %v4833 = vpop.permute.xlu0 %4832
  %v4835 = vadd.f32 %v4825, %v4833
  %v4836 = vtanh.pop %v4835
  %4838 = vrot.lane.b32.xlu0 %v4836, 64
  %v4839 = vpop.permute.xlu0 %4838
  %v4841 = vmul.f32 %v4823, %v4839
  %4843 = vrot.lane.b32.xlu0 %v4745, 32
  %v4844 = vpop.permute.xlu0 %4843
  %v4845 = vsel %vm38, %v4844, 0
  %4847 = vmatprep.subr.mxu0 0.0
  %4848 = vmatpush1.msra.mxu0 0.0
  %4849 = vmatprep.subr.mxu0 0.0
  %4850 = vmatpush1.msra.mxu0 0.0
  %4851 = vmatprep.subr.mxu0 0.0
  %4852 = vmatpush1.msra.mxu0 0.0
  %4853 = vmatprep.subr.mxu0 0.0
  %4854 = vmatpush1.msra.mxu0 0.0
  %4855 = vmatprep.subr.mxu0 0.0
  %4856 = vmatpush1.msra.mxu0 0.0
  %4857 = vmatprep.subr.mxu0 0.0
  %4858 = vmatpush1.msra.mxu0 0.0
  %4859 = vmatprep.subr.mxu0 0.0
  %4860 = vmatpush1.msra.mxu0 0.0
  %4861 = vmatprep.subr.mxu0 0.0
  %4862 = vmatpush1.msra.mxu0 0.0
  %4863 = vmatprep.subr.mxu0 0.0
  %4864 = vmatpush1.msra.mxu0 0.0
  %4865 = vmatprep.subr.mxu0 0.0
  %4866 = vmatpush1.msra.mxu0 0.0
  %4867 = vmatprep.subr.mxu0 0.0
  %4868 = vmatpush1.msra.mxu0 0.0
  %4869 = vmatprep.subr.mxu0 0.0
  %4870 = vmatpush1.msra.mxu0 0.0
  %4871 = vmatprep.subr.mxu0 0.0
  %4872 = vmatpush1.msra.mxu0 %v2843
  %4873 = vmatprep.subr.mxu0 0.0
  %4874 = vmatpush1.msra.mxu0 %v2842
  %4875 = vmatprep.subr.mxu0 0.0
  %4876 = vmatpush1.msra.mxu0 %v2841
  %4877 = vmatprep.subr.mxu0 0.0
  %4878 = vmatpush1.msra.mxu0 %v2840
  %4879 = vmatprep.subr.mxu0 0.0
  %4880 = vmatpush2.msra.mxu0 0.0
  %4881 = vmatprep.subr.mxu0 0.0
  %4882 = vmatpush2.msra.mxu0 0.0
  %4883 = vmatprep.subr.mxu0 0.0
  %4884 = vmatpush2.msra.mxu0 0.0
  %4885 = vmatprep.subr.mxu0 0.0
  %4886 = vmatpush2.msra.mxu0 0.0
  %4887 = vmatprep.subr.mxu0 0.0
  %4888 = vmatpush2.msra.mxu0 0.0
  %4889 = vmatprep.subr.mxu0 0.0
  %4890 = vmatpush2.msra.mxu0 0.0
  %4891 = vmatprep.subr.mxu0 0.0
  %4892 = vmatpush2.msra.mxu0 0.0
  %4893 = vmatprep.subr.mxu0 0.0
  %4894 = vmatpush2.msra.mxu0 0.0
  %4895 = vmatprep.subr.mxu0 0.0
  %4896 = vmatpush2.msra.mxu0 0.0
  %4897 = vmatprep.subr.mxu0 0.0
  %4898 = vmatpush2.msra.mxu0 0.0
  %4899 = vmatprep.subr.mxu0 0.0
  %4900 = vmatpush2.msra.mxu0 0.0
  %4901 = vmatprep.subr.mxu0 0.0
  %4902 = vmatpush2.msra.mxu0 0.0
  %4903 = vmatprep.subr.mxu0 0.0
  %4904 = vmatpush2.msra.mxu0 0.0
  %4905 = vmatprep.subr.mxu0 0.0
  %4906 = vmatpush2.msra.mxu0 0.0
  %4907 = vmatprep.subr.mxu0 0.0
  %4908 = vmatpush2.msra.mxu0 0.0
  %4909 = vmatprep.subr.mxu0 0.0
  %4910 = vmatpush2.msra.mxu0 0.0
  %4911 = vmatprep.mubr.f32.mxu0 0.0
  %4912 = vmatmul.mubr.f32.gmra.mxu0 %v4845
  %v4913 = vpop.f32.mrf.mxu0
  %v4914 = vadd.f32 0.0, %v4913
  %v4915 = vpop.f32.mrf.mxu0
  %4916 = vdwg.mxu0
  %4918 = vrot.lane.b32.xlu0 %v4841, 32
  %v4919 = vpop.permute.xlu0 %4918
  %v4920 = vsel %vm38, %v4919, 0
  %4922 = vmatprep.subr.mxu0 0.0
  %4923 = vmatpush1.msra.mxu0 0.0
  %4924 = vmatprep.subr.mxu0 0.0
  %4925 = vmatpush1.msra.mxu0 0.0
  %4926 = vmatprep.subr.mxu0 0.0
  %4927 = vmatpush1.msra.mxu0 0.0
  %4928 = vmatprep.subr.mxu0 0.0
  %4929 = vmatpush1.msra.mxu0 0.0
  %4930 = vmatprep.subr.mxu0 0.0
  %4931 = vmatpush1.msra.mxu0 0.0
  %4932 = vmatprep.subr.mxu0 0.0
  %4933 = vmatpush1.msra.mxu0 0.0
  %4934 = vmatprep.subr.mxu0 0.0
  %4935 = vmatpush1.msra.mxu0 0.0
  %4936 = vmatprep.subr.mxu0 0.0
  %4937 = vmatpush1.msra.mxu0 0.0
  %4938 = vmatprep.subr.mxu0 0.0
  %4939 = vmatpush1.msra.mxu0 0.0
  %4940 = vmatprep.subr.mxu0 0.0
  %4941 = vmatpush1.msra.mxu0 0.0
  %4942 = vmatprep.subr.mxu0 0.0
  %4943 = vmatpush1.msra.mxu0 0.0
  %4944 = vmatprep.subr.mxu0 0.0
  %4945 = vmatpush1.msra.mxu0 0.0
  %4946 = vmatprep.subr.mxu0 0.0
  %4947 = vmatpush1.msra.mxu0 %v2839
  %4948 = vmatprep.subr.mxu0 0.0
  %4949 = vmatpush1.msra.mxu0 %v2838
  %4950 = vmatprep.subr.mxu0 0.0
  %4951 = vmatpush1.msra.mxu0 %v2837
  %4952 = vmatprep.subr.mxu0 0.0
  %4953 = vmatpush1.msra.mxu0 %v2836
  %4954 = vmatprep.subr.mxu0 0.0
  %4955 = vmatpush2.msra.mxu0 0.0
  %4956 = vmatprep.subr.mxu0 0.0
  %4957 = vmatpush2.msra.mxu0 0.0
  %4958 = vmatprep.subr.mxu0 0.0
  %4959 = vmatpush2.msra.mxu0 0.0
  %4960 = vmatprep.subr.mxu0 0.0
  %4961 = vmatpush2.msra.mxu0 0.0
  %4962 = vmatprep.subr.mxu0 0.0
  %4963 = vmatpush2.msra.mxu0 0.0
  %4964 = vmatprep.subr.mxu0 0.0
  %4965 = vmatpush2.msra.mxu0 0.0
  %4966 = vmatprep.subr.mxu0 0.0
  %4967 = vmatpush2.msra.mxu0 0.0
  %4968 = vmatprep.subr.mxu0 0.0
  %4969 = vmatpush2.msra.mxu0 0.0
  %4970 = vmatprep.subr.mxu0 0.0
  %4971 = vmatpush2.msra.mxu0 0.0
  %4972 = vmatprep.subr.mxu0 0.0
  %4973 = vmatpush2.msra.mxu0 0.0
  %4974 = vmatprep.subr.mxu0 0.0
  %4975 = vmatpush2.msra.mxu0 0.0
  %4976 = vmatprep.subr.mxu0 0.0
  %4977 = vmatpush2.msra.mxu0 0.0
  %4978 = vmatprep.subr.mxu0 0.0
  %4979 = vmatpush2.msra.mxu0 0.0
  %4980 = vmatprep.subr.mxu0 0.0
  %4981 = vmatpush2.msra.mxu0 0.0
  %4982 = vmatprep.subr.mxu0 0.0
  %4983 = vmatpush2.msra.mxu0 0.0
  %4984 = vmatprep.subr.mxu0 0.0
  %4985 = vmatpush2.msra.mxu0 0.0
  %4986 = vmatprep.mubr.f32.mxu0 0.0
  %4987 = vmatmul.mubr.f32.gmra.mxu0 %v4920
  %v4988 = vpop.f32.mrf.mxu0
  %v4989 = vadd.f32 %v4914, %v4988
  %v4990 = vpop.f32.mrf.mxu0
  %4991 = vdwg.mxu0
  %v4992 = vadd.f32 %v4989, %v2849
  %v4993 = vxor.u32 %v4992, 2147483648
  %v4994 = vmul.f32 %v4993, 1.442695
  %v4995 = vpow.pop %v4994
  %v4996 = vadd.f32 %v4995, 1.0
  %v4997 = vrcp.pop %v4996
  %v4998 = vmul.f32 1.0, %v4997
  %v4999 = vtanh.pop %v4992
  %v5000 = vmul.f32 %v4998, %v4739
  %5002 = vrot.lane.b32.xlu0 %v4999, 64
  %v5003 = vpop.permute.xlu0 %5002
  %v5005 = vmul.f32 %v4998, %v5003
  %5007 = vrot.lane.b32.xlu0 %v5005, 32
  %v5008 = vpop.permute.xlu0 %5007
  %v5010 = vadd.f32 %v5000, %v5008
  %v5011 = vtanh.pop %v5010
  %5013 = vrot.lane.b32.xlu0 %v5011, 64
  %v5014 = vpop.permute.xlu0 %5013
  %v5016 = vmul.f32 %v4998, %v5014
  %v5017 = vld [vmem:[#allocation4 + $0x40] sm:$0xff]
  %5018 = vmatprep.subr.mxu0 0.0
  %5019 = vmatpush1.msra.mxu0 0.0
  %5020 = vmatprep.subr.mxu0 0.0
  %5021 = vmatpush1.msra.mxu0 0.0
  %5022 = vmatprep.subr.mxu0 0.0
  %5023 = vmatpush1.msra.mxu0 0.0
  %5024 = vmatprep.subr.mxu0 0.0
  %5025 = vmatpush1.msra.mxu0 0.0
  %5026 = vmatprep.subr.mxu0 0.0
  %5027 = vmatpush1.msra.mxu0 0.0
  %5028 = vmatprep.subr.mxu0 0.0
  %5029 = vmatpush1.msra.mxu0 0.0
  %5030 = vmatprep.subr.mxu0 0.0
  %5031 = vmatpush1.msra.mxu0 0.0
  %5032 = vmatprep.subr.mxu0 0.0
  %5033 = vmatpush1.msra.mxu0 0.0
  %5034 = vmatprep.subr.mxu0 0.0
  %5035 = vmatpush1.msra.mxu0 0.0
  %5036 = vmatprep.subr.mxu0 0.0
  %5037 = vmatpush1.msra.mxu0 0.0
  %5038 = vmatprep.subr.mxu0 0.0
  %5039 = vmatpush1.msra.mxu0 0.0
  %5040 = vmatprep.subr.mxu0 0.0
  %5041 = vmatpush1.msra.mxu0 0.0
  %5042 = vmatprep.subr.mxu0 0.0
  %5043 = vmatpush1.msra.mxu0 %v2835
  %5044 = vmatprep.subr.mxu0 0.0
  %5045 = vmatpush1.msra.mxu0 %v2834
  %5046 = vmatprep.subr.mxu0 0.0
  %5047 = vmatpush1.msra.mxu0 %v2833
  %5048 = vmatprep.subr.mxu0 0.0
  %5049 = vmatpush1.msra.mxu0 %v2832
  %5050 = vmatprep.subr.mxu0 0.0
  %5051 = vmatpush2.msra.mxu0 0.0
  %5052 = vmatprep.subr.mxu0 0.0
  %5053 = vmatpush2.msra.mxu0 0.0
  %5054 = vmatprep.subr.mxu0 0.0
  %5055 = vmatpush2.msra.mxu0 0.0
  %5056 = vmatprep.subr.mxu0 0.0
  %5057 = vmatpush2.msra.mxu0 0.0
  %5058 = vmatprep.subr.mxu0 0.0
  %5059 = vmatpush2.msra.mxu0 0.0
  %5060 = vmatprep.subr.mxu0 0.0
  %5061 = vmatpush2.msra.mxu0 0.0
  %5062 = vmatprep.subr.mxu0 0.0
  %5063 = vmatpush2.msra.mxu0 0.0
  %5064 = vmatprep.subr.mxu0 0.0
  %5065 = vmatpush2.msra.mxu0 0.0
  %5066 = vmatprep.subr.mxu0 0.0
  %5067 = vmatpush2.msra.mxu0 0.0
  %5068 = vmatprep.subr.mxu0 0.0
  %5069 = vmatpush2.msra.mxu0 0.0
  %5070 = vmatprep.subr.mxu0 0.0
  %5071 = vmatpush2.msra.mxu0 0.0
  %5072 = vmatprep.subr.mxu0 0.0
  %5073 = vmatpush2.msra.mxu0 0.0
  %5074 = vmatprep.subr.mxu0 0.0
  %5075 = vmatpush2.msra.mxu0 0.0
  %5076 = vmatprep.subr.mxu0 0.0
  %5077 = vmatpush2.msra.mxu0 0.0
  %5078 = vmatprep.subr.mxu0 0.0
  %5079 = vmatpush2.msra.mxu0 0.0
  %5080 = vmatprep.subr.mxu0 0.0
  %5081 = vmatpush2.msra.mxu0 0.0
  %5082 = vmatprep.mubr.f32.mxu0 0.0
  %5083 = vmatmul.mubr.f32.gmra.mxu0 %v4920
  %v5084 = vpop.f32.mrf.mxu0
  %v5085 = vadd.f32 0.0, %v5084
  %v5086 = vpop.f32.mrf.mxu0
  %5087 = vdwg.mxu0
  %v5088 = vadd.f32 %v5017, %v5085
  %v5089 = vxor.u32 %v5088, 2147483648
  %v5090 = vmul.f32 %v5089, 1.442695
  %v5091 = vpow.pop %v5090
  %v5092 = vadd.f32 %v5091, 1.0
  %v5093 = vrcp.pop %v5092
  %v5094 = vmul.f32 1.0, %v5093
  %v5095 = vtanh.pop %v5088
  %v5096 = vmul.f32 %v5094, %v4835
  %5098 = vrot.lane.b32.xlu0 %v5095, 64
  %v5099 = vpop.permute.xlu0 %5098
  %v5101 = vmul.f32 %v5094, %v5099
  %5103 = vrot.lane.b32.xlu0 %v5101, 32
  %v5104 = vpop.permute.xlu0 %5103
  %v5106 = vadd.f32 %v5096, %v5104
  %v5107 = vtanh.pop %v5106
  %5109 = vrot.lane.b32.xlu0 %v5107, 64
  %v5110 = vpop.permute.xlu0 %5109
  %v5112 = vmul.f32 %v5094, %v5110
  %5114 = vrot.lane.b32.xlu0 %v5016, 32
  %v5115 = vpop.permute.xlu0 %5114
  %v5116 = vsel %vm38, %v5115, 0
  %5118 = vmatprep.subr.mxu0 0.0
  %5119 = vmatpush1.msra.mxu0 0.0
  %5120 = vmatprep.subr.mxu0 0.0
  %5121 = vmatpush1.msra.mxu0 0.0
  %5122 = vmatprep.subr.mxu0 0.0
  %5123 = vmatpush1.msra.mxu0 0.0
  %5124 = vmatprep.subr.mxu0 0.0
  %5125 = vmatpush1.msra.mxu0 0.0
  %5126 = vmatprep.subr.mxu0 0.0
  %5127 = vmatpush1.msra.mxu0 0.0
  %5128 = vmatprep.subr.mxu0 0.0
  %5129 = vmatpush1.msra.mxu0 0.0
  %5130 = vmatprep.subr.mxu0 0.0
  %5131 = vmatpush1.msra.mxu0 0.0
  %5132 = vmatprep.subr.mxu0 0.0
  %5133 = vmatpush1.msra.mxu0 0.0
  %5134 = vmatprep.subr.mxu0 0.0
  %5135 = vmatpush1.msra.mxu0 0.0
  %5136 = vmatprep.subr.mxu0 0.0
  %5137 = vmatpush1.msra.mxu0 0.0
  %5138 = vmatprep.subr.mxu0 0.0
  %5139 = vmatpush1.msra.mxu0 0.0
  %5140 = vmatprep.subr.mxu0 0.0
  %5141 = vmatpush1.msra.mxu0 0.0
  %5142 = vmatprep.subr.mxu0 0.0
  %5143 = vmatpush1.msra.mxu0 %v2843
  %5144 = vmatprep.subr.mxu0 0.0
  %5145 = vmatpush1.msra.mxu0 %v2842
  %5146 = vmatprep.subr.mxu0 0.0
  %5147 = vmatpush1.msra.mxu0 %v2841
  %5148 = vmatprep.subr.mxu0 0.0
  %5149 = vmatpush1.msra.mxu0 %v2840
  %5150 = vmatprep.subr.mxu0 0.0
  %5151 = vmatpush2.msra.mxu0 0.0
  %5152 = vmatprep.subr.mxu0 0.0
  %5153 = vmatpush2.msra.mxu0 0.0
  %5154 = vmatprep.subr.mxu0 0.0
  %5155 = vmatpush2.msra.mxu0 0.0
  %5156 = vmatprep.subr.mxu0 0.0
  %5157 = vmatpush2.msra.mxu0 0.0
  %5158 = vmatprep.subr.mxu0 0.0
  %5159 = vmatpush2.msra.mxu0 0.0
  %5160 = vmatprep.subr.mxu0 0.0
  %5161 = vmatpush2.msra.mxu0 0.0
  %5162 = vmatprep.subr.mxu0 0.0
  %5163 = vmatpush2.msra.mxu0 0.0
  %5164 = vmatprep.subr.mxu0 0.0
  %5165 = vmatpush2.msra.mxu0 0.0
  %5166 = vmatprep.subr.mxu0 0.0
  %5167 = vmatpush2.msra.mxu0 0.0
  %5168 = vmatprep.subr.mxu0 0.0
  %5169 = vmatpush2.msra.mxu0 0.0
  %5170 = vmatprep.subr.mxu0 0.0
  %5171 = vmatpush2.msra.mxu0 0.0
  %5172 = vmatprep.subr.mxu0 0.0
  %5173 = vmatpush2.msra.mxu0 0.0
  %5174 = vmatprep.subr.mxu0 0.0
  %5175 = vmatpush2.msra.mxu0 0.0
  %5176 = vmatprep.subr.mxu0 0.0
  %5177 = vmatpush2.msra.mxu0 0.0
  %5178 = vmatprep.subr.mxu0 0.0
  %5179 = vmatpush2.msra.mxu0 0.0
  %5180 = vmatprep.subr.mxu0 0.0
  %5181 = vmatpush2.msra.mxu0 0.0
  %5182 = vmatprep.mubr.f32.mxu0 0.0
  %5183 = vmatmul.mubr.f32.gmra.mxu0 %v5116
  %v5184 = vpop.f32.mrf.mxu0
  %v5185 = vadd.f32 0.0, %v5184
  %v5186 = vpop.f32.mrf.mxu0
  %5187 = vdwg.mxu0
  %5189 = vrot.lane.b32.xlu0 %v5112, 32
  %v5190 = vpop.permute.xlu0 %5189
  %v5191 = vsel %vm38, %v5190, 0
  %5193 = vmatprep.subr.mxu0 0.0
  %5194 = vmatpush1.msra.mxu0 0.0
  %5195 = vmatprep.subr.mxu0 0.0
  %5196 = vmatpush1.msra.mxu0 0.0
  %5197 = vmatprep.subr.mxu0 0.0
  %5198 = vmatpush1.msra.mxu0 0.0
  %5199 = vmatprep.subr.mxu0 0.0
  %5200 = vmatpush1.msra.mxu0 0.0
  %5201 = vmatprep.subr.mxu0 0.0
  %5202 = vmatpush1.msra.mxu0 0.0
  %5203 = vmatprep.subr.mxu0 0.0
  %5204 = vmatpush1.msra.mxu0 0.0
  %5205 = vmatprep.subr.mxu0 0.0
  %5206 = vmatpush1.msra.mxu0 0.0
  %5207 = vmatprep.subr.mxu0 0.0
  %5208 = vmatpush1.msra.mxu0 0.0
  %5209 = vmatprep.subr.mxu0 0.0
  %5210 = vmatpush1.msra.mxu0 0.0
  %5211 = vmatprep.subr.mxu0 0.0
  %5212 = vmatpush1.msra.mxu0 0.0
  %5213 = vmatprep.subr.mxu0 0.0
  %5214 = vmatpush1.msra.mxu0 0.0
  %5215 = vmatprep.subr.mxu0 0.0
  %5216 = vmatpush1.msra.mxu0 0.0
  %5217 = vmatprep.subr.mxu0 0.0
  %5218 = vmatpush1.msra.mxu0 %v2839
  %5219 = vmatprep.subr.mxu0 0.0
  %5220 = vmatpush1.msra.mxu0 %v2838
  %5221 = vmatprep.subr.mxu0 0.0
  %5222 = vmatpush1.msra.mxu0 %v2837
  %5223 = vmatprep.subr.mxu0 0.0
  %5224 = vmatpush1.msra.mxu0 %v2836
  %5225 = vmatprep.subr.mxu0 0.0
  %5226 = vmatpush2.msra.mxu0 0.0
  %5227 = vmatprep.subr.mxu0 0.0
  %5228 = vmatpush2.msra.mxu0 0.0
  %5229 = vmatprep.subr.mxu0 0.0
  %5230 = vmatpush2.msra.mxu0 0.0
  %5231 = vmatprep.subr.mxu0 0.0
  %5232 = vmatpush2.msra.mxu0 0.0
  %5233 = vmatprep.subr.mxu0 0.0
  %5234 = vmatpush2.msra.mxu0 0.0
  %5235 = vmatprep.subr.mxu0 0.0
  %5236 = vmatpush2.msra.mxu0 0.0
  %5237 = vmatprep.subr.mxu0 0.0
  %5238 = vmatpush2.msra.mxu0 0.0
  %5239 = vmatprep.subr.mxu0 0.0
  %5240 = vmatpush2.msra.mxu0 0.0
  %5241 = vmatprep.subr.mxu0 0.0
  %5242 = vmatpush2.msra.mxu0 0.0
  %5243 = vmatprep.subr.mxu0 0.0
  %5244 = vmatpush2.msra.mxu0 0.0
  %5245 = vmatprep.subr.mxu0 0.0
  %5246 = vmatpush2.msra.mxu0 0.0
  %5247 = vmatprep.subr.mxu0 0.0
  %5248 = vmatpush2.msra.mxu0 0.0
  %5249 = vmatprep.subr.mxu0 0.0
  %5250 = vmatpush2.msra.mxu0 0.0
  %5251 = vmatprep.subr.mxu0 0.0
  %5252 = vmatpush2.msra.mxu0 0.0
  %5253 = vmatprep.subr.mxu0 0.0
  %5254 = vmatpush2.msra.mxu0 0.0
  %5255 = vmatprep.subr.mxu0 0.0
  %5256 = vmatpush2.msra.mxu0 0.0
  %5257 = vmatprep.mubr.f32.mxu0 0.0
  %5258 = vmatmul.mubr.f32.gmra.mxu0 %v5191
  %v5259 = vpop.f32.mrf.mxu0
  %v5260 = vadd.f32 %v5185, %v5259
  %v5261 = vpop.f32.mrf.mxu0
  %5262 = vdwg.mxu0
  %v5263 = vadd.f32 %v5260, %v2849
  %v5264 = vxor.u32 %v5263, 2147483648
  %v5265 = vmul.f32 %v5264, 1.442695
  %v5266 = vpow.pop %v5265
  %v5267 = vadd.f32 %v5266, 1.0
  %v5268 = vrcp.pop %v5267
  %v5269 = vmul.f32 1.0, %v5268
  %v5270 = vtanh.pop %v5263
  %v5271 = vmul.f32 %v5269, %v5010
  %5273 = vrot.lane.b32.xlu0 %v5270, 64
  %v5274 = vpop.permute.xlu0 %5273
  %v5276 = vmul.f32 %v5269, %v5274
  %5278 = vrot.lane.b32.xlu0 %v5276, 32
  %v5279 = vpop.permute.xlu0 %5278
  %v5281 = vadd.f32 %v5271, %v5279
  %v5282 = vtanh.pop %v5281
  %5284 = vrot.lane.b32.xlu0 %v5282, 64
  %v5285 = vpop.permute.xlu0 %5284
  %v5287 = vmul.f32 %v5269, %v5285
  %v5288 = vld [vmem:[#allocation4 + $0x48] sm:$0xff]
  %5289 = vmatprep.subr.mxu0 0.0
  %5290 = vmatpush1.msra.mxu0 0.0
  %5291 = vmatprep.subr.mxu0 0.0
  %5292 = vmatpush1.msra.mxu0 0.0
  %5293 = vmatprep.subr.mxu0 0.0
  %5294 = vmatpush1.msra.mxu0 0.0
  %5295 = vmatprep.subr.mxu0 0.0
  %5296 = vmatpush1.msra.mxu0 0.0
  %5297 = vmatprep.subr.mxu0 0.0
  %5298 = vmatpush1.msra.mxu0 0.0
  %5299 = vmatprep.subr.mxu0 0.0
  %5300 = vmatpush1.msra.mxu0 0.0
  %5301 = vmatprep.subr.mxu0 0.0
  %5302 = vmatpush1.msra.mxu0 0.0
  %5303 = vmatprep.subr.mxu0 0.0
  %5304 = vmatpush1.msra.mxu0 0.0
  %5305 = vmatprep.subr.mxu0 0.0
  %5306 = vmatpush1.msra.mxu0 0.0
  %5307 = vmatprep.subr.mxu0 0.0
  %5308 = vmatpush1.msra.mxu0 0.0
  %5309 = vmatprep.subr.mxu0 0.0
  %5310 = vmatpush1.msra.mxu0 0.0
  %5311 = vmatprep.subr.mxu0 0.0
  %5312 = vmatpush1.msra.mxu0 0.0
  %5313 = vmatprep.subr.mxu0 0.0
  %5314 = vmatpush1.msra.mxu0 %v2835
  %5315 = vmatprep.subr.mxu0 0.0
  %5316 = vmatpush1.msra.mxu0 %v2834
  %5317 = vmatprep.subr.mxu0 0.0
  %5318 = vmatpush1.msra.mxu0 %v2833
  %5319 = vmatprep.subr.mxu0 0.0
  %5320 = vmatpush1.msra.mxu0 %v2832
  %5321 = vmatprep.subr.mxu0 0.0
  %5322 = vmatpush2.msra.mxu0 0.0
  %5323 = vmatprep.subr.mxu0 0.0
  %5324 = vmatpush2.msra.mxu0 0.0
  %5325 = vmatprep.subr.mxu0 0.0
  %5326 = vmatpush2.msra.mxu0 0.0
  %5327 = vmatprep.subr.mxu0 0.0
  %5328 = vmatpush2.msra.mxu0 0.0
  %5329 = vmatprep.subr.mxu0 0.0
  %5330 = vmatpush2.msra.mxu0 0.0
  %5331 = vmatprep.subr.mxu0 0.0
  %5332 = vmatpush2.msra.mxu0 0.0
  %5333 = vmatprep.subr.mxu0 0.0
  %5334 = vmatpush2.msra.mxu0 0.0
  %5335 = vmatprep.subr.mxu0 0.0
  %5336 = vmatpush2.msra.mxu0 0.0
  %5337 = vmatprep.subr.mxu0 0.0
  %5338 = vmatpush2.msra.mxu0 0.0
  %5339 = vmatprep.subr.mxu0 0.0
  %5340 = vmatpush2.msra.mxu0 0.0
  %5341 = vmatprep.subr.mxu0 0.0
  %5342 = vmatpush2.msra.mxu0 0.0
  %5343 = vmatprep.subr.mxu0 0.0
  %5344 = vmatpush2.msra.mxu0 0.0
  %5345 = vmatprep.subr.mxu0 0.0
  %5346 = vmatpush2.msra.mxu0 0.0
  %5347 = vmatprep.subr.mxu0 0.0
  %5348 = vmatpush2.msra.mxu0 0.0
  %5349 = vmatprep.subr.mxu0 0.0
  %5350 = vmatpush2.msra.mxu0 0.0
  %5351 = vmatprep.subr.mxu0 0.0
  %5352 = vmatpush2.msra.mxu0 0.0
  %5353 = vmatprep.mubr.f32.mxu0 0.0
  %5354 = vmatmul.mubr.f32.gmra.mxu0 %v5191
  %v5355 = vpop.f32.mrf.mxu0
  %v5356 = vadd.f32 0.0, %v5355
  %v5357 = vpop.f32.mrf.mxu0
  %5358 = vdwg.mxu0
  %v5359 = vadd.f32 %v5288, %v5356
  %v5360 = vxor.u32 %v5359, 2147483648
  %v5361 = vmul.f32 %v5360, 1.442695
  %v5362 = vpow.pop %v5361
  %v5363 = vadd.f32 %v5362, 1.0
  %v5364 = vrcp.pop %v5363
  %v5365 = vmul.f32 1.0, %v5364
  %v5366 = vtanh.pop %v5359
  %v5367 = vmul.f32 %v5365, %v5106
  %5369 = vrot.lane.b32.xlu0 %v5366, 64
  %v5370 = vpop.permute.xlu0 %5369
  %v5372 = vmul.f32 %v5365, %v5370
  %5374 = vrot.lane.b32.xlu0 %v5372, 32
  %v5375 = vpop.permute.xlu0 %5374
  %v5377 = vadd.f32 %v5367, %v5375
  %v5378 = vtanh.pop %v5377
  %5380 = vrot.lane.b32.xlu0 %v5378, 64
  %v5381 = vpop.permute.xlu0 %5380
  %v5383 = vmul.f32 %v5365, %v5381
  %5385 = vrot.lane.b32.xlu0 %v5287, 32
  %v5386 = vpop.permute.xlu0 %5385
  %v5387 = vsel %vm38, %v5386, 0
  %5389 = vmatprep.subr.mxu0 0.0
  %5390 = vmatpush1.msra.mxu0 0.0
  %5391 = vmatprep.subr.mxu0 0.0
  %5392 = vmatpush1.msra.mxu0 0.0
  %5393 = vmatprep.subr.mxu0 0.0
  %5394 = vmatpush1.msra.mxu0 0.0
  %5395 = vmatprep.subr.mxu0 0.0
  %5396 = vmatpush1.msra.mxu0 0.0
  %5397 = vmatprep.subr.mxu0 0.0
  %5398 = vmatpush1.msra.mxu0 0.0
  %5399 = vmatprep.subr.mxu0 0.0
  %5400 = vmatpush1.msra.mxu0 0.0
  %5401 = vmatprep.subr.mxu0 0.0
  %5402 = vmatpush1.msra.mxu0 0.0
  %5403 = vmatprep.subr.mxu0 0.0
  %5404 = vmatpush1.msra.mxu0 0.0
  %5405 = vmatprep.subr.mxu0 0.0
  %5406 = vmatpush1.msra.mxu0 0.0
  %5407 = vmatprep.subr.mxu0 0.0
  %5408 = vmatpush1.msra.mxu0 0.0
  %5409 = vmatprep.subr.mxu0 0.0
  %5410 = vmatpush1.msra.mxu0 0.0
  %5411 = vmatprep.subr.mxu0 0.0
  %5412 = vmatpush1.msra.mxu0 0.0
  %5413 = vmatprep.subr.mxu0 0.0
  %5414 = vmatpush1.msra.mxu0 %v2843
  %5415 = vmatprep.subr.mxu0 0.0
  %5416 = vmatpush1.msra.mxu0 %v2842
  %5417 = vmatprep.subr.mxu0 0.0
  %5418 = vmatpush1.msra.mxu0 %v2841
  %5419 = vmatprep.subr.mxu0 0.0
  %5420 = vmatpush1.msra.mxu0 %v2840
  %5421 = vmatprep.subr.mxu0 0.0
  %5422 = vmatpush2.msra.mxu0 0.0
  %5423 = vmatprep.subr.mxu0 0.0
  %5424 = vmatpush2.msra.mxu0 0.0
  %5425 = vmatprep.subr.mxu0 0.0
  %5426 = vmatpush2.msra.mxu0 0.0
  %5427 = vmatprep.subr.mxu0 0.0
  %5428 = vmatpush2.msra.mxu0 0.0
  %5429 = vmatprep.subr.mxu0 0.0
  %5430 = vmatpush2.msra.mxu0 0.0
  %5431 = vmatprep.subr.mxu0 0.0
  %5432 = vmatpush2.msra.mxu0 0.0
  %5433 = vmatprep.subr.mxu0 0.0
  %5434 = vmatpush2.msra.mxu0 0.0
  %5435 = vmatprep.subr.mxu0 0.0
  %5436 = vmatpush2.msra.mxu0 0.0
  %5437 = vmatprep.subr.mxu0 0.0
  %5438 = vmatpush2.msra.mxu0 0.0
  %5439 = vmatprep.subr.mxu0 0.0
  %5440 = vmatpush2.msra.mxu0 0.0
  %5441 = vmatprep.subr.mxu0 0.0
  %5442 = vmatpush2.msra.mxu0 0.0
  %5443 = vmatprep.subr.mxu0 0.0
  %5444 = vmatpush2.msra.mxu0 0.0
  %5445 = vmatprep.subr.mxu0 0.0
  %5446 = vmatpush2.msra.mxu0 0.0
  %5447 = vmatprep.subr.mxu0 0.0
  %5448 = vmatpush2.msra.mxu0 0.0
  %5449 = vmatprep.subr.mxu0 0.0
  %5450 = vmatpush2.msra.mxu0 0.0
  %5451 = vmatprep.subr.mxu0 0.0
  %5452 = vmatpush2.msra.mxu0 0.0
  %5453 = vmatprep.mubr.f32.mxu0 0.0
  %5454 = vmatmul.mubr.f32.gmra.mxu0 %v5387
  %v5455 = vpop.f32.mrf.mxu0
  %v5456 = vadd.f32 0.0, %v5455
  %v5457 = vpop.f32.mrf.mxu0
  %5458 = vdwg.mxu0
  %5460 = vrot.lane.b32.xlu0 %v5383, 32
  %v5461 = vpop.permute.xlu0 %5460
  %v5462 = vsel %vm38, %v5461, 0
  %5464 = vmatprep.subr.mxu0 0.0
  %5465 = vmatpush1.msra.mxu0 0.0
  %5466 = vmatprep.subr.mxu0 0.0
  %5467 = vmatpush1.msra.mxu0 0.0
  %5468 = vmatprep.subr.mxu0 0.0
  %5469 = vmatpush1.msra.mxu0 0.0
  %5470 = vmatprep.subr.mxu0 0.0
  %5471 = vmatpush1.msra.mxu0 0.0
  %5472 = vmatprep.subr.mxu0 0.0
  %5473 = vmatpush1.msra.mxu0 0.0
  %5474 = vmatprep.subr.mxu0 0.0
  %5475 = vmatpush1.msra.mxu0 0.0
  %5476 = vmatprep.subr.mxu0 0.0
  %5477 = vmatpush1.msra.mxu0 0.0
  %5478 = vmatprep.subr.mxu0 0.0
  %5479 = vmatpush1.msra.mxu0 0.0
  %5480 = vmatprep.subr.mxu0 0.0
  %5481 = vmatpush1.msra.mxu0 0.0
  %5482 = vmatprep.subr.mxu0 0.0
  %5483 = vmatpush1.msra.mxu0 0.0
  %5484 = vmatprep.subr.mxu0 0.0
  %5485 = vmatpush1.msra.mxu0 0.0
  %5486 = vmatprep.subr.mxu0 0.0
  %5487 = vmatpush1.msra.mxu0 0.0
  %5488 = vmatprep.subr.mxu0 0.0
  %5489 = vmatpush1.msra.mxu0 %v2839
  %5490 = vmatprep.subr.mxu0 0.0
  %5491 = vmatpush1.msra.mxu0 %v2838
  %5492 = vmatprep.subr.mxu0 0.0
  %5493 = vmatpush1.msra.mxu0 %v2837
  %5494 = vmatprep.subr.mxu0 0.0
  %5495 = vmatpush1.msra.mxu0 %v2836
  %5496 = vmatprep.subr.mxu0 0.0
  %5497 = vmatpush2.msra.mxu0 0.0
  %5498 = vmatprep.subr.mxu0 0.0
  %5499 = vmatpush2.msra.mxu0 0.0
  %5500 = vmatprep.subr.mxu0 0.0
  %5501 = vmatpush2.msra.mxu0 0.0
  %5502 = vmatprep.subr.mxu0 0.0
  %5503 = vmatpush2.msra.mxu0 0.0
  %5504 = vmatprep.subr.mxu0 0.0
  %5505 = vmatpush2.msra.mxu0 0.0
  %5506 = vmatprep.subr.mxu0 0.0
  %5507 = vmatpush2.msra.mxu0 0.0
  %5508 = vmatprep.subr.mxu0 0.0
  %5509 = vmatpush2.msra.mxu0 0.0
  %5510 = vmatprep.subr.mxu0 0.0
  %5511 = vmatpush2.msra.mxu0 0.0
  %5512 = vmatprep.subr.mxu0 0.0
  %5513 = vmatpush2.msra.mxu0 0.0
  %5514 = vmatprep.subr.mxu0 0.0
  %5515 = vmatpush2.msra.mxu0 0.0
  %5516 = vmatprep.subr.mxu0 0.0
  %5517 = vmatpush2.msra.mxu0 0.0
  %5518 = vmatprep.subr.mxu0 0.0
  %5519 = vmatpush2.msra.mxu0 0.0
  %5520 = vmatprep.subr.mxu0 0.0
  %5521 = vmatpush2.msra.mxu0 0.0
  %5522 = vmatprep.subr.mxu0 0.0
  %5523 = vmatpush2.msra.mxu0 0.0
  %5524 = vmatprep.subr.mxu0 0.0
  %5525 = vmatpush2.msra.mxu0 0.0
  %5526 = vmatprep.subr.mxu0 0.0
  %5527 = vmatpush2.msra.mxu0 0.0
  %5528 = vmatprep.mubr.f32.mxu0 0.0
  %5529 = vmatmul.mubr.f32.gmra.mxu0 %v5462
  %v5530 = vpop.f32.mrf.mxu0
  %v5531 = vadd.f32 %v5456, %v5530
  %v5532 = vpop.f32.mrf.mxu0
  %5533 = vdwg.mxu0
  %v5534 = vadd.f32 %v5531, %v2849
  %v5535 = vxor.u32 %v5534, 2147483648
  %v5536 = vmul.f32 %v5535, 1.442695
  %v5537 = vpow.pop %v5536
  %v5538 = vadd.f32 %v5537, 1.0
  %v5539 = vrcp.pop %v5538
  %v5540 = vmul.f32 1.0, %v5539
  %v5541 = vtanh.pop %v5534
  %v5542 = vmul.f32 %v5540, %v5281
  %5544 = vrot.lane.b32.xlu0 %v5541, 64
  %v5545 = vpop.permute.xlu0 %5544
  %v5547 = vmul.f32 %v5540, %v5545
  %5549 = vrot.lane.b32.xlu0 %v5547, 32
  %v5550 = vpop.permute.xlu0 %5549
  %v5552 = vadd.f32 %v5542, %v5550
  %v5553 = vtanh.pop %v5552
  %5555 = vrot.lane.b32.xlu0 %v5553, 64
  %v5556 = vpop.permute.xlu0 %5555
  %v5558 = vmul.f32 %v5540, %v5556
  %v5559 = vld [vmem:[#allocation4 + $0x50] sm:$0xff]
  %5560 = vmatprep.subr.mxu0 0.0
  %5561 = vmatpush1.msra.mxu0 0.0
  %5562 = vmatprep.subr.mxu0 0.0
  %5563 = vmatpush1.msra.mxu0 0.0
  %5564 = vmatprep.subr.mxu0 0.0
  %5565 = vmatpush1.msra.mxu0 0.0
  %5566 = vmatprep.subr.mxu0 0.0
  %5567 = vmatpush1.msra.mxu0 0.0
  %5568 = vmatprep.subr.mxu0 0.0
  %5569 = vmatpush1.msra.mxu0 0.0
  %5570 = vmatprep.subr.mxu0 0.0
  %5571 = vmatpush1.msra.mxu0 0.0
  %5572 = vmatprep.subr.mxu0 0.0
  %5573 = vmatpush1.msra.mxu0 0.0
  %5574 = vmatprep.subr.mxu0 0.0
  %5575 = vmatpush1.msra.mxu0 0.0
  %5576 = vmatprep.subr.mxu0 0.0
  %5577 = vmatpush1.msra.mxu0 0.0
  %5578 = vmatprep.subr.mxu0 0.0
  %5579 = vmatpush1.msra.mxu0 0.0
  %5580 = vmatprep.subr.mxu0 0.0
  %5581 = vmatpush1.msra.mxu0 0.0
  %5582 = vmatprep.subr.mxu0 0.0
  %5583 = vmatpush1.msra.mxu0 0.0
  %5584 = vmatprep.subr.mxu0 0.0
  %5585 = vmatpush1.msra.mxu0 %v2835
  %5586 = vmatprep.subr.mxu0 0.0
  %5587 = vmatpush1.msra.mxu0 %v2834
  %5588 = vmatprep.subr.mxu0 0.0
  %5589 = vmatpush1.msra.mxu0 %v2833
  %5590 = vmatprep.subr.mxu0 0.0
  %5591 = vmatpush1.msra.mxu0 %v2832
  %5592 = vmatprep.subr.mxu0 0.0
  %5593 = vmatpush2.msra.mxu0 0.0
  %5594 = vmatprep.subr.mxu0 0.0
  %5595 = vmatpush2.msra.mxu0 0.0
  %5596 = vmatprep.subr.mxu0 0.0
  %5597 = vmatpush2.msra.mxu0 0.0
  %5598 = vmatprep.subr.mxu0 0.0
  %5599 = vmatpush2.msra.mxu0 0.0
  %5600 = vmatprep.subr.mxu0 0.0
  %5601 = vmatpush2.msra.mxu0 0.0
  %5602 = vmatprep.subr.mxu0 0.0
  %5603 = vmatpush2.msra.mxu0 0.0
  %5604 = vmatprep.subr.mxu0 0.0
  %5605 = vmatpush2.msra.mxu0 0.0
  %5606 = vmatprep.subr.mxu0 0.0
  %5607 = vmatpush2.msra.mxu0 0.0
  %5608 = vmatprep.subr.mxu0 0.0
  %5609 = vmatpush2.msra.mxu0 0.0
  %5610 = vmatprep.subr.mxu0 0.0
  %5611 = vmatpush2.msra.mxu0 0.0
  %5612 = vmatprep.subr.mxu0 0.0
  %5613 = vmatpush2.msra.mxu0 0.0
  %5614 = vmatprep.subr.mxu0 0.0
  %5615 = vmatpush2.msra.mxu0 0.0
  %5616 = vmatprep.subr.mxu0 0.0
  %5617 = vmatpush2.msra.mxu0 0.0
  %5618 = vmatprep.subr.mxu0 0.0
  %5619 = vmatpush2.msra.mxu0 0.0
  %5620 = vmatprep.subr.mxu0 0.0
  %5621 = vmatpush2.msra.mxu0 0.0
  %5622 = vmatprep.subr.mxu0 0.0
  %5623 = vmatpush2.msra.mxu0 0.0
  %5624 = vmatprep.mubr.f32.mxu0 0.0
  %5625 = vmatmul.mubr.f32.gmra.mxu0 %v5462
  %v5626 = vpop.f32.mrf.mxu0
  %v5627 = vadd.f32 0.0, %v5626
  %v5628 = vpop.f32.mrf.mxu0
  %5629 = vdwg.mxu0
  %v5630 = vadd.f32 %v5559, %v5627
  %v5631 = vxor.u32 %v5630, 2147483648
  %v5632 = vmul.f32 %v5631, 1.442695
  %v5633 = vpow.pop %v5632
  %v5634 = vadd.f32 %v5633, 1.0
  %v5635 = vrcp.pop %v5634
  %v5636 = vmul.f32 1.0, %v5635
  %v5637 = vtanh.pop %v5630
  %v5638 = vmul.f32 %v5636, %v5377
  %5640 = vrot.lane.b32.xlu0 %v5637, 64
  %v5641 = vpop.permute.xlu0 %5640
  %v5643 = vmul.f32 %v5636, %v5641
  %5645 = vrot.lane.b32.xlu0 %v5643, 32
  %v5646 = vpop.permute.xlu0 %5645
  %v5648 = vadd.f32 %v5638, %v5646
  %v5649 = vtanh.pop %v5648
  %5651 = vrot.lane.b32.xlu0 %v5649, 64
  %v5652 = vpop.permute.xlu0 %5651
  %v5654 = vmul.f32 %v5636, %v5652
  %5656 = vrot.lane.b32.xlu0 %v5558, 32
  %v5657 = vpop.permute.xlu0 %5656
  %v5658 = vsel %vm38, %v5657, 0
  %5660 = vmatprep.subr.mxu0 0.0
  %5661 = vmatpush1.msra.mxu0 0.0
  %5662 = vmatprep.subr.mxu0 0.0
  %5663 = vmatpush1.msra.mxu0 0.0
  %5664 = vmatprep.subr.mxu0 0.0
  %5665 = vmatpush1.msra.mxu0 0.0
  %5666 = vmatprep.subr.mxu0 0.0
  %5667 = vmatpush1.msra.mxu0 0.0
  %5668 = vmatprep.subr.mxu0 0.0
  %5669 = vmatpush1.msra.mxu0 0.0
  %5670 = vmatprep.subr.mxu0 0.0
  %5671 = vmatpush1.msra.mxu0 0.0
  %5672 = vmatprep.subr.mxu0 0.0
  %5673 = vmatpush1.msra.mxu0 0.0
  %5674 = vmatprep.subr.mxu0 0.0
  %5675 = vmatpush1.msra.mxu0 0.0
  %5676 = vmatprep.subr.mxu0 0.0
  %5677 = vmatpush1.msra.mxu0 0.0
  %5678 = vmatprep.subr.mxu0 0.0
  %5679 = vmatpush1.msra.mxu0 0.0
  %5680 = vmatprep.subr.mxu0 0.0
  %5681 = vmatpush1.msra.mxu0 0.0
  %5682 = vmatprep.subr.mxu0 0.0
  %5683 = vmatpush1.msra.mxu0 0.0
  %5684 = vmatprep.subr.mxu0 0.0
  %5685 = vmatpush1.msra.mxu0 %v2843
  %5686 = vmatprep.subr.mxu0 0.0
  %5687 = vmatpush1.msra.mxu0 %v2842
  %5688 = vmatprep.subr.mxu0 0.0
  %5689 = vmatpush1.msra.mxu0 %v2841
  %5690 = vmatprep.subr.mxu0 0.0
  %5691 = vmatpush1.msra.mxu0 %v2840
  %5692 = vmatprep.subr.mxu0 0.0
  %5693 = vmatpush2.msra.mxu0 0.0
  %5694 = vmatprep.subr.mxu0 0.0
  %5695 = vmatpush2.msra.mxu0 0.0
  %5696 = vmatprep.subr.mxu0 0.0
  %5697 = vmatpush2.msra.mxu0 0.0
  %5698 = vmatprep.subr.mxu0 0.0
  %5699 = vmatpush2.msra.mxu0 0.0
  %5700 = vmatprep.subr.mxu0 0.0
  %5701 = vmatpush2.msra.mxu0 0.0
  %5702 = vmatprep.subr.mxu0 0.0
  %5703 = vmatpush2.msra.mxu0 0.0
  %5704 = vmatprep.subr.mxu0 0.0
  %5705 = vmatpush2.msra.mxu0 0.0
  %5706 = vmatprep.subr.mxu0 0.0
  %5707 = vmatpush2.msra.mxu0 0.0
  %5708 = vmatprep.subr.mxu0 0.0
  %5709 = vmatpush2.msra.mxu0 0.0
  %5710 = vmatprep.subr.mxu0 0.0
  %5711 = vmatpush2.msra.mxu0 0.0
  %5712 = vmatprep.subr.mxu0 0.0
  %5713 = vmatpush2.msra.mxu0 0.0
  %5714 = vmatprep.subr.mxu0 0.0
  %5715 = vmatpush2.msra.mxu0 0.0
  %5716 = vmatprep.subr.mxu0 0.0
  %5717 = vmatpush2.msra.mxu0 0.0
  %5718 = vmatprep.subr.mxu0 0.0
  %5719 = vmatpush2.msra.mxu0 0.0
  %5720 = vmatprep.subr.mxu0 0.0
  %5721 = vmatpush2.msra.mxu0 0.0
  %5722 = vmatprep.subr.mxu0 0.0
  %5723 = vmatpush2.msra.mxu0 0.0
  %5724 = vmatprep.mubr.f32.mxu0 0.0
  %5725 = vmatmul.mubr.f32.gmra.mxu0 %v5658
  %v5726 = vpop.f32.mrf.mxu0
  %v5727 = vadd.f32 0.0, %v5726
  %v5728 = vpop.f32.mrf.mxu0
  %5729 = vdwg.mxu0
  %5731 = vrot.lane.b32.xlu0 %v5654, 32
  %v5732 = vpop.permute.xlu0 %5731
  %v5733 = vsel %vm38, %v5732, 0
  %5735 = vmatprep.subr.mxu0 0.0
  %5736 = vmatpush1.msra.mxu0 0.0
  %5737 = vmatprep.subr.mxu0 0.0
  %5738 = vmatpush1.msra.mxu0 0.0
  %5739 = vmatprep.subr.mxu0 0.0
  %5740 = vmatpush1.msra.mxu0 0.0
  %5741 = vmatprep.subr.mxu0 0.0
  %5742 = vmatpush1.msra.mxu0 0.0
  %5743 = vmatprep.subr.mxu0 0.0
  %5744 = vmatpush1.msra.mxu0 0.0
  %5745 = vmatprep.subr.mxu0 0.0
  %5746 = vmatpush1.msra.mxu0 0.0
  %5747 = vmatprep.subr.mxu0 0.0
  %5748 = vmatpush1.msra.mxu0 0.0
  %5749 = vmatprep.subr.mxu0 0.0
  %5750 = vmatpush1.msra.mxu0 0.0
  %5751 = vmatprep.subr.mxu0 0.0
  %5752 = vmatpush1.msra.mxu0 0.0
  %5753 = vmatprep.subr.mxu0 0.0
  %5754 = vmatpush1.msra.mxu0 0.0
  %5755 = vmatprep.subr.mxu0 0.0
  %5756 = vmatpush1.msra.mxu0 0.0
  %5757 = vmatprep.subr.mxu0 0.0
  %5758 = vmatpush1.msra.mxu0 0.0
  %5759 = vmatprep.subr.mxu0 0.0
  %5760 = vmatpush1.msra.mxu0 %v2839
  %5761 = vmatprep.subr.mxu0 0.0
  %5762 = vmatpush1.msra.mxu0 %v2838
  %5763 = vmatprep.subr.mxu0 0.0
  %5764 = vmatpush1.msra.mxu0 %v2837
  %5765 = vmatprep.subr.mxu0 0.0
  %5766 = vmatpush1.msra.mxu0 %v2836
  %5767 = vmatprep.subr.mxu0 0.0
  %5768 = vmatpush2.msra.mxu0 0.0
  %5769 = vmatprep.subr.mxu0 0.0
  %5770 = vmatpush2.msra.mxu0 0.0
  %5771 = vmatprep.subr.mxu0 0.0
  %5772 = vmatpush2.msra.mxu0 0.0
  %5773 = vmatprep.subr.mxu0 0.0
  %5774 = vmatpush2.msra.mxu0 0.0
  %5775 = vmatprep.subr.mxu0 0.0
  %5776 = vmatpush2.msra.mxu0 0.0
  %5777 = vmatprep.subr.mxu0 0.0
  %5778 = vmatpush2.msra.mxu0 0.0
  %5779 = vmatprep.subr.mxu0 0.0
  %5780 = vmatpush2.msra.mxu0 0.0
  %5781 = vmatprep.subr.mxu0 0.0
  %5782 = vmatpush2.msra.mxu0 0.0
  %5783 = vmatprep.subr.mxu0 0.0
  %5784 = vmatpush2.msra.mxu0 0.0
  %5785 = vmatprep.subr.mxu0 0.0
  %5786 = vmatpush2.msra.mxu0 0.0
  %5787 = vmatprep.subr.mxu0 0.0
  %5788 = vmatpush2.msra.mxu0 0.0
  %5789 = vmatprep.subr.mxu0 0.0
  %5790 = vmatpush2.msra.mxu0 0.0
  %5791 = vmatprep.subr.mxu0 0.0
  %5792 = vmatpush2.msra.mxu0 0.0
  %5793 = vmatprep.subr.mxu0 0.0
  %5794 = vmatpush2.msra.mxu0 0.0
  %5795 = vmatprep.subr.mxu0 0.0
  %5796 = vmatpush2.msra.mxu0 0.0
  %5797 = vmatprep.subr.mxu0 0.0
  %5798 = vmatpush2.msra.mxu0 0.0
  %5799 = vmatprep.mubr.f32.mxu0 0.0
  %5800 = vmatmul.mubr.f32.gmra.mxu0 %v5733
  %v5801 = vpop.f32.mrf.mxu0
  %v5802 = vadd.f32 %v5727, %v5801
  %v5803 = vpop.f32.mrf.mxu0
  %5804 = vdwg.mxu0
  %v5805 = vadd.f32 %v5802, %v2849
  %v5806 = vxor.u32 %v5805, 2147483648
  %v5807 = vmul.f32 %v5806, 1.442695
  %v5808 = vpow.pop %v5807
  %v5809 = vadd.f32 %v5808, 1.0
  %v5810 = vrcp.pop %v5809
  %v5811 = vmul.f32 1.0, %v5810
  %v5812 = vtanh.pop %v5805
  %v5813 = vmul.f32 %v5811, %v5552
  %5815 = vrot.lane.b32.xlu0 %v5812, 64
  %v5816 = vpop.permute.xlu0 %5815
  %v5818 = vmul.f32 %v5811, %v5816
  %5820 = vrot.lane.b32.xlu0 %v5818, 32
  %v5821 = vpop.permute.xlu0 %5820
  %v5823 = vadd.f32 %v5813, %v5821
  %v5824 = vtanh.pop %v5823
  %5826 = vrot.lane.b32.xlu0 %v5824, 64
  %v5827 = vpop.permute.xlu0 %5826
  %v5829 = vmul.f32 %v5811, %v5827
  %v5830 = vld [vmem:[#allocation4 + $0x58] sm:$0xff]
  %5831 = vmatprep.subr.mxu0 0.0
  %5832 = vmatpush1.msra.mxu0 0.0
  %5833 = vmatprep.subr.mxu0 0.0
  %5834 = vmatpush1.msra.mxu0 0.0
  %5835 = vmatprep.subr.mxu0 0.0
  %5836 = vmatpush1.msra.mxu0 0.0
  %5837 = vmatprep.subr.mxu0 0.0
  %5838 = vmatpush1.msra.mxu0 0.0
  %5839 = vmatprep.subr.mxu0 0.0
  %5840 = vmatpush1.msra.mxu0 0.0
  %5841 = vmatprep.subr.mxu0 0.0
  %5842 = vmatpush1.msra.mxu0 0.0
  %5843 = vmatprep.subr.mxu0 0.0
  %5844 = vmatpush1.msra.mxu0 0.0
  %5845 = vmatprep.subr.mxu0 0.0
  %5846 = vmatpush1.msra.mxu0 0.0
  %5847 = vmatprep.subr.mxu0 0.0
  %5848 = vmatpush1.msra.mxu0 0.0
  %5849 = vmatprep.subr.mxu0 0.0
  %5850 = vmatpush1.msra.mxu0 0.0
  %5851 = vmatprep.subr.mxu0 0.0
  %5852 = vmatpush1.msra.mxu0 0.0
  %5853 = vmatprep.subr.mxu0 0.0
  %5854 = vmatpush1.msra.mxu0 0.0
  %5855 = vmatprep.subr.mxu0 0.0
  %5856 = vmatpush1.msra.mxu0 %v2835
  %5857 = vmatprep.subr.mxu0 0.0
  %5858 = vmatpush1.msra.mxu0 %v2834
  %5859 = vmatprep.subr.mxu0 0.0
  %5860 = vmatpush1.msra.mxu0 %v2833
  %5861 = vmatprep.subr.mxu0 0.0
  %5862 = vmatpush1.msra.mxu0 %v2832
  %5863 = vmatprep.subr.mxu0 0.0
  %5864 = vmatpush2.msra.mxu0 0.0
  %5865 = vmatprep.subr.mxu0 0.0
  %5866 = vmatpush2.msra.mxu0 0.0
  %5867 = vmatprep.subr.mxu0 0.0
  %5868 = vmatpush2.msra.mxu0 0.0
  %5869 = vmatprep.subr.mxu0 0.0
  %5870 = vmatpush2.msra.mxu0 0.0
  %5871 = vmatprep.subr.mxu0 0.0
  %5872 = vmatpush2.msra.mxu0 0.0
  %5873 = vmatprep.subr.mxu0 0.0
  %5874 = vmatpush2.msra.mxu0 0.0
  %5875 = vmatprep.subr.mxu0 0.0
  %5876 = vmatpush2.msra.mxu0 0.0
  %5877 = vmatprep.subr.mxu0 0.0
  %5878 = vmatpush2.msra.mxu0 0.0
  %5879 = vmatprep.subr.mxu0 0.0
  %5880 = vmatpush2.msra.mxu0 0.0
  %5881 = vmatprep.subr.mxu0 0.0
  %5882 = vmatpush2.msra.mxu0 0.0
  %5883 = vmatprep.subr.mxu0 0.0
  %5884 = vmatpush2.msra.mxu0 0.0
  %5885 = vmatprep.subr.mxu0 0.0
  %5886 = vmatpush2.msra.mxu0 0.0
  %5887 = vmatprep.subr.mxu0 0.0
  %5888 = vmatpush2.msra.mxu0 0.0
  %5889 = vmatprep.subr.mxu0 0.0
  %5890 = vmatpush2.msra.mxu0 0.0
  %5891 = vmatprep.subr.mxu0 0.0
  %5892 = vmatpush2.msra.mxu0 0.0
  %5893 = vmatprep.subr.mxu0 0.0
  %5894 = vmatpush2.msra.mxu0 0.0
  %5895 = vmatprep.mubr.f32.mxu0 0.0
  %5896 = vmatmul.mubr.f32.gmra.mxu0 %v5733
  %v5897 = vpop.f32.mrf.mxu0
  %v5898 = vadd.f32 0.0, %v5897
  %v5899 = vpop.f32.mrf.mxu0
  %5900 = vdwg.mxu0
  %v5901 = vadd.f32 %v5830, %v5898
  %v5902 = vxor.u32 %v5901, 2147483648
  %v5903 = vmul.f32 %v5902, 1.442695
  %v5904 = vpow.pop %v5903
  %v5905 = vadd.f32 %v5904, 1.0
  %v5906 = vrcp.pop %v5905
  %v5907 = vmul.f32 1.0, %v5906
  %v5908 = vtanh.pop %v5901
  %v5909 = vmul.f32 %v5907, %v5648
  %5911 = vrot.lane.b32.xlu0 %v5908, 64
  %v5912 = vpop.permute.xlu0 %5911
  %v5914 = vmul.f32 %v5907, %v5912
  %5916 = vrot.lane.b32.xlu0 %v5914, 32
  %v5917 = vpop.permute.xlu0 %5916
  %v5919 = vadd.f32 %v5909, %v5917
  %v5920 = vtanh.pop %v5919
  %5922 = vrot.lane.b32.xlu0 %v5920, 64
  %v5923 = vpop.permute.xlu0 %5922
  %v5925 = vmul.f32 %v5907, %v5923
  %5927 = vrot.lane.b32.xlu0 %v5829, 32
  %v5928 = vpop.permute.xlu0 %5927
  %v5929 = vsel %vm38, %v5928, 0
  %5931 = vmatprep.subr.mxu0 0.0
  %5932 = vmatpush1.msra.mxu0 0.0
  %5933 = vmatprep.subr.mxu0 0.0
  %5934 = vmatpush1.msra.mxu0 0.0
  %5935 = vmatprep.subr.mxu0 0.0
  %5936 = vmatpush1.msra.mxu0 0.0
  %5937 = vmatprep.subr.mxu0 0.0
  %5938 = vmatpush1.msra.mxu0 0.0
  %5939 = vmatprep.subr.mxu0 0.0
  %5940 = vmatpush1.msra.mxu0 0.0
  %5941 = vmatprep.subr.mxu0 0.0
  %5942 = vmatpush1.msra.mxu0 0.0
  %5943 = vmatprep.subr.mxu0 0.0
  %5944 = vmatpush1.msra.mxu0 0.0
  %5945 = vmatprep.subr.mxu0 0.0
  %5946 = vmatpush1.msra.mxu0 0.0
  %5947 = vmatprep.subr.mxu0 0.0
  %5948 = vmatpush1.msra.mxu0 0.0
  %5949 = vmatprep.subr.mxu0 0.0
  %5950 = vmatpush1.msra.mxu0 0.0
  %5951 = vmatprep.subr.mxu0 0.0
  %5952 = vmatpush1.msra.mxu0 0.0
  %5953 = vmatprep.subr.mxu0 0.0
  %5954 = vmatpush1.msra.mxu0 0.0
  %5955 = vmatprep.subr.mxu0 0.0
  %5956 = vmatpush1.msra.mxu0 %v2843
  %5957 = vmatprep.subr.mxu0 0.0
  %5958 = vmatpush1.msra.mxu0 %v2842
  %5959 = vmatprep.subr.mxu0 0.0
  %5960 = vmatpush1.msra.mxu0 %v2841
  %5961 = vmatprep.subr.mxu0 0.0
  %5962 = vmatpush1.msra.mxu0 %v2840
  %5963 = vmatprep.subr.mxu0 0.0
  %5964 = vmatpush2.msra.mxu0 0.0
  %5965 = vmatprep.subr.mxu0 0.0
  %5966 = vmatpush2.msra.mxu0 0.0
  %5967 = vmatprep.subr.mxu0 0.0
  %5968 = vmatpush2.msra.mxu0 0.0
  %5969 = vmatprep.subr.mxu0 0.0
  %5970 = vmatpush2.msra.mxu0 0.0
  %5971 = vmatprep.subr.mxu0 0.0
  %5972 = vmatpush2.msra.mxu0 0.0
  %5973 = vmatprep.subr.mxu0 0.0
  %5974 = vmatpush2.msra.mxu0 0.0
  %5975 = vmatprep.subr.mxu0 0.0
  %5976 = vmatpush2.msra.mxu0 0.0
  %5977 = vmatprep.subr.mxu0 0.0
  %5978 = vmatpush2.msra.mxu0 0.0
  %5979 = vmatprep.subr.mxu0 0.0
  %5980 = vmatpush2.msra.mxu0 0.0
  %5981 = vmatprep.subr.mxu0 0.0
  %5982 = vmatpush2.msra.mxu0 0.0
  %5983 = vmatprep.subr.mxu0 0.0
  %5984 = vmatpush2.msra.mxu0 0.0
  %5985 = vmatprep.subr.mxu0 0.0
  %5986 = vmatpush2.msra.mxu0 0.0
  %5987 = vmatprep.subr.mxu0 0.0
  %5988 = vmatpush2.msra.mxu0 0.0
  %5989 = vmatprep.subr.mxu0 0.0
  %5990 = vmatpush2.msra.mxu0 0.0
  %5991 = vmatprep.subr.mxu0 0.0
  %5992 = vmatpush2.msra.mxu0 0.0
  %5993 = vmatprep.subr.mxu0 0.0
  %5994 = vmatpush2.msra.mxu0 0.0
  %5995 = vmatprep.mubr.f32.mxu0 0.0
  %5996 = vmatmul.mubr.f32.gmra.mxu0 %v5929
  %v5997 = vpop.f32.mrf.mxu0
  %v5998 = vadd.f32 0.0, %v5997
  %v5999 = vpop.f32.mrf.mxu0
  %6000 = vdwg.mxu0
  %6002 = vrot.lane.b32.xlu0 %v5925, 32
  %v6003 = vpop.permute.xlu0 %6002
  %v6004 = vsel %vm38, %v6003, 0
  %6006 = vmatprep.subr.mxu0 0.0
  %6007 = vmatpush1.msra.mxu0 0.0
  %6008 = vmatprep.subr.mxu0 0.0
  %6009 = vmatpush1.msra.mxu0 0.0
  %6010 = vmatprep.subr.mxu0 0.0
  %6011 = vmatpush1.msra.mxu0 0.0
  %6012 = vmatprep.subr.mxu0 0.0
  %6013 = vmatpush1.msra.mxu0 0.0
  %6014 = vmatprep.subr.mxu0 0.0
  %6015 = vmatpush1.msra.mxu0 0.0
  %6016 = vmatprep.subr.mxu0 0.0
  %6017 = vmatpush1.msra.mxu0 0.0
  %6018 = vmatprep.subr.mxu0 0.0
  %6019 = vmatpush1.msra.mxu0 0.0
  %6020 = vmatprep.subr.mxu0 0.0
  %6021 = vmatpush1.msra.mxu0 0.0
  %6022 = vmatprep.subr.mxu0 0.0
  %6023 = vmatpush1.msra.mxu0 0.0
  %6024 = vmatprep.subr.mxu0 0.0
  %6025 = vmatpush1.msra.mxu0 0.0
  %6026 = vmatprep.subr.mxu0 0.0
  %6027 = vmatpush1.msra.mxu0 0.0
  %6028 = vmatprep.subr.mxu0 0.0
  %6029 = vmatpush1.msra.mxu0 0.0
  %6030 = vmatprep.subr.mxu0 0.0
  %6031 = vmatpush1.msra.mxu0 %v2839
  %6032 = vmatprep.subr.mxu0 0.0
  %6033 = vmatpush1.msra.mxu0 %v2838
  %6034 = vmatprep.subr.mxu0 0.0
  %6035 = vmatpush1.msra.mxu0 %v2837
  %6036 = vmatprep.subr.mxu0 0.0
  %6037 = vmatpush1.msra.mxu0 %v2836
  %6038 = vmatprep.subr.mxu0 0.0
  %6039 = vmatpush2.msra.mxu0 0.0
  %6040 = vmatprep.subr.mxu0 0.0
  %6041 = vmatpush2.msra.mxu0 0.0
  %6042 = vmatprep.subr.mxu0 0.0
  %6043 = vmatpush2.msra.mxu0 0.0
  %6044 = vmatprep.subr.mxu0 0.0
  %6045 = vmatpush2.msra.mxu0 0.0
  %6046 = vmatprep.subr.mxu0 0.0
  %6047 = vmatpush2.msra.mxu0 0.0
  %6048 = vmatprep.subr.mxu0 0.0
  %6049 = vmatpush2.msra.mxu0 0.0
  %6050 = vmatprep.subr.mxu0 0.0
  %6051 = vmatpush2.msra.mxu0 0.0
  %6052 = vmatprep.subr.mxu0 0.0
  %6053 = vmatpush2.msra.mxu0 0.0
  %6054 = vmatprep.subr.mxu0 0.0
  %6055 = vmatpush2.msra.mxu0 0.0
  %6056 = vmatprep.subr.mxu0 0.0
  %6057 = vmatpush2.msra.mxu0 0.0
  %6058 = vmatprep.subr.mxu0 0.0
  %6059 = vmatpush2.msra.mxu0 0.0
  %6060 = vmatprep.subr.mxu0 0.0
  %6061 = vmatpush2.msra.mxu0 0.0
  %6062 = vmatprep.subr.mxu0 0.0
  %6063 = vmatpush2.msra.mxu0 0.0
  %6064 = vmatprep.subr.mxu0 0.0
  %6065 = vmatpush2.msra.mxu0 0.0
  %6066 = vmatprep.subr.mxu0 0.0
  %6067 = vmatpush2.msra.mxu0 0.0
  %6068 = vmatprep.subr.mxu0 0.0
  %6069 = vmatpush2.msra.mxu0 0.0
  %6070 = vmatprep.mubr.f32.mxu0 0.0
  %6071 = vmatmul.mubr.f32.gmra.mxu0 %v6004
  %v6072 = vpop.f32.mrf.mxu0
  %v6073 = vadd.f32 %v5998, %v6072
  %v6074 = vpop.f32.mrf.mxu0
  %6075 = vdwg.mxu0
  %v6076 = vadd.f32 %v6073, %v2849
  %v6077 = vxor.u32 %v6076, 2147483648
  %v6078 = vmul.f32 %v6077, 1.442695
  %v6079 = vpow.pop %v6078
  %v6080 = vadd.f32 %v6079, 1.0
  %v6081 = vrcp.pop %v6080
  %v6082 = vmul.f32 1.0, %v6081
  %v6083 = vtanh.pop %v6076
  %v6084 = vmul.f32 %v6082, %v5823
  %6086 = vrot.lane.b32.xlu0 %v6083, 64
  %v6087 = vpop.permute.xlu0 %6086
  %v6089 = vmul.f32 %v6082, %v6087
  %6091 = vrot.lane.b32.xlu0 %v6089, 32
  %v6092 = vpop.permute.xlu0 %6091
  %v6094 = vadd.f32 %v6084, %v6092
  %v6095 = vtanh.pop %v6094
  %6097 = vrot.lane.b32.xlu0 %v6095, 64
  %v6098 = vpop.permute.xlu0 %6097
  %v6100 = vmul.f32 %v6082, %v6098
  %v6101 = vld [vmem:[#allocation4 + $0x60] sm:$0xff]
  %6102 = vmatprep.subr.mxu0 0.0
  %6103 = vmatpush1.msra.mxu0 0.0
  %6104 = vmatprep.subr.mxu0 0.0
  %6105 = vmatpush1.msra.mxu0 0.0
  %6106 = vmatprep.subr.mxu0 0.0
  %6107 = vmatpush1.msra.mxu0 0.0
  %6108 = vmatprep.subr.mxu0 0.0
  %6109 = vmatpush1.msra.mxu0 0.0
  %6110 = vmatprep.subr.mxu0 0.0
  %6111 = vmatpush1.msra.mxu0 0.0
  %6112 = vmatprep.subr.mxu0 0.0
  %6113 = vmatpush1.msra.mxu0 0.0
  %6114 = vmatprep.subr.mxu0 0.0
  %6115 = vmatpush1.msra.mxu0 0.0
  %6116 = vmatprep.subr.mxu0 0.0
  %6117 = vmatpush1.msra.mxu0 0.0
  %6118 = vmatprep.subr.mxu0 0.0
  %6119 = vmatpush1.msra.mxu0 0.0
  %6120 = vmatprep.subr.mxu0 0.0
  %6121 = vmatpush1.msra.mxu0 0.0
  %6122 = vmatprep.subr.mxu0 0.0
  %6123 = vmatpush1.msra.mxu0 0.0
  %6124 = vmatprep.subr.mxu0 0.0
  %6125 = vmatpush1.msra.mxu0 0.0
  %6126 = vmatprep.subr.mxu0 0.0
  %6127 = vmatpush1.msra.mxu0 %v2835
  %6128 = vmatprep.subr.mxu0 0.0
  %6129 = vmatpush1.msra.mxu0 %v2834
  %6130 = vmatprep.subr.mxu0 0.0
  %6131 = vmatpush1.msra.mxu0 %v2833
  %6132 = vmatprep.subr.mxu0 0.0
  %6133 = vmatpush1.msra.mxu0 %v2832
  %6134 = vmatprep.subr.mxu0 0.0
  %6135 = vmatpush2.msra.mxu0 0.0
  %6136 = vmatprep.subr.mxu0 0.0
  %6137 = vmatpush2.msra.mxu0 0.0
  %6138 = vmatprep.subr.mxu0 0.0
  %6139 = vmatpush2.msra.mxu0 0.0
  %6140 = vmatprep.subr.mxu0 0.0
  %6141 = vmatpush2.msra.mxu0 0.0
  %6142 = vmatprep.subr.mxu0 0.0
  %6143 = vmatpush2.msra.mxu0 0.0
  %6144 = vmatprep.subr.mxu0 0.0
  %6145 = vmatpush2.msra.mxu0 0.0
  %6146 = vmatprep.subr.mxu0 0.0
  %6147 = vmatpush2.msra.mxu0 0.0
  %6148 = vmatprep.subr.mxu0 0.0
  %6149 = vmatpush2.msra.mxu0 0.0
  %6150 = vmatprep.subr.mxu0 0.0
  %6151 = vmatpush2.msra.mxu0 0.0
  %6152 = vmatprep.subr.mxu0 0.0
  %6153 = vmatpush2.msra.mxu0 0.0
  %6154 = vmatprep.subr.mxu0 0.0
  %6155 = vmatpush2.msra.mxu0 0.0
  %6156 = vmatprep.subr.mxu0 0.0
  %6157 = vmatpush2.msra.mxu0 0.0
  %6158 = vmatprep.subr.mxu0 0.0
  %6159 = vmatpush2.msra.mxu0 0.0
  %6160 = vmatprep.subr.mxu0 0.0
  %6161 = vmatpush2.msra.mxu0 0.0
  %6162 = vmatprep.subr.mxu0 0.0
  %6163 = vmatpush2.msra.mxu0 0.0
  %6164 = vmatprep.subr.mxu0 0.0
  %6165 = vmatpush2.msra.mxu0 0.0
  %6166 = vmatprep.mubr.f32.mxu0 0.0
  %6167 = vmatmul.mubr.f32.gmra.mxu0 %v6004
  %v6168 = vpop.f32.mrf.mxu0
  %v6169 = vadd.f32 0.0, %v6168
  %v6170 = vpop.f32.mrf.mxu0
  %6171 = vdwg.mxu0
  %v6172 = vadd.f32 %v6101, %v6169
  %v6173 = vxor.u32 %v6172, 2147483648
  %v6174 = vmul.f32 %v6173, 1.442695
  %v6175 = vpow.pop %v6174
  %v6176 = vadd.f32 %v6175, 1.0
  %v6177 = vrcp.pop %v6176
  %v6178 = vmul.f32 1.0, %v6177
  %v6179 = vtanh.pop %v6172
  %v6180 = vmul.f32 %v6178, %v5919
  %6182 = vrot.lane.b32.xlu0 %v6179, 64
  %v6183 = vpop.permute.xlu0 %6182
  %v6185 = vmul.f32 %v6178, %v6183
  %6187 = vrot.lane.b32.xlu0 %v6185, 32
  %v6188 = vpop.permute.xlu0 %6187
  %v6190 = vadd.f32 %v6180, %v6188
  %v6191 = vtanh.pop %v6190
  %6193 = vrot.lane.b32.xlu0 %v6191, 64
  %v6194 = vpop.permute.xlu0 %6193
  %v6196 = vmul.f32 %v6178, %v6194
  %6198 = vrot.lane.b32.xlu0 %v6100, 32
  %v6199 = vpop.permute.xlu0 %6198
  %v6200 = vsel %vm38, %v6199, 0
  %6202 = vmatprep.subr.mxu0 0.0
  %6203 = vmatpush1.msra.mxu0 0.0
  %6204 = vmatprep.subr.mxu0 0.0
  %6205 = vmatpush1.msra.mxu0 0.0
  %6206 = vmatprep.subr.mxu0 0.0
  %6207 = vmatpush1.msra.mxu0 0.0
  %6208 = vmatprep.subr.mxu0 0.0
  %6209 = vmatpush1.msra.mxu0 0.0
  %6210 = vmatprep.subr.mxu0 0.0
  %6211 = vmatpush1.msra.mxu0 0.0
  %6212 = vmatprep.subr.mxu0 0.0
  %6213 = vmatpush1.msra.mxu0 0.0
  %6214 = vmatprep.subr.mxu0 0.0
  %6215 = vmatpush1.msra.mxu0 0.0
  %6216 = vmatprep.subr.mxu0 0.0
  %6217 = vmatpush1.msra.mxu0 0.0
  %6218 = vmatprep.subr.mxu0 0.0
  %6219 = vmatpush1.msra.mxu0 0.0
  %6220 = vmatprep.subr.mxu0 0.0
  %6221 = vmatpush1.msra.mxu0 0.0
  %6222 = vmatprep.subr.mxu0 0.0
  %6223 = vmatpush1.msra.mxu0 0.0
  %6224 = vmatprep.subr.mxu0 0.0
  %6225 = vmatpush1.msra.mxu0 0.0
  %6226 = vmatprep.subr.mxu0 0.0
  %6227 = vmatpush1.msra.mxu0 %v2843
  %6228 = vmatprep.subr.mxu0 0.0
  %6229 = vmatpush1.msra.mxu0 %v2842
  %6230 = vmatprep.subr.mxu0 0.0
  %6231 = vmatpush1.msra.mxu0 %v2841
  %6232 = vmatprep.subr.mxu0 0.0
  %6233 = vmatpush1.msra.mxu0 %v2840
  %6234 = vmatprep.subr.mxu0 0.0
  %6235 = vmatpush2.msra.mxu0 0.0
  %6236 = vmatprep.subr.mxu0 0.0
  %6237 = vmatpush2.msra.mxu0 0.0
  %6238 = vmatprep.subr.mxu0 0.0
  %6239 = vmatpush2.msra.mxu0 0.0
  %6240 = vmatprep.subr.mxu0 0.0
  %6241 = vmatpush2.msra.mxu0 0.0
  %6242 = vmatprep.subr.mxu0 0.0
  %6243 = vmatpush2.msra.mxu0 0.0
  %6244 = vmatprep.subr.mxu0 0.0
  %6245 = vmatpush2.msra.mxu0 0.0
  %6246 = vmatprep.subr.mxu0 0.0
  %6247 = vmatpush2.msra.mxu0 0.0
  %6248 = vmatprep.subr.mxu0 0.0
  %6249 = vmatpush2.msra.mxu0 0.0
  %6250 = vmatprep.subr.mxu0 0.0
  %6251 = vmatpush2.msra.mxu0 0.0
  %6252 = vmatprep.subr.mxu0 0.0
  %6253 = vmatpush2.msra.mxu0 0.0
  %6254 = vmatprep.subr.mxu0 0.0
  %6255 = vmatpush2.msra.mxu0 0.0
  %6256 = vmatprep.subr.mxu0 0.0
  %6257 = vmatpush2.msra.mxu0 0.0
  %6258 = vmatprep.subr.mxu0 0.0
  %6259 = vmatpush2.msra.mxu0 0.0
  %6260 = vmatprep.subr.mxu0 0.0
  %6261 = vmatpush2.msra.mxu0 0.0
  %6262 = vmatprep.subr.mxu0 0.0
  %6263 = vmatpush2.msra.mxu0 0.0
  %6264 = vmatprep.subr.mxu0 0.0
  %6265 = vmatpush2.msra.mxu0 0.0
  %6266 = vmatprep.mubr.f32.mxu0 0.0
  %6267 = vmatmul.mubr.f32.gmra.mxu0 %v6200
  %v6268 = vpop.f32.mrf.mxu0
  %v6269 = vadd.f32 0.0, %v6268
  %v6270 = vpop.f32.mrf.mxu0
  %6271 = vdwg.mxu0
  %6273 = vrot.lane.b32.xlu0 %v6196, 32
  %v6274 = vpop.permute.xlu0 %6273
  %v6275 = vsel %vm38, %v6274, 0
  %6277 = vmatprep.subr.mxu0 0.0
  %6278 = vmatpush1.msra.mxu0 0.0
  %6279 = vmatprep.subr.mxu0 0.0
  %6280 = vmatpush1.msra.mxu0 0.0
  %6281 = vmatprep.subr.mxu0 0.0
  %6282 = vmatpush1.msra.mxu0 0.0
  %6283 = vmatprep.subr.mxu0 0.0
  %6284 = vmatpush1.msra.mxu0 0.0
  %6285 = vmatprep.subr.mxu0 0.0
  %6286 = vmatpush1.msra.mxu0 0.0
  %6287 = vmatprep.subr.mxu0 0.0
  %6288 = vmatpush1.msra.mxu0 0.0
  %6289 = vmatprep.subr.mxu0 0.0
  %6290 = vmatpush1.msra.mxu0 0.0
  %6291 = vmatprep.subr.mxu0 0.0
  %6292 = vmatpush1.msra.mxu0 0.0
  %6293 = vmatprep.subr.mxu0 0.0
  %6294 = vmatpush1.msra.mxu0 0.0
  %6295 = vmatprep.subr.mxu0 0.0
  %6296 = vmatpush1.msra.mxu0 0.0
  %6297 = vmatprep.subr.mxu0 0.0
  %6298 = vmatpush1.msra.mxu0 0.0
  %6299 = vmatprep.subr.mxu0 0.0
  %6300 = vmatpush1.msra.mxu0 0.0
  %6301 = vmatprep.subr.mxu0 0.0
  %6302 = vmatpush1.msra.mxu0 %v2839
  %6303 = vmatprep.subr.mxu0 0.0
  %6304 = vmatpush1.msra.mxu0 %v2838
  %6305 = vmatprep.subr.mxu0 0.0
  %6306 = vmatpush1.msra.mxu0 %v2837
  %6307 = vmatprep.subr.mxu0 0.0
  %6308 = vmatpush1.msra.mxu0 %v2836
  %6309 = vmatprep.subr.mxu0 0.0
  %6310 = vmatpush2.msra.mxu0 0.0
  %6311 = vmatprep.subr.mxu0 0.0
  %6312 = vmatpush2.msra.mxu0 0.0
  %6313 = vmatprep.subr.mxu0 0.0
  %6314 = vmatpush2.msra.mxu0 0.0
  %6315 = vmatprep.subr.mxu0 0.0
  %6316 = vmatpush2.msra.mxu0 0.0
  %6317 = vmatprep.subr.mxu0 0.0
  %6318 = vmatpush2.msra.mxu0 0.0
  %6319 = vmatprep.subr.mxu0 0.0
  %6320 = vmatpush2.msra.mxu0 0.0
  %6321 = vmatprep.subr.mxu0 0.0
  %6322 = vmatpush2.msra.mxu0 0.0
  %6323 = vmatprep.subr.mxu0 0.0
  %6324 = vmatpush2.msra.mxu0 0.0
  %6325 = vmatprep.subr.mxu0 0.0
  %6326 = vmatpush2.msra.mxu0 0.0
  %6327 = vmatprep.subr.mxu0 0.0
  %6328 = vmatpush2.msra.mxu0 0.0
  %6329 = vmatprep.subr.mxu0 0.0
  %6330 = vmatpush2.msra.mxu0 0.0
  %6331 = vmatprep.subr.mxu0 0.0
  %6332 = vmatpush2.msra.mxu0 0.0
  %6333 = vmatprep.subr.mxu0 0.0
  %6334 = vmatpush2.msra.mxu0 0.0
  %6335 = vmatprep.subr.mxu0 0.0
  %6336 = vmatpush2.msra.mxu0 0.0
  %6337 = vmatprep.subr.mxu0 0.0
  %6338 = vmatpush2.msra.mxu0 0.0
  %6339 = vmatprep.subr.mxu0 0.0
  %6340 = vmatpush2.msra.mxu0 0.0
  %6341 = vmatprep.mubr.f32.mxu0 0.0
  %6342 = vmatmul.mubr.f32.gmra.mxu0 %v6275
  %v6343 = vpop.f32.mrf.mxu0
  %v6344 = vadd.f32 %v6269, %v6343
  %v6345 = vpop.f32.mrf.mxu0
  %6346 = vdwg.mxu0
  %v6347 = vadd.f32 %v6344, %v2849
  %v6348 = vxor.u32 %v6347, 2147483648
  %v6349 = vmul.f32 %v6348, 1.442695
  %v6350 = vpow.pop %v6349
  %v6351 = vadd.f32 %v6350, 1.0
  %v6352 = vrcp.pop %v6351
  %v6353 = vmul.f32 1.0, %v6352
  %v6354 = vtanh.pop %v6347
  %v6355 = vmul.f32 %v6353, %v6094
  %6357 = vrot.lane.b32.xlu0 %v6354, 64
  %v6358 = vpop.permute.xlu0 %6357
  %v6360 = vmul.f32 %v6353, %v6358
  %6362 = vrot.lane.b32.xlu0 %v6360, 32
  %v6363 = vpop.permute.xlu0 %6362
  %v6365 = vadd.f32 %v6355, %v6363
  %v6366 = vtanh.pop %v6365
  %6368 = vrot.lane.b32.xlu0 %v6366, 64
  %v6369 = vpop.permute.xlu0 %6368
  %v6371 = vmul.f32 %v6353, %v6369
  %v6372 = vld [vmem:[#allocation4 + $0x68] sm:$0xff]
  %6373 = vmatprep.subr.mxu0 0.0
  %6374 = vmatpush1.msra.mxu0 0.0
  %6375 = vmatprep.subr.mxu0 0.0
  %6376 = vmatpush1.msra.mxu0 0.0
  %6377 = vmatprep.subr.mxu0 0.0
  %6378 = vmatpush1.msra.mxu0 0.0
  %6379 = vmatprep.subr.mxu0 0.0
  %6380 = vmatpush1.msra.mxu0 0.0
  %6381 = vmatprep.subr.mxu0 0.0
  %6382 = vmatpush1.msra.mxu0 0.0
  %6383 = vmatprep.subr.mxu0 0.0
  %6384 = vmatpush1.msra.mxu0 0.0
  %6385 = vmatprep.subr.mxu0 0.0
  %6386 = vmatpush1.msra.mxu0 0.0
  %6387 = vmatprep.subr.mxu0 0.0
  %6388 = vmatpush1.msra.mxu0 0.0
  %6389 = vmatprep.subr.mxu0 0.0
  %6390 = vmatpush1.msra.mxu0 0.0
  %6391 = vmatprep.subr.mxu0 0.0
  %6392 = vmatpush1.msra.mxu0 0.0
  %6393 = vmatprep.subr.mxu0 0.0
  %6394 = vmatpush1.msra.mxu0 0.0
  %6395 = vmatprep.subr.mxu0 0.0
  %6396 = vmatpush1.msra.mxu0 0.0
  %6397 = vmatprep.subr.mxu0 0.0
  %6398 = vmatpush1.msra.mxu0 %v2835
  %6399 = vmatprep.subr.mxu0 0.0
  %6400 = vmatpush1.msra.mxu0 %v2834
  %6401 = vmatprep.subr.mxu0 0.0
  %6402 = vmatpush1.msra.mxu0 %v2833
  %6403 = vmatprep.subr.mxu0 0.0
  %6404 = vmatpush1.msra.mxu0 %v2832
  %6405 = vmatprep.subr.mxu0 0.0
  %6406 = vmatpush2.msra.mxu0 0.0
  %6407 = vmatprep.subr.mxu0 0.0
  %6408 = vmatpush2.msra.mxu0 0.0
  %6409 = vmatprep.subr.mxu0 0.0
  %6410 = vmatpush2.msra.mxu0 0.0
  %6411 = vmatprep.subr.mxu0 0.0
  %6412 = vmatpush2.msra.mxu0 0.0
  %6413 = vmatprep.subr.mxu0 0.0
  %6414 = vmatpush2.msra.mxu0 0.0
  %6415 = vmatprep.subr.mxu0 0.0
  %6416 = vmatpush2.msra.mxu0 0.0
  %6417 = vmatprep.subr.mxu0 0.0
  %6418 = vmatpush2.msra.mxu0 0.0
  %6419 = vmatprep.subr.mxu0 0.0
  %6420 = vmatpush2.msra.mxu0 0.0
  %6421 = vmatprep.subr.mxu0 0.0
  %6422 = vmatpush2.msra.mxu0 0.0
  %6423 = vmatprep.subr.mxu0 0.0
  %6424 = vmatpush2.msra.mxu0 0.0
  %6425 = vmatprep.subr.mxu0 0.0
  %6426 = vmatpush2.msra.mxu0 0.0
  %6427 = vmatprep.subr.mxu0 0.0
  %6428 = vmatpush2.msra.mxu0 0.0
  %6429 = vmatprep.subr.mxu0 0.0
  %6430 = vmatpush2.msra.mxu0 0.0
  %6431 = vmatprep.subr.mxu0 0.0
  %6432 = vmatpush2.msra.mxu0 0.0
  %6433 = vmatprep.subr.mxu0 0.0
  %6434 = vmatpush2.msra.mxu0 0.0
  %6435 = vmatprep.subr.mxu0 0.0
  %6436 = vmatpush2.msra.mxu0 0.0
  %6437 = vmatprep.mubr.f32.mxu0 0.0
  %6438 = vmatmul.mubr.f32.gmra.mxu0 %v6275
  %v6439 = vpop.f32.mrf.mxu0
  %v6440 = vadd.f32 0.0, %v6439
  %v6441 = vpop.f32.mrf.mxu0
  %6442 = vdwg.mxu0
  %v6443 = vadd.f32 %v6372, %v6440
  %v6444 = vxor.u32 %v6443, 2147483648
  %v6445 = vmul.f32 %v6444, 1.442695
  %v6446 = vpow.pop %v6445
  %v6447 = vadd.f32 %v6446, 1.0
  %v6448 = vrcp.pop %v6447
  %v6449 = vmul.f32 1.0, %v6448
  %v6450 = vtanh.pop %v6443
  %v6451 = vmul.f32 %v6449, %v6190
  %6453 = vrot.lane.b32.xlu0 %v6450, 64
  %v6454 = vpop.permute.xlu0 %6453
  %v6456 = vmul.f32 %v6449, %v6454
  %6458 = vrot.lane.b32.xlu0 %v6456, 32
  %v6459 = vpop.permute.xlu0 %6458
  %v6461 = vadd.f32 %v6451, %v6459
  %v6462 = vtanh.pop %v6461
  %6464 = vrot.lane.b32.xlu0 %v6462, 64
  %v6465 = vpop.permute.xlu0 %6464
  %v6467 = vmul.f32 %v6449, %v6465
  %6469 = vrot.lane.b32.xlu0 %v6371, 32
  %v6470 = vpop.permute.xlu0 %6469
  %v6471 = vsel %vm38, %v6470, 0
  %6473 = vmatprep.subr.mxu0 0.0
  %6474 = vmatpush1.msra.mxu0 0.0
  %6475 = vmatprep.subr.mxu0 0.0
  %6476 = vmatpush1.msra.mxu0 0.0
  %6477 = vmatprep.subr.mxu0 0.0
  %6478 = vmatpush1.msra.mxu0 0.0
  %6479 = vmatprep.subr.mxu0 0.0
  %6480 = vmatpush1.msra.mxu0 0.0
  %6481 = vmatprep.subr.mxu0 0.0
  %6482 = vmatpush1.msra.mxu0 0.0
  %6483 = vmatprep.subr.mxu0 0.0
  %6484 = vmatpush1.msra.mxu0 0.0
  %6485 = vmatprep.subr.mxu0 0.0
  %6486 = vmatpush1.msra.mxu0 0.0
  %6487 = vmatprep.subr.mxu0 0.0
  %6488 = vmatpush1.msra.mxu0 0.0
  %6489 = vmatprep.subr.mxu0 0.0
  %6490 = vmatpush1.msra.mxu0 0.0
  %6491 = vmatprep.subr.mxu0 0.0
  %6492 = vmatpush1.msra.mxu0 0.0
  %6493 = vmatprep.subr.mxu0 0.0
  %6494 = vmatpush1.msra.mxu0 0.0
  %6495 = vmatprep.subr.mxu0 0.0
  %6496 = vmatpush1.msra.mxu0 0.0
  %6497 = vmatprep.subr.mxu0 0.0
  %6498 = vmatpush1.msra.mxu0 %v2843
  %6499 = vmatprep.subr.mxu0 0.0
  %6500 = vmatpush1.msra.mxu0 %v2842
  %6501 = vmatprep.subr.mxu0 0.0
  %6502 = vmatpush1.msra.mxu0 %v2841
  %6503 = vmatprep.subr.mxu0 0.0
  %6504 = vmatpush1.msra.mxu0 %v2840
  %6505 = vmatprep.subr.mxu0 0.0
  %6506 = vmatpush2.msra.mxu0 0.0
  %6507 = vmatprep.subr.mxu0 0.0
  %6508 = vmatpush2.msra.mxu0 0.0
  %6509 = vmatprep.subr.mxu0 0.0
  %6510 = vmatpush2.msra.mxu0 0.0
  %6511 = vmatprep.subr.mxu0 0.0
  %6512 = vmatpush2.msra.mxu0 0.0
  %6513 = vmatprep.subr.mxu0 0.0
  %6514 = vmatpush2.msra.mxu0 0.0
  %6515 = vmatprep.subr.mxu0 0.0
  %6516 = vmatpush2.msra.mxu0 0.0
  %6517 = vmatprep.subr.mxu0 0.0
  %6518 = vmatpush2.msra.mxu0 0.0
  %6519 = vmatprep.subr.mxu0 0.0
  %6520 = vmatpush2.msra.mxu0 0.0
  %6521 = vmatprep.subr.mxu0 0.0
  %6522 = vmatpush2.msra.mxu0 0.0
  %6523 = vmatprep.subr.mxu0 0.0
  %6524 = vmatpush2.msra.mxu0 0.0
  %6525 = vmatprep.subr.mxu0 0.0
  %6526 = vmatpush2.msra.mxu0 0.0
  %6527 = vmatprep.subr.mxu0 0.0
  %6528 = vmatpush2.msra.mxu0 0.0
  %6529 = vmatprep.subr.mxu0 0.0
  %6530 = vmatpush2.msra.mxu0 0.0
  %6531 = vmatprep.subr.mxu0 0.0
  %6532 = vmatpush2.msra.mxu0 0.0
  %6533 = vmatprep.subr.mxu0 0.0
  %6534 = vmatpush2.msra.mxu0 0.0
  %6535 = vmatprep.subr.mxu0 0.0
  %6536 = vmatpush2.msra.mxu0 0.0
  %6537 = vmatprep.mubr.f32.mxu0 0.0
  %6538 = vmatmul.mubr.f32.gmra.mxu0 %v6471
  %v6539 = vpop.f32.mrf.mxu0
  %v6540 = vadd.f32 0.0, %v6539
  %v6541 = vpop.f32.mrf.mxu0
  %6542 = vdwg.mxu0
  %6544 = vrot.lane.b32.xlu0 %v6467, 32
  %v6545 = vpop.permute.xlu0 %6544
  %v6546 = vsel %vm38, %v6545, 0
  %6548 = vmatprep.subr.mxu0 0.0
  %6549 = vmatpush1.msra.mxu0 0.0
  %6550 = vmatprep.subr.mxu0 0.0
  %6551 = vmatpush1.msra.mxu0 0.0
  %6552 = vmatprep.subr.mxu0 0.0
  %6553 = vmatpush1.msra.mxu0 0.0
  %6554 = vmatprep.subr.mxu0 0.0
  %6555 = vmatpush1.msra.mxu0 0.0
  %6556 = vmatprep.subr.mxu0 0.0
  %6557 = vmatpush1.msra.mxu0 0.0
  %6558 = vmatprep.subr.mxu0 0.0
  %6559 = vmatpush1.msra.mxu0 0.0
  %6560 = vmatprep.subr.mxu0 0.0
  %6561 = vmatpush1.msra.mxu0 0.0
  %6562 = vmatprep.subr.mxu0 0.0
  %6563 = vmatpush1.msra.mxu0 0.0
  %6564 = vmatprep.subr.mxu0 0.0
  %6565 = vmatpush1.msra.mxu0 0.0
  %6566 = vmatprep.subr.mxu0 0.0
  %6567 = vmatpush1.msra.mxu0 0.0
  %6568 = vmatprep.subr.mxu0 0.0
  %6569 = vmatpush1.msra.mxu0 0.0
  %6570 = vmatprep.subr.mxu0 0.0
  %6571 = vmatpush1.msra.mxu0 0.0
  %6572 = vmatprep.subr.mxu0 0.0
  %6573 = vmatpush1.msra.mxu0 %v2839
  %6574 = vmatprep.subr.mxu0 0.0
  %6575 = vmatpush1.msra.mxu0 %v2838
  %6576 = vmatprep.subr.mxu0 0.0
  %6577 = vmatpush1.msra.mxu0 %v2837
  %6578 = vmatprep.subr.mxu0 0.0
  %6579 = vmatpush1.msra.mxu0 %v2836
  %6580 = vmatprep.subr.mxu0 0.0
  %6581 = vmatpush2.msra.mxu0 0.0
  %6582 = vmatprep.subr.mxu0 0.0
  %6583 = vmatpush2.msra.mxu0 0.0
  %6584 = vmatprep.subr.mxu0 0.0
  %6585 = vmatpush2.msra.mxu0 0.0
  %6586 = vmatprep.subr.mxu0 0.0
  %6587 = vmatpush2.msra.mxu0 0.0
  %6588 = vmatprep.subr.mxu0 0.0
  %6589 = vmatpush2.msra.mxu0 0.0
  %6590 = vmatprep.subr.mxu0 0.0
  %6591 = vmatpush2.msra.mxu0 0.0
  %6592 = vmatprep.subr.mxu0 0.0
  %6593 = vmatpush2.msra.mxu0 0.0
  %6594 = vmatprep.subr.mxu0 0.0
  %6595 = vmatpush2.msra.mxu0 0.0
  %6596 = vmatprep.subr.mxu0 0.0
  %6597 = vmatpush2.msra.mxu0 0.0
  %6598 = vmatprep.subr.mxu0 0.0
  %6599 = vmatpush2.msra.mxu0 0.0
  %6600 = vmatprep.subr.mxu0 0.0
  %6601 = vmatpush2.msra.mxu0 0.0
  %6602 = vmatprep.subr.mxu0 0.0
  %6603 = vmatpush2.msra.mxu0 0.0
  %6604 = vmatprep.subr.mxu0 0.0
  %6605 = vmatpush2.msra.mxu0 0.0
  %6606 = vmatprep.subr.mxu0 0.0
  %6607 = vmatpush2.msra.mxu0 0.0
  %6608 = vmatprep.subr.mxu0 0.0
  %6609 = vmatpush2.msra.mxu0 0.0
  %6610 = vmatprep.subr.mxu0 0.0
  %6611 = vmatpush2.msra.mxu0 0.0
  %6612 = vmatprep.mubr.f32.mxu0 0.0
  %6613 = vmatmul.mubr.f32.gmra.mxu0 %v6546
  %v6614 = vpop.f32.mrf.mxu0
  %v6615 = vadd.f32 %v6540, %v6614
  %v6616 = vpop.f32.mrf.mxu0
  %6617 = vdwg.mxu0
  %v6618 = vadd.f32 %v6615, %v2849
  %v6619 = vxor.u32 %v6618, 2147483648
  %v6620 = vmul.f32 %v6619, 1.442695
  %v6621 = vpow.pop %v6620
  %v6622 = vadd.f32 %v6621, 1.0
  %v6623 = vrcp.pop %v6622
  %v6624 = vmul.f32 1.0, %v6623
  %v6625 = vtanh.pop %v6618
  %v6626 = vmul.f32 %v6624, %v6365
  %6628 = vrot.lane.b32.xlu0 %v6625, 64
  %v6629 = vpop.permute.xlu0 %6628
  %v6631 = vmul.f32 %v6624, %v6629
  %6633 = vrot.lane.b32.xlu0 %v6631, 32
  %v6634 = vpop.permute.xlu0 %6633
  %v6636 = vadd.f32 %v6626, %v6634
  %v6637 = vtanh.pop %v6636
  %6639 = vrot.lane.b32.xlu0 %v6637, 64
  %v6640 = vpop.permute.xlu0 %6639
  %v6642 = vmul.f32 %v6624, %v6640
  %v6643 = vld [vmem:[#allocation4 + $0x70] sm:$0xff]
  %6644 = vmatprep.subr.mxu0 0.0
  %6645 = vmatpush1.msra.mxu0 0.0
  %6646 = vmatprep.subr.mxu0 0.0
  %6647 = vmatpush1.msra.mxu0 0.0
  %6648 = vmatprep.subr.mxu0 0.0
  %6649 = vmatpush1.msra.mxu0 0.0
  %6650 = vmatprep.subr.mxu0 0.0
  %6651 = vmatpush1.msra.mxu0 0.0
  %6652 = vmatprep.subr.mxu0 0.0
  %6653 = vmatpush1.msra.mxu0 0.0
  %6654 = vmatprep.subr.mxu0 0.0
  %6655 = vmatpush1.msra.mxu0 0.0
  %6656 = vmatprep.subr.mxu0 0.0
  %6657 = vmatpush1.msra.mxu0 0.0
  %6658 = vmatprep.subr.mxu0 0.0
  %6659 = vmatpush1.msra.mxu0 0.0
  %6660 = vmatprep.subr.mxu0 0.0
  %6661 = vmatpush1.msra.mxu0 0.0
  %6662 = vmatprep.subr.mxu0 0.0
  %6663 = vmatpush1.msra.mxu0 0.0
  %6664 = vmatprep.subr.mxu0 0.0
  %6665 = vmatpush1.msra.mxu0 0.0
  %6666 = vmatprep.subr.mxu0 0.0
  %6667 = vmatpush1.msra.mxu0 0.0
  %6668 = vmatprep.subr.mxu0 0.0
  %6669 = vmatpush1.msra.mxu0 %v2835
  %6670 = vmatprep.subr.mxu0 0.0
  %6671 = vmatpush1.msra.mxu0 %v2834
  %6672 = vmatprep.subr.mxu0 0.0
  %6673 = vmatpush1.msra.mxu0 %v2833
  %6674 = vmatprep.subr.mxu0 0.0
  %6675 = vmatpush1.msra.mxu0 %v2832
  %6676 = vmatprep.subr.mxu0 0.0
  %6677 = vmatpush2.msra.mxu0 0.0
  %6678 = vmatprep.subr.mxu0 0.0
  %6679 = vmatpush2.msra.mxu0 0.0
  %6680 = vmatprep.subr.mxu0 0.0
  %6681 = vmatpush2.msra.mxu0 0.0
  %6682 = vmatprep.subr.mxu0 0.0
  %6683 = vmatpush2.msra.mxu0 0.0
  %6684 = vmatprep.subr.mxu0 0.0
  %6685 = vmatpush2.msra.mxu0 0.0
  %6686 = vmatprep.subr.mxu0 0.0
  %6687 = vmatpush2.msra.mxu0 0.0
  %6688 = vmatprep.subr.mxu0 0.0
  %6689 = vmatpush2.msra.mxu0 0.0
  %6690 = vmatprep.subr.mxu0 0.0
  %6691 = vmatpush2.msra.mxu0 0.0
  %6692 = vmatprep.subr.mxu0 0.0
  %6693 = vmatpush2.msra.mxu0 0.0
  %6694 = vmatprep.subr.mxu0 0.0
  %6695 = vmatpush2.msra.mxu0 0.0
  %6696 = vmatprep.subr.mxu0 0.0
  %6697 = vmatpush2.msra.mxu0 0.0
  %6698 = vmatprep.subr.mxu0 0.0
  %6699 = vmatpush2.msra.mxu0 0.0
  %6700 = vmatprep.subr.mxu0 0.0
  %6701 = vmatpush2.msra.mxu0 0.0
  %6702 = vmatprep.subr.mxu0 0.0
  %6703 = vmatpush2.msra.mxu0 0.0
  %6704 = vmatprep.subr.mxu0 0.0
  %6705 = vmatpush2.msra.mxu0 0.0
  %6706 = vmatprep.subr.mxu0 0.0
  %6707 = vmatpush2.msra.mxu0 0.0
  %6708 = vmatprep.mubr.f32.mxu0 0.0
  %6709 = vmatmul.mubr.f32.gmra.mxu0 %v6546
  %v6710 = vpop.f32.mrf.mxu0
  %v6711 = vadd.f32 0.0, %v6710
  %v6712 = vpop.f32.mrf.mxu0
  %6713 = vdwg.mxu0
  %v6714 = vadd.f32 %v6643, %v6711
  %v6715 = vxor.u32 %v6714, 2147483648
  %v6716 = vmul.f32 %v6715, 1.442695
  %v6717 = vpow.pop %v6716
  %v6718 = vadd.f32 %v6717, 1.0
  %v6719 = vrcp.pop %v6718
  %v6720 = vmul.f32 1.0, %v6719
  %v6721 = vtanh.pop %v6714
  %v6722 = vmul.f32 %v6720, %v6461
  %6724 = vrot.lane.b32.xlu0 %v6721, 64
  %v6725 = vpop.permute.xlu0 %6724
  %v6727 = vmul.f32 %v6720, %v6725
  %6729 = vrot.lane.b32.xlu0 %v6727, 32
  %v6730 = vpop.permute.xlu0 %6729
  %v6732 = vadd.f32 %v6722, %v6730
  %v6733 = vtanh.pop %v6732
  %6735 = vrot.lane.b32.xlu0 %v6733, 64
  %v6736 = vpop.permute.xlu0 %6735
  %v6738 = vmul.f32 %v6720, %v6736
  %6740 = vrot.lane.b32.xlu0 %v6642, 32
  %v6741 = vpop.permute.xlu0 %6740
  %v6742 = vsel %vm38, %v6741, 0
  %6744 = vmatprep.subr.mxu0 0.0
  %6745 = vmatpush1.msra.mxu0 0.0
  %6746 = vmatprep.subr.mxu0 0.0
  %6747 = vmatpush1.msra.mxu0 0.0
  %6748 = vmatprep.subr.mxu0 0.0
  %6749 = vmatpush1.msra.mxu0 0.0
  %6750 = vmatprep.subr.mxu0 0.0
  %6751 = vmatpush1.msra.mxu0 0.0
  %6752 = vmatprep.subr.mxu0 0.0
  %6753 = vmatpush1.msra.mxu0 0.0
  %6754 = vmatprep.subr.mxu0 0.0
  %6755 = vmatpush1.msra.mxu0 0.0
  %6756 = vmatprep.subr.mxu0 0.0
  %6757 = vmatpush1.msra.mxu0 0.0
  %6758 = vmatprep.subr.mxu0 0.0
  %6759 = vmatpush1.msra.mxu0 0.0
  %6760 = vmatprep.subr.mxu0 0.0
  %6761 = vmatpush1.msra.mxu0 0.0
  %6762 = vmatprep.subr.mxu0 0.0
  %6763 = vmatpush1.msra.mxu0 0.0
  %6764 = vmatprep.subr.mxu0 0.0
  %6765 = vmatpush1.msra.mxu0 0.0
  %6766 = vmatprep.subr.mxu0 0.0
  %6767 = vmatpush1.msra.mxu0 0.0
  %6768 = vmatprep.subr.mxu0 0.0
  %6769 = vmatpush1.msra.mxu0 %v2843
  %6770 = vmatprep.subr.mxu0 0.0
  %6771 = vmatpush1.msra.mxu0 %v2842
  %6772 = vmatprep.subr.mxu0 0.0
  %6773 = vmatpush1.msra.mxu0 %v2841
  %6774 = vmatprep.subr.mxu0 0.0
  %6775 = vmatpush1.msra.mxu0 %v2840
  %6776 = vmatprep.subr.mxu0 0.0
  %6777 = vmatpush2.msra.mxu0 0.0
  %6778 = vmatprep.subr.mxu0 0.0
  %6779 = vmatpush2.msra.mxu0 0.0
  %6780 = vmatprep.subr.mxu0 0.0
  %6781 = vmatpush2.msra.mxu0 0.0
  %6782 = vmatprep.subr.mxu0 0.0
  %6783 = vmatpush2.msra.mxu0 0.0
  %6784 = vmatprep.subr.mxu0 0.0
  %6785 = vmatpush2.msra.mxu0 0.0
  %6786 = vmatprep.subr.mxu0 0.0
  %6787 = vmatpush2.msra.mxu0 0.0
  %6788 = vmatprep.subr.mxu0 0.0
  %6789 = vmatpush2.msra.mxu0 0.0
  %6790 = vmatprep.subr.mxu0 0.0
  %6791 = vmatpush2.msra.mxu0 0.0
  %6792 = vmatprep.subr.mxu0 0.0
  %6793 = vmatpush2.msra.mxu0 0.0
  %6794 = vmatprep.subr.mxu0 0.0
  %6795 = vmatpush2.msra.mxu0 0.0
  %6796 = vmatprep.subr.mxu0 0.0
  %6797 = vmatpush2.msra.mxu0 0.0
  %6798 = vmatprep.subr.mxu0 0.0
  %6799 = vmatpush2.msra.mxu0 0.0
  %6800 = vmatprep.subr.mxu0 0.0
  %6801 = vmatpush2.msra.mxu0 0.0
  %6802 = vmatprep.subr.mxu0 0.0
  %6803 = vmatpush2.msra.mxu0 0.0
  %6804 = vmatprep.subr.mxu0 0.0
  %6805 = vmatpush2.msra.mxu0 0.0
  %6806 = vmatprep.subr.mxu0 0.0
  %6807 = vmatpush2.msra.mxu0 0.0
  %6808 = vmatprep.mubr.f32.mxu0 0.0
  %6809 = vmatmul.mubr.f32.gmra.mxu0 %v6742
  %v6810 = vpop.f32.mrf.mxu0
  %v6811 = vadd.f32 0.0, %v6810
  %v6812 = vpop.f32.mrf.mxu0
  %6813 = vdwg.mxu0
  %6815 = vrot.lane.b32.xlu0 %v6738, 32
  %v6816 = vpop.permute.xlu0 %6815
  %v6817 = vsel %vm38, %v6816, 0
  %6819 = vmatprep.subr.mxu0 0.0
  %6820 = vmatpush1.msra.mxu0 0.0
  %6821 = vmatprep.subr.mxu0 0.0
  %6822 = vmatpush1.msra.mxu0 0.0
  %6823 = vmatprep.subr.mxu0 0.0
  %6824 = vmatpush1.msra.mxu0 0.0
  %6825 = vmatprep.subr.mxu0 0.0
  %6826 = vmatpush1.msra.mxu0 0.0
  %6827 = vmatprep.subr.mxu0 0.0
  %6828 = vmatpush1.msra.mxu0 0.0
  %6829 = vmatprep.subr.mxu0 0.0
  %6830 = vmatpush1.msra.mxu0 0.0
  %6831 = vmatprep.subr.mxu0 0.0
  %6832 = vmatpush1.msra.mxu0 0.0
  %6833 = vmatprep.subr.mxu0 0.0
  %6834 = vmatpush1.msra.mxu0 0.0
  %6835 = vmatprep.subr.mxu0 0.0
  %6836 = vmatpush1.msra.mxu0 0.0
  %6837 = vmatprep.subr.mxu0 0.0
  %6838 = vmatpush1.msra.mxu0 0.0
  %6839 = vmatprep.subr.mxu0 0.0
  %6840 = vmatpush1.msra.mxu0 0.0
  %6841 = vmatprep.subr.mxu0 0.0
  %6842 = vmatpush1.msra.mxu0 0.0
  %6843 = vmatprep.subr.mxu0 0.0
  %6844 = vmatpush1.msra.mxu0 %v2839
  %6845 = vmatprep.subr.mxu0 0.0
  %6846 = vmatpush1.msra.mxu0 %v2838
  %6847 = vmatprep.subr.mxu0 0.0
  %6848 = vmatpush1.msra.mxu0 %v2837
  %6849 = vmatprep.subr.mxu0 0.0
  %6850 = vmatpush1.msra.mxu0 %v2836
  %6851 = vmatprep.subr.mxu0 0.0
  %6852 = vmatpush2.msra.mxu0 0.0
  %6853 = vmatprep.subr.mxu0 0.0
  %6854 = vmatpush2.msra.mxu0 0.0
  %6855 = vmatprep.subr.mxu0 0.0
  %6856 = vmatpush2.msra.mxu0 0.0
  %6857 = vmatprep.subr.mxu0 0.0
  %6858 = vmatpush2.msra.mxu0 0.0
  %6859 = vmatprep.subr.mxu0 0.0
  %6860 = vmatpush2.msra.mxu0 0.0
  %6861 = vmatprep.subr.mxu0 0.0
  %6862 = vmatpush2.msra.mxu0 0.0
  %6863 = vmatprep.subr.mxu0 0.0
  %6864 = vmatpush2.msra.mxu0 0.0
  %6865 = vmatprep.subr.mxu0 0.0
  %6866 = vmatpush2.msra.mxu0 0.0
  %6867 = vmatprep.subr.mxu0 0.0
  %6868 = vmatpush2.msra.mxu0 0.0
  %6869 = vmatprep.subr.mxu0 0.0
  %6870 = vmatpush2.msra.mxu0 0.0
  %6871 = vmatprep.subr.mxu0 0.0
  %6872 = vmatpush2.msra.mxu0 0.0
  %6873 = vmatprep.subr.mxu0 0.0
  %6874 = vmatpush2.msra.mxu0 0.0
  %6875 = vmatprep.subr.mxu0 0.0
  %6876 = vmatpush2.msra.mxu0 0.0
  %6877 = vmatprep.subr.mxu0 0.0
  %6878 = vmatpush2.msra.mxu0 0.0
  %6879 = vmatprep.subr.mxu0 0.0
  %6880 = vmatpush2.msra.mxu0 0.0
  %6881 = vmatprep.subr.mxu0 0.0
  %6882 = vmatpush2.msra.mxu0 0.0
  %6883 = vmatprep.mubr.f32.mxu0 0.0
  %6884 = vmatmul.mubr.f32.gmra.mxu0 %v6817
  %v6885 = vpop.f32.mrf.mxu0
  %v6886 = vadd.f32 %v6811, %v6885
  %v6887 = vpop.f32.mrf.mxu0
  %6888 = vdwg.mxu0
  %v6889 = vadd.f32 %v6886, %v2849
  %v6890 = vxor.u32 %v6889, 2147483648
  %v6891 = vmul.f32 %v6890, 1.442695
  %v6892 = vpow.pop %v6891
  %v6893 = vadd.f32 %v6892, 1.0
  %v6894 = vrcp.pop %v6893
  %v6895 = vmul.f32 1.0, %v6894
  %v6896 = vtanh.pop %v6889
  %v6897 = vmul.f32 %v6895, %v6636
  %6899 = vrot.lane.b32.xlu0 %v6896, 64
  %v6900 = vpop.permute.xlu0 %6899
  %v6902 = vmul.f32 %v6895, %v6900
  %6904 = vrot.lane.b32.xlu0 %v6902, 32
  %v6905 = vpop.permute.xlu0 %6904
  %v6907 = vadd.f32 %v6897, %v6905
  %v6908 = vtanh.pop %v6907
  %6910 = vrot.lane.b32.xlu0 %v6908, 64
  %v6911 = vpop.permute.xlu0 %6910
  %v6913 = vmul.f32 %v6895, %v6911
  %v6914 = vld [vmem:[#allocation4 + $0x78] sm:$0xff]
  %6915 = vmatprep.subr.mxu0 0.0
  %6916 = vmatpush1.msra.mxu0 0.0
  %6917 = vmatprep.subr.mxu0 0.0
  %6918 = vmatpush1.msra.mxu0 0.0
  %6919 = vmatprep.subr.mxu0 0.0
  %6920 = vmatpush1.msra.mxu0 0.0
  %6921 = vmatprep.subr.mxu0 0.0
  %6922 = vmatpush1.msra.mxu0 0.0
  %6923 = vmatprep.subr.mxu0 0.0
  %6924 = vmatpush1.msra.mxu0 0.0
  %6925 = vmatprep.subr.mxu0 0.0
  %6926 = vmatpush1.msra.mxu0 0.0
  %6927 = vmatprep.subr.mxu0 0.0
  %6928 = vmatpush1.msra.mxu0 0.0
  %6929 = vmatprep.subr.mxu0 0.0
  %6930 = vmatpush1.msra.mxu0 0.0
  %6931 = vmatprep.subr.mxu0 0.0
  %6932 = vmatpush1.msra.mxu0 0.0
  %6933 = vmatprep.subr.mxu0 0.0
  %6934 = vmatpush1.msra.mxu0 0.0
  %6935 = vmatprep.subr.mxu0 0.0
  %6936 = vmatpush1.msra.mxu0 0.0
  %6937 = vmatprep.subr.mxu0 0.0
  %6938 = vmatpush1.msra.mxu0 0.0
  %6939 = vmatprep.subr.mxu0 0.0
  %6940 = vmatpush1.msra.mxu0 %v2835
  %6941 = vmatprep.subr.mxu0 0.0
  %6942 = vmatpush1.msra.mxu0 %v2834
  %6943 = vmatprep.subr.mxu0 0.0
  %6944 = vmatpush1.msra.mxu0 %v2833
  %6945 = vmatprep.subr.mxu0 0.0
  %6946 = vmatpush1.msra.mxu0 %v2832
  %6947 = vmatprep.subr.mxu0 0.0
  %6948 = vmatpush2.msra.mxu0 0.0
  %6949 = vmatprep.subr.mxu0 0.0
  %6950 = vmatpush2.msra.mxu0 0.0
  %6951 = vmatprep.subr.mxu0 0.0
  %6952 = vmatpush2.msra.mxu0 0.0
  %6953 = vmatprep.subr.mxu0 0.0
  %6954 = vmatpush2.msra.mxu0 0.0
  %6955 = vmatprep.subr.mxu0 0.0
  %6956 = vmatpush2.msra.mxu0 0.0
  %6957 = vmatprep.subr.mxu0 0.0
  %6958 = vmatpush2.msra.mxu0 0.0
  %6959 = vmatprep.subr.mxu0 0.0
  %6960 = vmatpush2.msra.mxu0 0.0
  %6961 = vmatprep.subr.mxu0 0.0
  %6962 = vmatpush2.msra.mxu0 0.0
  %6963 = vmatprep.subr.mxu0 0.0
  %6964 = vmatpush2.msra.mxu0 0.0
  %6965 = vmatprep.subr.mxu0 0.0
  %6966 = vmatpush2.msra.mxu0 0.0
  %6967 = vmatprep.subr.mxu0 0.0
  %6968 = vmatpush2.msra.mxu0 0.0
  %6969 = vmatprep.subr.mxu0 0.0
  %6970 = vmatpush2.msra.mxu0 0.0
  %6971 = vmatprep.subr.mxu0 0.0
  %6972 = vmatpush2.msra.mxu0 0.0
  %6973 = vmatprep.subr.mxu0 0.0
  %6974 = vmatpush2.msra.mxu0 0.0
  %6975 = vmatprep.subr.mxu0 0.0
  %6976 = vmatpush2.msra.mxu0 0.0
  %6977 = vmatprep.subr.mxu0 0.0
  %6978 = vmatpush2.msra.mxu0 0.0
  %6979 = vmatprep.mubr.f32.mxu0 0.0
  %6980 = vmatmul.mubr.f32.gmra.mxu0 %v6817
  %v6981 = vpop.f32.mrf.mxu0
  %v6982 = vadd.f32 0.0, %v6981
  %v6983 = vpop.f32.mrf.mxu0
  %6984 = vdwg.mxu0
  %v6985 = vadd.f32 %v6914, %v6982
  %v6986 = vxor.u32 %v6985, 2147483648
  %v6987 = vmul.f32 %v6986, 1.442695
  %v6988 = vpow.pop %v6987
  %v6989 = vadd.f32 %v6988, 1.0
  %v6990 = vrcp.pop %v6989
  %v6991 = vmul.f32 1.0, %v6990
  %v6992 = vtanh.pop %v6985
  %v6993 = vmul.f32 %v6991, %v6732
  %6995 = vrot.lane.b32.xlu0 %v6992, 64
  %v6996 = vpop.permute.xlu0 %6995
  %v6998 = vmul.f32 %v6991, %v6996
  %7000 = vrot.lane.b32.xlu0 %v6998, 32
  %v7001 = vpop.permute.xlu0 %7000
  %v7003 = vadd.f32 %v6993, %v7001
  %v7004 = vtanh.pop %v7003
  %7006 = vrot.lane.b32.xlu0 %v7004, 64
  %v7007 = vpop.permute.xlu0 %7006
  %v7009 = vmul.f32 %v6991, %v7007
  %7011 = vrot.lane.b32.xlu0 %v6913, 32
  %v7012 = vpop.permute.xlu0 %7011
  %v7013 = vsel %vm38, %v7012, 0
  %7015 = vmatprep.subr.mxu0 0.0
  %7016 = vmatpush1.msra.mxu0 0.0
  %7017 = vmatprep.subr.mxu0 0.0
  %7018 = vmatpush1.msra.mxu0 0.0
  %7019 = vmatprep.subr.mxu0 0.0
  %7020 = vmatpush1.msra.mxu0 0.0
  %7021 = vmatprep.subr.mxu0 0.0
  %7022 = vmatpush1.msra.mxu0 0.0
  %7023 = vmatprep.subr.mxu0 0.0
  %7024 = vmatpush1.msra.mxu0 0.0
  %7025 = vmatprep.subr.mxu0 0.0
  %7026 = vmatpush1.msra.mxu0 0.0
  %7027 = vmatprep.subr.mxu0 0.0
  %7028 = vmatpush1.msra.mxu0 0.0
  %7029 = vmatprep.subr.mxu0 0.0
  %7030 = vmatpush1.msra.mxu0 0.0
  %7031 = vmatprep.subr.mxu0 0.0
  %7032 = vmatpush1.msra.mxu0 0.0
  %7033 = vmatprep.subr.mxu0 0.0
  %7034 = vmatpush1.msra.mxu0 0.0
  %7035 = vmatprep.subr.mxu0 0.0
  %7036 = vmatpush1.msra.mxu0 0.0
  %7037 = vmatprep.subr.mxu0 0.0
  %7038 = vmatpush1.msra.mxu0 0.0
  %7039 = vmatprep.subr.mxu0 0.0
  %7040 = vmatpush1.msra.mxu0 %v2843
  %7041 = vmatprep.subr.mxu0 0.0
  %7042 = vmatpush1.msra.mxu0 %v2842
  %7043 = vmatprep.subr.mxu0 0.0
  %7044 = vmatpush1.msra.mxu0 %v2841
  %7045 = vmatprep.subr.mxu0 0.0
  %7046 = vmatpush1.msra.mxu0 %v2840
  %7047 = vmatprep.subr.mxu0 0.0
  %7048 = vmatpush2.msra.mxu0 0.0
  %7049 = vmatprep.subr.mxu0 0.0
  %7050 = vmatpush2.msra.mxu0 0.0
  %7051 = vmatprep.subr.mxu0 0.0
  %7052 = vmatpush2.msra.mxu0 0.0
  %7053 = vmatprep.subr.mxu0 0.0
  %7054 = vmatpush2.msra.mxu0 0.0
  %7055 = vmatprep.subr.mxu0 0.0
  %7056 = vmatpush2.msra.mxu0 0.0
  %7057 = vmatprep.subr.mxu0 0.0
  %7058 = vmatpush2.msra.mxu0 0.0
  %7059 = vmatprep.subr.mxu0 0.0
  %7060 = vmatpush2.msra.mxu0 0.0
  %7061 = vmatprep.subr.mxu0 0.0
  %7062 = vmatpush2.msra.mxu0 0.0
  %7063 = vmatprep.subr.mxu0 0.0
  %7064 = vmatpush2.msra.mxu0 0.0
  %7065 = vmatprep.subr.mxu0 0.0
  %7066 = vmatpush2.msra.mxu0 0.0
  %7067 = vmatprep.subr.mxu0 0.0
  %7068 = vmatpush2.msra.mxu0 0.0
  %7069 = vmatprep.subr.mxu0 0.0
  %7070 = vmatpush2.msra.mxu0 0.0
  %7071 = vmatprep.subr.mxu0 0.0
  %7072 = vmatpush2.msra.mxu0 0.0
  %7073 = vmatprep.subr.mxu0 0.0
  %7074 = vmatpush2.msra.mxu0 0.0
  %7075 = vmatprep.subr.mxu0 0.0
  %7076 = vmatpush2.msra.mxu0 0.0
  %7077 = vmatprep.subr.mxu0 0.0
  %7078 = vmatpush2.msra.mxu0 0.0
  %7079 = vmatprep.mubr.f32.mxu0 0.0
  %7080 = vmatmul.mubr.f32.gmra.mxu0 %v7013
  %v7081 = vpop.f32.mrf.mxu0
  %v7082 = vadd.f32 0.0, %v7081
  %v7083 = vpop.f32.mrf.mxu0
  %7084 = vdwg.mxu0
  %7086 = vrot.lane.b32.xlu0 %v7009, 32
  %v7087 = vpop.permute.xlu0 %7086
  %v7088 = vsel %vm38, %v7087, 0
  %7090 = vmatprep.subr.mxu0 0.0
  %7091 = vmatpush1.msra.mxu0 0.0
  %7092 = vmatprep.subr.mxu0 0.0
  %7093 = vmatpush1.msra.mxu0 0.0
  %7094 = vmatprep.subr.mxu0 0.0
  %7095 = vmatpush1.msra.mxu0 0.0
  %7096 = vmatprep.subr.mxu0 0.0
  %7097 = vmatpush1.msra.mxu0 0.0
  %7098 = vmatprep.subr.mxu0 0.0
  %7099 = vmatpush1.msra.mxu0 0.0
  %7100 = vmatprep.subr.mxu0 0.0
  %7101 = vmatpush1.msra.mxu0 0.0
  %7102 = vmatprep.subr.mxu0 0.0
  %7103 = vmatpush1.msra.mxu0 0.0
  %7104 = vmatprep.subr.mxu0 0.0
  %7105 = vmatpush1.msra.mxu0 0.0
  %7106 = vmatprep.subr.mxu0 0.0
  %7107 = vmatpush1.msra.mxu0 0.0
  %7108 = vmatprep.subr.mxu0 0.0
  %7109 = vmatpush1.msra.mxu0 0.0
  %7110 = vmatprep.subr.mxu0 0.0
  %7111 = vmatpush1.msra.mxu0 0.0
  %7112 = vmatprep.subr.mxu0 0.0
  %7113 = vmatpush1.msra.mxu0 0.0
  %7114 = vmatprep.subr.mxu0 0.0
  %7115 = vmatpush1.msra.mxu0 %v2839
  %7116 = vmatprep.subr.mxu0 0.0
  %7117 = vmatpush1.msra.mxu0 %v2838
  %7118 = vmatprep.subr.mxu0 0.0
  %7119 = vmatpush1.msra.mxu0 %v2837
  %7120 = vmatprep.subr.mxu0 0.0
  %7121 = vmatpush1.msra.mxu0 %v2836
  %7122 = vmatprep.subr.mxu0 0.0
  %7123 = vmatpush2.msra.mxu0 0.0
  %7124 = vmatprep.subr.mxu0 0.0
  %7125 = vmatpush2.msra.mxu0 0.0
  %7126 = vmatprep.subr.mxu0 0.0
  %7127 = vmatpush2.msra.mxu0 0.0
  %7128 = vmatprep.subr.mxu0 0.0
  %7129 = vmatpush2.msra.mxu0 0.0
  %7130 = vmatprep.subr.mxu0 0.0
  %7131 = vmatpush2.msra.mxu0 0.0
  %7132 = vmatprep.subr.mxu0 0.0
  %7133 = vmatpush2.msra.mxu0 0.0
  %7134 = vmatprep.subr.mxu0 0.0
  %7135 = vmatpush2.msra.mxu0 0.0
  %7136 = vmatprep.subr.mxu0 0.0
  %7137 = vmatpush2.msra.mxu0 0.0
  %7138 = vmatprep.subr.mxu0 0.0
  %7139 = vmatpush2.msra.mxu0 0.0
  %7140 = vmatprep.subr.mxu0 0.0
  %7141 = vmatpush2.msra.mxu0 0.0
  %7142 = vmatprep.subr.mxu0 0.0
  %7143 = vmatpush2.msra.mxu0 0.0
  %7144 = vmatprep.subr.mxu0 0.0
  %7145 = vmatpush2.msra.mxu0 0.0
  %7146 = vmatprep.subr.mxu0 0.0
  %7147 = vmatpush2.msra.mxu0 0.0
  %7148 = vmatprep.subr.mxu0 0.0
  %7149 = vmatpush2.msra.mxu0 0.0
  %7150 = vmatprep.subr.mxu0 0.0
  %7151 = vmatpush2.msra.mxu0 0.0
  %7152 = vmatprep.subr.mxu0 0.0
  %7153 = vmatpush2.msra.mxu0 0.0
  %7154 = vmatprep.mubr.f32.mxu0 0.0
  %7155 = vmatmul.mubr.f32.gmra.mxu0 %v7088
  %v7156 = vpop.f32.mrf.mxu0
  %v7157 = vadd.f32 %v7082, %v7156
  %v7158 = vpop.f32.mrf.mxu0
  %7159 = vdwg.mxu0
  %v7160 = vadd.f32 %v7157, %v2849
  %v7161 = vxor.u32 %v7160, 2147483648
  %v7162 = vmul.f32 %v7161, 1.442695
  %v7163 = vpow.pop %v7162
  %v7164 = vadd.f32 %v7163, 1.0
  %v7165 = vrcp.pop %v7164
  %v7166 = vmul.f32 1.0, %v7165
  %v7167 = vtanh.pop %v7160
  %v7168 = vmul.f32 %v7166, %v6907
  %7170 = vrot.lane.b32.xlu0 %v7167, 64
  %v7171 = vpop.permute.xlu0 %7170
  %v7173 = vmul.f32 %v7166, %v7171
  %7175 = vrot.lane.b32.xlu0 %v7173, 32
  %v7176 = vpop.permute.xlu0 %7175
  %v7178 = vadd.f32 %v7168, %v7176
  %v7179 = vtanh.pop %v7178
  %7181 = vrot.lane.b32.xlu0 %v7179, 64
  %v7182 = vpop.permute.xlu0 %7181
  %v7184 = vmul.f32 %v7166, %v7182
  %v7185 = vld [vmem:[%s9] sm:$0xff]
  %v7186 = vld [vmem:[%s9 + $0x8] sm:$0xff]
  %v7187 = vld [vmem:[%s9 + $0x10] sm:$0xff]
  %v7188 = vld [vmem:[%s9 + $0x18] sm:$0xff]
  %v7189 = vld [vmem:[%s10] sm:$0x1]
  %v7191 = vlaneseq
  %v7192 = vshrl.u32 %v7191, 7
  %v7193 = vsub.s32 0, %v7192
  %v7194 = vrot.slane %v7189, %v7193
  %7197 = vrot.lane.b32.xlu0 %v7184, 32
  %v7198 = vpop.permute.xlu0 %7197
  %v7199 = vsel %vm38, %v7198, 0
  %7201 = vmatprep.subr.mxu0 0.0
  %7202 = vmatpush1.msra.mxu0 0.0
  %7203 = vmatprep.subr.mxu0 0.0
  %7204 = vmatpush1.msra.mxu0 0.0
  %7205 = vmatprep.subr.mxu0 0.0
  %7206 = vmatpush1.msra.mxu0 0.0
  %7207 = vmatprep.subr.mxu0 0.0
  %7208 = vmatpush1.msra.mxu0 0.0
  %7209 = vmatprep.subr.mxu0 0.0
  %7210 = vmatpush1.msra.mxu0 0.0
  %7211 = vmatprep.subr.mxu0 0.0
  %7212 = vmatpush1.msra.mxu0 0.0
  %7213 = vmatprep.subr.mxu0 0.0
  %7214 = vmatpush1.msra.mxu0 0.0
  %7215 = vmatprep.subr.mxu0 0.0
  %7216 = vmatpush1.msra.mxu0 0.0
  %7217 = vmatprep.subr.mxu0 0.0
  %7218 = vmatpush1.msra.mxu0 0.0
  %7219 = vmatprep.subr.mxu0 0.0
  %7220 = vmatpush1.msra.mxu0 0.0
  %7221 = vmatprep.subr.mxu0 0.0
  %7222 = vmatpush1.msra.mxu0 0.0
  %7223 = vmatprep.subr.mxu0 0.0
  %7224 = vmatpush1.msra.mxu0 0.0
  %7225 = vmatprep.subr.mxu0 0.0
  %7226 = vmatpush1.msra.mxu0 %v7188
  %7227 = vmatprep.subr.mxu0 0.0
  %7228 = vmatpush1.msra.mxu0 %v7187
  %7229 = vmatprep.subr.mxu0 0.0
  %7230 = vmatpush1.msra.mxu0 %v7186
  %7231 = vmatprep.subr.mxu0 0.0
  %7232 = vmatpush1.msra.mxu0 %v7185
  %7233 = vmatprep.subr.mxu0 0.0
  %7234 = vmatpush2.msra.mxu0 0.0
  %7235 = vmatprep.subr.mxu0 0.0
  %7236 = vmatpush2.msra.mxu0 0.0
  %7237 = vmatprep.subr.mxu0 0.0
  %7238 = vmatpush2.msra.mxu0 0.0
  %7239 = vmatprep.subr.mxu0 0.0
  %7240 = vmatpush2.msra.mxu0 0.0
  %7241 = vmatprep.subr.mxu0 0.0
  %7242 = vmatpush2.msra.mxu0 0.0
  %7243 = vmatprep.subr.mxu0 0.0
  %7244 = vmatpush2.msra.mxu0 0.0
  %7245 = vmatprep.subr.mxu0 0.0
  %7246 = vmatpush2.msra.mxu0 0.0
  %7247 = vmatprep.subr.mxu0 0.0
  %7248 = vmatpush2.msra.mxu0 0.0
  %7249 = vmatprep.subr.mxu0 0.0
  %7250 = vmatpush2.msra.mxu0 0.0
  %7251 = vmatprep.subr.mxu0 0.0
  %7252 = vmatpush2.msra.mxu0 0.0
  %7253 = vmatprep.subr.mxu0 0.0
  %7254 = vmatpush2.msra.mxu0 0.0
  %7255 = vmatprep.subr.mxu0 0.0
  %7256 = vmatpush2.msra.mxu0 0.0
  %7257 = vmatprep.subr.mxu0 0.0
  %7258 = vmatpush2.msra.mxu0 0.0
  %7259 = vmatprep.subr.mxu0 0.0
  %7260 = vmatpush2.msra.mxu0 0.0
  %7261 = vmatprep.subr.mxu0 0.0
  %7262 = vmatpush2.msra.mxu0 0.0
  %7263 = vmatprep.subr.mxu0 0.0
  %7264 = vmatpush2.msra.mxu0 0.0
  %7265 = vmatprep.mubr.f32.mxu0 0.0
  %7266 = vmatmul.mubr.f32.gmra.mxu0 %v7199
  %v7267 = vpop.f32.mrf.mxu0
  %v7268 = vadd.f32 %v7194, %v7267
  %v7269 = vpop.f32.mrf.mxu0
  %7270 = vdwg.mxu0
  %vm7271 = vcmask 31744
  %7272 = vst.msk [vmem:[%s11] sm:$0xff] %vm7271, %v7268
  // Predicated region
  $region46: #{model_forward.1} parent=0 // pred_check
    _
  $region47: #{model_forward.1} parent=0 // pred_check_branch
    %7274 = sbr.rel (0) target = $region49
  $region48: #{model_forward.1} parent=0 // pred_region
    _
  $region49: #{model_forward.1} parent=0 // pred_fallthru
    _
  // Predicated region
  $region50: #{model_forward.1} parent=0 // pred_check
    _
  $region51: #{model_forward.1} parent=0 // pred_check_branch
    %7276 = sbr.rel (0) target = $region53
  $region52: #{model_forward.1} parent=0 // pred_region
    _
  $region53: #{model_forward.1} parent=0 // pred_fallthru
    _

</llo_original>
